<compile_context>
chip_gen: v7x
topology: tpu7x:2x2x1
jax: 0.10.0
libtpu: 0.0.40
codegen_flags: <defaults>
</compile_context>

<pallas_src>
import functools

import numpy as np
import jax
import jax.numpy as jnp
from jax import lax
from jax.experimental import pallas as pl
from jax.experimental.pallas import tpu as pltpu

_EPS = 1e-5


def _round_up(x, m):
    return (x + m - 1) // m * m


# ---------------------------------------------------------------------------
# In-kernel helpers.  "Row layout" = (N*H, W*C) values with lane index w*C + c
# (lane-dense: 256 / 512 lanes here); rows are (n, h).
# ---------------------------------------------------------------------------
def _fold_width(row, C):
    # (1, W*C) -> (1, C): sum the W channel groups (W is a power of two).
    width = row.shape[1]
    while width > C:
        half = width // 2
        row = row[:, :half] + row[:, half:width]
        width = half
    return row


def _bcast_width(row, WC):
    # (1, C) -> (1, W*C): repeat the channel vector W times along the lane axis.
    while row.shape[1] < WC:
        row = jnp.concatenate([row, row], axis=1)
    return row


def _bn_relu_rows(acc, gamma_l, beta_l, *, C, count, eps):
    # Training-mode BatchNorm (two-pass batch statistics, biased variance) + ReLU.
    WC = acc.shape[1]
    inv = 1.0 / float(count)
    mean_l = _bcast_width(_fold_width(jnp.sum(acc, axis=0, keepdims=True), C) * inv, WC)
    cen = acc - mean_l
    var_c = _fold_width(jnp.sum(cen * cen, axis=0, keepdims=True), C) * inv
    rstd_l = _bcast_width(lax.rsqrt(var_c + eps), WC)
    return jnp.maximum(cen * (gamma_l * rstd_l) + beta_l, 0.0)


def _maxpool_3x3_s2_rows(z, *, N, H, W, C):
    # MaxPool2d(kernel=3, stride=2, padding=1) on post-ReLU (>=0) row-layout data.
    # Zero pad taps are exact because every window contains a real value >= 0.
    Ho, Wo, WC = H // 2, W // 2, W * C
    # row direction: max over rows {2ho-1, 2ho, 2ho+1}
    z4 = z.reshape(N, Ho, 2, WC)
    z_even, z_odd = z4[:, :, 0, :], z4[:, :, 1, :]
    z_up = jnp.concatenate(
        [jnp.zeros((N, 1, WC), z.dtype), z_odd[:, :Ho - 1, :]], axis=1)
    hd = jnp.maximum(jnp.maximum(z_even, z_odd), z_up)           # (N, Ho, W*C)
    # column direction: max over cols {2wo-1, 2wo, 2wo+1}, whole lane-dense rows
    h4 = hd.reshape(N, Ho, Wo, 2 * C)
    c_even, c_odd = h4[:, :, :, :C], h4[:, :, :, C:]
    c_up = jnp.concatenate(
        [jnp.zeros((N, Ho, 1, C), z.dtype), c_odd[:, :, :Wo - 1, :]], axis=2)
    return jnp.maximum(jnp.maximum(c_even, c_odd), c_up)         # (N, Ho, Wo, C)


# ---------------------------------------------------------------------------
# Fused kernel: conv1 + BN + ReLU + pool + conv2 + BN + ReLU + pool + flatten
# ---------------------------------------------------------------------------
def _encoder_bn_kernel(x_ref, wb1_ref, g1_ref, b1_ref, wb2_ref, g2_ref, b2_ref,
                       o_ref, xp1_ref, xp2_ref, *, eps):
    # x_ref  : (N, Cin1, H1, W1)   NCHW input
    # wb1_ref: (K1, Lp1, W1*Cout1) bf16 banded conv1 weights (input lanes c*Wp1 + w)
    # wb2_ref: (K2, Lp2, W2*Cout2) bf16 banded conv2 weights (input lanes w*Cin2 + c)
    # g*,b*  : (1, W*Cout) f32     BN gamma/beta pre-tiled per lane
    # o_ref  : (N, Cout2*Ho2*Wo2)  f32 output, NCHW flatten order
    # xp1/xp2: padded-row VMEM scratches (N, Hp, Lp)
    N, Cin1, H1, W1 = x_ref.shape
    K1, Lp1, _ = wb1_ref.shape
    K2, Lp2, _ = wb2_ref.shape
    Cout1 = wb1_ref.shape[2] // W1
    P1, Wp1 = K1 // 2, W1 + K1 - 1
    H2, W2, Cin2 = H1 // 2, W1 // 2, Cout1
    Cout2 = wb2_ref.shape[2] // W2
    P2 = K2 // 2
    Ho2, Wo2 = H2 // 2, W2 // 2

    # ---- layer 1: "same" zero padding in VMEM, filled straight from NCHW ----
    # Whole-scratch zeroing is only ~10 vregs of dense stores here and is cheaper
    # than enumerating the strided halo slices of the channel-major layout.
    xp1_ref[...] = jnp.zeros(xp1_ref.shape, xp1_ref.dtype)
    for c in range(Cin1):                                        # Cin1=4, static unroll
        xp1_ref[:, P1:P1 + H1, c * Wp1 + P1:c * Wp1 + P1 + W1] = x_ref[:, c, :, :]

    # conv1: K1 lane-dense row matmuls (bf16 x bf16 -> f32 acc), K = Lp1 = 128 aligned.
    xp1 = xp1_ref[...].astype(jnp.bfloat16)
    acc1 = jnp.dot(xp1[:, 0:H1, :].reshape(N * H1, Lp1), wb1_ref[0],
                   preferred_element_type=jnp.float32)
    for kh in range(1, K1):
        lhs = xp1[:, kh:kh + H1, :].reshape(N * H1, Lp1)
        acc1 = acc1 + jnp.dot(lhs, wb1_ref[kh], preferred_element_type=jnp.float32)
    # conv bias intentionally omitted: it cancels under training-mode BatchNorm.

    z1 = _bn_relu_rows(acc1, g1_ref[...], b1_ref[...],
                       C=Cout1, count=N * H1 * W1, eps=eps)
    p1 = _maxpool_3x3_s2_rows(z1, N=N, H=H1, W=W1, C=Cout1)      # (N, H2, W2, Cin2)

    # ---- layer 2: pooled rows drop straight into the padded scratch (one store) ----
    xp2_ref[...] = jnp.zeros(xp2_ref.shape, xp2_ref.dtype)
    xp2_ref[:, P2:P2 + H2, P2 * Cin2:(P2 + W2) * Cin2] = p1.reshape(N, H2, W2 * Cin2)

    xp2 = xp2_ref[...].astype(jnp.bfloat16)
    acc2 = jnp.dot(xp2[:, 0:H2, :].reshape(N * H2, Lp2), wb2_ref[0],
                   preferred_element_type=jnp.float32)
    for kh in range(1, K2):
        lhs = xp2[:, kh:kh + H2, :].reshape(N * H2, Lp2)
        acc2 = acc2 + jnp.dot(lhs, wb2_ref[kh], preferred_element_type=jnp.float32)

    z2 = _bn_relu_rows(acc2, g2_ref[...], b2_ref[...],
                       C=Cout2, count=N * H2 * W2, eps=eps)
    p2 = _maxpool_3x3_s2_rows(z2, N=N, H=H2, W=W2, C=Cout2)      # (N, Ho2, Wo2, Cout2)

    # ---- PyTorch NCHW flatten order, single lane-dense (N, C*Ho*Wo) store ----
    pm = p2.reshape(N, Ho2 * Wo2, Cout2)
    o_ref[...] = jnp.swapaxes(pm, 1, 2).reshape(N, Cout2 * Ho2 * Wo2)


# ---------------------------------------------------------------------------
# Host-side (numpy) parameter preparation: banded bf16 conv weights, tiled BN params
# ---------------------------------------------------------------------------
def _banded_conv1_weights(w_oihw, W_out, Lp):
    # conv1: input row lanes are channel-major (c*Wp + w_in); output lanes w*Cout + co.
    Cout, Cin, KH, KW = w_oihw.shape
    Wp = W_out + KW - 1
    wb = np.zeros((KH, Lp, W_out * Cout), np.float32)
    w = np.asarray(w_oihw, np.float32)
    for kh in range(KH):
        for kw in range(KW):
            for c in range(Cin):
                for wo in range(W_out):
                    wb[kh, c * Wp + wo + kw, wo * Cout:(wo + 1) * Cout] += w[:, c, kh, kw]
    return wb


def _banded_conv2_weights(w_oihw, W_out, Lp):
    # conv2: input row lanes are channel-minor (w_in*Cin + c); output lanes w*Cout + co.
    Cout, Cin, KH, KW = w_oihw.shape
    wb = np.zeros((KH, Lp, W_out * Cout), np.float32)
    w = np.asarray(w_oihw, np.float32)
    for kh in range(KH):
        for kw in range(KW):
            for c in range(Cin):
                for wo in range(W_out):
                    wb[kh, (wo + kw) * Cin + c, wo * Cout:(wo + 1) * Cout] += w[:, c, kh, kw]
    return wb


def prepare_encoder_params(img_hw, w1_oihw, b1, g1, be1, w2_oihw, b2, g2, be2):
    """Host-side prep.  Conv biases (b1, b2) are accepted for interface fidelity but
    are mathematical no-ops under training-mode BatchNorm, so they are not used."""
    del b1, b2
    Cout1, Cin1, K1, _ = w1_oihw.shape
    Cout2, Cin2, K2, _ = w2_oihw.shape
    assert Cin2 == Cout1
    H1 = W1 = int(img_hw)
    W2 = W1 // 2
    Lp1 = _round_up(Cin1 * (W1 + K1 - 1), 128)
    Lp2 = _round_up((W2 + K2 - 1) * Cin2, 128)
    wb1 = jnp.asarray(_banded_conv1_weights(w1_oihw, W1, Lp1)).astype(jnp.bfloat16)
    wb2 = jnp.asarray(_banded_conv2_weights(w2_oihw, W2, Lp2)).astype(jnp.bfloat16)
    g1l = jnp.asarray(np.tile(np.asarray(g1, np.float32), W1)[None, :])
    b1l = jnp.asarray(np.tile(np.asarray(be1, np.float32), W1)[None, :])
    g2l = jnp.asarray(np.tile(np.asarray(g2, np.float32), W2)[None, :])
    b2l = jnp.asarray(np.tile(np.asarray(be2, np.float32), W2)[None, :])
    return dict(wb1=wb1, g1=g1l, b1=b1l, wb2=wb2, g2=g2l, b2=b2l)


# ---------------------------------------------------------------------------
# Full forward: ONE pallas_call, no grid (everything fits VMEM trivially)
# ---------------------------------------------------------------------------
@jax.jit
def encoder_bn_forward(x_nchw, wb1, g1l, b1l, wb2, g2l, b2l):
    N, Cin1, H1, W1 = x_nchw.shape
    K1, Lp1, _ = wb1.shape
    K2, Lp2, _ = wb2.shape
    assert H1 == W1 and H1 % 4 == 0 and (H1 & (H1 - 1)) == 0, "square power-of-two image"
    H2, W2 = H1 // 2, W1 // 2
    Cout2 = wb2.shape[2] // W2
    Ho2, Wo2 = H2 // 2, W2 // 2

    kernel = functools.partial(_encoder_bn_kernel, eps=_EPS)
    vmem = pltpu.MemorySpace.VMEM
    return pl.pallas_call(
        kernel,
        out_shape=jax.ShapeDtypeStruct((N, Cout2 * Ho2 * Wo2), jnp.float32),
        in_specs=[pl.BlockSpec(memory_space=vmem)] * 7,
        out_specs=pl.BlockSpec(memory_space=vmem),
        scratch_shapes=[
            pltpu.VMEM((N, H1 + K1 - 1, Lp1), jnp.float32),   # layer-1 padded rows
            pltpu.VMEM((N, H2 + K2 - 1, Lp2), jnp.float32),   # layer-2 padded rows
        ],
    )(x_nchw.astype(jnp.float32), wb1, g1l, b1l, wb2, g2l, b2l)


# ---------------------------------------------------------------------------
# Pure-JAX reference (correctness sanity check)
# ---------------------------------------------------------------------------
def ref_forward(x_nchw, layers):
    y = x_nchw.astype(jnp.float32)
    for (w_oihw, b, g, be) in layers:
        p = w_oihw.shape[2] // 2
        y = lax.conv_general_dilated(
            y, w_oihw, (1, 1), [(p, p), (p, p)],
            dimension_numbers=('NCHW', 'OIHW', 'NCHW'))
        y = y + b[None, :, None, None]
        mean = y.mean(axis=(0, 2, 3), keepdims=True)
        var = y.var(axis=(0, 2, 3), keepdims=True)
        y = (y - mean) * lax.rsqrt(var + _EPS)
        y = y * g[None, :, None, None] + be[None, :, None, None]
        y = jnp.maximum(y, 0.0)
        y = lax.reduce_window(y, -jnp.inf, lax.max,
                              (1, 1, 3, 3), (1, 1, 2, 2),
                              [(0, 0), (0, 0), (1, 1), (1, 1)])
    return y.reshape(y.shape[0], -1)


def xavier_uniform(key, cout, cin, kh, kw):
    fan_in, fan_out = cin * kh * kw, cout * kh * kw
    bound = float(np.sqrt(6.0 / (fan_in + fan_out)))
    return jax.random.uniform(key, (cout, cin, kh, kw), jnp.float32, -bound, bound)


if __name__ == "__main__":
    # EncoderBN(input_nc=4, img_size=16), batch=2.
    input_nc, img_size, batch = 4, 16, 2

    key = jax.random.PRNGKey(0)
    k1, k2, kx = jax.random.split(key, 3)

    # conv1: (img_size, input_nc, 5, 5), conv2: (64, img_size, 3, 3); biases zero,
    # BatchNorm at default init (gamma=1, beta=0).
    w1 = xavier_uniform(k1, img_size, input_nc, 5, 5)
    b1 = jnp.zeros((img_size,), jnp.float32)
    g1 = jnp.ones((img_size,), jnp.float32)
    be1 = jnp.zeros((img_size,), jnp.float32)

    w2 = xavier_uniform(k2, 64, img_size, 3, 3)
    b2 = jnp.zeros((64,), jnp.float32)
    g2 = jnp.ones((64,), jnp.float32)
    be2 = jnp.zeros((64,), jnp.float32)

    prep = prepare_encoder_params(img_size, w1, b1, g1, be1, w2, b2, g2, be2)

    x = jax.random.normal(kx, (batch, input_nc, img_size, img_size), jnp.float32)

    out = encoder_bn_forward(x, prep["wb1"], prep["g1"], prep["b1"],
                             prep["wb2"], prep["g2"], prep["b2"])
    out = jax.block_until_ready(out)

    assert out.shape == (batch, 64 * (img_size // 4) * (img_size // 4)), out.shape
    ref = jax.block_until_ready(
        ref_forward(x, [(w1, b1, g1, be1), (w2, b2, g2, be2)]))
    np.testing.assert_allclose(np.asarray(out), np.asarray(ref), rtol=5e-2, atol=5e-2)

    print("KERNEL_OK")
</pallas_src>

<mosaic_0001>
module attributes {stable_mosaic.version = 11 : i64} {
  func.func @_encoder_bn_kernel(%arg0: memref<2x4x16x16xf32, #tpu.memory_space<vmem>>, %arg1: memref<5x128x256xbf16, #tpu.memory_space<vmem>>, %arg2: memref<1x256xf32, #tpu.memory_space<vmem>>, %arg3: memref<1x256xf32, #tpu.memory_space<vmem>>, %arg4: memref<3x256x512xbf16, #tpu.memory_space<vmem>>, %arg5: memref<1x512xf32, #tpu.memory_space<vmem>>, %arg6: memref<1x512xf32, #tpu.memory_space<vmem>>, %arg7: memref<2x1024xf32, #tpu.memory_space<vmem>>, %arg8: memref<2x20x128xf32, #tpu.memory_space<vmem>>, %arg9: memref<2x10x256xf32, #tpu.memory_space<vmem>>) attributes {dimension_semantics = [], scalar_prefetch = 0 : i64, scratch_operands = 2 : i64, tpu.core_type = #tpu.core_type<tc>} {
    %cst = arith.constant 0.000000e+00 : f32
    %0 = vector.broadcast %cst : f32 to vector<2x20x128xf32>
    %c0 = arith.constant 0 : index
    %c0_0 = arith.constant 0 : index
    %c0_1 = arith.constant 0 : index
    %1 = vector.load %arg8[%c0, %c0_0, %c0_1] : memref<2x20x128xf32, #tpu.memory_space<vmem>>, vector<2x20x128xf32>
    tpu.vector_store %arg8[%c0, %c0_0, %c0_1], %0 {strides = array<i32>} : memref<2x20x128xf32, #tpu.memory_space<vmem>>, vector<2x20x128xf32>,
    %c0_2 = arith.constant 0 : index
    %c0_3 = arith.constant 0 : index
    %c0_4 = arith.constant 0 : index
    %c0_5 = arith.constant 0 : index
    %2 = vector.load %arg0[%c0_2, %c0_3, %c0_4, %c0_5] : memref<2x4x16x16xf32, #tpu.memory_space<vmem>>, vector<2x1x16x16xf32>
    %3 = vector.shape_cast %2 : vector<2x1x16x16xf32> to vector<2x16x16xf32>
    %c0_6 = arith.constant 0 : index
    %c2 = arith.constant 2 : index
    %c2_7 = arith.constant 2 : index
    %4 = vector.load %arg8[%c0_6, %c2, %c2_7] : memref<2x20x128xf32, #tpu.memory_space<vmem>>, vector<2x16x16xf32>
    tpu.vector_store %arg8[%c0_6, %c2, %c2_7], %3 {strides = array<i32>} : memref<2x20x128xf32, #tpu.memory_space<vmem>>, vector<2x16x16xf32>,
    %c0_8 = arith.constant 0 : index
    %c1 = arith.constant 1 : index
    %c0_9 = arith.constant 0 : index
    %c0_10 = arith.constant 0 : index
    %5 = vector.load %arg0[%c0_8, %c1, %c0_9, %c0_10] : memref<2x4x16x16xf32, #tpu.memory_space<vmem>>, vector<2x1x16x16xf32>
    %6 = vector.shape_cast %5 : vector<2x1x16x16xf32> to vector<2x16x16xf32>
    %c0_11 = arith.constant 0 : index
    %c2_12 = arith.constant 2 : index
    %c22 = arith.constant 22 : index
    %7 = vector.load %arg8[%c0_11, %c2_12, %c22] : memref<2x20x128xf32, #tpu.memory_space<vmem>>, vector<2x16x16xf32>
    tpu.vector_store %arg8[%c0_11, %c2_12, %c22], %6 {strides = array<i32>} : memref<2x20x128xf32, #tpu.memory_space<vmem>>, vector<2x16x16xf32>,
    %c0_13 = arith.constant 0 : index
    %c2_14 = arith.constant 2 : index
    %c0_15 = arith.constant 0 : index
    %c0_16 = arith.constant 0 : index
    %8 = vector.load %arg0[%c0_13, %c2_14, %c0_15, %c0_16] : memref<2x4x16x16xf32, #tpu.memory_space<vmem>>, vector<2x1x16x16xf32>
    %9 = vector.shape_cast %8 : vector<2x1x16x16xf32> to vector<2x16x16xf32>
    %c0_17 = arith.constant 0 : index
    %c2_18 = arith.constant 2 : index
    %c42 = arith.constant 42 : index
    %10 = vector.load %arg8[%c0_17, %c2_18, %c42] : memref<2x20x128xf32, #tpu.memory_space<vmem>>, vector<2x16x16xf32>
    tpu.vector_store %arg8[%c0_17, %c2_18, %c42], %9 {strides = array<i32>} : memref<2x20x128xf32, #tpu.memory_space<vmem>>, vector<2x16x16xf32>,
    %c0_19 = arith.constant 0 : index
    %c3 = arith.constant 3 : index
    %c0_20 = arith.constant 0 : index
    %c0_21 = arith.constant 0 : index
    %11 = vector.load %arg0[%c0_19, %c3, %c0_20, %c0_21] : memref<2x4x16x16xf32, #tpu.memory_space<vmem>>, vector<2x1x16x16xf32>
    %12 = vector.shape_cast %11 : vector<2x1x16x16xf32> to vector<2x16x16xf32>
    %c0_22 = arith.constant 0 : index
    %c2_23 = arith.constant 2 : index
    %c62 = arith.constant 62 : index
    %13 = vector.load %arg8[%c0_22, %c2_23, %c62] : memref<2x20x128xf32, #tpu.memory_space<vmem>>, vector<2x16x16xf32>
    tpu.vector_store %arg8[%c0_22, %c2_23, %c62], %12 {strides = array<i32>} : memref<2x20x128xf32, #tpu.memory_space<vmem>>, vector<2x16x16xf32>,
    %c0_24 = arith.constant 0 : index
    %c0_25 = arith.constant 0 : index
    %c0_26 = arith.constant 0 : index
    %14 = vector.load %arg8[%c0_24, %c0_25, %c0_26] : memref<2x20x128xf32, #tpu.memory_space<vmem>>, vector<2x20x128xf32>
    %15 = arith.truncf %14 : vector<2x20x128xf32> to vector<2x20x128xbf16>
    %16 = vector.extract_strided_slice %15 {offsets = [0, 0, 0], sizes = [2, 16, 128], strides = [1, 1, 1]} : vector<2x20x128xbf16> to vector<2x16x128xbf16>
    %17 = vector.shape_cast %16 : vector<2x16x128xbf16> to vector<32x128xbf16>
    %c0_27 = arith.constant 0 : index
    %c0_28 = arith.constant 0 : index
    %c0_29 = arith.constant 0 : index
    %18 = vector.load %arg1[%c0_27, %c0_28, %c0_29] : memref<5x128x256xbf16, #tpu.memory_space<vmem>>, vector<1x128x256xbf16>
    %19 = vector.shape_cast %18 : vector<1x128x256xbf16> to vector<128x256xbf16>
    %cst_30 = arith.constant dense<0.000000e+00> : vector<32x256xf32>
    %20 = tpu.matmul %17, %19, %cst_30 {dimension_numbers = #tpu.dot_dimension_numbers<[1], [0], [0], [1], [0, 0, 1, 1], [], []>} : vector<32x128xbf16>, vector<128x256xbf16>, vector<32x256xf32> -> vector<32x256xf32>
    %21 = vector.extract_strided_slice %15 {offsets = [0, 1, 0], sizes = [2, 16, 128], strides = [1, 1, 1]} : vector<2x20x128xbf16> to vector<2x16x128xbf16>
    %22 = vector.shape_cast %21 : vector<2x16x128xbf16> to vector<32x128xbf16>
    %c1_31 = arith.constant 1 : index
    %c0_32 = arith.constant 0 : index
    %c0_33 = arith.constant 0 : index
    %23 = vector.load %arg1[%c1_31, %c0_32, %c0_33] : memref<5x128x256xbf16, #tpu.memory_space<vmem>>, vector<1x128x256xbf16>
    %24 = vector.shape_cast %23 : vector<1x128x256xbf16> to vector<128x256xbf16>
    %cst_34 = arith.constant dense<0.000000e+00> : vector<32x256xf32>
    %25 = tpu.matmul %22, %24, %cst_34 {dimension_numbers = #tpu.dot_dimension_numbers<[1], [0], [0], [1], [0, 0, 1, 1], [], []>} : vector<32x128xbf16>, vector<128x256xbf16>, vector<32x256xf32> -> vector<32x256xf32>
    %26 = arith.addf %20, %25 : vector<32x256xf32>
    %27 = vector.extract_strided_slice %15 {offsets = [0, 2, 0], sizes = [2, 16, 128], strides = [1, 1, 1]} : vector<2x20x128xbf16> to vector<2x16x128xbf16>
    %28 = vector.shape_cast %27 : vector<2x16x128xbf16> to vector<32x128xbf16>
    %c2_35 = arith.constant 2 : index
    %c0_36 = arith.constant 0 : index
    %c0_37 = arith.constant 0 : index
    %29 = vector.load %arg1[%c2_35, %c0_36, %c0_37] : memref<5x128x256xbf16, #tpu.memory_space<vmem>>, vector<1x128x256xbf16>
    %30 = vector.shape_cast %29 : vector<1x128x256xbf16> to vector<128x256xbf16>
    %cst_38 = arith.constant dense<0.000000e+00> : vector<32x256xf32>
    %31 = tpu.matmul %28, %30, %cst_38 {dimension_numbers = #tpu.dot_dimension_numbers<[1], [0], [0], [1], [0, 0, 1, 1], [], []>} : vector<32x128xbf16>, vector<128x256xbf16>, vector<32x256xf32> -> vector<32x256xf32>
    %32 = arith.addf %26, %31 : vector<32x256xf32>
    %33 = vector.extract_strided_slice %15 {offsets = [0, 3, 0], sizes = [2, 16, 128], strides = [1, 1, 1]} : vector<2x20x128xbf16> to vector<2x16x128xbf16>
    %34 = vector.shape_cast %33 : vector<2x16x128xbf16> to vector<32x128xbf16>
    %c3_39 = arith.constant 3 : index
    %c0_40 = arith.constant 0 : index
    %c0_41 = arith.constant 0 : index
    %35 = vector.load %arg1[%c3_39, %c0_40, %c0_41] : memref<5x128x256xbf16, #tpu.memory_space<vmem>>, vector<1x128x256xbf16>
    %36 = vector.shape_cast %35 : vector<1x128x256xbf16> to vector<128x256xbf16>
    %cst_42 = arith.constant dense<0.000000e+00> : vector<32x256xf32>
    %37 = tpu.matmul %34, %36, %cst_42 {dimension_numbers = #tpu.dot_dimension_numbers<[1], [0], [0], [1], [0, 0, 1, 1], [], []>} : vector<32x128xbf16>, vector<128x256xbf16>, vector<32x256xf32> -> vector<32x256xf32>
    %38 = arith.addf %32, %37 : vector<32x256xf32>
    %39 = vector.extract_strided_slice %15 {offsets = [0, 4, 0], sizes = [2, 16, 128], strides = [1, 1, 1]} : vector<2x20x128xbf16> to vector<2x16x128xbf16>
    %40 = vector.shape_cast %39 : vector<2x16x128xbf16> to vector<32x128xbf16>
    %c4 = arith.constant 4 : index
    %c0_43 = arith.constant 0 : index
    %c0_44 = arith.constant 0 : index
    %41 = vector.load %arg1[%c4, %c0_43, %c0_44] : memref<5x128x256xbf16, #tpu.memory_space<vmem>>, vector<1x128x256xbf16>
    %42 = vector.shape_cast %41 : vector<1x128x256xbf16> to vector<128x256xbf16>
    %cst_45 = arith.constant dense<0.000000e+00> : vector<32x256xf32>
    %43 = tpu.matmul %40, %42, %cst_45 {dimension_numbers = #tpu.dot_dimension_numbers<[1], [0], [0], [1], [0, 0, 1, 1], [], []>} : vector<32x128xbf16>, vector<128x256xbf16>, vector<32x256xf32> -> vector<32x256xf32>
    %44 = arith.addf %38, %43 : vector<32x256xf32>
    %c0_46 = arith.constant 0 : index
    %c0_47 = arith.constant 0 : index
    %45 = vector.load %arg2[%c0_46, %c0_47] : memref<1x256xf32, #tpu.memory_space<vmem>>, vector<1x256xf32>
    %c0_48 = arith.constant 0 : index
    %c0_49 = arith.constant 0 : index
    %46 = vector.load %arg3[%c0_48, %c0_49] : memref<1x256xf32, #tpu.memory_space<vmem>>, vector<1x256xf32>
    %cst_50 = arith.constant dense<0.000000e+00> : vector<256xf32>
    %47 = vector.multi_reduction <add>, %44, %cst_50 [0] : vector<32x256xf32> to vector<256xf32>
    %48 = vector.shape_cast %47 : vector<256xf32> to vector<1x256xf32>
    %49 = vector.extract_strided_slice %48 {offsets = [0, 0], sizes = [1, 128], strides = [1, 1]} : vector<1x256xf32> to vector<1x128xf32>
    %50 = vector.extract_strided_slice %48 {offsets = [0, 128], sizes = [1, 128], strides = [1, 1]} : vector<1x256xf32> to vector<1x128xf32>
    %51 = arith.addf %49, %50 : vector<1x128xf32>
    %52 = vector.extract_strided_slice %51 {offsets = [0, 0], sizes = [1, 64], strides = [1, 1]} : vector<1x128xf32> to vector<1x64xf32>
    %53 = vector.extract_strided_slice %51 {offsets = [0, 64], sizes = [1, 64], strides = [1, 1]} : vector<1x128xf32> to vector<1x64xf32>
    %54 = arith.addf %52, %53 : vector<1x64xf32>
    %55 = vector.extract_strided_slice %54 {offsets = [0, 0], sizes = [1, 32], strides = [1, 1]} : vector<1x64xf32> to vector<1x32xf32>
    %56 = vector.extract_strided_slice %54 {offsets = [0, 32], sizes = [1, 32], strides = [1, 1]} : vector<1x64xf32> to vector<1x32xf32>
    %57 = arith.addf %55, %56 : vector<1x32xf32>
    %58 = vector.extract_strided_slice %57 {offsets = [0, 0], sizes = [1, 16], strides = [1, 1]} : vector<1x32xf32> to vector<1x16xf32>
    %59 = vector.extract_strided_slice %57 {offsets = [0, 16], sizes = [1, 16], strides = [1, 1]} : vector<1x32xf32> to vector<1x16xf32>
    %60 = arith.addf %58, %59 : vector<1x16xf32>
    %cst_51 = arith.constant 0.001953125 : f32
    %61 = vector.broadcast %cst_51 : f32 to vector<1x16xf32>
    %62 = arith.mulf %60, %61 : vector<1x16xf32>
    %63 = tpu.concatenate %62, %62 in 1 : vector<1x16xf32>, vector<1x16xf32> -> vector<1x32xf32>
    %64 = tpu.concatenate %63, %63 in 1 : vector<1x32xf32>, vector<1x32xf32> -> vector<1x64xf32>
    %65 = tpu.concatenate %64, %64 in 1 : vector<1x64xf32>, vector<1x64xf32> -> vector<1x128xf32>
    %66 = tpu.concatenate %65, %65 in 1 : vector<1x128xf32>, vector<1x128xf32> -> vector<1x256xf32>
    %67 = vector.broadcast %66 : vector<1x256xf32> to vector<32x256xf32>
    %68 = arith.subf %44, %67 : vector<32x256xf32>
    %69 = arith.mulf %68, %68 : vector<32x256xf32>
    %cst_52 = arith.constant dense<0.000000e+00> : vector<256xf32>
    %70 = vector.multi_reduction <add>, %69, %cst_52 [0] : vector<32x256xf32> to vector<256xf32>
    %71 = vector.shape_cast %70 : vector<256xf32> to vector<1x256xf32>
    %72 = vector.extract_strided_slice %71 {offsets = [0, 0], sizes = [1, 128], strides = [1, 1]} : vector<1x256xf32> to vector<1x128xf32>
    %73 = vector.extract_strided_slice %71 {offsets = [0, 128], sizes = [1, 128], strides = [1, 1]} : vector<1x256xf32> to vector<1x128xf32>
    %74 = arith.addf %72, %73 : vector<1x128xf32>
    %75 = vector.extract_strided_slice %74 {offsets = [0, 0], sizes = [1, 64], strides = [1, 1]} : vector<1x128xf32> to vector<1x64xf32>
    %76 = vector.extract_strided_slice %74 {offsets = [0, 64], sizes = [1, 64], strides = [1, 1]} : vector<1x128xf32> to vector<1x64xf32>
    %77 = arith.addf %75, %76 : vector<1x64xf32>
    %78 = vector.extract_strided_slice %77 {offsets = [0, 0], sizes = [1, 32], strides = [1, 1]} : vector<1x64xf32> to vector<1x32xf32>
    %79 = vector.extract_strided_slice %77 {offsets = [0, 32], sizes = [1, 32], strides = [1, 1]} : vector<1x64xf32> to vector<1x32xf32>
    %80 = arith.addf %78, %79 : vector<1x32xf32>
    %81 = vector.extract_strided_slice %80 {offsets = [0, 0], sizes = [1, 16], strides = [1, 1]} : vector<1x32xf32> to vector<1x16xf32>
    %82 = vector.extract_strided_slice %80 {offsets = [0, 16], sizes = [1, 16], strides = [1, 1]} : vector<1x32xf32> to vector<1x16xf32>
    %83 = arith.addf %81, %82 : vector<1x16xf32>
    %cst_53 = arith.constant 0.001953125 : f32
    %84 = vector.broadcast %cst_53 : f32 to vector<1x16xf32>
    %85 = arith.mulf %83, %84 : vector<1x16xf32>
    %cst_54 = arith.constant 9.99999974E-6 : f32
    %86 = vector.broadcast %cst_54 : f32 to vector<1x16xf32>
    %87 = arith.addf %85, %86 : vector<1x16xf32>
    %88 = math.rsqrt %87 : vector<1x16xf32>
    %89 = tpu.concatenate %88, %88 in 1 : vector<1x16xf32>, vector<1x16xf32> -> vector<1x32xf32>
    %90 = tpu.concatenate %89, %89 in 1 : vector<1x32xf32>, vector<1x32xf32> -> vector<1x64xf32>
    %91 = tpu.concatenate %90, %90 in 1 : vector<1x64xf32>, vector<1x64xf32> -> vector<1x128xf32>
    %92 = tpu.concatenate %91, %91 in 1 : vector<1x128xf32>, vector<1x128xf32> -> vector<1x256xf32>
    %93 = arith.mulf %45, %92 : vector<1x256xf32>
    %94 = vector.broadcast %93 : vector<1x256xf32> to vector<32x256xf32>
    %95 = arith.mulf %68, %94 : vector<32x256xf32>
    %96 = vector.broadcast %46 : vector<1x256xf32> to vector<32x256xf32>
    %97 = arith.addf %95, %96 : vector<32x256xf32>
    %cst_55 = arith.constant 0.000000e+00 : f32
    %98 = vector.broadcast %cst_55 : f32 to vector<32x256xf32>
    %99 = arith.maximumf %97, %98 : vector<32x256xf32>
    %100 = vector.shape_cast %99 : vector<32x256xf32> to vector<2x8x2x256xf32>
    %101 = vector.extract_strided_slice %100 {offsets = [0, 0, 0, 0], sizes = [2, 8, 1, 256], strides = [1, 1, 1, 1]} : vector<2x8x2x256xf32> to vector<2x8x1x256xf32>
    %102 = vector.shape_cast %101 : vector<2x8x1x256xf32> to vector<2x8x256xf32>
    %103 = vector.extract_strided_slice %100 {offsets = [0, 0, 1, 0], sizes = [2, 8, 1, 256], strides = [1, 1, 1, 1]} : vector<2x8x2x256xf32> to vector<2x8x1x256xf32>
    %104 = vector.shape_cast %103 : vector<2x8x1x256xf32> to vector<2x8x256xf32>
    %cst_56 = arith.constant 0.000000e+00 : f32
    %105 = vector.broadcast %cst_56 : f32 to vector<2x1x256xf32>
    %106 = vector.extract_strided_slice %104 {offsets = [0, 0, 0], sizes = [2, 7, 256], strides = [1, 1, 1]} : vector<2x8x256xf32> to vector<2x7x256xf32>
    %107 = tpu.concatenate %105, %106 in 1 : vector<2x1x256xf32>, vector<2x7x256xf32> -> vector<2x8x256xf32>
    %108 = arith.maximumf %102, %104 : vector<2x8x256xf32>
    %109 = arith.maximumf %108, %107 : vector<2x8x256xf32>
    %110 = vector.shape_cast %109 : vector<2x8x256xf32> to vector<2x8x8x32xf32>
    %111 = vector.extract_strided_slice %110 {offsets = [0, 0, 0, 0], sizes = [2, 8, 8, 16], strides = [1, 1, 1, 1]} : vector<2x8x8x32xf32> to vector<2x8x8x16xf32>
    %112 = vector.extract_strided_slice %110 {offsets = [0, 0, 0, 16], sizes = [2, 8, 8, 16], strides = [1, 1, 1, 1]} : vector<2x8x8x32xf32> to vector<2x8x8x16xf32>
    %cst_57 = arith.constant 0.000000e+00 : f32
    %113 = vector.broadcast %cst_57 : f32 to vector<2x8x1x16xf32>
    %114 = vector.extract_strided_slice %112 {offsets = [0, 0, 0, 0], sizes = [2, 8, 7, 16], strides = [1, 1, 1, 1]} : vector<2x8x8x16xf32> to vector<2x8x7x16xf32>
    %115 = tpu.concatenate %113, %114 in 2 : vector<2x8x1x16xf32>, vector<2x8x7x16xf32> -> vector<2x8x8x16xf32>
    %116 = arith.maximumf %111, %112 : vector<2x8x8x16xf32>
    %117 = arith.maximumf %116, %115 : vector<2x8x8x16xf32>
    %cst_58 = arith.constant 0.000000e+00 : f32
    %118 = vector.broadcast %cst_58 : f32 to vector<2x10x256xf32>
    %c0_59 = arith.constant 0 : index
    %c0_60 = arith.constant 0 : index
    %c0_61 = arith.constant 0 : index
    %119 = vector.load %arg9[%c0_59, %c0_60, %c0_61] : memref<2x10x256xf32, #tpu.memory_space<vmem>>, vector<2x10x256xf32>
    tpu.vector_store %arg9[%c0_59, %c0_60, %c0_61], %118 {strides = array<i32>} : memref<2x10x256xf32, #tpu.memory_space<vmem>>, vector<2x10x256xf32>,
    %120 = vector.shape_cast %117 : vector<2x8x8x16xf32> to vector<2x8x128xf32>
    %c0_62 = arith.constant 0 : index
    %c1_63 = arith.constant 1 : index
    %c16 = arith.constant 16 : index
    %121 = vector.load %arg9[%c0_62, %c1_63, %c16] : memref<2x10x256xf32, #tpu.memory_space<vmem>>, vector<2x8x128xf32>
    tpu.vector_store %arg9[%c0_62, %c1_63, %c16], %120 {strides = array<i32>} : memref<2x10x256xf32, #tpu.memory_space<vmem>>, vector<2x8x128xf32>,
    %c0_64 = arith.constant 0 : index
    %c0_65 = arith.constant 0 : index
    %c0_66 = arith.constant 0 : index
    %122 = vector.load %arg9[%c0_64, %c0_65, %c0_66] : memref<2x10x256xf32, #tpu.memory_space<vmem>>, vector<2x10x256xf32>
    %123 = arith.truncf %122 : vector<2x10x256xf32> to vector<2x10x256xbf16>
    %124 = vector.extract_strided_slice %123 {offsets = [0, 0, 0], sizes = [2, 8, 256], strides = [1, 1, 1]} : vector<2x10x256xbf16> to vector<2x8x256xbf16>
    %125 = vector.shape_cast %124 : vector<2x8x256xbf16> to vector<16x256xbf16>
    %c0_67 = arith.constant 0 : index
    %c0_68 = arith.constant 0 : index
    %c0_69 = arith.constant 0 : index
    %126 = vector.load %arg4[%c0_67, %c0_68, %c0_69] : memref<3x256x512xbf16, #tpu.memory_space<vmem>>, vector<1x256x512xbf16>
    %127 = vector.shape_cast %126 : vector<1x256x512xbf16> to vector<256x512xbf16>
    %cst_70 = arith.constant dense<0.000000e+00> : vector<16x512xf32>
    %128 = tpu.matmul %125, %127, %cst_70 {dimension_numbers = #tpu.dot_dimension_numbers<[1], [0], [0], [1], [0, 0, 1, 1], [], []>} : vector<16x256xbf16>, vector<256x512xbf16>, vector<16x512xf32> -> vector<16x512xf32>
    %129 = vector.extract_strided_slice %123 {offsets = [0, 1, 0], sizes = [2, 8, 256], strides = [1, 1, 1]} : vector<2x10x256xbf16> to vector<2x8x256xbf16>
    %130 = vector.shape_cast %129 : vector<2x8x256xbf16> to vector<16x256xbf16>
    %c1_71 = arith.constant 1 : index
    %c0_72 = arith.constant 0 : index
    %c0_73 = arith.constant 0 : index
    %131 = vector.load %arg4[%c1_71, %c0_72, %c0_73] : memref<3x256x512xbf16, #tpu.memory_space<vmem>>, vector<1x256x512xbf16>
    %132 = vector.shape_cast %131 : vector<1x256x512xbf16> to vector<256x512xbf16>
    %cst_74 = arith.constant dense<0.000000e+00> : vector<16x512xf32>
    %133 = tpu.matmul %130, %132, %cst_74 {dimension_numbers = #tpu.dot_dimension_numbers<[1], [0], [0], [1], [0, 0, 1, 1], [], []>} : vector<16x256xbf16>, vector<256x512xbf16>, vector<16x512xf32> -> vector<16x512xf32>
    %134 = arith.addf %128, %133 : vector<16x512xf32>
    %135 = vector.extract_strided_slice %123 {offsets = [0, 2, 0], sizes = [2, 8, 256], strides = [1, 1, 1]} : vector<2x10x256xbf16> to vector<2x8x256xbf16>
    %136 = vector.shape_cast %135 : vector<2x8x256xbf16> to vector<16x256xbf16>
    %c2_75 = arith.constant 2 : index
    %c0_76 = arith.constant 0 : index
    %c0_77 = arith.constant 0 : index
    %137 = vector.load %arg4[%c2_75, %c0_76, %c0_77] : memref<3x256x512xbf16, #tpu.memory_space<vmem>>, vector<1x256x512xbf16>
    %138 = vector.shape_cast %137 : vector<1x256x512xbf16> to vector<256x512xbf16>
    %cst_78 = arith.constant dense<0.000000e+00> : vector<16x512xf32>
    %139 = tpu.matmul %136, %138, %cst_78 {dimension_numbers = #tpu.dot_dimension_numbers<[1], [0], [0], [1], [0, 0, 1, 1], [], []>} : vector<16x256xbf16>, vector<256x512xbf16>, vector<16x512xf32> -> vector<16x512xf32>
    %140 = arith.addf %134, %139 : vector<16x512xf32>
    %c0_79 = arith.constant 0 : index
    %c0_80 = arith.constant 0 : index
    %141 = vector.load %arg5[%c0_79, %c0_80] : memref<1x512xf32, #tpu.memory_space<vmem>>, vector<1x512xf32>
    %c0_81 = arith.constant 0 : index
    %c0_82 = arith.constant 0 : index
    %142 = vector.load %arg6[%c0_81, %c0_82] : memref<1x512xf32, #tpu.memory_space<vmem>>, vector<1x512xf32>
    %cst_83 = arith.constant dense<0.000000e+00> : vector<512xf32>
    %143 = vector.multi_reduction <add>, %140, %cst_83 [0] : vector<16x512xf32> to vector<512xf32>
    %144 = vector.shape_cast %143 : vector<512xf32> to vector<1x512xf32>
    %145 = vector.extract_strided_slice %144 {offsets = [0, 0], sizes = [1, 256], strides = [1, 1]} : vector<1x512xf32> to vector<1x256xf32>
    %146 = vector.extract_strided_slice %144 {offsets = [0, 256], sizes = [1, 256], strides = [1, 1]} : vector<1x512xf32> to vector<1x256xf32>
    %147 = arith.addf %145, %146 : vector<1x256xf32>
    %148 = vector.extract_strided_slice %147 {offsets = [0, 0], sizes = [1, 128], strides = [1, 1]} : vector<1x256xf32> to vector<1x128xf32>
    %149 = vector.extract_strided_slice %147 {offsets = [0, 128], sizes = [1, 128], strides = [1, 1]} : vector<1x256xf32> to vector<1x128xf32>
    %150 = arith.addf %148, %149 : vector<1x128xf32>
    %151 = vector.extract_strided_slice %150 {offsets = [0, 0], sizes = [1, 64], strides = [1, 1]} : vector<1x128xf32> to vector<1x64xf32>
    %152 = vector.extract_strided_slice %150 {offsets = [0, 64], sizes = [1, 64], strides = [1, 1]} : vector<1x128xf32> to vector<1x64xf32>
    %153 = arith.addf %151, %152 : vector<1x64xf32>
    %cst_84 = arith.constant 7.812500e-03 : f32
    %154 = vector.broadcast %cst_84 : f32 to vector<1x64xf32>
    %155 = arith.mulf %153, %154 : vector<1x64xf32>
    %156 = tpu.concatenate %155, %155 in 1 : vector<1x64xf32>, vector<1x64xf32> -> vector<1x128xf32>
    %157 = tpu.concatenate %156, %156 in 1 : vector<1x128xf32>, vector<1x128xf32> -> vector<1x256xf32>
    %158 = tpu.concatenate %157, %157 in 1 : vector<1x256xf32>, vector<1x256xf32> -> vector<1x512xf32>
    %159 = vector.broadcast %158 : vector<1x512xf32> to vector<16x512xf32>
    %160 = arith.subf %140, %159 : vector<16x512xf32>
    %161 = arith.mulf %160, %160 : vector<16x512xf32>
    %cst_85 = arith.constant dense<0.000000e+00> : vector<512xf32>
    %162 = vector.multi_reduction <add>, %161, %cst_85 [0] : vector<16x512xf32> to vector<512xf32>
    %163 = vector.shape_cast %162 : vector<512xf32> to vector<1x512xf32>
    %164 = vector.extract_strided_slice %163 {offsets = [0, 0], sizes = [1, 256], strides = [1, 1]} : vector<1x512xf32> to vector<1x256xf32>
    %165 = vector.extract_strided_slice %163 {offsets = [0, 256], sizes = [1, 256], strides = [1, 1]} : vector<1x512xf32> to vector<1x256xf32>
    %166 = arith.addf %164, %165 : vector<1x256xf32>
    %167 = vector.extract_strided_slice %166 {offsets = [0, 0], sizes = [1, 128], strides = [1, 1]} : vector<1x256xf32> to vector<1x128xf32>
    %168 = vector.extract_strided_slice %166 {offsets = [0, 128], sizes = [1, 128], strides = [1, 1]} : vector<1x256xf32> to vector<1x128xf32>
    %169 = arith.addf %167, %168 : vector<1x128xf32>
    %170 = vector.extract_strided_slice %169 {offsets = [0, 0], sizes = [1, 64], strides = [1, 1]} : vector<1x128xf32> to vector<1x64xf32>
    %171 = vector.extract_strided_slice %169 {offsets = [0, 64], sizes = [1, 64], strides = [1, 1]} : vector<1x128xf32> to vector<1x64xf32>
    %172 = arith.addf %170, %171 : vector<1x64xf32>
    %cst_86 = arith.constant 7.812500e-03 : f32
    %173 = vector.broadcast %cst_86 : f32 to vector<1x64xf32>
    %174 = arith.mulf %172, %173 : vector<1x64xf32>
    %cst_87 = arith.constant 9.99999974E-6 : f32
    %175 = vector.broadcast %cst_87 : f32 to vector<1x64xf32>
    %176 = arith.addf %174, %175 : vector<1x64xf32>
    %177 = math.rsqrt %176 : vector<1x64xf32>
    %178 = tpu.concatenate %177, %177 in 1 : vector<1x64xf32>, vector<1x64xf32> -> vector<1x128xf32>
    %179 = tpu.concatenate %178, %178 in 1 : vector<1x128xf32>, vector<1x128xf32> -> vector<1x256xf32>
    %180 = tpu.concatenate %179, %179 in 1 : vector<1x256xf32>, vector<1x256xf32> -> vector<1x512xf32>
    %181 = arith.mulf %141, %180 : vector<1x512xf32>
    %182 = vector.broadcast %181 : vector<1x512xf32> to vector<16x512xf32>
    %183 = arith.mulf %160, %182 : vector<16x512xf32>
    %184 = vector.broadcast %142 : vector<1x512xf32> to vector<16x512xf32>
    %185 = arith.addf %183, %184 : vector<16x512xf32>
    %cst_88 = arith.constant 0.000000e+00 : f32
    %186 = vector.broadcast %cst_88 : f32 to vector<16x512xf32>
    %187 = arith.maximumf %185, %186 : vector<16x512xf32>
    %188 = vector.shape_cast %187 : vector<16x512xf32> to vector<2x4x2x512xf32>
    %189 = vector.extract_strided_slice %188 {offsets = [0, 0, 0, 0], sizes = [2, 4, 1, 512], strides = [1, 1, 1, 1]} : vector<2x4x2x512xf32> to vector<2x4x1x512xf32>
    %190 = vector.shape_cast %189 : vector<2x4x1x512xf32> to vector<2x4x512xf32>
    %191 = vector.extract_strided_slice %188 {offsets = [0, 0, 1, 0], sizes = [2, 4, 1, 512], strides = [1, 1, 1, 1]} : vector<2x4x2x512xf32> to vector<2x4x1x512xf32>
    %192 = vector.shape_cast %191 : vector<2x4x1x512xf32> to vector<2x4x512xf32>
    %cst_89 = arith.constant 0.000000e+00 : f32
    %193 = vector.broadcast %cst_89 : f32 to vector<2x1x512xf32>
    %194 = vector.extract_strided_slice %192 {offsets = [0, 0, 0], sizes = [2, 3, 512], strides = [1, 1, 1]} : vector<2x4x512xf32> to vector<2x3x512xf32>
    %195 = tpu.concatenate %193, %194 in 1 : vector<2x1x512xf32>, vector<2x3x512xf32> -> vector<2x4x512xf32>
    %196 = arith.maximumf %190, %192 : vector<2x4x512xf32>
    %197 = arith.maximumf %196, %195 : vector<2x4x512xf32>
    %198 = vector.shape_cast %197 : vector<2x4x512xf32> to vector<2x4x4x128xf32>
    %199 = vector.extract_strided_slice %198 {offsets = [0, 0, 0, 0], sizes = [2, 4, 4, 64], strides = [1, 1, 1, 1]} : vector<2x4x4x128xf32> to vector<2x4x4x64xf32>
    %200 = vector.extract_strided_slice %198 {offsets = [0, 0, 0, 64], sizes = [2, 4, 4, 64], strides = [1, 1, 1, 1]} : vector<2x4x4x128xf32> to vector<2x4x4x64xf32>
    %cst_90 = arith.constant 0.000000e+00 : f32
    %201 = vector.broadcast %cst_90 : f32 to vector<2x4x1x64xf32>
    %202 = vector.extract_strided_slice %200 {offsets = [0, 0, 0, 0], sizes = [2, 4, 3, 64], strides = [1, 1, 1, 1]} : vector<2x4x4x64xf32> to vector<2x4x3x64xf32>
    %203 = tpu.concatenate %201, %202 in 2 : vector<2x4x1x64xf32>, vector<2x4x3x64xf32> -> vector<2x4x4x64xf32>
    %204 = arith.maximumf %199, %200 : vector<2x4x4x64xf32>
    %205 = arith.maximumf %204, %203 : vector<2x4x4x64xf32>
    %206 = vector.shape_cast %205 : vector<2x4x4x64xf32> to vector<2x16x64xf32>
    %207 = tpu.transpose %206, [0, 2, 1] : vector<2x16x64xf32> -> vector<2x64x16xf32>
    %208 = vector.shape_cast %207 : vector<2x64x16xf32> to vector<2x1024xf32>
    %c0_91 = arith.constant 0 : index
    %c0_92 = arith.constant 0 : index
    %209 = vector.load %arg7[%c0_91, %c0_92] : memref<2x1024xf32, #tpu.memory_space<vmem>>, vector<2x1024xf32>
    tpu.vector_store %arg7[%c0_91, %c0_92], %208 {strides = array<i32>} : memref<2x1024xf32, #tpu.memory_space<vmem>>, vector<2x1024xf32>,
    return
  }
}

</mosaic_0001>

<llo_original>
// kernel: encoder_bn_forward.1
$region0: #{encoder_bn_forward.1}
  #allocation0 [shape = 'u32[]', space=smem, size = 0x4, offset = 0x4, fixed_abs, tag = 'smem constant byte address 0x4 - core index']
  #allocation1 [shape = 'u32[144,128]{1,0:T(1,128)}', space=vmem, size = 0x12000, scoped, tag = 'internal scratch']
  #allocation2 [shape = 'f32[2,20,128]{2,1,0:T(8,128)}', space=vmem, size = 0x6000, scoped, tag = 'scratch operand']
  #allocation3 [shape = 'f32[2,10,256]{2,1,0:T(8,128)}', space=vmem, size = 0x8000, scoped, tag = 'scratch operand']
  %s0 = inlined_call_operand.hbm [shape: f32[2,4,16,16], index: 0, kind: input, shape index: {}]
  %s1 = inlined_call_operand.hbm [shape: bf16[5,128,256], index: 1, kind: input, shape index: {}]
  %s2 = inlined_call_operand.vmem [shape: f32[1,256], index: 2, kind: input, shape index: {}]
  %s3 = inlined_call_operand.hbm [shape: f32[1,256], index: 3, kind: input, shape index: {}]
  %s4 = inlined_call_operand.hbm [shape: bf16[3,256,512], index: 4, kind: input, shape index: {}]
  %s5 = inlined_call_operand.vmem [shape: f32[1,512], index: 5, kind: input, shape index: {}]
  %s6 = inlined_call_operand.vmem [shape: f32[1,512], index: 6, kind: input, shape index: {}]
  %s7 = inlined_call_operand.hbm [shape: f32[2,1024], index: 7, kind: output, shape index: {}]
  %s8 = sld [smem:[#allocation0]]
  $region54: #{encoder_bn_forward.1} parent=0
    _
  %s10 = ssub.s32 1, %s8
  %s11 = scalar_select 0, %s10, %s8
  $region1: #{encoder_bn_forward.1} parent=0
    #allocation4 [shape = 'u8[65536]{0}', space=vmem, size = 0x10000, scoped, tag = 'input window, operand 0, single buffered']
    #allocation5 [shape = 's32[1]{0}', space=sflag, size = 0x4, scoped, tag = 'scoped memory for encoder_bn_forward.1']
    #allocation6 [shape = 's32[1]{0}', space=sflag, size = 0x4, scoped, tag = 'scoped memory for encoder_bn_forward.1']
    #allocation7 [shape = 'u8[327680]{0}', space=vmem, size = 0x50000, scoped, tag = 'input window, operand 1, single buffered']
    #allocation8 [shape = 's32[1]{0}', space=sflag, size = 0x4, scoped, tag = 'scoped memory for encoder_bn_forward.1']
    #allocation9 [shape = 'u8[1024]{0}', space=vmem, size = 0x400, scoped, tag = 'input window, operand 3, single buffered']
    #allocation10 [shape = 'u8[786432]{0}', space=vmem, size = 0xc0000, scoped, tag = 'input window, operand 4, single buffered']
    #allocation11 [shape = 's32[1]{0}', space=sflag, size = 0x4, scoped, tag = 'scoped memory for encoder_bn_forward.1']
    #allocation12 [shape = 'u8[8192]{0}', space=vmem, size = 0x2000, scoped, tag = 'output window, operand 0, single buffered']
    %12 = vsyncpa [#allocation5], 0
    %13 = vsyncpa [#allocation8], 0
    %14 = vsyncpa [#allocation11], 0
    %15 = vsyncpa [#allocation6], 0
    // Predicated region
    $region2: #{encoder_bn_forward.1} parent=1 // pred_check
      _
    $region3: #{encoder_bn_forward.1} parent=1 // pred_check_branch
      %17 = sbr.rel (0) target = $region5
    $region4: #{encoder_bn_forward.1} parent=1 // pred_region
      %s19 = ssub.s32 2048, 2048
      %20 = vsyncadd [#allocation5], %s19
      %s21 = sshll.u32 [#allocation4], 4
      %s22 = int_to_ptr.vmem [resolvable:$true] %s21
      %27 = dma.hbm_to_vmem [thread:$0]  %s0, 2048, %s22, [#allocation5], 128, 128, 8
    $region5: #{encoder_bn_forward.1} parent=1 // pred_fallthru
      _
    // Predicated region
    $region6: #{encoder_bn_forward.1} parent=1 // pred_check
      _
    $region7: #{encoder_bn_forward.1} parent=1 // pred_check_branch
      %29 = sbr.rel (0) target = $region9
    $region8: #{encoder_bn_forward.1} parent=1 // pred_region
      %s31 = ssub.s32 10240, 10240
      %32 = vsyncadd [#allocation8], %s31
      %s33 = sshll.u32 [#allocation7], 4
      %s34 = int_to_ptr.vmem [resolvable:$true] %s33
      %39 = dma.hbm_to_vmem [thread:$0]  %s1, 10240, %s34, [#allocation8], 128, 128, 8
    $region9: #{encoder_bn_forward.1} parent=1 // pred_fallthru
      _
    // Predicated region
    $region10: #{encoder_bn_forward.1} parent=1 // pred_check
      _
    $region11: #{encoder_bn_forward.1} parent=1 // pred_check_branch
      %41 = sbr.rel (0) target = $region13
    $region12: #{encoder_bn_forward.1} parent=1 // pred_region
      _
    $region13: #{encoder_bn_forward.1} parent=1 // pred_fallthru
      _
    // Predicated region
    $region14: #{encoder_bn_forward.1} parent=1 // pred_check
      _
    $region15: #{encoder_bn_forward.1} parent=1 // pred_check_branch
      %43 = sbr.rel (0) target = $region17
    $region16: #{encoder_bn_forward.1} parent=1 // pred_region
      %s45 = ssub.s32 32, 32
      %46 = vsyncadd [#allocation8], %s45
      %s48 = sshll.u32 [#allocation9], 4
      %s49 = int_to_ptr.vmem [resolvable:$true] %s48
      %51 = dma.hbm_to_vmem [thread:$0]  %s3, 32, %s49, [#allocation8]
    $region17: #{encoder_bn_forward.1} parent=1 // pred_fallthru
      _
    // Predicated region
    $region18: #{encoder_bn_forward.1} parent=1 // pred_check
      _
    $region19: #{encoder_bn_forward.1} parent=1 // pred_check_branch
      %53 = sbr.rel (0) target = $region21
    $region20: #{encoder_bn_forward.1} parent=1 // pred_region
      %s55 = ssub.s32 24576, 24576
      %56 = vsyncadd [#allocation11], %s55
      %s57 = sshll.u32 [#allocation10], 4
      %s58 = int_to_ptr.vmem [resolvable:$true] %s57
      %63 = dma.hbm_to_vmem [thread:$0]  %s4, 24576, %s58, [#allocation11], 256, 256, 16
    $region21: #{encoder_bn_forward.1} parent=1 // pred_fallthru
      _
    // Predicated region
    $region22: #{encoder_bn_forward.1} parent=1 // pred_check
      _
    $region23: #{encoder_bn_forward.1} parent=1 // pred_check_branch
      %65 = sbr.rel (0) target = $region25
    $region24: #{encoder_bn_forward.1} parent=1 // pred_region
      _
    $region25: #{encoder_bn_forward.1} parent=1 // pred_fallthru
      _
    // Predicated region
    $region26: #{encoder_bn_forward.1} parent=1 // pred_check
      _
    $region27: #{encoder_bn_forward.1} parent=1 // pred_check_branch
      %67 = sbr.rel (0) target = $region29
    $region28: #{encoder_bn_forward.1} parent=1 // pred_region
      _
    $region29: #{encoder_bn_forward.1} parent=1 // pred_fallthru
      _
    // Predicated region
    $region30: #{encoder_bn_forward.1} parent=1 // pred_check
      _
    $region31: #{encoder_bn_forward.1} parent=1 // pred_check_branch
      %69 = sbr.rel (0) target = $region33
    $region32: #{encoder_bn_forward.1} parent=1 // pred_region
      %70 = dma.done [#allocation5], 2048
    $region33: #{encoder_bn_forward.1} parent=1 // pred_fallthru
      _
    // Predicated region
    $region34: #{encoder_bn_forward.1} parent=1 // pred_check
      _
    $region35: #{encoder_bn_forward.1} parent=1 // pred_check_branch
      %72 = sbr.rel (0) target = $region37
    $region36: #{encoder_bn_forward.1} parent=1 // pred_region
      %73 = dma.done [#allocation8], 10240
    $region37: #{encoder_bn_forward.1} parent=1 // pred_fallthru
      _
    // Predicated region
    $region38: #{encoder_bn_forward.1} parent=1 // pred_check
      _
    $region39: #{encoder_bn_forward.1} parent=1 // pred_check_branch
      %75 = sbr.rel (0) target = $region41
    $region40: #{encoder_bn_forward.1} parent=1 // pred_region
      %76 = dma.done [#allocation8], 32
    $region41: #{encoder_bn_forward.1} parent=1 // pred_fallthru
      _
    // Predicated region
    $region42: #{encoder_bn_forward.1} parent=1 // pred_check
      _
    $region43: #{encoder_bn_forward.1} parent=1 // pred_check_branch
      %78 = sbr.rel (0) target = $region45
    $region44: #{encoder_bn_forward.1} parent=1 // pred_region
      %79 = dma.done [#allocation11], 24576
    $region45: #{encoder_bn_forward.1} parent=1 // pred_fallthru
      _
    %81 = vst [vmem:[#allocation2] sm:$0xff] 0.0
    %82 = vst [vmem:[#allocation2 + $0x8] sm:$0xff] 0.0
    %83 = vst [vmem:[#allocation2 + $0x10] sm:$0xf] 0.0
    %84 = vst [vmem:[#allocation2 + $0x18] sm:$0xff] 0.0
    %85 = vst [vmem:[#allocation2 + $0x20] sm:$0xff] 0.0
    %86 = vst [vmem:[#allocation2 + $0x28] sm:$0xf] 0.0
    %v87 = vld [vmem:[#allocation4] sm:$0xff]
    %v88 = vld [vmem:[#allocation4 + $0x8] sm:$0xff]
    %v89 = vld [vmem:[#allocation4 + $0x40] sm:$0xff]
    %v90 = vld [vmem:[#allocation4 + $0x48] sm:$0xff]
    %95 = vrot.lane.b32.xlu0 %v87, 2
    %v96 = vpop.permute.xlu0 %95
    %97 = vrot.lane.b32.xlu0 %v88, 2
    %v98 = vpop.permute.xlu0 %97
    %99 = vrot.lane.b32.xlu0 %v89, 2
    %v100 = vpop.permute.xlu0 %99
    %101 = vrot.lane.b32.xlu0 %v90, 2
    %v102 = vpop.permute.xlu0 %101
    %vm107 = vcmask 146448
    %108 = vst.msk [vmem:[#allocation2 + $0x2] sm:$0xff] %vm107, %v96
    %109 = vst.msk [vmem:[#allocation2 + $0xa] sm:$0xff] %vm107, %v98
    %110 = vst.msk [vmem:[#allocation2 + $0x1a] sm:$0xff] %vm107, %v100
    %111 = vst.msk [vmem:[#allocation2 + $0x22] sm:$0xff] %vm107, %v102
    %s112 = scalar_lea.vmem [#allocation4], 16
    %v113 = vld [vmem:[%s112] sm:$0xff]
    %v114 = vld [vmem:[%s112 + $0x8] sm:$0xff]
    %v115 = vld [vmem:[%s112 + $0x40] sm:$0xff]
    %v116 = vld [vmem:[%s112 + $0x48] sm:$0xff]
    %121 = vrot.lane.b32.xlu0 %v113, 22
    %v122 = vpop.permute.xlu0 %121
    %123 = vrot.lane.b32.xlu0 %v114, 22
    %v124 = vpop.permute.xlu0 %123
    %125 = vrot.lane.b32.xlu0 %v115, 22
    %v126 = vpop.permute.xlu0 %125
    %127 = vrot.lane.b32.xlu0 %v116, 22
    %v128 = vpop.permute.xlu0 %127
    %vm133 = vcmask 310448
    %134 = vst.msk [vmem:[#allocation2 + $0x2] sm:$0xff] %vm133, %v122
    %135 = vst.msk [vmem:[#allocation2 + $0xa] sm:$0xff] %vm133, %v124
    %136 = vst.msk [vmem:[#allocation2 + $0x1a] sm:$0xff] %vm133, %v126
    %137 = vst.msk [vmem:[#allocation2 + $0x22] sm:$0xff] %vm133, %v128
    %s138 = scalar_lea.vmem [#allocation4], 32
    %v139 = vld [vmem:[%s138] sm:$0xff]
    %v140 = vld [vmem:[%s138 + $0x8] sm:$0xff]
    %v141 = vld [vmem:[%s138 + $0x40] sm:$0xff]
    %v142 = vld [vmem:[%s138 + $0x48] sm:$0xff]
    %147 = vrot.lane.b32.xlu0 %v139, 42
    %v148 = vpop.permute.xlu0 %147
    %149 = vrot.lane.b32.xlu0 %v140, 42
    %v150 = vpop.permute.xlu0 %149
    %151 = vrot.lane.b32.xlu0 %v141, 42
    %v152 = vpop.permute.xlu0 %151
    %153 = vrot.lane.b32.xlu0 %v142, 42
    %v154 = vpop.permute.xlu0 %153
    %vm159 = vcmask 474448
    %160 = vst.msk [vmem:[#allocation2 + $0x2] sm:$0xff] %vm159, %v148
    %161 = vst.msk [vmem:[#allocation2 + $0xa] sm:$0xff] %vm159, %v150
    %162 = vst.msk [vmem:[#allocation2 + $0x1a] sm:$0xff] %vm159, %v152
    %163 = vst.msk [vmem:[#allocation2 + $0x22] sm:$0xff] %vm159, %v154
    %s164 = scalar_lea.vmem [#allocation4], 48
    %v165 = vld [vmem:[%s164] sm:$0xff]
    %v166 = vld [vmem:[%s164 + $0x8] sm:$0xff]
    %v167 = vld [vmem:[%s164 + $0x40] sm:$0xff]
    %v168 = vld [vmem:[%s164 + $0x48] sm:$0xff]
    %173 = vrot.lane.b32.xlu0 %v165, 62
    %v174 = vpop.permute.xlu0 %173
    %175 = vrot.lane.b32.xlu0 %v166, 62
    %v176 = vpop.permute.xlu0 %175
    %177 = vrot.lane.b32.xlu0 %v167, 62
    %v178 = vpop.permute.xlu0 %177
    %179 = vrot.lane.b32.xlu0 %v168, 62
    %v180 = vpop.permute.xlu0 %179
    %vm185 = vcmask 638448
    %186 = vst.msk [vmem:[#allocation2 + $0x2] sm:$0xff] %vm185, %v174
    %187 = vst.msk [vmem:[#allocation2 + $0xa] sm:$0xff] %vm185, %v176
    %188 = vst.msk [vmem:[#allocation2 + $0x1a] sm:$0xff] %vm185, %v178
    %189 = vst.msk [vmem:[#allocation2 + $0x22] sm:$0xff] %vm185, %v180
    %v190 = vld [vmem:[#allocation2] sm:$0xff]
    %v191 = vld [vmem:[#allocation2 + $0x8] sm:$0xff]
    %v192 = vld [vmem:[#allocation2 + $0x10] sm:$0xf]
    %v193 = vld [vmem:[#allocation2 + $0x18] sm:$0xff]
    %v194 = vld [vmem:[#allocation2 + $0x20] sm:$0xff]
    %v195 = vld [vmem:[#allocation2 + $0x28] sm:$0xf]
    %v196 = vpack.c.bf16 %v191, %v190
    %v197 = vpack.c.bf16 %v192, %v192
    %v198 = vpack.c.bf16 %v194, %v193
    %v199 = vpack.c.bf16 %v195, %v195
    %v200 = vld [vmem:[#allocation7] sm:$0xff]
    %v201 = vld [vmem:[#allocation7 + $0x8] sm:$0xff]
    %v202 = vld [vmem:[#allocation7 + $0x10] sm:$0xff]
    %v203 = vld [vmem:[#allocation7 + $0x18] sm:$0xff]
    %v204 = vld [vmem:[#allocation7 + $0x20] sm:$0xff]
    %v205 = vld [vmem:[#allocation7 + $0x28] sm:$0xff]
    %v206 = vld [vmem:[#allocation7 + $0x30] sm:$0xff]
    %v207 = vld [vmem:[#allocation7 + $0x38] sm:$0xff]
    %v208 = vld [vmem:[#allocation7 + $0x40] sm:$0xff]
    %v209 = vld [vmem:[#allocation7 + $0x48] sm:$0xff]
    %v210 = vld [vmem:[#allocation7 + $0x50] sm:$0xff]
    %v211 = vld [vmem:[#allocation7 + $0x58] sm:$0xff]
    %v212 = vld [vmem:[#allocation7 + $0x60] sm:$0xff]
    %v213 = vld [vmem:[#allocation7 + $0x68] sm:$0xff]
    %v214 = vld [vmem:[#allocation7 + $0x70] sm:$0xff]
    %v215 = vld [vmem:[#allocation7 + $0x78] sm:$0xff]
    %vm216 = vsmask.f32 7424
    %v218 = vshrl.u32 %v196, 16
    %v220 = vshll.u32 %v196, 16
    %v222 = vrot.slane %v220, 1
    %v223 = vor.u32 %v218, %v222
    %v225 = vshll.u32 %v197, 16
    %v227 = vrot.slane %v225, 1
    %v228 = vsel %vm216, %v223, %v227
    %v230 = vshrl.u32 %v198, 16
    %v232 = vshll.u32 %v198, 16
    %v234 = vrot.slane %v232, 1
    %v235 = vor.u32 %v230, %v234
    %v237 = vshll.u32 %v199, 16
    %v239 = vrot.slane %v237, 1
    %v240 = vsel %vm216, %v235, %v239
    %s243 = scalar_lea.vmem [#allocation7], 128
    %v244 = vld [vmem:[%s243] sm:$0xff]
    %v245 = vld [vmem:[%s243 + $0x8] sm:$0xff]
    %v246 = vld [vmem:[%s243 + $0x10] sm:$0xff]
    %v247 = vld [vmem:[%s243 + $0x18] sm:$0xff]
    %v248 = vld [vmem:[%s243 + $0x20] sm:$0xff]
    %v249 = vld [vmem:[%s243 + $0x28] sm:$0xff]
    %v250 = vld [vmem:[%s243 + $0x30] sm:$0xff]
    %v251 = vld [vmem:[%s243 + $0x38] sm:$0xff]
    %v252 = vld [vmem:[%s243 + $0x40] sm:$0xff]
    %v253 = vld [vmem:[%s243 + $0x48] sm:$0xff]
    %v254 = vld [vmem:[%s243 + $0x50] sm:$0xff]
    %v255 = vld [vmem:[%s243 + $0x58] sm:$0xff]
    %v256 = vld [vmem:[%s243 + $0x60] sm:$0xff]
    %v257 = vld [vmem:[%s243 + $0x68] sm:$0xff]
    %v258 = vld [vmem:[%s243 + $0x70] sm:$0xff]
    %v259 = vld [vmem:[%s243 + $0x78] sm:$0xff]
    %v276 = vunpack.c.l.b16 %v244
    %v277 = vunpack.c.h.b16 %v244
    %v278 = vunpack.c.l.b16 %v245
    %v279 = vunpack.c.h.b16 %v245
    %v280 = vunpack.c.l.b16 %v246
    %v281 = vunpack.c.h.b16 %v246
    %v282 = vunpack.c.l.b16 %v247
    %v283 = vunpack.c.h.b16 %v247
    %v284 = vunpack.c.l.b16 %v248
    %v285 = vunpack.c.h.b16 %v248
    %v286 = vunpack.c.l.b16 %v249
    %v287 = vunpack.c.h.b16 %v249
    %v288 = vunpack.c.l.b16 %v250
    %v289 = vunpack.c.h.b16 %v250
    %v290 = vunpack.c.l.b16 %v251
    %v291 = vunpack.c.h.b16 %v251
    %v292 = vunpack.c.l.b16 %v252
    %v293 = vunpack.c.h.b16 %v252
    %v294 = vunpack.c.l.b16 %v253
    %v295 = vunpack.c.h.b16 %v253
    %v296 = vunpack.c.l.b16 %v254
    %v297 = vunpack.c.h.b16 %v254
    %v298 = vunpack.c.l.b16 %v255
    %v299 = vunpack.c.h.b16 %v255
    %v300 = vunpack.c.l.b16 %v256
    %v301 = vunpack.c.h.b16 %v256
    %v302 = vunpack.c.l.b16 %v257
    %v303 = vunpack.c.h.b16 %v257
    %v304 = vunpack.c.l.b16 %v258
    %v305 = vunpack.c.h.b16 %v258
    %v306 = vunpack.c.l.b16 %v259
    %v307 = vunpack.c.h.b16 %v259
    %v308 = vpack.c.b16 %v278, %v276
    %v309 = vpack.c.b16 %v279, %v277
    %v310 = vpack.c.b16 %v282, %v280
    %v311 = vpack.c.b16 %v283, %v281
    %v312 = vpack.c.b16 %v286, %v284
    %v313 = vpack.c.b16 %v287, %v285
    %v314 = vpack.c.b16 %v290, %v288
    %v315 = vpack.c.b16 %v291, %v289
    %v316 = vpack.c.b16 %v294, %v292
    %v317 = vpack.c.b16 %v295, %v293
    %v318 = vpack.c.b16 %v298, %v296
    %v319 = vpack.c.b16 %v299, %v297
    %v320 = vpack.c.b16 %v302, %v300
    %v321 = vpack.c.b16 %v303, %v301
    %v322 = vpack.c.b16 %v306, %v304
    %v323 = vpack.c.b16 %v307, %v305
    %340 = vmatprep.subr.bf16.mxu0 %v309
    %341 = vmatpush1.bf16.msra.mxu0 %v308
    %342 = vmatprep.subr.bf16.mxu0 %v311
    %343 = vmatpush1.bf16.msra.mxu0 %v310
    %344 = vmatprep.subr.bf16.mxu0 %v313
    %345 = vmatpush1.bf16.msra.mxu0 %v312
    %346 = vmatprep.subr.bf16.mxu0 %v315
    %347 = vmatpush1.bf16.msra.mxu0 %v314
    %348 = vmatprep.subr.bf16.mxu0 %v317
    %349 = vmatpush1.bf16.msra.mxu0 %v316
    %350 = vmatprep.subr.bf16.mxu0 %v319
    %351 = vmatpush1.bf16.msra.mxu0 %v318
    %352 = vmatprep.subr.bf16.mxu0 %v321
    %353 = vmatpush1.bf16.msra.mxu0 %v320
    %354 = vmatprep.subr.bf16.mxu0 %v323
    %355 = vmatpush1.bf16.msra.mxu0 %v322
    %356 = vmatprep.subr.bf16.mxu0 0
    %357 = vmatpush1.bf16.msra.mxu0 0
    %358 = vmatprep.subr.bf16.mxu0 0
    %359 = vmatpush1.bf16.msra.mxu0 0
    %360 = vmatprep.subr.bf16.mxu0 0
    %361 = vmatpush1.bf16.msra.mxu0 0
    %362 = vmatprep.subr.bf16.mxu0 0
    %363 = vmatpush1.bf16.msra.mxu0 0
    %364 = vmatprep.subr.bf16.mxu0 0
    %365 = vmatpush1.bf16.msra.mxu0 0
    %366 = vmatprep.subr.bf16.mxu0 0
    %367 = vmatpush1.bf16.msra.mxu0 0
    %368 = vmatprep.subr.bf16.mxu0 0
    %369 = vmatpush1.bf16.msra.mxu0 0
    %370 = vmatprep.subr.bf16.mxu0 0
    %371 = vmatpush1.bf16.msra.mxu0 0
    %372 = vmatprep.mubr.bf16.mxu0 0
    %373 = vmatmul.mubr.bf16.gmra.mrb[0].mxu0 %v228
    %v374 = vpop.f32.mrb[0].mxu0
    %v375 = vadd.f32 0.0, %v374
    %v376 = vpop.f32.mrb[0].mxu0
    %v377 = vadd.f32 0.0, %v376
    %v378 = vpop.f32.mrb[0].mxu0
    %v379 = vadd.f32 0.0, %v378
    %v380 = vpop.f32.mrb[0].mxu0
    %v381 = vadd.f32 0.0, %v380
    %382 = vmatprep.mubr.bf16.mxu0 0
    %383 = vmatmul.mubr.bf16.gmra.mrb[0].mxu0 %v240
    %v384 = vpop.f32.mrb[0].mxu0
    %v385 = vadd.f32 0.0, %v384
    %v386 = vpop.f32.mrb[0].mxu0
    %v387 = vadd.f32 0.0, %v386
    %v388 = vpop.f32.mrb[0].mxu0
    %v389 = vadd.f32 0.0, %v388
    %v390 = vpop.f32.mrb[0].mxu0
    %v391 = vadd.f32 0.0, %v390
    %392 = vdwg.mxu0
    %v409 = vunpack.c.l.b16 %v200
    %v410 = vunpack.c.h.b16 %v200
    %v411 = vunpack.c.l.b16 %v201
    %v412 = vunpack.c.h.b16 %v201
    %v413 = vunpack.c.l.b16 %v202
    %v414 = vunpack.c.h.b16 %v202
    %v415 = vunpack.c.l.b16 %v203
    %v416 = vunpack.c.h.b16 %v203
    %v417 = vunpack.c.l.b16 %v204
    %v418 = vunpack.c.h.b16 %v204
    %v419 = vunpack.c.l.b16 %v205
    %v420 = vunpack.c.h.b16 %v205
    %v421 = vunpack.c.l.b16 %v206
    %v422 = vunpack.c.h.b16 %v206
    %v423 = vunpack.c.l.b16 %v207
    %v424 = vunpack.c.h.b16 %v207
    %v425 = vunpack.c.l.b16 %v208
    %v426 = vunpack.c.h.b16 %v208
    %v427 = vunpack.c.l.b16 %v209
    %v428 = vunpack.c.h.b16 %v209
    %v429 = vunpack.c.l.b16 %v210
    %v430 = vunpack.c.h.b16 %v210
    %v431 = vunpack.c.l.b16 %v211
    %v432 = vunpack.c.h.b16 %v211
    %v433 = vunpack.c.l.b16 %v212
    %v434 = vunpack.c.h.b16 %v212
    %v435 = vunpack.c.l.b16 %v213
    %v436 = vunpack.c.h.b16 %v213
    %v437 = vunpack.c.l.b16 %v214
    %v438 = vunpack.c.h.b16 %v214
    %v439 = vunpack.c.l.b16 %v215
    %v440 = vunpack.c.h.b16 %v215
    %v441 = vpack.c.b16 %v411, %v409
    %v442 = vpack.c.b16 %v412, %v410
    %v443 = vpack.c.b16 %v415, %v413
    %v444 = vpack.c.b16 %v416, %v414
    %v445 = vpack.c.b16 %v419, %v417
    %v446 = vpack.c.b16 %v420, %v418
    %v447 = vpack.c.b16 %v423, %v421
    %v448 = vpack.c.b16 %v424, %v422
    %v449 = vpack.c.b16 %v427, %v425
    %v450 = vpack.c.b16 %v428, %v426
    %v451 = vpack.c.b16 %v431, %v429
    %v452 = vpack.c.b16 %v432, %v430
    %v453 = vpack.c.b16 %v435, %v433
    %v454 = vpack.c.b16 %v436, %v434
    %v455 = vpack.c.b16 %v439, %v437
    %v456 = vpack.c.b16 %v440, %v438
    %473 = vmatprep.subr.bf16.mxu0 %v442
    %474 = vmatpush1.bf16.msra.mxu0 %v441
    %475 = vmatprep.subr.bf16.mxu0 %v444
    %476 = vmatpush1.bf16.msra.mxu0 %v443
    %477 = vmatprep.subr.bf16.mxu0 %v446
    %478 = vmatpush1.bf16.msra.mxu0 %v445
    %479 = vmatprep.subr.bf16.mxu0 %v448
    %480 = vmatpush1.bf16.msra.mxu0 %v447
    %481 = vmatprep.subr.bf16.mxu0 %v450
    %482 = vmatpush1.bf16.msra.mxu0 %v449
    %483 = vmatprep.subr.bf16.mxu0 %v452
    %484 = vmatpush1.bf16.msra.mxu0 %v451
    %485 = vmatprep.subr.bf16.mxu0 %v454
    %486 = vmatpush1.bf16.msra.mxu0 %v453
    %487 = vmatprep.subr.bf16.mxu0 %v456
    %488 = vmatpush1.bf16.msra.mxu0 %v455
    %489 = vmatprep.subr.bf16.mxu0 0
    %490 = vmatpush1.bf16.msra.mxu0 0
    %491 = vmatprep.subr.bf16.mxu0 0
    %492 = vmatpush1.bf16.msra.mxu0 0
    %493 = vmatprep.subr.bf16.mxu0 0
    %494 = vmatpush1.bf16.msra.mxu0 0
    %495 = vmatprep.subr.bf16.mxu0 0
    %496 = vmatpush1.bf16.msra.mxu0 0
    %497 = vmatprep.subr.bf16.mxu0 0
    %498 = vmatpush1.bf16.msra.mxu0 0
    %499 = vmatprep.subr.bf16.mxu0 0
    %500 = vmatpush1.bf16.msra.mxu0 0
    %501 = vmatprep.subr.bf16.mxu0 0
    %502 = vmatpush1.bf16.msra.mxu0 0
    %503 = vmatprep.subr.bf16.mxu0 0
    %504 = vmatpush1.bf16.msra.mxu0 0
    %505 = vmatprep.mubr.bf16.mxu0 0
    %506 = vmatmul.mubr.bf16.gmra.mrb[0].mxu0 %v196
    %v507 = vpop.f32.mrb[0].mxu0
    %v508 = vadd.f32 %v375, %v507
    %v509 = vpop.f32.mrb[0].mxu0
    %v510 = vadd.f32 %v377, %v509
    %v511 = vpop.f32.mrb[0].mxu0
    %v512 = vadd.f32 %v379, %v511
    %v513 = vpop.f32.mrb[0].mxu0
    %v514 = vadd.f32 %v381, %v513
    %515 = vmatprep.mubr.bf16.mxu0 0
    %516 = vmatmul.mubr.bf16.gmra.mrb[0].mxu0 %v198
    %v517 = vpop.f32.mrb[0].mxu0
    %v518 = vadd.f32 %v385, %v517
    %v519 = vpop.f32.mrb[0].mxu0
    %v520 = vadd.f32 %v387, %v519
    %v521 = vpop.f32.mrb[0].mxu0
    %v522 = vadd.f32 %v389, %v521
    %v523 = vpop.f32.mrb[0].mxu0
    %v524 = vadd.f32 %v391, %v523
    %525 = vdwg.mxu0
    %vm530 = vcmask 1046528
    %v531 = vrot.slane %v196, 1
    %v532 = vrot.slane %v197, 1
    %v533 = vsel %vm530, %v531, %v532
    %v534 = vrot.slane %v198, 1
    %v535 = vrot.slane %v199, 1
    %v536 = vsel %vm530, %v534, %v535
    %s539 = scalar_lea.vmem [#allocation7], 256
    %v540 = vld [vmem:[%s539] sm:$0xff]
    %v541 = vld [vmem:[%s539 + $0x8] sm:$0xff]
    %v542 = vld [vmem:[%s539 + $0x10] sm:$0xff]
    %v543 = vld [vmem:[%s539 + $0x18] sm:$0xff]
    %v544 = vld [vmem:[%s539 + $0x20] sm:$0xff]
    %v545 = vld [vmem:[%s539 + $0x28] sm:$0xff]
    %v546 = vld [vmem:[%s539 + $0x30] sm:$0xff]
    %v547 = vld [vmem:[%s539 + $0x38] sm:$0xff]
    %v548 = vld [vmem:[%s539 + $0x40] sm:$0xff]
    %v549 = vld [vmem:[%s539 + $0x48] sm:$0xff]
    %v550 = vld [vmem:[%s539 + $0x50] sm:$0xff]
    %v551 = vld [vmem:[%s539 + $0x58] sm:$0xff]
    %v552 = vld [vmem:[%s539 + $0x60] sm:$0xff]
    %v553 = vld [vmem:[%s539 + $0x68] sm:$0xff]
    %v554 = vld [vmem:[%s539 + $0x70] sm:$0xff]
    %v555 = vld [vmem:[%s539 + $0x78] sm:$0xff]
    %v572 = vunpack.c.l.b16 %v540
    %v573 = vunpack.c.h.b16 %v540
    %v574 = vunpack.c.l.b16 %v541
    %v575 = vunpack.c.h.b16 %v541
    %v576 = vunpack.c.l.b16 %v542
    %v577 = vunpack.c.h.b16 %v542
    %v578 = vunpack.c.l.b16 %v543
    %v579 = vunpack.c.h.b16 %v543
    %v580 = vunpack.c.l.b16 %v544
    %v581 = vunpack.c.h.b16 %v544
    %v582 = vunpack.c.l.b16 %v545
    %v583 = vunpack.c.h.b16 %v545
    %v584 = vunpack.c.l.b16 %v546
    %v585 = vunpack.c.h.b16 %v546
    %v586 = vunpack.c.l.b16 %v547
    %v587 = vunpack.c.h.b16 %v547
    %v588 = vunpack.c.l.b16 %v548
    %v589 = vunpack.c.h.b16 %v548
    %v590 = vunpack.c.l.b16 %v549
    %v591 = vunpack.c.h.b16 %v549
    %v592 = vunpack.c.l.b16 %v550
    %v593 = vunpack.c.h.b16 %v550
    %v594 = vunpack.c.l.b16 %v551
    %v595 = vunpack.c.h.b16 %v551
    %v596 = vunpack.c.l.b16 %v552
    %v597 = vunpack.c.h.b16 %v552
    %v598 = vunpack.c.l.b16 %v553
    %v599 = vunpack.c.h.b16 %v553
    %v600 = vunpack.c.l.b16 %v554
    %v601 = vunpack.c.h.b16 %v554
    %v602 = vunpack.c.l.b16 %v555
    %v603 = vunpack.c.h.b16 %v555
    %v604 = vpack.c.b16 %v574, %v572
    %v605 = vpack.c.b16 %v575, %v573
    %v606 = vpack.c.b16 %v578, %v576
    %v607 = vpack.c.b16 %v579, %v577
    %v608 = vpack.c.b16 %v582, %v580
    %v609 = vpack.c.b16 %v583, %v581
    %v610 = vpack.c.b16 %v586, %v584
    %v611 = vpack.c.b16 %v587, %v585
    %v612 = vpack.c.b16 %v590, %v588
    %v613 = vpack.c.b16 %v591, %v589
    %v614 = vpack.c.b16 %v594, %v592
    %v615 = vpack.c.b16 %v595, %v593
    %v616 = vpack.c.b16 %v598, %v596
    %v617 = vpack.c.b16 %v599, %v597
    %v618 = vpack.c.b16 %v602, %v600
    %v619 = vpack.c.b16 %v603, %v601
    %636 = vmatprep.subr.bf16.mxu0 %v605
    %637 = vmatpush1.bf16.msra.mxu0 %v604
    %638 = vmatprep.subr.bf16.mxu0 %v607
    %639 = vmatpush1.bf16.msra.mxu0 %v606
    %640 = vmatprep.subr.bf16.mxu0 %v609
    %641 = vmatpush1.bf16.msra.mxu0 %v608
    %642 = vmatprep.subr.bf16.mxu0 %v611
    %643 = vmatpush1.bf16.msra.mxu0 %v610
    %644 = vmatprep.subr.bf16.mxu0 %v613
    %645 = vmatpush1.bf16.msra.mxu0 %v612
    %646 = vmatprep.subr.bf16.mxu0 %v615
    %647 = vmatpush1.bf16.msra.mxu0 %v614
    %648 = vmatprep.subr.bf16.mxu0 %v617
    %649 = vmatpush1.bf16.msra.mxu0 %v616
    %650 = vmatprep.subr.bf16.mxu0 %v619
    %651 = vmatpush1.bf16.msra.mxu0 %v618
    %652 = vmatprep.subr.bf16.mxu0 0
    %653 = vmatpush1.bf16.msra.mxu0 0
    %654 = vmatprep.subr.bf16.mxu0 0
    %655 = vmatpush1.bf16.msra.mxu0 0
    %656 = vmatprep.subr.bf16.mxu0 0
    %657 = vmatpush1.bf16.msra.mxu0 0
    %658 = vmatprep.subr.bf16.mxu0 0
    %659 = vmatpush1.bf16.msra.mxu0 0
    %660 = vmatprep.subr.bf16.mxu0 0
    %661 = vmatpush1.bf16.msra.mxu0 0
    %662 = vmatprep.subr.bf16.mxu0 0
    %663 = vmatpush1.bf16.msra.mxu0 0
    %664 = vmatprep.subr.bf16.mxu0 0
    %665 = vmatpush1.bf16.msra.mxu0 0
    %666 = vmatprep.subr.bf16.mxu0 0
    %667 = vmatpush1.bf16.msra.mxu0 0
    %668 = vmatprep.mubr.bf16.mxu0 0
    %669 = vmatmul.mubr.bf16.gmra.mrb[0].mxu0 %v533
    %v670 = vpop.f32.mrb[0].mxu0
    %v671 = vadd.f32 0.0, %v670
    %v672 = vpop.f32.mrb[0].mxu0
    %v673 = vadd.f32 0.0, %v672
    %v674 = vpop.f32.mrb[0].mxu0
    %v675 = vadd.f32 0.0, %v674
    %v676 = vpop.f32.mrb[0].mxu0
    %v677 = vadd.f32 0.0, %v676
    %678 = vmatprep.mubr.bf16.mxu0 0
    %679 = vmatmul.mubr.bf16.gmra.mrb[0].mxu0 %v536
    %v680 = vpop.f32.mrb[0].mxu0
    %v681 = vadd.f32 0.0, %v680
    %v682 = vpop.f32.mrb[0].mxu0
    %v683 = vadd.f32 0.0, %v682
    %v684 = vpop.f32.mrb[0].mxu0
    %v685 = vadd.f32 0.0, %v684
    %v686 = vpop.f32.mrb[0].mxu0
    %v687 = vadd.f32 0.0, %v686
    %688 = vdwg.mxu0
    %v689 = vadd.f32 %v508, %v671
    %v690 = vadd.f32 %v510, %v673
    %v691 = vadd.f32 %v512, %v675
    %v692 = vadd.f32 %v514, %v677
    %v693 = vadd.f32 %v518, %v681
    %v694 = vadd.f32 %v520, %v683
    %v695 = vadd.f32 %v522, %v685
    %v696 = vadd.f32 %v524, %v687
    %vm697 = vsmask.f32 6400
    %v698 = vrot.slane %v218, 1
    %v699 = vrot.slane %v220, 2
    %v700 = vor.u32 %v698, %v699
    %v701 = vshrl.u32 %v197, 16
    %v703 = vrot.slane %v701, 1
    %v704 = vrot.slane %v225, 2
    %v705 = vor.u32 %v703, %v704
    %v706 = vsel %vm697, %v700, %v705
    %v707 = vrot.slane %v230, 1
    %v708 = vrot.slane %v232, 2
    %v709 = vor.u32 %v707, %v708
    %v710 = vshrl.u32 %v199, 16
    %v712 = vrot.slane %v710, 1
    %v713 = vrot.slane %v237, 2
    %v714 = vor.u32 %v712, %v713
    %v715 = vsel %vm697, %v709, %v714
    %s718 = scalar_lea.vmem [#allocation7], 384
    %v719 = vld [vmem:[%s718] sm:$0xff]
    %v720 = vld [vmem:[%s718 + $0x8] sm:$0xff]
    %v721 = vld [vmem:[%s718 + $0x10] sm:$0xff]
    %v722 = vld [vmem:[%s718 + $0x18] sm:$0xff]
    %v723 = vld [vmem:[%s718 + $0x20] sm:$0xff]
    %v724 = vld [vmem:[%s718 + $0x28] sm:$0xff]
    %v725 = vld [vmem:[%s718 + $0x30] sm:$0xff]
    %v726 = vld [vmem:[%s718 + $0x38] sm:$0xff]
    %v727 = vld [vmem:[%s718 + $0x40] sm:$0xff]
    %v728 = vld [vmem:[%s718 + $0x48] sm:$0xff]
    %v729 = vld [vmem:[%s718 + $0x50] sm:$0xff]
    %v730 = vld [vmem:[%s718 + $0x58] sm:$0xff]
    %v731 = vld [vmem:[%s718 + $0x60] sm:$0xff]
    %v732 = vld [vmem:[%s718 + $0x68] sm:$0xff]
    %v733 = vld [vmem:[%s718 + $0x70] sm:$0xff]
    %v734 = vld [vmem:[%s718 + $0x78] sm:$0xff]
    %v751 = vunpack.c.l.b16 %v719
    %v752 = vunpack.c.h.b16 %v719
    %v753 = vunpack.c.l.b16 %v720
    %v754 = vunpack.c.h.b16 %v720
    %v755 = vunpack.c.l.b16 %v721
    %v756 = vunpack.c.h.b16 %v721
    %v757 = vunpack.c.l.b16 %v722
    %v758 = vunpack.c.h.b16 %v722
    %v759 = vunpack.c.l.b16 %v723
    %v760 = vunpack.c.h.b16 %v723
    %v761 = vunpack.c.l.b16 %v724
    %v762 = vunpack.c.h.b16 %v724
    %v763 = vunpack.c.l.b16 %v725
    %v764 = vunpack.c.h.b16 %v725
    %v765 = vunpack.c.l.b16 %v726
    %v766 = vunpack.c.h.b16 %v726
    %v767 = vunpack.c.l.b16 %v727
    %v768 = vunpack.c.h.b16 %v727
    %v769 = vunpack.c.l.b16 %v728
    %v770 = vunpack.c.h.b16 %v728
    %v771 = vunpack.c.l.b16 %v729
    %v772 = vunpack.c.h.b16 %v729
    %v773 = vunpack.c.l.b16 %v730
    %v774 = vunpack.c.h.b16 %v730
    %v775 = vunpack.c.l.b16 %v731
    %v776 = vunpack.c.h.b16 %v731
    %v777 = vunpack.c.l.b16 %v732
    %v778 = vunpack.c.h.b16 %v732
    %v779 = vunpack.c.l.b16 %v733
    %v780 = vunpack.c.h.b16 %v733
    %v781 = vunpack.c.l.b16 %v734
    %v782 = vunpack.c.h.b16 %v734
    %v783 = vpack.c.b16 %v753, %v751
    %v784 = vpack.c.b16 %v754, %v752
    %v785 = vpack.c.b16 %v757, %v755
    %v786 = vpack.c.b16 %v758, %v756
    %v787 = vpack.c.b16 %v761, %v759
    %v788 = vpack.c.b16 %v762, %v760
    %v789 = vpack.c.b16 %v765, %v763
    %v790 = vpack.c.b16 %v766, %v764
    %v791 = vpack.c.b16 %v769, %v767
    %v792 = vpack.c.b16 %v770, %v768
    %v793 = vpack.c.b16 %v773, %v771
    %v794 = vpack.c.b16 %v774, %v772
    %v795 = vpack.c.b16 %v777, %v775
    %v796 = vpack.c.b16 %v778, %v776
    %v797 = vpack.c.b16 %v781, %v779
    %v798 = vpack.c.b16 %v782, %v780
    %815 = vmatprep.subr.bf16.mxu0 %v784
    %816 = vmatpush1.bf16.msra.mxu0 %v783
    %817 = vmatprep.subr.bf16.mxu0 %v786
    %818 = vmatpush1.bf16.msra.mxu0 %v785
    %819 = vmatprep.subr.bf16.mxu0 %v788
    %820 = vmatpush1.bf16.msra.mxu0 %v787
    %821 = vmatprep.subr.bf16.mxu0 %v790
    %822 = vmatpush1.bf16.msra.mxu0 %v789
    %823 = vmatprep.subr.bf16.mxu0 %v792
    %824 = vmatpush1.bf16.msra.mxu0 %v791
    %825 = vmatprep.subr.bf16.mxu0 %v794
    %826 = vmatpush1.bf16.msra.mxu0 %v793
    %827 = vmatprep.subr.bf16.mxu0 %v796
    %828 = vmatpush1.bf16.msra.mxu0 %v795
    %829 = vmatprep.subr.bf16.mxu0 %v798
    %830 = vmatpush1.bf16.msra.mxu0 %v797
    %831 = vmatprep.subr.bf16.mxu0 0
    %832 = vmatpush1.bf16.msra.mxu0 0
    %833 = vmatprep.subr.bf16.mxu0 0
    %834 = vmatpush1.bf16.msra.mxu0 0
    %835 = vmatprep.subr.bf16.mxu0 0
    %836 = vmatpush1.bf16.msra.mxu0 0
    %837 = vmatprep.subr.bf16.mxu0 0
    %838 = vmatpush1.bf16.msra.mxu0 0
    %839 = vmatprep.subr.bf16.mxu0 0
    %840 = vmatpush1.bf16.msra.mxu0 0
    %841 = vmatprep.subr.bf16.mxu0 0
    %842 = vmatpush1.bf16.msra.mxu0 0
    %843 = vmatprep.subr.bf16.mxu0 0
    %844 = vmatpush1.bf16.msra.mxu0 0
    %845 = vmatprep.subr.bf16.mxu0 0
    %846 = vmatpush1.bf16.msra.mxu0 0
    %847 = vmatprep.mubr.bf16.mxu0 0
    %848 = vmatmul.mubr.bf16.gmra.mrb[0].mxu0 %v706
    %v849 = vpop.f32.mrb[0].mxu0
    %v850 = vadd.f32 0.0, %v849
    %v851 = vpop.f32.mrb[0].mxu0
    %v852 = vadd.f32 0.0, %v851
    %v853 = vpop.f32.mrb[0].mxu0
    %v854 = vadd.f32 0.0, %v853
    %v855 = vpop.f32.mrb[0].mxu0
    %v856 = vadd.f32 0.0, %v855
    %857 = vmatprep.mubr.bf16.mxu0 0
    %858 = vmatmul.mubr.bf16.gmra.mrb[0].mxu0 %v715
    %v859 = vpop.f32.mrb[0].mxu0
    %v860 = vadd.f32 0.0, %v859
    %v861 = vpop.f32.mrb[0].mxu0
    %v862 = vadd.f32 0.0, %v861
    %v863 = vpop.f32.mrb[0].mxu0
    %v864 = vadd.f32 0.0, %v863
    %v865 = vpop.f32.mrb[0].mxu0
    %v866 = vadd.f32 0.0, %v865
    %867 = vdwg.mxu0
    %v868 = vadd.f32 %v689, %v850
    %v869 = vadd.f32 %v690, %v852
    %v870 = vadd.f32 %v691, %v854
    %v871 = vadd.f32 %v692, %v856
    %v872 = vadd.f32 %v693, %v860
    %v873 = vadd.f32 %v694, %v862
    %v874 = vadd.f32 %v695, %v864
    %v875 = vadd.f32 %v696, %v866
    %vm876 = vcmask 1045504
    %v877 = vrot.slane %v196, 2
    %v878 = vrot.slane %v197, 2
    %v879 = vsel %vm876, %v877, %v878
    %v880 = vrot.slane %v198, 2
    %v881 = vrot.slane %v199, 2
    %v882 = vsel %vm876, %v880, %v881
    %s885 = scalar_lea.vmem [#allocation7], 512
    %v886 = vld [vmem:[%s885] sm:$0xff]
    %v887 = vld [vmem:[%s885 + $0x8] sm:$0xff]
    %v888 = vld [vmem:[%s885 + $0x10] sm:$0xff]
    %v889 = vld [vmem:[%s885 + $0x18] sm:$0xff]
    %v890 = vld [vmem:[%s885 + $0x20] sm:$0xff]
    %v891 = vld [vmem:[%s885 + $0x28] sm:$0xff]
    %v892 = vld [vmem:[%s885 + $0x30] sm:$0xff]
    %v893 = vld [vmem:[%s885 + $0x38] sm:$0xff]
    %v894 = vld [vmem:[%s885 + $0x40] sm:$0xff]
    %v895 = vld [vmem:[%s885 + $0x48] sm:$0xff]
    %v896 = vld [vmem:[%s885 + $0x50] sm:$0xff]
    %v897 = vld [vmem:[%s885 + $0x58] sm:$0xff]
    %v898 = vld [vmem:[%s885 + $0x60] sm:$0xff]
    %v899 = vld [vmem:[%s885 + $0x68] sm:$0xff]
    %v900 = vld [vmem:[%s885 + $0x70] sm:$0xff]
    %v901 = vld [vmem:[%s885 + $0x78] sm:$0xff]
    %v918 = vunpack.c.l.b16 %v886
    %v919 = vunpack.c.h.b16 %v886
    %v920 = vunpack.c.l.b16 %v887
    %v921 = vunpack.c.h.b16 %v887
    %v922 = vunpack.c.l.b16 %v888
    %v923 = vunpack.c.h.b16 %v888
    %v924 = vunpack.c.l.b16 %v889
    %v925 = vunpack.c.h.b16 %v889
    %v926 = vunpack.c.l.b16 %v890
    %v927 = vunpack.c.h.b16 %v890
    %v928 = vunpack.c.l.b16 %v891
    %v929 = vunpack.c.h.b16 %v891
    %v930 = vunpack.c.l.b16 %v892
    %v931 = vunpack.c.h.b16 %v892
    %v932 = vunpack.c.l.b16 %v893
    %v933 = vunpack.c.h.b16 %v893
    %v934 = vunpack.c.l.b16 %v894
    %v935 = vunpack.c.h.b16 %v894
    %v936 = vunpack.c.l.b16 %v895
    %v937 = vunpack.c.h.b16 %v895
    %v938 = vunpack.c.l.b16 %v896
    %v939 = vunpack.c.h.b16 %v896
    %v940 = vunpack.c.l.b16 %v897
    %v941 = vunpack.c.h.b16 %v897
    %v942 = vunpack.c.l.b16 %v898
    %v943 = vunpack.c.h.b16 %v898
    %v944 = vunpack.c.l.b16 %v899
    %v945 = vunpack.c.h.b16 %v899
    %v946 = vunpack.c.l.b16 %v900
    %v947 = vunpack.c.h.b16 %v900
    %v948 = vunpack.c.l.b16 %v901
    %v949 = vunpack.c.h.b16 %v901
    %v950 = vpack.c.b16 %v920, %v918
    %v951 = vpack.c.b16 %v921, %v919
    %v952 = vpack.c.b16 %v924, %v922
    %v953 = vpack.c.b16 %v925, %v923
    %v954 = vpack.c.b16 %v928, %v926
    %v955 = vpack.c.b16 %v929, %v927
    %v956 = vpack.c.b16 %v932, %v930
    %v957 = vpack.c.b16 %v933, %v931
    %v958 = vpack.c.b16 %v936, %v934
    %v959 = vpack.c.b16 %v937, %v935
    %v960 = vpack.c.b16 %v940, %v938
    %v961 = vpack.c.b16 %v941, %v939
    %v962 = vpack.c.b16 %v944, %v942
    %v963 = vpack.c.b16 %v945, %v943
    %v964 = vpack.c.b16 %v948, %v946
    %v965 = vpack.c.b16 %v949, %v947
    %982 = vmatprep.subr.bf16.mxu0 %v951
    %983 = vmatpush1.bf16.msra.mxu0 %v950
    %984 = vmatprep.subr.bf16.mxu0 %v953
    %985 = vmatpush1.bf16.msra.mxu0 %v952
    %986 = vmatprep.subr.bf16.mxu0 %v955
    %987 = vmatpush1.bf16.msra.mxu0 %v954
    %988 = vmatprep.subr.bf16.mxu0 %v957
    %989 = vmatpush1.bf16.msra.mxu0 %v956
    %990 = vmatprep.subr.bf16.mxu0 %v959
    %991 = vmatpush1.bf16.msra.mxu0 %v958
    %992 = vmatprep.subr.bf16.mxu0 %v961
    %993 = vmatpush1.bf16.msra.mxu0 %v960
    %994 = vmatprep.subr.bf16.mxu0 %v963
    %995 = vmatpush1.bf16.msra.mxu0 %v962
    %996 = vmatprep.subr.bf16.mxu0 %v965
    %997 = vmatpush1.bf16.msra.mxu0 %v964
    %998 = vmatprep.subr.bf16.mxu0 0
    %999 = vmatpush1.bf16.msra.mxu0 0
    %1000 = vmatprep.subr.bf16.mxu0 0
    %1001 = vmatpush1.bf16.msra.mxu0 0
    %1002 = vmatprep.subr.bf16.mxu0 0
    %1003 = vmatpush1.bf16.msra.mxu0 0
    %1004 = vmatprep.subr.bf16.mxu0 0
    %1005 = vmatpush1.bf16.msra.mxu0 0
    %1006 = vmatprep.subr.bf16.mxu0 0
    %1007 = vmatpush1.bf16.msra.mxu0 0
    %1008 = vmatprep.subr.bf16.mxu0 0
    %1009 = vmatpush1.bf16.msra.mxu0 0
    %1010 = vmatprep.subr.bf16.mxu0 0
    %1011 = vmatpush1.bf16.msra.mxu0 0
    %1012 = vmatprep.subr.bf16.mxu0 0
    %1013 = vmatpush1.bf16.msra.mxu0 0
    %1014 = vmatprep.mubr.bf16.mxu0 0
    %1015 = vmatmul.mubr.bf16.gmra.mrb[0].mxu0 %v879
    %v1016 = vpop.f32.mrb[0].mxu0
    %v1017 = vadd.f32 0.0, %v1016
    %v1018 = vpop.f32.mrb[0].mxu0
    %v1019 = vadd.f32 0.0, %v1018
    %v1020 = vpop.f32.mrb[0].mxu0
    %v1021 = vadd.f32 0.0, %v1020
    %v1022 = vpop.f32.mrb[0].mxu0
    %v1023 = vadd.f32 0.0, %v1022
    %1024 = vmatprep.mubr.bf16.mxu0 0
    %1025 = vmatmul.mubr.bf16.gmra.mrb[0].mxu0 %v882
    %v1026 = vpop.f32.mrb[0].mxu0
    %v1027 = vadd.f32 0.0, %v1026
    %v1028 = vpop.f32.mrb[0].mxu0
    %v1029 = vadd.f32 0.0, %v1028
    %v1030 = vpop.f32.mrb[0].mxu0
    %v1031 = vadd.f32 0.0, %v1030
    %v1032 = vpop.f32.mrb[0].mxu0
    %v1033 = vadd.f32 0.0, %v1032
    %1034 = vdwg.mxu0
    %v1035 = vadd.f32 %v868, %v1017
    %v1036 = vadd.f32 %v869, %v1019
    %v1037 = vadd.f32 %v870, %v1021
    %v1038 = vadd.f32 %v871, %v1023
    %v1039 = vadd.f32 %v872, %v1027
    %v1040 = vadd.f32 %v873, %v1029
    %v1041 = vadd.f32 %v874, %v1031
    %v1042 = vadd.f32 %v875, %v1033
    %v1043 = vld [vmem:[%s2] sm:$0x3]
    %v1044 = vld [vmem:[#allocation9] sm:$0x3]
    %v1045 = vadd.f32 %v1035, %v1037
    %v1046 = vadd.f32 %v1045, %v1039
    %v1047 = vadd.f32 %v1046, %v1041
    %v1048 = vrot.slane %v1047, 4
    %v1049 = vadd.f32 %v1047, %v1048
    %v1050 = vrot.slane %v1049, 2
    %v1051 = vadd.f32 %v1049, %v1050
    %v1052 = vrot.slane %v1051, 1
    %v1053 = vadd.f32 %v1051, %v1052
    %v1054 = vadd.f32 %v1036, %v1038
    %v1055 = vadd.f32 %v1054, %v1040
    %v1056 = vadd.f32 %v1055, %v1042
    %v1057 = vrot.slane %v1056, 4
    %v1058 = vadd.f32 %v1056, %v1057
    %v1059 = vrot.slane %v1058, 2
    %v1060 = vadd.f32 %v1058, %v1059
    %v1061 = vrot.slane %v1060, 1
    %v1062 = vadd.f32 %v1060, %v1061
    %v1063 = vadd.f32 %v1053, %v1062
    %1065 = vrot.lane.b32.xlu0 %v1063, 64
    %v1066 = vpop.permute.xlu0 %1065
    %v1068 = vadd.f32 %v1063, %v1066
    %1070 = vrot.lane.b32.xlu0 %v1068, 96
    %v1071 = vpop.permute.xlu0 %1070
    %v1073 = vadd.f32 %v1068, %v1071
    %1075 = vrot.lane.b32.xlu0 %v1073, 112
    %v1076 = vpop.permute.xlu0 %1075
    %v1078 = vadd.f32 %v1073, %v1076
    %v1079 = vmul.f32 %v1078, 0.001953125
    %1081 = vrot.lane.b32.xlu0 %v1079, 16
    %v1082 = vpop.permute.xlu0 %1081
    %vm1084 = vcmask 130048
    %v1085 = vsel %vm1084, %v1079, %v1082
    %1087 = vrot.lane.b32.xlu0 %v1085, 32
    %v1088 = vpop.permute.xlu0 %1087
    %vm1090 = vcmask 261120
    %v1091 = vsel %vm1090, %v1085, %v1088
    %1093 = vrot.lane.b32.xlu0 %v1091, 64
    %v1094 = vpop.permute.xlu0 %1093
    %vm1096 = vcmask 523264
    %v1097 = vsel %vm1096, %v1091, %v1094
    %v1098 = vlaneseq
    %v1099 = vshrl.u32 %v1098, 7
    %v1100 = vsub.s32 0, %v1099
    %v1101 = vrot.slane %v1097, %v1100
    %v1102 = vsub.f32 %v1035, %v1101
    %v1103 = vsub.f32 %v1036, %v1101
    %v1104 = vsub.f32 %v1037, %v1101
    %v1105 = vsub.f32 %v1038, %v1101
    %v1106 = vsub.f32 %v1039, %v1101
    %v1107 = vsub.f32 %v1040, %v1101
    %v1108 = vsub.f32 %v1041, %v1101
    %v1109 = vsub.f32 %v1042, %v1101
    %v1110 = vmul.f32 %v1102, %v1102
    %v1111 = vmul.f32 %v1103, %v1103
    %v1112 = vmul.f32 %v1104, %v1104
    %v1113 = vmul.f32 %v1105, %v1105
    %v1114 = vmul.f32 %v1106, %v1106
    %v1115 = vmul.f32 %v1107, %v1107
    %v1116 = vmul.f32 %v1108, %v1108
    %v1117 = vmul.f32 %v1109, %v1109
    %v1118 = vadd.f32 %v1110, %v1112
    %v1119 = vadd.f32 %v1118, %v1114
    %v1120 = vadd.f32 %v1119, %v1116
    %v1121 = vrot.slane %v1120, 4
    %v1122 = vadd.f32 %v1120, %v1121
    %v1123 = vrot.slane %v1122, 2
    %v1124 = vadd.f32 %v1122, %v1123
    %v1125 = vrot.slane %v1124, 1
    %v1126 = vadd.f32 %v1124, %v1125
    %v1127 = vadd.f32 %v1111, %v1113
    %v1128 = vadd.f32 %v1127, %v1115
    %v1129 = vadd.f32 %v1128, %v1117
    %v1130 = vrot.slane %v1129, 4
    %v1131 = vadd.f32 %v1129, %v1130
    %v1132 = vrot.slane %v1131, 2
    %v1133 = vadd.f32 %v1131, %v1132
    %v1134 = vrot.slane %v1133, 1
    %v1135 = vadd.f32 %v1133, %v1134
    %v1136 = vadd.f32 %v1126, %v1135
    %1138 = vrot.lane.b32.xlu0 %v1136, 64
    %v1139 = vpop.permute.xlu0 %1138
    %v1141 = vadd.f32 %v1136, %v1139
    %1143 = vrot.lane.b32.xlu0 %v1141, 96
    %v1144 = vpop.permute.xlu0 %1143
    %v1146 = vadd.f32 %v1141, %v1144
    %1148 = vrot.lane.b32.xlu0 %v1146, 112
    %v1149 = vpop.permute.xlu0 %1148
    %v1151 = vadd.f32 %v1146, %v1149
    %v1152 = vmul.f32 %v1151, 0.001953125
    %v1153 = vadd.f32 %v1152, 1e-05
    %v1154 = vrsqrt.pop %v1153
    %1156 = vrot.lane.b32.xlu0 %v1154, 16
    %v1157 = vpop.permute.xlu0 %1156
    %v1159 = vsel %vm1084, %v1154, %v1157
    %1161 = vrot.lane.b32.xlu0 %v1159, 32
    %v1162 = vpop.permute.xlu0 %1161
    %v1164 = vsel %vm1090, %v1159, %v1162
    %1166 = vrot.lane.b32.xlu0 %v1164, 64
    %v1167 = vpop.permute.xlu0 %1166
    %v1169 = vsel %vm1096, %v1164, %v1167
    %v1171 = vcombine.low %v1169, %v1169
    %v1173 = vunpack.c.l.s4 1966171168
    %v1174 = vunpack.c.0.s8 %v1173
    %v1175 = vlaneseq
    %v1176 = vshrl.u32 %v1175, 7
    %v1177 = vsub.s32 %v1174, %v1176
    %v1178 = vrot.slane %v1171, %v1177
    %v1180 = vunpack.c.l.s4 1966171168
    %v1181 = vunpack.c.0.s8 %v1180
    %v1182 = vlaneseq
    %v1183 = vshrl.u32 %v1182, 7
    %v1184 = vsub.s32 %v1181, %v1183
    %v1185 = vrot.slane %v1178, %v1184
    %v1187 = vmul.f32 %v1043, %v1185
    %v1189 = vlaneseq
    %v1190 = vshrl.u32 %v1189, 7
    %v1191 = vsub.s32 0, %v1190
    %v1192 = vrot.slane %v1187, %v1191
    %v1193 = vlaneseq
    %v1194 = vshrl.u32 %v1193, 7
    %v1195 = vsub.s32 1, %v1194
    %v1196 = vrot.slane %v1187, %v1195
    %v1199 = vmul.f32 %v1102, %v1192
    %v1200 = vmul.f32 %v1103, %v1196
    %v1201 = vmul.f32 %v1104, %v1192
    %v1202 = vmul.f32 %v1105, %v1196
    %v1203 = vmul.f32 %v1106, %v1192
    %v1204 = vmul.f32 %v1107, %v1196
    %v1205 = vmul.f32 %v1108, %v1192
    %v1206 = vmul.f32 %v1109, %v1196
    %v1208 = vlaneseq
    %v1209 = vshrl.u32 %v1208, 7
    %v1210 = vsub.s32 0, %v1209
    %v1211 = vrot.slane %v1044, %v1210
    %v1212 = vlaneseq
    %v1213 = vshrl.u32 %v1212, 7
    %v1214 = vsub.s32 1, %v1213
    %v1215 = vrot.slane %v1044, %v1214
    %v1218 = vadd.f32 %v1199, %v1211
    %v1219 = vadd.f32 %v1200, %v1215
    %v1220 = vadd.f32 %v1201, %v1211
    %v1221 = vadd.f32 %v1202, %v1215
    %v1222 = vadd.f32 %v1203, %v1211
    %v1223 = vadd.f32 %v1204, %v1215
    %v1224 = vadd.f32 %v1205, %v1211
    %v1225 = vadd.f32 %v1206, %v1215
    %v1226 = vmax.f32 %v1218, 0.0
    %v1227 = vmax.f32 %v1219, 0.0
    %v1228 = vmax.f32 %v1220, 0.0
    %v1229 = vmax.f32 %v1221, 0.0
    %v1230 = vmax.f32 %v1222, 0.0
    %v1231 = vmax.f32 %v1223, 0.0
    %v1232 = vmax.f32 %v1224, 0.0
    %v1233 = vmax.f32 %v1225, 0.0
    %v1242 = vcombine.low %v1226, %v1227
    %v1243 = vcombine.high %v1226, %v1227
    %v1245 = vunpack.c.l.s4 1983009808
    %v1246 = vunpack.c.0.s8 %v1245
    %v1247 = vlaneseq
    %v1248 = vshrl.u32 %v1247, 7
    %v1249 = vsub.s32 %v1246, %v1248
    %v1250 = vrot.slane %v1242, %v1249
    %v1252 = vunpack.c.l.s4 1983009808
    %v1253 = vunpack.c.0.s8 %v1252
    %v1254 = vlaneseq
    %v1255 = vshrl.u32 %v1254, 7
    %v1256 = vsub.s32 %v1253, %v1255
    %v1257 = vrot.slane %v1243, %v1256
    %v1258 = vcombine.high %v1250, %v1250
    %v1259 = vcombine.high %v1257, %v1257
    %v1260 = vcombine.low %v1228, %v1229
    %v1261 = vcombine.high %v1228, %v1229
    %v1263 = vunpack.c.l.s4 1983009808
    %v1264 = vunpack.c.0.s8 %v1263
    %v1265 = vlaneseq
    %v1266 = vshrl.u32 %v1265, 7
    %v1267 = vsub.s32 %v1264, %v1266
    %v1268 = vrot.slane %v1260, %v1267
    %v1270 = vunpack.c.l.s4 1983009808
    %v1271 = vunpack.c.0.s8 %v1270
    %v1272 = vlaneseq
    %v1273 = vshrl.u32 %v1272, 7
    %v1274 = vsub.s32 %v1271, %v1273
    %v1275 = vrot.slane %v1261, %v1274
    %v1276 = vcombine.high %v1268, %v1268
    %v1277 = vcombine.high %v1275, %v1275
    %v1278 = vcombine.low %v1230, %v1231
    %v1279 = vcombine.high %v1230, %v1231
    %v1281 = vunpack.c.l.s4 1983009808
    %v1282 = vunpack.c.0.s8 %v1281
    %v1283 = vlaneseq
    %v1284 = vshrl.u32 %v1283, 7
    %v1285 = vsub.s32 %v1282, %v1284
    %v1286 = vrot.slane %v1278, %v1285
    %v1288 = vunpack.c.l.s4 1983009808
    %v1289 = vunpack.c.0.s8 %v1288
    %v1290 = vlaneseq
    %v1291 = vshrl.u32 %v1290, 7
    %v1292 = vsub.s32 %v1289, %v1291
    %v1293 = vrot.slane %v1279, %v1292
    %v1294 = vcombine.high %v1286, %v1286
    %v1295 = vcombine.high %v1293, %v1293
    %v1296 = vcombine.low %v1232, %v1233
    %v1297 = vcombine.high %v1232, %v1233
    %v1299 = vunpack.c.l.s4 1983009808
    %v1300 = vunpack.c.0.s8 %v1299
    %v1301 = vlaneseq
    %v1302 = vshrl.u32 %v1301, 7
    %v1303 = vsub.s32 %v1300, %v1302
    %v1304 = vrot.slane %v1296, %v1303
    %v1306 = vunpack.c.l.s4 1983009808
    %v1307 = vunpack.c.0.s8 %v1306
    %v1308 = vlaneseq
    %v1309 = vshrl.u32 %v1308, 7
    %v1310 = vsub.s32 %v1307, %v1309
    %v1311 = vrot.slane %v1297, %v1310
    %v1312 = vcombine.high %v1304, %v1304
    %v1313 = vcombine.high %v1311, %v1311
    %v1330 = vlaneseq
    %v1331 = vshrl.u32 %v1330, 7
    %v1332 = vsub.s32 1, %v1331
    %v1333 = vrot.slane %v1250, %v1332
    %v1334 = vlaneseq
    %v1335 = vshrl.u32 %v1334, 7
    %v1336 = vsub.s32 3, %v1335
    %v1337 = vrot.slane %v1250, %v1336
    %v1338 = vlaneseq
    %v1339 = vshrl.u32 %v1338, 7
    %v1340 = vsub.s32 1, %v1339
    %v1341 = vrot.slane %v1258, %v1340
    %v1342 = vlaneseq
    %v1343 = vshrl.u32 %v1342, 7
    %v1344 = vsub.s32 3, %v1343
    %v1345 = vrot.slane %v1258, %v1344
    %v1346 = vlaneseq
    %v1347 = vshrl.u32 %v1346, 7
    %v1348 = vsub.s32 1, %v1347
    %v1349 = vrot.slane %v1257, %v1348
    %v1350 = vlaneseq
    %v1351 = vshrl.u32 %v1350, 7
    %v1352 = vsub.s32 3, %v1351
    %v1353 = vrot.slane %v1257, %v1352
    %v1354 = vlaneseq
    %v1355 = vshrl.u32 %v1354, 7
    %v1356 = vsub.s32 1, %v1355
    %v1357 = vrot.slane %v1259, %v1356
    %v1358 = vlaneseq
    %v1359 = vshrl.u32 %v1358, 7
    %v1360 = vsub.s32 3, %v1359
    %v1361 = vrot.slane %v1259, %v1360
    %v1362 = vlaneseq
    %v1363 = vshrl.u32 %v1362, 7
    %v1364 = vsub.s32 1, %v1363
    %v1365 = vrot.slane %v1268, %v1364
    %v1366 = vlaneseq
    %v1367 = vshrl.u32 %v1366, 7
    %v1368 = vsub.s32 3, %v1367
    %v1369 = vrot.slane %v1268, %v1368
    %v1370 = vlaneseq
    %v1371 = vshrl.u32 %v1370, 7
    %v1372 = vsub.s32 1, %v1371
    %v1373 = vrot.slane %v1276, %v1372
    %v1374 = vlaneseq
    %v1375 = vshrl.u32 %v1374, 7
    %v1376 = vsub.s32 3, %v1375
    %v1377 = vrot.slane %v1276, %v1376
    %v1378 = vlaneseq
    %v1379 = vshrl.u32 %v1378, 7
    %v1380 = vsub.s32 1, %v1379
    %v1381 = vrot.slane %v1275, %v1380
    %v1382 = vlaneseq
    %v1383 = vshrl.u32 %v1382, 7
    %v1384 = vsub.s32 3, %v1383
    %v1385 = vrot.slane %v1275, %v1384
    %v1386 = vlaneseq
    %v1387 = vshrl.u32 %v1386, 7
    %v1388 = vsub.s32 1, %v1387
    %v1389 = vrot.slane %v1286, %v1388
    %v1390 = vlaneseq
    %v1391 = vshrl.u32 %v1390, 7
    %v1392 = vsub.s32 3, %v1391
    %v1393 = vrot.slane %v1286, %v1392
    %v1394 = vlaneseq
    %v1395 = vshrl.u32 %v1394, 7
    %v1396 = vsub.s32 1, %v1395
    %v1397 = vrot.slane %v1294, %v1396
    %v1398 = vlaneseq
    %v1399 = vshrl.u32 %v1398, 7
    %v1400 = vsub.s32 3, %v1399
    %v1401 = vrot.slane %v1294, %v1400
    %v1402 = vlaneseq
    %v1403 = vshrl.u32 %v1402, 7
    %v1404 = vsub.s32 1, %v1403
    %v1405 = vrot.slane %v1293, %v1404
    %v1406 = vlaneseq
    %v1407 = vshrl.u32 %v1406, 7
    %v1408 = vsub.s32 3, %v1407
    %v1409 = vrot.slane %v1293, %v1408
    %v1410 = vlaneseq
    %v1411 = vshrl.u32 %v1410, 7
    %v1412 = vsub.s32 1, %v1411
    %v1413 = vrot.slane %v1295, %v1412
    %v1414 = vlaneseq
    %v1415 = vshrl.u32 %v1414, 7
    %v1416 = vsub.s32 3, %v1415
    %v1417 = vrot.slane %v1295, %v1416
    %v1418 = vlaneseq
    %v1419 = vshrl.u32 %v1418, 7
    %v1420 = vsub.s32 1, %v1419
    %v1421 = vrot.slane %v1304, %v1420
    %v1422 = vlaneseq
    %v1423 = vshrl.u32 %v1422, 7
    %v1424 = vsub.s32 3, %v1423
    %v1425 = vrot.slane %v1304, %v1424
    %v1426 = vlaneseq
    %v1427 = vshrl.u32 %v1426, 7
    %v1428 = vsub.s32 1, %v1427
    %v1429 = vrot.slane %v1312, %v1428
    %v1430 = vlaneseq
    %v1431 = vshrl.u32 %v1430, 7
    %v1432 = vsub.s32 3, %v1431
    %v1433 = vrot.slane %v1312, %v1432
    %v1434 = vlaneseq
    %v1435 = vshrl.u32 %v1434, 7
    %v1436 = vsub.s32 1, %v1435
    %v1437 = vrot.slane %v1311, %v1436
    %v1438 = vlaneseq
    %v1439 = vshrl.u32 %v1438, 7
    %v1440 = vsub.s32 3, %v1439
    %v1441 = vrot.slane %v1311, %v1440
    %vm1442 = vcmask 1042434
    %v1443 = vsel %vm1442, %v1341, %v1333
    %vm1444 = vcmask 1043459
    %v1445 = vsel %vm1444, %v1349, %v1443
    %vm1446 = vcmask 1044484
    %v1447 = vsel %vm1446, %v1357, %v1445
    %vm1448 = vcmask 1045509
    %v1449 = vsel %vm1448, %v1365, %v1447
    %vm1450 = vcmask 1046534
    %v1451 = vsel %vm1450, %v1373, %v1449
    %vm1452 = vcmask 1047559
    %v1453 = vsel %vm1452, %v1381, %v1451
    %v1454 = vsel %vm1442, %v1345, %v1337
    %v1455 = vsel %vm1444, %v1353, %v1454
    %v1456 = vsel %vm1446, %v1361, %v1455
    %v1457 = vsel %vm1448, %v1369, %v1456
    %v1458 = vsel %vm1450, %v1377, %v1457
    %v1459 = vsel %vm1452, %v1385, %v1458
    %v1460 = vsel %vm1442, %v1397, %v1389
    %v1461 = vsel %vm1444, %v1405, %v1460
    %v1462 = vsel %vm1446, %v1413, %v1461
    %v1463 = vsel %vm1448, %v1421, %v1462
    %v1464 = vsel %vm1450, %v1429, %v1463
    %v1465 = vsel %vm1452, %v1437, %v1464
    %v1466 = vsel %vm1442, %v1401, %v1393
    %v1467 = vsel %vm1444, %v1409, %v1466
    %v1468 = vsel %vm1446, %v1417, %v1467
    %v1469 = vsel %vm1448, %v1425, %v1468
    %v1470 = vsel %vm1450, %v1433, %v1469
    %v1471 = vsel %vm1452, %v1441, %v1470
    %vm1476 = vcmask 1040384
    %v1477 = vsel %vm1476, 0.0, %v1453
    %v1478 = vsel %vm1476, 0.0, %v1459
    %v1479 = vsel %vm1476, 0.0, %v1465
    %v1480 = vsel %vm1476, 0.0, %v1471
    %v1481 = vrot.slane %v1250, 7
    %v1482 = vrot.slane %v1481, 2
    %v1483 = vrot.slane %v1258, 7
    %v1484 = vrot.slane %v1483, 2
    %v1485 = vrot.slane %v1257, 7
    %v1486 = vrot.slane %v1485, 2
    %v1487 = vrot.slane %v1259, 7
    %v1488 = vrot.slane %v1487, 2
    %v1489 = vrot.slane %v1268, 7
    %v1490 = vrot.slane %v1489, 2
    %v1491 = vrot.slane %v1276, 7
    %v1492 = vrot.slane %v1491, 2
    %v1493 = vrot.slane %v1275, 7
    %v1494 = vrot.slane %v1493, 2
    %v1495 = vrot.slane %v1277, 7
    %v1496 = vrot.slane %v1495, 2
    %v1497 = vrot.slane %v1286, 7
    %v1498 = vrot.slane %v1497, 2
    %v1499 = vrot.slane %v1294, 7
    %v1500 = vrot.slane %v1499, 2
    %v1501 = vrot.slane %v1293, 7
    %v1502 = vrot.slane %v1501, 2
    %v1503 = vrot.slane %v1295, 7
    %v1504 = vrot.slane %v1503, 2
    %v1505 = vrot.slane %v1304, 7
    %v1506 = vrot.slane %v1505, 2
    %v1507 = vrot.slane %v1312, 7
    %v1508 = vrot.slane %v1507, 2
    %v1509 = vrot.slane %v1311, 7
    %v1510 = vrot.slane %v1509, 2
    %v1511 = vrot.slane %v1313, 7
    %v1512 = vrot.slane %v1511, 2
    %v1529 = vmax.f32 %v1250, %v1482
    %v1530 = vmax.f32 %v1258, %v1484
    %v1531 = vmax.f32 %v1257, %v1486
    %v1532 = vmax.f32 %v1259, %v1488
    %v1533 = vmax.f32 %v1268, %v1490
    %v1534 = vmax.f32 %v1276, %v1492
    %v1535 = vmax.f32 %v1275, %v1494
    %v1536 = vmax.f32 %v1277, %v1496
    %v1537 = vmax.f32 %v1286, %v1498
    %v1538 = vmax.f32 %v1294, %v1500
    %v1539 = vmax.f32 %v1293, %v1502
    %v1540 = vmax.f32 %v1295, %v1504
    %v1541 = vmax.f32 %v1304, %v1506
    %v1542 = vmax.f32 %v1312, %v1508
    %v1543 = vmax.f32 %v1311, %v1510
    %v1544 = vmax.f32 %v1313, %v1512
    %v1549 = vcombine.low %v1477, %v1478
    %v1550 = vcombine.high %v1477, %v1478
    %v1552 = vunpack.c.l.s4 1983009808
    %v1553 = vunpack.c.0.s8 %v1552
    %v1554 = vlaneseq
    %v1555 = vshrl.u32 %v1554, 7
    %v1556 = vsub.s32 %v1553, %v1555
    %v1557 = vrot.slane %v1549, %v1556
    %v1559 = vunpack.c.l.s4 1983009808
    %v1560 = vunpack.c.0.s8 %v1559
    %v1561 = vlaneseq
    %v1562 = vshrl.u32 %v1561, 7
    %v1563 = vsub.s32 %v1560, %v1562
    %v1564 = vrot.slane %v1550, %v1563
    %v1565 = vcombine.high %v1557, %v1557
    %v1566 = vcombine.high %v1564, %v1564
    %v1567 = vcombine.low %v1479, %v1480
    %v1568 = vcombine.high %v1479, %v1480
    %v1570 = vunpack.c.l.s4 1983009808
    %v1571 = vunpack.c.0.s8 %v1570
    %v1572 = vlaneseq
    %v1573 = vshrl.u32 %v1572, 7
    %v1574 = vsub.s32 %v1571, %v1573
    %v1575 = vrot.slane %v1567, %v1574
    %v1577 = vunpack.c.l.s4 1983009808
    %v1578 = vunpack.c.0.s8 %v1577
    %v1579 = vlaneseq
    %v1580 = vshrl.u32 %v1579, 7
    %v1581 = vsub.s32 %v1578, %v1580
    %v1582 = vrot.slane %v1568, %v1581
    %v1583 = vcombine.high %v1575, %v1575
    %v1584 = vcombine.high %v1582, %v1582
    %v1585 = vrot.slane %v1557, 1
    %v1586 = vrot.slane %v1565, 1
    %v1587 = vrot.slane %v1564, 1
    %v1588 = vrot.slane %v1566, 1
    %v1589 = vrot.slane %v1575, 1
    %v1590 = vrot.slane %v1583, 1
    %v1591 = vrot.slane %v1582, 1
    %v1592 = vrot.slane %v1584, 1
    %v1609 = vmax.f32 %v1529, %v1557
    %v1610 = vmax.f32 %v1530, %v1585
    %v1611 = vmax.f32 %v1531, %v1565
    %v1612 = vmax.f32 %v1532, %v1586
    %v1613 = vmax.f32 %v1533, %v1564
    %v1614 = vmax.f32 %v1534, %v1587
    %v1615 = vmax.f32 %v1535, %v1566
    %v1616 = vmax.f32 %v1536, %v1588
    %v1617 = vmax.f32 %v1537, %v1575
    %v1618 = vmax.f32 %v1538, %v1589
    %v1619 = vmax.f32 %v1539, %v1583
    %v1620 = vmax.f32 %v1540, %v1590
    %v1621 = vmax.f32 %v1541, %v1582
    %v1622 = vmax.f32 %v1542, %v1591
    %v1623 = vmax.f32 %v1543, %v1584
    %v1624 = vmax.f32 %v1544, %v1592
    %v1641 = vrot.slane %v1609, 2
    %v1642 = vrot.slane %v1610, 2
    %v1643 = vrot.slane %v1611, 2
    %v1644 = vrot.slane %v1612, 2
    %v1645 = vrot.slane %v1613, 2
    %v1646 = vrot.slane %v1614, 2
    %v1647 = vrot.slane %v1615, 2
    %v1648 = vrot.slane %v1616, 2
    %v1649 = vrot.slane %v1617, 2
    %v1650 = vrot.slane %v1618, 2
    %v1651 = vrot.slane %v1619, 2
    %v1652 = vrot.slane %v1620, 2
    %v1653 = vrot.slane %v1621, 2
    %v1654 = vrot.slane %v1622, 2
    %v1655 = vrot.slane %v1623, 2
    %v1656 = vrot.slane %v1624, 2
    %1657 = vrot.lane.b32.xlu0 %v1609, 96
    %v1658 = vpop.permute.xlu0 %1657
    %1659 = vrot.lane.b32.xlu0 %v1610, 96
    %v1660 = vpop.permute.xlu0 %1659
    %1661 = vrot.lane.b32.xlu0 %v1611, 96
    %v1662 = vpop.permute.xlu0 %1661
    %1663 = vrot.lane.b32.xlu0 %v1612, 96
    %v1664 = vpop.permute.xlu0 %1663
    %1665 = vrot.lane.b32.xlu0 %v1613, 96
    %v1666 = vpop.permute.xlu0 %1665
    %1667 = vrot.lane.b32.xlu0 %v1614, 96
    %v1668 = vpop.permute.xlu0 %1667
    %1669 = vrot.lane.b32.xlu0 %v1615, 96
    %v1670 = vpop.permute.xlu0 %1669
    %1671 = vrot.lane.b32.xlu0 %v1616, 96
    %v1672 = vpop.permute.xlu0 %1671
    %1673 = vrot.lane.b32.xlu0 %v1617, 96
    %v1674 = vpop.permute.xlu0 %1673
    %1675 = vrot.lane.b32.xlu0 %v1618, 96
    %v1676 = vpop.permute.xlu0 %1675
    %1677 = vrot.lane.b32.xlu0 %v1619, 96
    %v1678 = vpop.permute.xlu0 %1677
    %1679 = vrot.lane.b32.xlu0 %v1620, 96
    %v1680 = vpop.permute.xlu0 %1679
    %1681 = vrot.lane.b32.xlu0 %v1621, 96
    %v1682 = vpop.permute.xlu0 %1681
    %1683 = vrot.lane.b32.xlu0 %v1622, 96
    %v1684 = vpop.permute.xlu0 %1683
    %1685 = vrot.lane.b32.xlu0 %v1623, 96
    %v1686 = vpop.permute.xlu0 %1685
    %1687 = vrot.lane.b32.xlu0 %v1624, 96
    %v1688 = vpop.permute.xlu0 %1687
    %v1689 = vrot.slane %v1658, 2
    %v1690 = vrot.slane %v1660, 2
    %v1691 = vrot.slane %v1662, 2
    %v1692 = vrot.slane %v1664, 2
    %v1693 = vrot.slane %v1666, 2
    %v1694 = vrot.slane %v1668, 2
    %v1695 = vrot.slane %v1670, 2
    %v1696 = vrot.slane %v1672, 2
    %v1697 = vrot.slane %v1674, 2
    %v1698 = vrot.slane %v1676, 2
    %v1699 = vrot.slane %v1678, 2
    %v1700 = vrot.slane %v1680, 2
    %v1701 = vrot.slane %v1682, 2
    %v1702 = vrot.slane %v1684, 2
    %v1703 = vrot.slane %v1686, 2
    %v1704 = vrot.slane %v1688, 2
    %1705 = vrot.lane.b32.xlu0 %v1609, 64
    %v1706 = vpop.permute.xlu0 %1705
    %1707 = vrot.lane.b32.xlu0 %v1610, 64
    %v1708 = vpop.permute.xlu0 %1707
    %1709 = vrot.lane.b32.xlu0 %v1611, 64
    %v1710 = vpop.permute.xlu0 %1709
    %1711 = vrot.lane.b32.xlu0 %v1612, 64
    %v1712 = vpop.permute.xlu0 %1711
    %1713 = vrot.lane.b32.xlu0 %v1613, 64
    %v1714 = vpop.permute.xlu0 %1713
    %1715 = vrot.lane.b32.xlu0 %v1614, 64
    %v1716 = vpop.permute.xlu0 %1715
    %1717 = vrot.lane.b32.xlu0 %v1615, 64
    %v1718 = vpop.permute.xlu0 %1717
    %1719 = vrot.lane.b32.xlu0 %v1616, 64
    %v1720 = vpop.permute.xlu0 %1719
    %1721 = vrot.lane.b32.xlu0 %v1617, 64
    %v1722 = vpop.permute.xlu0 %1721
    %1723 = vrot.lane.b32.xlu0 %v1618, 64
    %v1724 = vpop.permute.xlu0 %1723
    %1725 = vrot.lane.b32.xlu0 %v1619, 64
    %v1726 = vpop.permute.xlu0 %1725
    %1727 = vrot.lane.b32.xlu0 %v1620, 64
    %v1728 = vpop.permute.xlu0 %1727
    %1729 = vrot.lane.b32.xlu0 %v1621, 64
    %v1730 = vpop.permute.xlu0 %1729
    %1731 = vrot.lane.b32.xlu0 %v1622, 64
    %v1732 = vpop.permute.xlu0 %1731
    %1733 = vrot.lane.b32.xlu0 %v1623, 64
    %v1734 = vpop.permute.xlu0 %1733
    %1735 = vrot.lane.b32.xlu0 %v1624, 64
    %v1736 = vpop.permute.xlu0 %1735
    %v1737 = vrot.slane %v1706, 2
    %v1738 = vrot.slane %v1708, 2
    %v1739 = vrot.slane %v1710, 2
    %v1740 = vrot.slane %v1712, 2
    %v1741 = vrot.slane %v1714, 2
    %v1742 = vrot.slane %v1716, 2
    %v1743 = vrot.slane %v1718, 2
    %v1744 = vrot.slane %v1720, 2
    %v1745 = vrot.slane %v1722, 2
    %v1746 = vrot.slane %v1724, 2
    %v1747 = vrot.slane %v1726, 2
    %v1748 = vrot.slane %v1728, 2
    %v1749 = vrot.slane %v1730, 2
    %v1750 = vrot.slane %v1732, 2
    %v1751 = vrot.slane %v1734, 2
    %v1752 = vrot.slane %v1736, 2
    %1753 = vrot.lane.b32.xlu0 %v1609, 32
    %v1754 = vpop.permute.xlu0 %1753
    %1755 = vrot.lane.b32.xlu0 %v1610, 32
    %v1756 = vpop.permute.xlu0 %1755
    %1757 = vrot.lane.b32.xlu0 %v1611, 32
    %v1758 = vpop.permute.xlu0 %1757
    %1759 = vrot.lane.b32.xlu0 %v1612, 32
    %v1760 = vpop.permute.xlu0 %1759
    %1761 = vrot.lane.b32.xlu0 %v1613, 32
    %v1762 = vpop.permute.xlu0 %1761
    %1763 = vrot.lane.b32.xlu0 %v1614, 32
    %v1764 = vpop.permute.xlu0 %1763
    %1765 = vrot.lane.b32.xlu0 %v1615, 32
    %v1766 = vpop.permute.xlu0 %1765
    %1767 = vrot.lane.b32.xlu0 %v1616, 32
    %v1768 = vpop.permute.xlu0 %1767
    %1769 = vrot.lane.b32.xlu0 %v1617, 32
    %v1770 = vpop.permute.xlu0 %1769
    %1771 = vrot.lane.b32.xlu0 %v1618, 32
    %v1772 = vpop.permute.xlu0 %1771
    %1773 = vrot.lane.b32.xlu0 %v1619, 32
    %v1774 = vpop.permute.xlu0 %1773
    %1775 = vrot.lane.b32.xlu0 %v1620, 32
    %v1776 = vpop.permute.xlu0 %1775
    %1777 = vrot.lane.b32.xlu0 %v1621, 32
    %v1778 = vpop.permute.xlu0 %1777
    %1779 = vrot.lane.b32.xlu0 %v1622, 32
    %v1780 = vpop.permute.xlu0 %1779
    %1781 = vrot.lane.b32.xlu0 %v1623, 32
    %v1782 = vpop.permute.xlu0 %1781
    %1783 = vrot.lane.b32.xlu0 %v1624, 32
    %v1784 = vpop.permute.xlu0 %1783
    %v1785 = vrot.slane %v1754, 2
    %v1786 = vrot.slane %v1756, 2
    %v1787 = vrot.slane %v1758, 2
    %v1788 = vrot.slane %v1760, 2
    %v1789 = vrot.slane %v1762, 2
    %v1790 = vrot.slane %v1764, 2
    %v1791 = vrot.slane %v1766, 2
    %v1792 = vrot.slane %v1768, 2
    %v1793 = vrot.slane %v1770, 2
    %v1794 = vrot.slane %v1772, 2
    %v1795 = vrot.slane %v1774, 2
    %v1796 = vrot.slane %v1776, 2
    %v1797 = vrot.slane %v1778, 2
    %v1798 = vrot.slane %v1780, 2
    %v1799 = vrot.slane %v1782, 2
    %v1800 = vrot.slane %v1784, 2
    %v1801 = vsel %vm1446, %v1609, %v1609
    %v1802 = vsel %vm1450, %v1609, %v1801
    %v1803 = vrot.slane %v1610, 7
    %vm1804 = vcmask 1041409
    %v1805 = vsel %vm1804, %v1803, %v1802
    %v1806 = vsel %vm1444, %v1803, %v1805
    %v1807 = vsel %vm1448, %v1803, %v1806
    %v1808 = vsel %vm1452, %v1803, %v1807
    %v1809 = vsel %vm1446, %v1611, %v1611
    %v1810 = vsel %vm1450, %v1611, %v1809
    %v1811 = vrot.slane %v1612, 7
    %v1812 = vsel %vm1804, %v1811, %v1810
    %v1813 = vsel %vm1444, %v1811, %v1812
    %v1814 = vsel %vm1448, %v1811, %v1813
    %v1815 = vsel %vm1452, %v1811, %v1814
    %v1816 = vsel %vm1446, %v1613, %v1613
    %v1817 = vsel %vm1450, %v1613, %v1816
    %v1818 = vrot.slane %v1614, 7
    %v1819 = vsel %vm1804, %v1818, %v1817
    %v1820 = vsel %vm1444, %v1818, %v1819
    %v1821 = vsel %vm1448, %v1818, %v1820
    %v1822 = vsel %vm1452, %v1818, %v1821
    %v1823 = vsel %vm1446, %v1615, %v1615
    %v1824 = vsel %vm1450, %v1615, %v1823
    %v1825 = vrot.slane %v1616, 7
    %v1826 = vsel %vm1804, %v1825, %v1824
    %v1827 = vsel %vm1444, %v1825, %v1826
    %v1828 = vsel %vm1448, %v1825, %v1827
    %v1829 = vsel %vm1452, %v1825, %v1828
    %v1830 = vsel %vm1446, %v1658, %v1658
    %v1831 = vsel %vm1450, %v1658, %v1830
    %v1832 = vrot.slane %v1660, 7
    %v1833 = vsel %vm1804, %v1832, %v1831
    %v1834 = vsel %vm1444, %v1832, %v1833
    %v1835 = vsel %vm1448, %v1832, %v1834
    %v1836 = vsel %vm1452, %v1832, %v1835
    %v1837 = vsel %vm1446, %v1662, %v1662
    %v1838 = vsel %vm1450, %v1662, %v1837
    %v1839 = vrot.slane %v1664, 7
    %v1840 = vsel %vm1804, %v1839, %v1838
    %v1841 = vsel %vm1444, %v1839, %v1840
    %v1842 = vsel %vm1448, %v1839, %v1841
    %v1843 = vsel %vm1452, %v1839, %v1842
    %v1844 = vsel %vm1446, %v1666, %v1666
    %v1845 = vsel %vm1450, %v1666, %v1844
    %v1846 = vrot.slane %v1668, 7
    %v1847 = vsel %vm1804, %v1846, %v1845
    %v1848 = vsel %vm1444, %v1846, %v1847
    %v1849 = vsel %vm1448, %v1846, %v1848
    %v1850 = vsel %vm1452, %v1846, %v1849
    %v1851 = vsel %vm1446, %v1670, %v1670
    %v1852 = vsel %vm1450, %v1670, %v1851
    %v1853 = vrot.slane %v1672, 7
    %v1854 = vsel %vm1804, %v1853, %v1852
    %v1855 = vsel %vm1444, %v1853, %v1854
    %v1856 = vsel %vm1448, %v1853, %v1855
    %v1857 = vsel %vm1452, %v1853, %v1856
    %v1858 = vsel %vm1446, %v1706, %v1706
    %v1859 = vsel %vm1450, %v1706, %v1858
    %v1860 = vrot.slane %v1708, 7
    %v1861 = vsel %vm1804, %v1860, %v1859
    %v1862 = vsel %vm1444, %v1860, %v1861
    %v1863 = vsel %vm1448, %v1860, %v1862
    %v1864 = vsel %vm1452, %v1860, %v1863
    %v1865 = vsel %vm1446, %v1710, %v1710
    %v1866 = vsel %vm1450, %v1710, %v1865
    %v1867 = vrot.slane %v1712, 7
    %v1868 = vsel %vm1804, %v1867, %v1866
    %v1869 = vsel %vm1444, %v1867, %v1868
    %v1870 = vsel %vm1448, %v1867, %v1869
    %v1871 = vsel %vm1452, %v1867, %v1870
    %v1872 = vsel %vm1446, %v1714, %v1714
    %v1873 = vsel %vm1450, %v1714, %v1872
    %v1874 = vrot.slane %v1716, 7
    %v1875 = vsel %vm1804, %v1874, %v1873
    %v1876 = vsel %vm1444, %v1874, %v1875
    %v1877 = vsel %vm1448, %v1874, %v1876
    %v1878 = vsel %vm1452, %v1874, %v1877
    %v1879 = vsel %vm1446, %v1718, %v1718
    %v1880 = vsel %vm1450, %v1718, %v1879
    %v1881 = vrot.slane %v1720, 7
    %v1882 = vsel %vm1804, %v1881, %v1880
    %v1883 = vsel %vm1444, %v1881, %v1882
    %v1884 = vsel %vm1448, %v1881, %v1883
    %v1885 = vsel %vm1452, %v1881, %v1884
    %v1886 = vsel %vm1446, %v1754, %v1754
    %v1887 = vsel %vm1450, %v1754, %v1886
    %v1888 = vrot.slane %v1756, 7
    %v1889 = vsel %vm1804, %v1888, %v1887
    %v1890 = vsel %vm1444, %v1888, %v1889
    %v1891 = vsel %vm1448, %v1888, %v1890
    %v1892 = vsel %vm1452, %v1888, %v1891
    %v1893 = vsel %vm1446, %v1758, %v1758
    %v1894 = vsel %vm1450, %v1758, %v1893
    %v1895 = vrot.slane %v1760, 7
    %v1896 = vsel %vm1804, %v1895, %v1894
    %v1897 = vsel %vm1444, %v1895, %v1896
    %v1898 = vsel %vm1448, %v1895, %v1897
    %v1899 = vsel %vm1452, %v1895, %v1898
    %v1900 = vsel %vm1446, %v1762, %v1762
    %v1901 = vsel %vm1450, %v1762, %v1900
    %v1902 = vrot.slane %v1764, 7
    %v1903 = vsel %vm1804, %v1902, %v1901
    %v1904 = vsel %vm1444, %v1902, %v1903
    %v1905 = vsel %vm1448, %v1902, %v1904
    %v1906 = vsel %vm1452, %v1902, %v1905
    %v1907 = vsel %vm1446, %v1766, %v1766
    %v1908 = vsel %vm1450, %v1766, %v1907
    %v1909 = vrot.slane %v1768, 7
    %v1910 = vsel %vm1804, %v1909, %v1908
    %v1911 = vsel %vm1444, %v1909, %v1910
    %v1912 = vsel %vm1448, %v1909, %v1911
    %v1913 = vsel %vm1452, %v1909, %v1912
    %v1914 = vsel %vm1446, %v1641, %v1641
    %v1915 = vsel %vm1450, %v1641, %v1914
    %v1916 = vrot.slane %v1642, 7
    %v1917 = vsel %vm1804, %v1916, %v1915
    %v1918 = vsel %vm1444, %v1916, %v1917
    %v1919 = vsel %vm1448, %v1916, %v1918
    %v1920 = vsel %vm1452, %v1916, %v1919
    %v1921 = vsel %vm1446, %v1643, %v1643
    %v1922 = vsel %vm1450, %v1643, %v1921
    %v1923 = vrot.slane %v1644, 7
    %v1924 = vsel %vm1804, %v1923, %v1922
    %v1925 = vsel %vm1444, %v1923, %v1924
    %v1926 = vsel %vm1448, %v1923, %v1925
    %v1927 = vsel %vm1452, %v1923, %v1926
    %v1928 = vsel %vm1446, %v1645, %v1645
    %v1929 = vsel %vm1450, %v1645, %v1928
    %v1930 = vrot.slane %v1646, 7
    %v1931 = vsel %vm1804, %v1930, %v1929
    %v1932 = vsel %vm1444, %v1930, %v1931
    %v1933 = vsel %vm1448, %v1930, %v1932
    %v1934 = vsel %vm1452, %v1930, %v1933
    %v1935 = vsel %vm1446, %v1647, %v1647
    %v1936 = vsel %vm1450, %v1647, %v1935
    %v1937 = vrot.slane %v1648, 7
    %v1938 = vsel %vm1804, %v1937, %v1936
    %v1939 = vsel %vm1444, %v1937, %v1938
    %v1940 = vsel %vm1448, %v1937, %v1939
    %v1941 = vsel %vm1452, %v1937, %v1940
    %v1942 = vsel %vm1446, %v1689, %v1689
    %v1943 = vsel %vm1450, %v1689, %v1942
    %v1944 = vrot.slane %v1690, 7
    %v1945 = vsel %vm1804, %v1944, %v1943
    %v1946 = vsel %vm1444, %v1944, %v1945
    %v1947 = vsel %vm1448, %v1944, %v1946
    %v1948 = vsel %vm1452, %v1944, %v1947
    %v1949 = vsel %vm1446, %v1691, %v1691
    %v1950 = vsel %vm1450, %v1691, %v1949
    %v1951 = vrot.slane %v1692, 7
    %v1952 = vsel %vm1804, %v1951, %v1950
    %v1953 = vsel %vm1444, %v1951, %v1952
    %v1954 = vsel %vm1448, %v1951, %v1953
    %v1955 = vsel %vm1452, %v1951, %v1954
    %v1956 = vsel %vm1446, %v1693, %v1693
    %v1957 = vsel %vm1450, %v1693, %v1956
    %v1958 = vrot.slane %v1694, 7
    %v1959 = vsel %vm1804, %v1958, %v1957
    %v1960 = vsel %vm1444, %v1958, %v1959
    %v1961 = vsel %vm1448, %v1958, %v1960
    %v1962 = vsel %vm1452, %v1958, %v1961
    %v1963 = vsel %vm1446, %v1695, %v1695
    %v1964 = vsel %vm1450, %v1695, %v1963
    %v1965 = vrot.slane %v1696, 7
    %v1966 = vsel %vm1804, %v1965, %v1964
    %v1967 = vsel %vm1444, %v1965, %v1966
    %v1968 = vsel %vm1448, %v1965, %v1967
    %v1969 = vsel %vm1452, %v1965, %v1968
    %v1970 = vsel %vm1446, %v1737, %v1737
    %v1971 = vsel %vm1450, %v1737, %v1970
    %v1972 = vrot.slane %v1738, 7
    %v1973 = vsel %vm1804, %v1972, %v1971
    %v1974 = vsel %vm1444, %v1972, %v1973
    %v1975 = vsel %vm1448, %v1972, %v1974
    %v1976 = vsel %vm1452, %v1972, %v1975
    %v1977 = vsel %vm1446, %v1739, %v1739
    %v1978 = vsel %vm1450, %v1739, %v1977
    %v1979 = vrot.slane %v1740, 7
    %v1980 = vsel %vm1804, %v1979, %v1978
    %v1981 = vsel %vm1444, %v1979, %v1980
    %v1982 = vsel %vm1448, %v1979, %v1981
    %v1983 = vsel %vm1452, %v1979, %v1982
    %v1984 = vsel %vm1446, %v1741, %v1741
    %v1985 = vsel %vm1450, %v1741, %v1984
    %v1986 = vrot.slane %v1742, 7
    %v1987 = vsel %vm1804, %v1986, %v1985
    %v1988 = vsel %vm1444, %v1986, %v1987
    %v1989 = vsel %vm1448, %v1986, %v1988
    %v1990 = vsel %vm1452, %v1986, %v1989
    %v1991 = vsel %vm1446, %v1743, %v1743
    %v1992 = vsel %vm1450, %v1743, %v1991
    %v1993 = vrot.slane %v1744, 7
    %v1994 = vsel %vm1804, %v1993, %v1992
    %v1995 = vsel %vm1444, %v1993, %v1994
    %v1996 = vsel %vm1448, %v1993, %v1995
    %v1997 = vsel %vm1452, %v1993, %v1996
    %v1998 = vsel %vm1446, %v1785, %v1785
    %v1999 = vsel %vm1450, %v1785, %v1998
    %v2000 = vrot.slane %v1786, 7
    %v2001 = vsel %vm1804, %v2000, %v1999
    %v2002 = vsel %vm1444, %v2000, %v2001
    %v2003 = vsel %vm1448, %v2000, %v2002
    %v2004 = vsel %vm1452, %v2000, %v2003
    %v2005 = vsel %vm1446, %v1787, %v1787
    %v2006 = vsel %vm1450, %v1787, %v2005
    %v2007 = vrot.slane %v1788, 7
    %v2008 = vsel %vm1804, %v2007, %v2006
    %v2009 = vsel %vm1444, %v2007, %v2008
    %v2010 = vsel %vm1448, %v2007, %v2009
    %v2011 = vsel %vm1452, %v2007, %v2010
    %v2012 = vsel %vm1446, %v1789, %v1789
    %v2013 = vsel %vm1450, %v1789, %v2012
    %v2014 = vrot.slane %v1790, 7
    %v2015 = vsel %vm1804, %v2014, %v2013
    %v2016 = vsel %vm1444, %v2014, %v2015
    %v2017 = vsel %vm1448, %v2014, %v2016
    %v2018 = vsel %vm1452, %v2014, %v2017
    %v2019 = vsel %vm1446, %v1791, %v1791
    %v2020 = vsel %vm1450, %v1791, %v2019
    %v2021 = vrot.slane %v1792, 7
    %v2022 = vsel %vm1804, %v2021, %v2020
    %v2023 = vsel %vm1444, %v2021, %v2022
    %v2024 = vsel %vm1448, %v2021, %v2023
    %v2025 = vsel %vm1452, %v2021, %v2024
    %v2026 = vsel %vm1446, %v1617, %v1617
    %v2027 = vsel %vm1450, %v1617, %v2026
    %v2028 = vrot.slane %v1618, 7
    %v2029 = vsel %vm1804, %v2028, %v2027
    %v2030 = vsel %vm1444, %v2028, %v2029
    %v2031 = vsel %vm1448, %v2028, %v2030
    %v2032 = vsel %vm1452, %v2028, %v2031
    %v2033 = vsel %vm1446, %v1619, %v1619
    %v2034 = vsel %vm1450, %v1619, %v2033
    %v2035 = vrot.slane %v1620, 7
    %v2036 = vsel %vm1804, %v2035, %v2034
    %v2037 = vsel %vm1444, %v2035, %v2036
    %v2038 = vsel %vm1448, %v2035, %v2037
    %v2039 = vsel %vm1452, %v2035, %v2038
    %v2040 = vsel %vm1446, %v1621, %v1621
    %v2041 = vsel %vm1450, %v1621, %v2040
    %v2042 = vrot.slane %v1622, 7
    %v2043 = vsel %vm1804, %v2042, %v2041
    %v2044 = vsel %vm1444, %v2042, %v2043
    %v2045 = vsel %vm1448, %v2042, %v2044
    %v2046 = vsel %vm1452, %v2042, %v2045
    %v2047 = vsel %vm1446, %v1623, %v1623
    %v2048 = vsel %vm1450, %v1623, %v2047
    %v2049 = vrot.slane %v1624, 7
    %v2050 = vsel %vm1804, %v2049, %v2048
    %v2051 = vsel %vm1444, %v2049, %v2050
    %v2052 = vsel %vm1448, %v2049, %v2051
    %v2053 = vsel %vm1452, %v2049, %v2052
    %v2054 = vsel %vm1446, %v1674, %v1674
    %v2055 = vsel %vm1450, %v1674, %v2054
    %v2056 = vrot.slane %v1676, 7
    %v2057 = vsel %vm1804, %v2056, %v2055
    %v2058 = vsel %vm1444, %v2056, %v2057
    %v2059 = vsel %vm1448, %v2056, %v2058
    %v2060 = vsel %vm1452, %v2056, %v2059
    %v2061 = vsel %vm1446, %v1678, %v1678
    %v2062 = vsel %vm1450, %v1678, %v2061
    %v2063 = vrot.slane %v1680, 7
    %v2064 = vsel %vm1804, %v2063, %v2062
    %v2065 = vsel %vm1444, %v2063, %v2064
    %v2066 = vsel %vm1448, %v2063, %v2065
    %v2067 = vsel %vm1452, %v2063, %v2066
    %v2068 = vsel %vm1446, %v1682, %v1682
    %v2069 = vsel %vm1450, %v1682, %v2068
    %v2070 = vrot.slane %v1684, 7
    %v2071 = vsel %vm1804, %v2070, %v2069
    %v2072 = vsel %vm1444, %v2070, %v2071
    %v2073 = vsel %vm1448, %v2070, %v2072
    %v2074 = vsel %vm1452, %v2070, %v2073
    %v2075 = vsel %vm1446, %v1686, %v1686
    %v2076 = vsel %vm1450, %v1686, %v2075
    %v2077 = vrot.slane %v1688, 7
    %v2078 = vsel %vm1804, %v2077, %v2076
    %v2079 = vsel %vm1444, %v2077, %v2078
    %v2080 = vsel %vm1448, %v2077, %v2079
    %v2081 = vsel %vm1452, %v2077, %v2080
    %v2082 = vsel %vm1446, %v1722, %v1722
    %v2083 = vsel %vm1450, %v1722, %v2082
    %v2084 = vrot.slane %v1724, 7
    %v2085 = vsel %vm1804, %v2084, %v2083
    %v2086 = vsel %vm1444, %v2084, %v2085
    %v2087 = vsel %vm1448, %v2084, %v2086
    %v2088 = vsel %vm1452, %v2084, %v2087
    %v2089 = vsel %vm1446, %v1726, %v1726
    %v2090 = vsel %vm1450, %v1726, %v2089
    %v2091 = vrot.slane %v1728, 7
    %v2092 = vsel %vm1804, %v2091, %v2090
    %v2093 = vsel %vm1444, %v2091, %v2092
    %v2094 = vsel %vm1448, %v2091, %v2093
    %v2095 = vsel %vm1452, %v2091, %v2094
    %v2096 = vsel %vm1446, %v1730, %v1730
    %v2097 = vsel %vm1450, %v1730, %v2096
    %v2098 = vrot.slane %v1732, 7
    %v2099 = vsel %vm1804, %v2098, %v2097
    %v2100 = vsel %vm1444, %v2098, %v2099
    %v2101 = vsel %vm1448, %v2098, %v2100
    %v2102 = vsel %vm1452, %v2098, %v2101
    %v2103 = vsel %vm1446, %v1734, %v1734
    %v2104 = vsel %vm1450, %v1734, %v2103
    %v2105 = vrot.slane %v1736, 7
    %v2106 = vsel %vm1804, %v2105, %v2104
    %v2107 = vsel %vm1444, %v2105, %v2106
    %v2108 = vsel %vm1448, %v2105, %v2107
    %v2109 = vsel %vm1452, %v2105, %v2108
    %v2110 = vsel %vm1446, %v1770, %v1770
    %v2111 = vsel %vm1450, %v1770, %v2110
    %v2112 = vrot.slane %v1772, 7
    %v2113 = vsel %vm1804, %v2112, %v2111
    %v2114 = vsel %vm1444, %v2112, %v2113
    %v2115 = vsel %vm1448, %v2112, %v2114
    %v2116 = vsel %vm1452, %v2112, %v2115
    %v2117 = vsel %vm1446, %v1774, %v1774
    %v2118 = vsel %vm1450, %v1774, %v2117
    %v2119 = vrot.slane %v1776, 7
    %v2120 = vsel %vm1804, %v2119, %v2118
    %v2121 = vsel %vm1444, %v2119, %v2120
    %v2122 = vsel %vm1448, %v2119, %v2121
    %v2123 = vsel %vm1452, %v2119, %v2122
    %v2124 = vsel %vm1446, %v1778, %v1778
    %v2125 = vsel %vm1450, %v1778, %v2124
    %v2126 = vrot.slane %v1780, 7
    %v2127 = vsel %vm1804, %v2126, %v2125
    %v2128 = vsel %vm1444, %v2126, %v2127
    %v2129 = vsel %vm1448, %v2126, %v2128
    %v2130 = vsel %vm1452, %v2126, %v2129
    %v2131 = vsel %vm1446, %v1782, %v1782
    %v2132 = vsel %vm1450, %v1782, %v2131
    %v2133 = vrot.slane %v1784, 7
    %v2134 = vsel %vm1804, %v2133, %v2132
    %v2135 = vsel %vm1444, %v2133, %v2134
    %v2136 = vsel %vm1448, %v2133, %v2135
    %v2137 = vsel %vm1452, %v2133, %v2136
    %v2138 = vsel %vm1446, %v1649, %v1649
    %v2139 = vsel %vm1450, %v1649, %v2138
    %v2140 = vrot.slane %v1650, 7
    %v2141 = vsel %vm1804, %v2140, %v2139
    %v2142 = vsel %vm1444, %v2140, %v2141
    %v2143 = vsel %vm1448, %v2140, %v2142
    %v2144 = vsel %vm1452, %v2140, %v2143
    %v2145 = vsel %vm1446, %v1651, %v1651
    %v2146 = vsel %vm1450, %v1651, %v2145
    %v2147 = vrot.slane %v1652, 7
    %v2148 = vsel %vm1804, %v2147, %v2146
    %v2149 = vsel %vm1444, %v2147, %v2148
    %v2150 = vsel %vm1448, %v2147, %v2149
    %v2151 = vsel %vm1452, %v2147, %v2150
    %v2152 = vsel %vm1446, %v1653, %v1653
    %v2153 = vsel %vm1450, %v1653, %v2152
    %v2154 = vrot.slane %v1654, 7
    %v2155 = vsel %vm1804, %v2154, %v2153
    %v2156 = vsel %vm1444, %v2154, %v2155
    %v2157 = vsel %vm1448, %v2154, %v2156
    %v2158 = vsel %vm1452, %v2154, %v2157
    %v2159 = vsel %vm1446, %v1655, %v1655
    %v2160 = vsel %vm1450, %v1655, %v2159
    %v2161 = vrot.slane %v1656, 7
    %v2162 = vsel %vm1804, %v2161, %v2160
    %v2163 = vsel %vm1444, %v2161, %v2162
    %v2164 = vsel %vm1448, %v2161, %v2163
    %v2165 = vsel %vm1452, %v2161, %v2164
    %v2166 = vsel %vm1446, %v1697, %v1697
    %v2167 = vsel %vm1450, %v1697, %v2166
    %v2168 = vrot.slane %v1698, 7
    %v2169 = vsel %vm1804, %v2168, %v2167
    %v2170 = vsel %vm1444, %v2168, %v2169
    %v2171 = vsel %vm1448, %v2168, %v2170
    %v2172 = vsel %vm1452, %v2168, %v2171
    %v2173 = vsel %vm1446, %v1699, %v1699
    %v2174 = vsel %vm1450, %v1699, %v2173
    %v2175 = vrot.slane %v1700, 7
    %v2176 = vsel %vm1804, %v2175, %v2174
    %v2177 = vsel %vm1444, %v2175, %v2176
    %v2178 = vsel %vm1448, %v2175, %v2177
    %v2179 = vsel %vm1452, %v2175, %v2178
    %v2180 = vsel %vm1446, %v1701, %v1701
    %v2181 = vsel %vm1450, %v1701, %v2180
    %v2182 = vrot.slane %v1702, 7
    %v2183 = vsel %vm1804, %v2182, %v2181
    %v2184 = vsel %vm1444, %v2182, %v2183
    %v2185 = vsel %vm1448, %v2182, %v2184
    %v2186 = vsel %vm1452, %v2182, %v2185
    %v2187 = vsel %vm1446, %v1703, %v1703
    %v2188 = vsel %vm1450, %v1703, %v2187
    %v2189 = vrot.slane %v1704, 7
    %v2190 = vsel %vm1804, %v2189, %v2188
    %v2191 = vsel %vm1444, %v2189, %v2190
    %v2192 = vsel %vm1448, %v2189, %v2191
    %v2193 = vsel %vm1452, %v2189, %v2192
    %v2194 = vsel %vm1446, %v1745, %v1745
    %v2195 = vsel %vm1450, %v1745, %v2194
    %v2196 = vrot.slane %v1746, 7
    %v2197 = vsel %vm1804, %v2196, %v2195
    %v2198 = vsel %vm1444, %v2196, %v2197
    %v2199 = vsel %vm1448, %v2196, %v2198
    %v2200 = vsel %vm1452, %v2196, %v2199
    %v2201 = vsel %vm1446, %v1747, %v1747
    %v2202 = vsel %vm1450, %v1747, %v2201
    %v2203 = vrot.slane %v1748, 7
    %v2204 = vsel %vm1804, %v2203, %v2202
    %v2205 = vsel %vm1444, %v2203, %v2204
    %v2206 = vsel %vm1448, %v2203, %v2205
    %v2207 = vsel %vm1452, %v2203, %v2206
    %v2208 = vsel %vm1446, %v1749, %v1749
    %v2209 = vsel %vm1450, %v1749, %v2208
    %v2210 = vrot.slane %v1750, 7
    %v2211 = vsel %vm1804, %v2210, %v2209
    %v2212 = vsel %vm1444, %v2210, %v2211
    %v2213 = vsel %vm1448, %v2210, %v2212
    %v2214 = vsel %vm1452, %v2210, %v2213
    %v2215 = vsel %vm1446, %v1751, %v1751
    %v2216 = vsel %vm1450, %v1751, %v2215
    %v2217 = vrot.slane %v1752, 7
    %v2218 = vsel %vm1804, %v2217, %v2216
    %v2219 = vsel %vm1444, %v2217, %v2218
    %v2220 = vsel %vm1448, %v2217, %v2219
    %v2221 = vsel %vm1452, %v2217, %v2220
    %v2222 = vsel %vm1446, %v1793, %v1793
    %v2223 = vsel %vm1450, %v1793, %v2222
    %v2224 = vrot.slane %v1794, 7
    %v2225 = vsel %vm1804, %v2224, %v2223
    %v2226 = vsel %vm1444, %v2224, %v2225
    %v2227 = vsel %vm1448, %v2224, %v2226
    %v2228 = vsel %vm1452, %v2224, %v2227
    %v2229 = vsel %vm1446, %v1795, %v1795
    %v2230 = vsel %vm1450, %v1795, %v2229
    %v2231 = vrot.slane %v1796, 7
    %v2232 = vsel %vm1804, %v2231, %v2230
    %v2233 = vsel %vm1444, %v2231, %v2232
    %v2234 = vsel %vm1448, %v2231, %v2233
    %v2235 = vsel %vm1452, %v2231, %v2234
    %v2236 = vsel %vm1446, %v1797, %v1797
    %v2237 = vsel %vm1450, %v1797, %v2236
    %v2238 = vrot.slane %v1798, 7
    %v2239 = vsel %vm1804, %v2238, %v2237
    %v2240 = vsel %vm1444, %v2238, %v2239
    %v2241 = vsel %vm1448, %v2238, %v2240
    %v2242 = vsel %vm1452, %v2238, %v2241
    %v2243 = vsel %vm1446, %v1799, %v1799
    %v2244 = vsel %vm1450, %v1799, %v2243
    %v2245 = vrot.slane %v1800, 7
    %v2246 = vsel %vm1804, %v2245, %v2244
    %v2247 = vsel %vm1444, %v2245, %v2246
    %v2248 = vsel %vm1448, %v2245, %v2247
    %v2249 = vsel %vm1452, %v2245, %v2248
    %v2314 = vcombine.low %v1808, %v1836
    %v2316 = vunpack.c.l.s4 1934713408
    %v2317 = vunpack.c.0.s8 %v2316
    %v2318 = vlaneseq
    %v2319 = vshrl.u32 %v2318, 7
    %v2320 = vsub.s32 %v2317, %v2319
    %v2321 = vrot.slane %v2314, %v2320
    %v2322 = vcombine.high %v2321, 0.0
    %v2323 = vcombine.low %v1864, %v1892
    %v2325 = vunpack.c.l.s4 1934713408
    %v2326 = vunpack.c.0.s8 %v2325
    %v2327 = vlaneseq
    %v2328 = vshrl.u32 %v2327, 7
    %v2329 = vsub.s32 %v2326, %v2328
    %v2330 = vrot.slane %v2323, %v2329
    %v2331 = vcombine.high %v2330, 0.0
    %v2332 = vcombine.low %v1920, %v1948
    %v2334 = vunpack.c.l.s4 1934713408
    %v2335 = vunpack.c.0.s8 %v2334
    %v2336 = vlaneseq
    %v2337 = vshrl.u32 %v2336, 7
    %v2338 = vsub.s32 %v2335, %v2337
    %v2339 = vrot.slane %v2332, %v2338
    %v2340 = vcombine.high %v2339, 0.0
    %v2341 = vcombine.low %v1976, %v2004
    %v2343 = vunpack.c.l.s4 1934713408
    %v2344 = vunpack.c.0.s8 %v2343
    %v2345 = vlaneseq
    %v2346 = vshrl.u32 %v2345, 7
    %v2347 = vsub.s32 %v2344, %v2346
    %v2348 = vrot.slane %v2341, %v2347
    %v2349 = vcombine.high %v2348, 0.0
    %v2350 = vcombine.low %v1815, %v1843
    %v2352 = vunpack.c.l.s4 1934713408
    %v2353 = vunpack.c.0.s8 %v2352
    %v2354 = vlaneseq
    %v2355 = vshrl.u32 %v2354, 7
    %v2356 = vsub.s32 %v2353, %v2355
    %v2357 = vrot.slane %v2350, %v2356
    %v2358 = vcombine.high %v2357, 0.0
    %v2359 = vcombine.low %v1871, %v1899
    %v2361 = vunpack.c.l.s4 1934713408
    %v2362 = vunpack.c.0.s8 %v2361
    %v2363 = vlaneseq
    %v2364 = vshrl.u32 %v2363, 7
    %v2365 = vsub.s32 %v2362, %v2364
    %v2366 = vrot.slane %v2359, %v2365
    %v2367 = vcombine.high %v2366, 0.0
    %v2368 = vcombine.low %v1927, %v1955
    %v2370 = vunpack.c.l.s4 1934713408
    %v2371 = vunpack.c.0.s8 %v2370
    %v2372 = vlaneseq
    %v2373 = vshrl.u32 %v2372, 7
    %v2374 = vsub.s32 %v2371, %v2373
    %v2375 = vrot.slane %v2368, %v2374
    %v2376 = vcombine.high %v2375, 0.0
    %v2377 = vcombine.low %v1983, %v2011
    %v2379 = vunpack.c.l.s4 1934713408
    %v2380 = vunpack.c.0.s8 %v2379
    %v2381 = vlaneseq
    %v2382 = vshrl.u32 %v2381, 7
    %v2383 = vsub.s32 %v2380, %v2382
    %v2384 = vrot.slane %v2377, %v2383
    %v2385 = vcombine.high %v2384, 0.0
    %v2386 = vcombine.low %v1822, %v1850
    %v2388 = vunpack.c.l.s4 1934713408
    %v2389 = vunpack.c.0.s8 %v2388
    %v2390 = vlaneseq
    %v2391 = vshrl.u32 %v2390, 7
    %v2392 = vsub.s32 %v2389, %v2391
    %v2393 = vrot.slane %v2386, %v2392
    %v2394 = vcombine.high %v2393, 0.0
    %v2395 = vcombine.low %v1878, %v1906
    %v2397 = vunpack.c.l.s4 1934713408
    %v2398 = vunpack.c.0.s8 %v2397
    %v2399 = vlaneseq
    %v2400 = vshrl.u32 %v2399, 7
    %v2401 = vsub.s32 %v2398, %v2400
    %v2402 = vrot.slane %v2395, %v2401
    %v2403 = vcombine.high %v2402, 0.0
    %v2404 = vcombine.low %v1934, %v1962
    %v2406 = vunpack.c.l.s4 1934713408
    %v2407 = vunpack.c.0.s8 %v2406
    %v2408 = vlaneseq
    %v2409 = vshrl.u32 %v2408, 7
    %v2410 = vsub.s32 %v2407, %v2409
    %v2411 = vrot.slane %v2404, %v2410
    %v2412 = vcombine.high %v2411, 0.0
    %v2413 = vcombine.low %v1990, %v2018
    %v2415 = vunpack.c.l.s4 1934713408
    %v2416 = vunpack.c.0.s8 %v2415
    %v2417 = vlaneseq
    %v2418 = vshrl.u32 %v2417, 7
    %v2419 = vsub.s32 %v2416, %v2418
    %v2420 = vrot.slane %v2413, %v2419
    %v2421 = vcombine.high %v2420, 0.0
    %v2422 = vcombine.low %v1829, %v1857
    %v2424 = vunpack.c.l.s4 1934713408
    %v2425 = vunpack.c.0.s8 %v2424
    %v2426 = vlaneseq
    %v2427 = vshrl.u32 %v2426, 7
    %v2428 = vsub.s32 %v2425, %v2427
    %v2429 = vrot.slane %v2422, %v2428
    %v2430 = vcombine.high %v2429, 0.0
    %v2431 = vcombine.low %v1885, %v1913
    %v2433 = vunpack.c.l.s4 1934713408
    %v2434 = vunpack.c.0.s8 %v2433
    %v2435 = vlaneseq
    %v2436 = vshrl.u32 %v2435, 7
    %v2437 = vsub.s32 %v2434, %v2436
    %v2438 = vrot.slane %v2431, %v2437
    %v2439 = vcombine.high %v2438, 0.0
    %v2440 = vcombine.low %v1941, %v1969
    %v2442 = vunpack.c.l.s4 1934713408
    %v2443 = vunpack.c.0.s8 %v2442
    %v2444 = vlaneseq
    %v2445 = vshrl.u32 %v2444, 7
    %v2446 = vsub.s32 %v2443, %v2445
    %v2447 = vrot.slane %v2440, %v2446
    %v2448 = vcombine.high %v2447, 0.0
    %v2449 = vcombine.low %v1997, %v2025
    %v2451 = vunpack.c.l.s4 1934713408
    %v2452 = vunpack.c.0.s8 %v2451
    %v2453 = vlaneseq
    %v2454 = vshrl.u32 %v2453, 7
    %v2455 = vsub.s32 %v2452, %v2454
    %v2456 = vrot.slane %v2449, %v2455
    %v2457 = vcombine.high %v2456, 0.0
    %v2458 = vcombine.low %v2032, %v2060
    %v2460 = vunpack.c.l.s4 1934713408
    %v2461 = vunpack.c.0.s8 %v2460
    %v2462 = vlaneseq
    %v2463 = vshrl.u32 %v2462, 7
    %v2464 = vsub.s32 %v2461, %v2463
    %v2465 = vrot.slane %v2458, %v2464
    %v2466 = vcombine.high %v2465, 0.0
    %v2467 = vcombine.low %v2088, %v2116
    %v2469 = vunpack.c.l.s4 1934713408
    %v2470 = vunpack.c.0.s8 %v2469
    %v2471 = vlaneseq
    %v2472 = vshrl.u32 %v2471, 7
    %v2473 = vsub.s32 %v2470, %v2472
    %v2474 = vrot.slane %v2467, %v2473
    %v2475 = vcombine.high %v2474, 0.0
    %v2476 = vcombine.low %v2144, %v2172
    %v2478 = vunpack.c.l.s4 1934713408
    %v2479 = vunpack.c.0.s8 %v2478
    %v2480 = vlaneseq
    %v2481 = vshrl.u32 %v2480, 7
    %v2482 = vsub.s32 %v2479, %v2481
    %v2483 = vrot.slane %v2476, %v2482
    %v2484 = vcombine.high %v2483, 0.0
    %v2485 = vcombine.low %v2200, %v2228
    %v2487 = vunpack.c.l.s4 1934713408
    %v2488 = vunpack.c.0.s8 %v2487
    %v2489 = vlaneseq
    %v2490 = vshrl.u32 %v2489, 7
    %v2491 = vsub.s32 %v2488, %v2490
    %v2492 = vrot.slane %v2485, %v2491
    %v2493 = vcombine.high %v2492, 0.0
    %v2494 = vcombine.low %v2039, %v2067
    %v2496 = vunpack.c.l.s4 1934713408
    %v2497 = vunpack.c.0.s8 %v2496
    %v2498 = vlaneseq
    %v2499 = vshrl.u32 %v2498, 7
    %v2500 = vsub.s32 %v2497, %v2499
    %v2501 = vrot.slane %v2494, %v2500
    %v2502 = vcombine.high %v2501, 0.0
    %v2503 = vcombine.low %v2095, %v2123
    %v2505 = vunpack.c.l.s4 1934713408
    %v2506 = vunpack.c.0.s8 %v2505
    %v2507 = vlaneseq
    %v2508 = vshrl.u32 %v2507, 7
    %v2509 = vsub.s32 %v2506, %v2508
    %v2510 = vrot.slane %v2503, %v2509
    %v2511 = vcombine.high %v2510, 0.0
    %v2512 = vcombine.low %v2151, %v2179
    %v2514 = vunpack.c.l.s4 1934713408
    %v2515 = vunpack.c.0.s8 %v2514
    %v2516 = vlaneseq
    %v2517 = vshrl.u32 %v2516, 7
    %v2518 = vsub.s32 %v2515, %v2517
    %v2519 = vrot.slane %v2512, %v2518
    %v2520 = vcombine.high %v2519, 0.0
    %v2521 = vcombine.low %v2207, %v2235
    %v2523 = vunpack.c.l.s4 1934713408
    %v2524 = vunpack.c.0.s8 %v2523
    %v2525 = vlaneseq
    %v2526 = vshrl.u32 %v2525, 7
    %v2527 = vsub.s32 %v2524, %v2526
    %v2528 = vrot.slane %v2521, %v2527
    %v2529 = vcombine.high %v2528, 0.0
    %v2530 = vcombine.low %v2046, %v2074
    %v2532 = vunpack.c.l.s4 1934713408
    %v2533 = vunpack.c.0.s8 %v2532
    %v2534 = vlaneseq
    %v2535 = vshrl.u32 %v2534, 7
    %v2536 = vsub.s32 %v2533, %v2535
    %v2537 = vrot.slane %v2530, %v2536
    %v2538 = vcombine.high %v2537, 0.0
    %v2539 = vcombine.low %v2102, %v2130
    %v2541 = vunpack.c.l.s4 1934713408
    %v2542 = vunpack.c.0.s8 %v2541
    %v2543 = vlaneseq
    %v2544 = vshrl.u32 %v2543, 7
    %v2545 = vsub.s32 %v2542, %v2544
    %v2546 = vrot.slane %v2539, %v2545
    %v2547 = vcombine.high %v2546, 0.0
    %v2548 = vcombine.low %v2158, %v2186
    %v2550 = vunpack.c.l.s4 1934713408
    %v2551 = vunpack.c.0.s8 %v2550
    %v2552 = vlaneseq
    %v2553 = vshrl.u32 %v2552, 7
    %v2554 = vsub.s32 %v2551, %v2553
    %v2555 = vrot.slane %v2548, %v2554
    %v2556 = vcombine.high %v2555, 0.0
    %v2557 = vcombine.low %v2214, %v2242
    %v2559 = vunpack.c.l.s4 1934713408
    %v2560 = vunpack.c.0.s8 %v2559
    %v2561 = vlaneseq
    %v2562 = vshrl.u32 %v2561, 7
    %v2563 = vsub.s32 %v2560, %v2562
    %v2564 = vrot.slane %v2557, %v2563
    %v2565 = vcombine.high %v2564, 0.0
    %v2566 = vcombine.low %v2053, %v2081
    %v2568 = vunpack.c.l.s4 1934713408
    %v2569 = vunpack.c.0.s8 %v2568
    %v2570 = vlaneseq
    %v2571 = vshrl.u32 %v2570, 7
    %v2572 = vsub.s32 %v2569, %v2571
    %v2573 = vrot.slane %v2566, %v2572
    %v2574 = vcombine.high %v2573, 0.0
    %v2575 = vcombine.low %v2109, %v2137
    %v2577 = vunpack.c.l.s4 1934713408
    %v2578 = vunpack.c.0.s8 %v2577
    %v2579 = vlaneseq
    %v2580 = vshrl.u32 %v2579, 7
    %v2581 = vsub.s32 %v2578, %v2580
    %v2582 = vrot.slane %v2575, %v2581
    %v2583 = vcombine.high %v2582, 0.0
    %v2584 = vcombine.low %v2165, %v2193
    %v2586 = vunpack.c.l.s4 1934713408
    %v2587 = vunpack.c.0.s8 %v2586
    %v2588 = vlaneseq
    %v2589 = vshrl.u32 %v2588, 7
    %v2590 = vsub.s32 %v2587, %v2589
    %v2591 = vrot.slane %v2584, %v2590
    %v2592 = vcombine.high %v2591, 0.0
    %v2593 = vcombine.low %v2221, %v2249
    %v2595 = vunpack.c.l.s4 1934713408
    %v2596 = vunpack.c.0.s8 %v2595
    %v2597 = vlaneseq
    %v2598 = vshrl.u32 %v2597, 7
    %v2599 = vsub.s32 %v2596, %v2598
    %v2600 = vrot.slane %v2593, %v2599
    %v2601 = vcombine.high %v2600, 0.0
    %v2666 = vcombine.low %v2321, %v2330
    %v2667 = vcombine.low %v2339, %v2348
    %v2669 = vunpack.c.l.s4 1983009808
    %v2670 = vunpack.c.0.s8 %v2669
    %v2671 = vlaneseq
    %v2672 = vshrl.u32 %v2671, 7
    %v2673 = vsub.s32 %v2670, %v2672
    %v2674 = vrot.slane %v2666, %v2673
    %v2676 = vunpack.c.l.s4 1983009808
    %v2677 = vunpack.c.0.s8 %v2676
    %v2678 = vlaneseq
    %v2679 = vshrl.u32 %v2678, 7
    %v2680 = vsub.s32 %v2677, %v2679
    %v2681 = vrot.slane %v2667, %v2680
    %v2682 = vcombine.low %v2674, %v2681
    %v2683 = vcombine.low %v2322, %v2331
    %v2684 = vcombine.low %v2340, %v2349
    %v2686 = vunpack.c.l.s4 1983009808
    %v2687 = vunpack.c.0.s8 %v2686
    %v2688 = vlaneseq
    %v2689 = vshrl.u32 %v2688, 7
    %v2690 = vsub.s32 %v2687, %v2689
    %v2691 = vrot.slane %v2683, %v2690
    %v2693 = vunpack.c.l.s4 1983009808
    %v2694 = vunpack.c.0.s8 %v2693
    %v2695 = vlaneseq
    %v2696 = vshrl.u32 %v2695, 7
    %v2697 = vsub.s32 %v2694, %v2696
    %v2698 = vrot.slane %v2684, %v2697
    %v2699 = vcombine.low %v2691, %v2698
    %v2700 = vcombine.low %v2357, %v2366
    %v2701 = vcombine.low %v2375, %v2384
    %v2703 = vunpack.c.l.s4 1983009808
    %v2704 = vunpack.c.0.s8 %v2703
    %v2705 = vlaneseq
    %v2706 = vshrl.u32 %v2705, 7
    %v2707 = vsub.s32 %v2704, %v2706
    %v2708 = vrot.slane %v2700, %v2707
    %v2710 = vunpack.c.l.s4 1983009808
    %v2711 = vunpack.c.0.s8 %v2710
    %v2712 = vlaneseq
    %v2713 = vshrl.u32 %v2712, 7
    %v2714 = vsub.s32 %v2711, %v2713
    %v2715 = vrot.slane %v2701, %v2714
    %v2716 = vcombine.low %v2708, %v2715
    %v2717 = vcombine.low %v2358, %v2367
    %v2718 = vcombine.low %v2376, %v2385
    %v2720 = vunpack.c.l.s4 1983009808
    %v2721 = vunpack.c.0.s8 %v2720
    %v2722 = vlaneseq
    %v2723 = vshrl.u32 %v2722, 7
    %v2724 = vsub.s32 %v2721, %v2723
    %v2725 = vrot.slane %v2717, %v2724
    %v2727 = vunpack.c.l.s4 1983009808
    %v2728 = vunpack.c.0.s8 %v2727
    %v2729 = vlaneseq
    %v2730 = vshrl.u32 %v2729, 7
    %v2731 = vsub.s32 %v2728, %v2730
    %v2732 = vrot.slane %v2718, %v2731
    %v2733 = vcombine.low %v2725, %v2732
    %v2734 = vcombine.low %v2393, %v2402
    %v2735 = vcombine.low %v2411, %v2420
    %v2737 = vunpack.c.l.s4 1983009808
    %v2738 = vunpack.c.0.s8 %v2737
    %v2739 = vlaneseq
    %v2740 = vshrl.u32 %v2739, 7
    %v2741 = vsub.s32 %v2738, %v2740
    %v2742 = vrot.slane %v2734, %v2741
    %v2744 = vunpack.c.l.s4 1983009808
    %v2745 = vunpack.c.0.s8 %v2744
    %v2746 = vlaneseq
    %v2747 = vshrl.u32 %v2746, 7
    %v2748 = vsub.s32 %v2745, %v2747
    %v2749 = vrot.slane %v2735, %v2748
    %v2750 = vcombine.low %v2742, %v2749
    %v2751 = vcombine.low %v2394, %v2403
    %v2752 = vcombine.low %v2412, %v2421
    %v2754 = vunpack.c.l.s4 1983009808
    %v2755 = vunpack.c.0.s8 %v2754
    %v2756 = vlaneseq
    %v2757 = vshrl.u32 %v2756, 7
    %v2758 = vsub.s32 %v2755, %v2757
    %v2759 = vrot.slane %v2751, %v2758
    %v2761 = vunpack.c.l.s4 1983009808
    %v2762 = vunpack.c.0.s8 %v2761
    %v2763 = vlaneseq
    %v2764 = vshrl.u32 %v2763, 7
    %v2765 = vsub.s32 %v2762, %v2764
    %v2766 = vrot.slane %v2752, %v2765
    %v2767 = vcombine.low %v2759, %v2766
    %v2768 = vcombine.low %v2429, %v2438
    %v2769 = vcombine.low %v2447, %v2456
    %v2771 = vunpack.c.l.s4 1983009808
    %v2772 = vunpack.c.0.s8 %v2771
    %v2773 = vlaneseq
    %v2774 = vshrl.u32 %v2773, 7
    %v2775 = vsub.s32 %v2772, %v2774
    %v2776 = vrot.slane %v2768, %v2775
    %v2778 = vunpack.c.l.s4 1983009808
    %v2779 = vunpack.c.0.s8 %v2778
    %v2780 = vlaneseq
    %v2781 = vshrl.u32 %v2780, 7
    %v2782 = vsub.s32 %v2779, %v2781
    %v2783 = vrot.slane %v2769, %v2782
    %v2784 = vcombine.low %v2776, %v2783
    %v2785 = vcombine.low %v2430, %v2439
    %v2786 = vcombine.low %v2448, %v2457
    %v2788 = vunpack.c.l.s4 1983009808
    %v2789 = vunpack.c.0.s8 %v2788
    %v2790 = vlaneseq
    %v2791 = vshrl.u32 %v2790, 7
    %v2792 = vsub.s32 %v2789, %v2791
    %v2793 = vrot.slane %v2785, %v2792
    %v2795 = vunpack.c.l.s4 1983009808
    %v2796 = vunpack.c.0.s8 %v2795
    %v2797 = vlaneseq
    %v2798 = vshrl.u32 %v2797, 7
    %v2799 = vsub.s32 %v2796, %v2798
    %v2800 = vrot.slane %v2786, %v2799
    %v2801 = vcombine.low %v2793, %v2800
    %v2802 = vcombine.low %v2465, %v2474
    %v2803 = vcombine.low %v2483, %v2492
    %v2805 = vunpack.c.l.s4 1983009808
    %v2806 = vunpack.c.0.s8 %v2805
    %v2807 = vlaneseq
    %v2808 = vshrl.u32 %v2807, 7
    %v2809 = vsub.s32 %v2806, %v2808
    %v2810 = vrot.slane %v2802, %v2809
    %v2812 = vunpack.c.l.s4 1983009808
    %v2813 = vunpack.c.0.s8 %v2812
    %v2814 = vlaneseq
    %v2815 = vshrl.u32 %v2814, 7
    %v2816 = vsub.s32 %v2813, %v2815
    %v2817 = vrot.slane %v2803, %v2816
    %v2818 = vcombine.low %v2810, %v2817
    %v2819 = vcombine.low %v2466, %v2475
    %v2820 = vcombine.low %v2484, %v2493
    %v2822 = vunpack.c.l.s4 1983009808
    %v2823 = vunpack.c.0.s8 %v2822
    %v2824 = vlaneseq
    %v2825 = vshrl.u32 %v2824, 7
    %v2826 = vsub.s32 %v2823, %v2825
    %v2827 = vrot.slane %v2819, %v2826
    %v2829 = vunpack.c.l.s4 1983009808
    %v2830 = vunpack.c.0.s8 %v2829
    %v2831 = vlaneseq
    %v2832 = vshrl.u32 %v2831, 7
    %v2833 = vsub.s32 %v2830, %v2832
    %v2834 = vrot.slane %v2820, %v2833
    %v2835 = vcombine.low %v2827, %v2834
    %v2836 = vcombine.low %v2501, %v2510
    %v2837 = vcombine.low %v2519, %v2528
    %v2839 = vunpack.c.l.s4 1983009808
    %v2840 = vunpack.c.0.s8 %v2839
    %v2841 = vlaneseq
    %v2842 = vshrl.u32 %v2841, 7
    %v2843 = vsub.s32 %v2840, %v2842
    %v2844 = vrot.slane %v2836, %v2843
    %v2846 = vunpack.c.l.s4 1983009808
    %v2847 = vunpack.c.0.s8 %v2846
    %v2848 = vlaneseq
    %v2849 = vshrl.u32 %v2848, 7
    %v2850 = vsub.s32 %v2847, %v2849
    %v2851 = vrot.slane %v2837, %v2850
    %v2852 = vcombine.low %v2844, %v2851
    %v2853 = vcombine.low %v2502, %v2511
    %v2854 = vcombine.low %v2520, %v2529
    %v2856 = vunpack.c.l.s4 1983009808
    %v2857 = vunpack.c.0.s8 %v2856
    %v2858 = vlaneseq
    %v2859 = vshrl.u32 %v2858, 7
    %v2860 = vsub.s32 %v2857, %v2859
    %v2861 = vrot.slane %v2853, %v2860
    %v2863 = vunpack.c.l.s4 1983009808
    %v2864 = vunpack.c.0.s8 %v2863
    %v2865 = vlaneseq
    %v2866 = vshrl.u32 %v2865, 7
    %v2867 = vsub.s32 %v2864, %v2866
    %v2868 = vrot.slane %v2854, %v2867
    %v2869 = vcombine.low %v2861, %v2868
    %v2870 = vcombine.low %v2537, %v2546
    %v2871 = vcombine.low %v2555, %v2564
    %v2873 = vunpack.c.l.s4 1983009808
    %v2874 = vunpack.c.0.s8 %v2873
    %v2875 = vlaneseq
    %v2876 = vshrl.u32 %v2875, 7
    %v2877 = vsub.s32 %v2874, %v2876
    %v2878 = vrot.slane %v2870, %v2877
    %v2880 = vunpack.c.l.s4 1983009808
    %v2881 = vunpack.c.0.s8 %v2880
    %v2882 = vlaneseq
    %v2883 = vshrl.u32 %v2882, 7
    %v2884 = vsub.s32 %v2881, %v2883
    %v2885 = vrot.slane %v2871, %v2884
    %v2886 = vcombine.low %v2878, %v2885
    %v2887 = vcombine.low %v2538, %v2547
    %v2888 = vcombine.low %v2556, %v2565
    %v2890 = vunpack.c.l.s4 1983009808
    %v2891 = vunpack.c.0.s8 %v2890
    %v2892 = vlaneseq
    %v2893 = vshrl.u32 %v2892, 7
    %v2894 = vsub.s32 %v2891, %v2893
    %v2895 = vrot.slane %v2887, %v2894
    %v2897 = vunpack.c.l.s4 1983009808
    %v2898 = vunpack.c.0.s8 %v2897
    %v2899 = vlaneseq
    %v2900 = vshrl.u32 %v2899, 7
    %v2901 = vsub.s32 %v2898, %v2900
    %v2902 = vrot.slane %v2888, %v2901
    %v2903 = vcombine.low %v2895, %v2902
    %v2904 = vcombine.low %v2573, %v2582
    %v2905 = vcombine.low %v2591, %v2600
    %v2907 = vunpack.c.l.s4 1983009808
    %v2908 = vunpack.c.0.s8 %v2907
    %v2909 = vlaneseq
    %v2910 = vshrl.u32 %v2909, 7
    %v2911 = vsub.s32 %v2908, %v2910
    %v2912 = vrot.slane %v2904, %v2911
    %v2914 = vunpack.c.l.s4 1983009808
    %v2915 = vunpack.c.0.s8 %v2914
    %v2916 = vlaneseq
    %v2917 = vshrl.u32 %v2916, 7
    %v2918 = vsub.s32 %v2915, %v2917
    %v2919 = vrot.slane %v2905, %v2918
    %v2920 = vcombine.low %v2912, %v2919
    %v2921 = vcombine.low %v2574, %v2583
    %v2922 = vcombine.low %v2592, %v2601
    %v2924 = vunpack.c.l.s4 1983009808
    %v2925 = vunpack.c.0.s8 %v2924
    %v2926 = vlaneseq
    %v2927 = vshrl.u32 %v2926, 7
    %v2928 = vsub.s32 %v2925, %v2927
    %v2929 = vrot.slane %v2921, %v2928
    %v2931 = vunpack.c.l.s4 1983009808
    %v2932 = vunpack.c.0.s8 %v2931
    %v2933 = vlaneseq
    %v2934 = vshrl.u32 %v2933, 7
    %v2935 = vsub.s32 %v2932, %v2934
    %v2936 = vrot.slane %v2922, %v2935
    %v2937 = vcombine.low %v2929, %v2936
    %v2938 = vrot.slane %v2682, 7
    %v2939 = vrot.slane %v2699, 7
    %v2940 = vrot.slane %v2716, 7
    %v2941 = vrot.slane %v2733, 7
    %v2942 = vrot.slane %v2750, 7
    %v2943 = vrot.slane %v2767, 7
    %v2944 = vrot.slane %v2784, 7
    %v2945 = vrot.slane %v2801, 7
    %v2946 = vrot.slane %v2818, 7
    %v2947 = vrot.slane %v2835, 7
    %v2948 = vrot.slane %v2852, 7
    %v2949 = vrot.slane %v2869, 7
    %v2950 = vrot.slane %v2886, 7
    %v2951 = vrot.slane %v2903, 7
    %v2952 = vrot.slane %v2920, 7
    %v2953 = vrot.slane %v2937, 7
    %2954 = vrot.lane.b32.xlu0 %v2938, 112
    %v2955 = vpop.permute.xlu0 %2954
    %2956 = vrot.lane.b32.xlu0 %v2939, 112
    %v2957 = vpop.permute.xlu0 %2956
    %2958 = vrot.lane.b32.xlu0 %v2940, 112
    %v2959 = vpop.permute.xlu0 %2958
    %2960 = vrot.lane.b32.xlu0 %v2941, 112
    %v2961 = vpop.permute.xlu0 %2960
    %2962 = vrot.lane.b32.xlu0 %v2942, 112
    %v2963 = vpop.permute.xlu0 %2962
    %2964 = vrot.lane.b32.xlu0 %v2943, 112
    %v2965 = vpop.permute.xlu0 %2964
    %2966 = vrot.lane.b32.xlu0 %v2944, 112
    %v2967 = vpop.permute.xlu0 %2966
    %2968 = vrot.lane.b32.xlu0 %v2945, 112
    %v2969 = vpop.permute.xlu0 %2968
    %2970 = vrot.lane.b32.xlu0 %v2946, 112
    %v2971 = vpop.permute.xlu0 %2970
    %2972 = vrot.lane.b32.xlu0 %v2947, 112
    %v2973 = vpop.permute.xlu0 %2972
    %2974 = vrot.lane.b32.xlu0 %v2948, 112
    %v2975 = vpop.permute.xlu0 %2974
    %2976 = vrot.lane.b32.xlu0 %v2949, 112
    %v2977 = vpop.permute.xlu0 %2976
    %2978 = vrot.lane.b32.xlu0 %v2950, 112
    %v2979 = vpop.permute.xlu0 %2978
    %2980 = vrot.lane.b32.xlu0 %v2951, 112
    %v2981 = vpop.permute.xlu0 %2980
    %2982 = vrot.lane.b32.xlu0 %v2952, 112
    %v2983 = vpop.permute.xlu0 %2982
    %2984 = vrot.lane.b32.xlu0 %v2953, 112
    %v2985 = vpop.permute.xlu0 %2984
    %v3002 = vsel %vm1476, 0.0, %v2955
    %v3003 = vsel %vm1476, 0.0, %v2957
    %v3004 = vsel %vm1476, 0.0, %v2959
    %v3005 = vsel %vm1476, 0.0, %v2961
    %v3006 = vsel %vm1476, 0.0, %v2963
    %v3007 = vsel %vm1476, 0.0, %v2965
    %v3008 = vsel %vm1476, 0.0, %v2967
    %v3009 = vsel %vm1476, 0.0, %v2969
    %v3010 = vsel %vm1476, 0.0, %v2971
    %v3011 = vsel %vm1476, 0.0, %v2973
    %v3012 = vsel %vm1476, 0.0, %v2975
    %v3013 = vsel %vm1476, 0.0, %v2977
    %v3014 = vsel %vm1476, 0.0, %v2979
    %v3015 = vsel %vm1476, 0.0, %v2981
    %v3016 = vsel %vm1476, 0.0, %v2983
    %v3017 = vsel %vm1476, 0.0, %v2985
    %3018 = vrot.lane.b32.xlu0 %v2321, 112
    %v3019 = vpop.permute.xlu0 %3018
    %3020 = vrot.lane.b32.xlu0 %v2330, 112
    %v3021 = vpop.permute.xlu0 %3020
    %3022 = vrot.lane.b32.xlu0 %v2339, 112
    %v3023 = vpop.permute.xlu0 %3022
    %3024 = vrot.lane.b32.xlu0 %v2348, 112
    %v3025 = vpop.permute.xlu0 %3024
    %3026 = vrot.lane.b32.xlu0 %v2322, 112
    %v3027 = vpop.permute.xlu0 %3026
    %3028 = vrot.lane.b32.xlu0 %v2331, 112
    %v3029 = vpop.permute.xlu0 %3028
    %3030 = vrot.lane.b32.xlu0 %v2340, 112
    %v3031 = vpop.permute.xlu0 %3030
    %3032 = vrot.lane.b32.xlu0 %v2349, 112
    %v3033 = vpop.permute.xlu0 %3032
    %3034 = vrot.lane.b32.xlu0 %v2357, 112
    %v3035 = vpop.permute.xlu0 %3034
    %3036 = vrot.lane.b32.xlu0 %v2366, 112
    %v3037 = vpop.permute.xlu0 %3036
    %3038 = vrot.lane.b32.xlu0 %v2375, 112
    %v3039 = vpop.permute.xlu0 %3038
    %3040 = vrot.lane.b32.xlu0 %v2384, 112
    %v3041 = vpop.permute.xlu0 %3040
    %3042 = vrot.lane.b32.xlu0 %v2358, 112
    %v3043 = vpop.permute.xlu0 %3042
    %3044 = vrot.lane.b32.xlu0 %v2367, 112
    %v3045 = vpop.permute.xlu0 %3044
    %3046 = vrot.lane.b32.xlu0 %v2376, 112
    %v3047 = vpop.permute.xlu0 %3046
    %3048 = vrot.lane.b32.xlu0 %v2385, 112
    %v3049 = vpop.permute.xlu0 %3048
    %3050 = vrot.lane.b32.xlu0 %v2393, 112
    %v3051 = vpop.permute.xlu0 %3050
    %3052 = vrot.lane.b32.xlu0 %v2402, 112
    %v3053 = vpop.permute.xlu0 %3052
    %3054 = vrot.lane.b32.xlu0 %v2411, 112
    %v3055 = vpop.permute.xlu0 %3054
    %3056 = vrot.lane.b32.xlu0 %v2420, 112
    %v3057 = vpop.permute.xlu0 %3056
    %3058 = vrot.lane.b32.xlu0 %v2394, 112
    %v3059 = vpop.permute.xlu0 %3058
    %3060 = vrot.lane.b32.xlu0 %v2403, 112
    %v3061 = vpop.permute.xlu0 %3060
    %3062 = vrot.lane.b32.xlu0 %v2412, 112
    %v3063 = vpop.permute.xlu0 %3062
    %3064 = vrot.lane.b32.xlu0 %v2421, 112
    %v3065 = vpop.permute.xlu0 %3064
    %3066 = vrot.lane.b32.xlu0 %v2429, 112
    %v3067 = vpop.permute.xlu0 %3066
    %3068 = vrot.lane.b32.xlu0 %v2438, 112
    %v3069 = vpop.permute.xlu0 %3068
    %3070 = vrot.lane.b32.xlu0 %v2447, 112
    %v3071 = vpop.permute.xlu0 %3070
    %3072 = vrot.lane.b32.xlu0 %v2456, 112
    %v3073 = vpop.permute.xlu0 %3072
    %3074 = vrot.lane.b32.xlu0 %v2430, 112
    %v3075 = vpop.permute.xlu0 %3074
    %3076 = vrot.lane.b32.xlu0 %v2439, 112
    %v3077 = vpop.permute.xlu0 %3076
    %3078 = vrot.lane.b32.xlu0 %v2448, 112
    %v3079 = vpop.permute.xlu0 %3078
    %3080 = vrot.lane.b32.xlu0 %v2457, 112
    %v3081 = vpop.permute.xlu0 %3080
    %3082 = vrot.lane.b32.xlu0 %v2465, 112
    %v3083 = vpop.permute.xlu0 %3082
    %3084 = vrot.lane.b32.xlu0 %v2474, 112
    %v3085 = vpop.permute.xlu0 %3084
    %3086 = vrot.lane.b32.xlu0 %v2483, 112
    %v3087 = vpop.permute.xlu0 %3086
    %3088 = vrot.lane.b32.xlu0 %v2492, 112
    %v3089 = vpop.permute.xlu0 %3088
    %3090 = vrot.lane.b32.xlu0 %v2466, 112
    %v3091 = vpop.permute.xlu0 %3090
    %3092 = vrot.lane.b32.xlu0 %v2475, 112
    %v3093 = vpop.permute.xlu0 %3092
    %3094 = vrot.lane.b32.xlu0 %v2484, 112
    %v3095 = vpop.permute.xlu0 %3094
    %3096 = vrot.lane.b32.xlu0 %v2493, 112
    %v3097 = vpop.permute.xlu0 %3096
    %3098 = vrot.lane.b32.xlu0 %v2501, 112
    %v3099 = vpop.permute.xlu0 %3098
    %3100 = vrot.lane.b32.xlu0 %v2510, 112
    %v3101 = vpop.permute.xlu0 %3100
    %3102 = vrot.lane.b32.xlu0 %v2519, 112
    %v3103 = vpop.permute.xlu0 %3102
    %3104 = vrot.lane.b32.xlu0 %v2528, 112
    %v3105 = vpop.permute.xlu0 %3104
    %3106 = vrot.lane.b32.xlu0 %v2502, 112
    %v3107 = vpop.permute.xlu0 %3106
    %3108 = vrot.lane.b32.xlu0 %v2511, 112
    %v3109 = vpop.permute.xlu0 %3108
    %3110 = vrot.lane.b32.xlu0 %v2520, 112
    %v3111 = vpop.permute.xlu0 %3110
    %3112 = vrot.lane.b32.xlu0 %v2529, 112
    %v3113 = vpop.permute.xlu0 %3112
    %3114 = vrot.lane.b32.xlu0 %v2537, 112
    %v3115 = vpop.permute.xlu0 %3114
    %3116 = vrot.lane.b32.xlu0 %v2546, 112
    %v3117 = vpop.permute.xlu0 %3116
    %3118 = vrot.lane.b32.xlu0 %v2555, 112
    %v3119 = vpop.permute.xlu0 %3118
    %3120 = vrot.lane.b32.xlu0 %v2564, 112
    %v3121 = vpop.permute.xlu0 %3120
    %3122 = vrot.lane.b32.xlu0 %v2538, 112
    %v3123 = vpop.permute.xlu0 %3122
    %3124 = vrot.lane.b32.xlu0 %v2547, 112
    %v3125 = vpop.permute.xlu0 %3124
    %3126 = vrot.lane.b32.xlu0 %v2556, 112
    %v3127 = vpop.permute.xlu0 %3126
    %3128 = vrot.lane.b32.xlu0 %v2565, 112
    %v3129 = vpop.permute.xlu0 %3128
    %3130 = vrot.lane.b32.xlu0 %v2573, 112
    %v3131 = vpop.permute.xlu0 %3130
    %3132 = vrot.lane.b32.xlu0 %v2582, 112
    %v3133 = vpop.permute.xlu0 %3132
    %3134 = vrot.lane.b32.xlu0 %v2591, 112
    %v3135 = vpop.permute.xlu0 %3134
    %3136 = vrot.lane.b32.xlu0 %v2600, 112
    %v3137 = vpop.permute.xlu0 %3136
    %3138 = vrot.lane.b32.xlu0 %v2574, 112
    %v3139 = vpop.permute.xlu0 %3138
    %3140 = vrot.lane.b32.xlu0 %v2583, 112
    %v3141 = vpop.permute.xlu0 %3140
    %3142 = vrot.lane.b32.xlu0 %v2592, 112
    %v3143 = vpop.permute.xlu0 %3142
    %3144 = vrot.lane.b32.xlu0 %v2601, 112
    %v3145 = vpop.permute.xlu0 %3144
    %v3210 = vmax.f32 %v2321, %v3019
    %v3211 = vmax.f32 %v2330, %v3021
    %v3212 = vmax.f32 %v2339, %v3023
    %v3213 = vmax.f32 %v2348, %v3025
    %v3214 = vmax.f32 %v2322, %v3027
    %v3215 = vmax.f32 %v2331, %v3029
    %v3216 = vmax.f32 %v2340, %v3031
    %v3217 = vmax.f32 %v2349, %v3033
    %v3218 = vmax.f32 %v2357, %v3035
    %v3219 = vmax.f32 %v2366, %v3037
    %v3220 = vmax.f32 %v2375, %v3039
    %v3221 = vmax.f32 %v2384, %v3041
    %v3222 = vmax.f32 %v2358, %v3043
    %v3223 = vmax.f32 %v2367, %v3045
    %v3224 = vmax.f32 %v2376, %v3047
    %v3225 = vmax.f32 %v2385, %v3049
    %v3226 = vmax.f32 %v2393, %v3051
    %v3227 = vmax.f32 %v2402, %v3053
    %v3228 = vmax.f32 %v2411, %v3055
    %v3229 = vmax.f32 %v2420, %v3057
    %v3230 = vmax.f32 %v2394, %v3059
    %v3231 = vmax.f32 %v2403, %v3061
    %v3232 = vmax.f32 %v2412, %v3063
    %v3233 = vmax.f32 %v2421, %v3065
    %v3234 = vmax.f32 %v2429, %v3067
    %v3235 = vmax.f32 %v2438, %v3069
    %v3236 = vmax.f32 %v2447, %v3071
    %v3237 = vmax.f32 %v2456, %v3073
    %v3238 = vmax.f32 %v2430, %v3075
    %v3239 = vmax.f32 %v2439, %v3077
    %v3240 = vmax.f32 %v2448, %v3079
    %v3241 = vmax.f32 %v2457, %v3081
    %v3242 = vmax.f32 %v2465, %v3083
    %v3243 = vmax.f32 %v2474, %v3085
    %v3244 = vmax.f32 %v2483, %v3087
    %v3245 = vmax.f32 %v2492, %v3089
    %v3246 = vmax.f32 %v2466, %v3091
    %v3247 = vmax.f32 %v2475, %v3093
    %v3248 = vmax.f32 %v2484, %v3095
    %v3249 = vmax.f32 %v2493, %v3097
    %v3250 = vmax.f32 %v2501, %v3099
    %v3251 = vmax.f32 %v2510, %v3101
    %v3252 = vmax.f32 %v2519, %v3103
    %v3253 = vmax.f32 %v2528, %v3105
    %v3254 = vmax.f32 %v2502, %v3107
    %v3255 = vmax.f32 %v2511, %v3109
    %v3256 = vmax.f32 %v2520, %v3111
    %v3257 = vmax.f32 %v2529, %v3113
    %v3258 = vmax.f32 %v2537, %v3115
    %v3259 = vmax.f32 %v2546, %v3117
    %v3260 = vmax.f32 %v2555, %v3119
    %v3261 = vmax.f32 %v2564, %v3121
    %v3262 = vmax.f32 %v2538, %v3123
    %v3263 = vmax.f32 %v2547, %v3125
    %v3264 = vmax.f32 %v2556, %v3127
    %v3265 = vmax.f32 %v2565, %v3129
    %v3266 = vmax.f32 %v2573, %v3131
    %v3267 = vmax.f32 %v2582, %v3133
    %v3268 = vmax.f32 %v2591, %v3135
    %v3269 = vmax.f32 %v2600, %v3137
    %v3270 = vmax.f32 %v2574, %v3139
    %v3271 = vmax.f32 %v2583, %v3141
    %v3272 = vmax.f32 %v2592, %v3143
    %v3273 = vmax.f32 %v2601, %v3145
    %v3290 = vcombine.high %v3002, %v3002
    %v3292 = vunpack.c.l.s4 1983009808
    %v3293 = vunpack.c.0.s8 %v3292
    %v3294 = vlaneseq
    %v3295 = vshrl.u32 %v3294, 7
    %v3296 = vsub.s32 %v3293, %v3295
    %v3297 = vrot.slane %v3002, %v3296
    %v3299 = vunpack.c.l.s4 1983009808
    %v3300 = vunpack.c.0.s8 %v3299
    %v3301 = vlaneseq
    %v3302 = vshrl.u32 %v3301, 7
    %v3303 = vsub.s32 %v3300, %v3302
    %v3304 = vrot.slane %v3290, %v3303
    %v3305 = vcombine.high %v3297, %v3297
    %v3306 = vcombine.high %v3304, %v3304
    %v3307 = vcombine.high %v3003, %v3003
    %v3309 = vunpack.c.l.s4 1983009808
    %v3310 = vunpack.c.0.s8 %v3309
    %v3311 = vlaneseq
    %v3312 = vshrl.u32 %v3311, 7
    %v3313 = vsub.s32 %v3310, %v3312
    %v3314 = vrot.slane %v3003, %v3313
    %v3316 = vunpack.c.l.s4 1983009808
    %v3317 = vunpack.c.0.s8 %v3316
    %v3318 = vlaneseq
    %v3319 = vshrl.u32 %v3318, 7
    %v3320 = vsub.s32 %v3317, %v3319
    %v3321 = vrot.slane %v3307, %v3320
    %v3322 = vcombine.high %v3314, %v3314
    %v3323 = vcombine.high %v3321, %v3321
    %v3324 = vcombine.high %v3004, %v3004
    %v3326 = vunpack.c.l.s4 1983009808
    %v3327 = vunpack.c.0.s8 %v3326
    %v3328 = vlaneseq
    %v3329 = vshrl.u32 %v3328, 7
    %v3330 = vsub.s32 %v3327, %v3329
    %v3331 = vrot.slane %v3004, %v3330
    %v3333 = vunpack.c.l.s4 1983009808
    %v3334 = vunpack.c.0.s8 %v3333
    %v3335 = vlaneseq
    %v3336 = vshrl.u32 %v3335, 7
    %v3337 = vsub.s32 %v3334, %v3336
    %v3338 = vrot.slane %v3324, %v3337
    %v3339 = vcombine.high %v3331, %v3331
    %v3340 = vcombine.high %v3338, %v3338
    %v3341 = vcombine.high %v3005, %v3005
    %v3343 = vunpack.c.l.s4 1983009808
    %v3344 = vunpack.c.0.s8 %v3343
    %v3345 = vlaneseq
    %v3346 = vshrl.u32 %v3345, 7
    %v3347 = vsub.s32 %v3344, %v3346
    %v3348 = vrot.slane %v3005, %v3347
    %v3350 = vunpack.c.l.s4 1983009808
    %v3351 = vunpack.c.0.s8 %v3350
    %v3352 = vlaneseq
    %v3353 = vshrl.u32 %v3352, 7
    %v3354 = vsub.s32 %v3351, %v3353
    %v3355 = vrot.slane %v3341, %v3354
    %v3356 = vcombine.high %v3348, %v3348
    %v3357 = vcombine.high %v3355, %v3355
    %v3358 = vcombine.high %v3006, %v3006
    %v3360 = vunpack.c.l.s4 1983009808
    %v3361 = vunpack.c.0.s8 %v3360
    %v3362 = vlaneseq
    %v3363 = vshrl.u32 %v3362, 7
    %v3364 = vsub.s32 %v3361, %v3363
    %v3365 = vrot.slane %v3006, %v3364
    %v3367 = vunpack.c.l.s4 1983009808
    %v3368 = vunpack.c.0.s8 %v3367
    %v3369 = vlaneseq
    %v3370 = vshrl.u32 %v3369, 7
    %v3371 = vsub.s32 %v3368, %v3370
    %v3372 = vrot.slane %v3358, %v3371
    %v3373 = vcombine.high %v3365, %v3365
    %v3374 = vcombine.high %v3372, %v3372
    %v3375 = vcombine.high %v3007, %v3007
    %v3377 = vunpack.c.l.s4 1983009808
    %v3378 = vunpack.c.0.s8 %v3377
    %v3379 = vlaneseq
    %v3380 = vshrl.u32 %v3379, 7
    %v3381 = vsub.s32 %v3378, %v3380
    %v3382 = vrot.slane %v3007, %v3381
    %v3384 = vunpack.c.l.s4 1983009808
    %v3385 = vunpack.c.0.s8 %v3384
    %v3386 = vlaneseq
    %v3387 = vshrl.u32 %v3386, 7
    %v3388 = vsub.s32 %v3385, %v3387
    %v3389 = vrot.slane %v3375, %v3388
    %v3390 = vcombine.high %v3382, %v3382
    %v3391 = vcombine.high %v3389, %v3389
    %v3392 = vcombine.high %v3008, %v3008
    %v3394 = vunpack.c.l.s4 1983009808
    %v3395 = vunpack.c.0.s8 %v3394
    %v3396 = vlaneseq
    %v3397 = vshrl.u32 %v3396, 7
    %v3398 = vsub.s32 %v3395, %v3397
    %v3399 = vrot.slane %v3008, %v3398
    %v3401 = vunpack.c.l.s4 1983009808
    %v3402 = vunpack.c.0.s8 %v3401
    %v3403 = vlaneseq
    %v3404 = vshrl.u32 %v3403, 7
    %v3405 = vsub.s32 %v3402, %v3404
    %v3406 = vrot.slane %v3392, %v3405
    %v3407 = vcombine.high %v3399, %v3399
    %v3408 = vcombine.high %v3406, %v3406
    %v3409 = vcombine.high %v3009, %v3009
    %v3411 = vunpack.c.l.s4 1983009808
    %v3412 = vunpack.c.0.s8 %v3411
    %v3413 = vlaneseq
    %v3414 = vshrl.u32 %v3413, 7
    %v3415 = vsub.s32 %v3412, %v3414
    %v3416 = vrot.slane %v3009, %v3415
    %v3418 = vunpack.c.l.s4 1983009808
    %v3419 = vunpack.c.0.s8 %v3418
    %v3420 = vlaneseq
    %v3421 = vshrl.u32 %v3420, 7
    %v3422 = vsub.s32 %v3419, %v3421
    %v3423 = vrot.slane %v3409, %v3422
    %v3424 = vcombine.high %v3416, %v3416
    %v3425 = vcombine.high %v3423, %v3423
    %v3426 = vcombine.high %v3010, %v3010
    %v3428 = vunpack.c.l.s4 1983009808
    %v3429 = vunpack.c.0.s8 %v3428
    %v3430 = vlaneseq
    %v3431 = vshrl.u32 %v3430, 7
    %v3432 = vsub.s32 %v3429, %v3431
    %v3433 = vrot.slane %v3010, %v3432
    %v3435 = vunpack.c.l.s4 1983009808
    %v3436 = vunpack.c.0.s8 %v3435
    %v3437 = vlaneseq
    %v3438 = vshrl.u32 %v3437, 7
    %v3439 = vsub.s32 %v3436, %v3438
    %v3440 = vrot.slane %v3426, %v3439
    %v3441 = vcombine.high %v3433, %v3433
    %v3442 = vcombine.high %v3440, %v3440
    %v3443 = vcombine.high %v3011, %v3011
    %v3445 = vunpack.c.l.s4 1983009808
    %v3446 = vunpack.c.0.s8 %v3445
    %v3447 = vlaneseq
    %v3448 = vshrl.u32 %v3447, 7
    %v3449 = vsub.s32 %v3446, %v3448
    %v3450 = vrot.slane %v3011, %v3449
    %v3452 = vunpack.c.l.s4 1983009808
    %v3453 = vunpack.c.0.s8 %v3452
    %v3454 = vlaneseq
    %v3455 = vshrl.u32 %v3454, 7
    %v3456 = vsub.s32 %v3453, %v3455
    %v3457 = vrot.slane %v3443, %v3456
    %v3458 = vcombine.high %v3450, %v3450
    %v3459 = vcombine.high %v3457, %v3457
    %v3460 = vcombine.high %v3012, %v3012
    %v3462 = vunpack.c.l.s4 1983009808
    %v3463 = vunpack.c.0.s8 %v3462
    %v3464 = vlaneseq
    %v3465 = vshrl.u32 %v3464, 7
    %v3466 = vsub.s32 %v3463, %v3465
    %v3467 = vrot.slane %v3012, %v3466
    %v3469 = vunpack.c.l.s4 1983009808
    %v3470 = vunpack.c.0.s8 %v3469
    %v3471 = vlaneseq
    %v3472 = vshrl.u32 %v3471, 7
    %v3473 = vsub.s32 %v3470, %v3472
    %v3474 = vrot.slane %v3460, %v3473
    %v3475 = vcombine.high %v3467, %v3467
    %v3476 = vcombine.high %v3474, %v3474
    %v3477 = vcombine.high %v3013, %v3013
    %v3479 = vunpack.c.l.s4 1983009808
    %v3480 = vunpack.c.0.s8 %v3479
    %v3481 = vlaneseq
    %v3482 = vshrl.u32 %v3481, 7
    %v3483 = vsub.s32 %v3480, %v3482
    %v3484 = vrot.slane %v3013, %v3483
    %v3486 = vunpack.c.l.s4 1983009808
    %v3487 = vunpack.c.0.s8 %v3486
    %v3488 = vlaneseq
    %v3489 = vshrl.u32 %v3488, 7
    %v3490 = vsub.s32 %v3487, %v3489
    %v3491 = vrot.slane %v3477, %v3490
    %v3492 = vcombine.high %v3484, %v3484
    %v3493 = vcombine.high %v3491, %v3491
    %v3494 = vcombine.high %v3014, %v3014
    %v3496 = vunpack.c.l.s4 1983009808
    %v3497 = vunpack.c.0.s8 %v3496
    %v3498 = vlaneseq
    %v3499 = vshrl.u32 %v3498, 7
    %v3500 = vsub.s32 %v3497, %v3499
    %v3501 = vrot.slane %v3014, %v3500
    %v3503 = vunpack.c.l.s4 1983009808
    %v3504 = vunpack.c.0.s8 %v3503
    %v3505 = vlaneseq
    %v3506 = vshrl.u32 %v3505, 7
    %v3507 = vsub.s32 %v3504, %v3506
    %v3508 = vrot.slane %v3494, %v3507
    %v3509 = vcombine.high %v3501, %v3501
    %v3510 = vcombine.high %v3508, %v3508
    %v3511 = vcombine.high %v3015, %v3015
    %v3513 = vunpack.c.l.s4 1983009808
    %v3514 = vunpack.c.0.s8 %v3513
    %v3515 = vlaneseq
    %v3516 = vshrl.u32 %v3515, 7
    %v3517 = vsub.s32 %v3514, %v3516
    %v3518 = vrot.slane %v3015, %v3517
    %v3520 = vunpack.c.l.s4 1983009808
    %v3521 = vunpack.c.0.s8 %v3520
    %v3522 = vlaneseq
    %v3523 = vshrl.u32 %v3522, 7
    %v3524 = vsub.s32 %v3521, %v3523
    %v3525 = vrot.slane %v3511, %v3524
    %v3526 = vcombine.high %v3518, %v3518
    %v3527 = vcombine.high %v3525, %v3525
    %v3528 = vcombine.high %v3016, %v3016
    %v3530 = vunpack.c.l.s4 1983009808
    %v3531 = vunpack.c.0.s8 %v3530
    %v3532 = vlaneseq
    %v3533 = vshrl.u32 %v3532, 7
    %v3534 = vsub.s32 %v3531, %v3533
    %v3535 = vrot.slane %v3016, %v3534
    %v3537 = vunpack.c.l.s4 1983009808
    %v3538 = vunpack.c.0.s8 %v3537
    %v3539 = vlaneseq
    %v3540 = vshrl.u32 %v3539, 7
    %v3541 = vsub.s32 %v3538, %v3540
    %v3542 = vrot.slane %v3528, %v3541
    %v3543 = vcombine.high %v3535, %v3535
    %v3544 = vcombine.high %v3542, %v3542
    %v3545 = vcombine.high %v3017, %v3017
    %v3547 = vunpack.c.l.s4 1983009808
    %v3548 = vunpack.c.0.s8 %v3547
    %v3549 = vlaneseq
    %v3550 = vshrl.u32 %v3549, 7
    %v3551 = vsub.s32 %v3548, %v3550
    %v3552 = vrot.slane %v3017, %v3551
    %v3554 = vunpack.c.l.s4 1983009808
    %v3555 = vunpack.c.0.s8 %v3554
    %v3556 = vlaneseq
    %v3557 = vshrl.u32 %v3556, 7
    %v3558 = vsub.s32 %v3555, %v3557
    %v3559 = vrot.slane %v3545, %v3558
    %v3560 = vcombine.high %v3552, %v3552
    %v3561 = vcombine.high %v3559, %v3559
    %v3626 = vmax.f32 %v3210, %v3297
    %v3627 = vmax.f32 %v3211, %v3305
    %v3628 = vmax.f32 %v3212, %v3304
    %v3629 = vmax.f32 %v3213, %v3306
    %v3630 = vmax.f32 %v3214, %v3314
    %v3631 = vmax.f32 %v3215, %v3322
    %v3632 = vmax.f32 %v3216, %v3321
    %v3633 = vmax.f32 %v3217, %v3323
    %v3634 = vmax.f32 %v3218, %v3331
    %v3635 = vmax.f32 %v3219, %v3339
    %v3636 = vmax.f32 %v3220, %v3338
    %v3637 = vmax.f32 %v3221, %v3340
    %v3638 = vmax.f32 %v3222, %v3348
    %v3639 = vmax.f32 %v3223, %v3356
    %v3640 = vmax.f32 %v3224, %v3355
    %v3641 = vmax.f32 %v3225, %v3357
    %v3642 = vmax.f32 %v3226, %v3365
    %v3643 = vmax.f32 %v3227, %v3373
    %v3644 = vmax.f32 %v3228, %v3372
    %v3645 = vmax.f32 %v3229, %v3374
    %v3646 = vmax.f32 %v3230, %v3382
    %v3647 = vmax.f32 %v3231, %v3390
    %v3648 = vmax.f32 %v3232, %v3389
    %v3649 = vmax.f32 %v3233, %v3391
    %v3650 = vmax.f32 %v3234, %v3399
    %v3651 = vmax.f32 %v3235, %v3407
    %v3652 = vmax.f32 %v3236, %v3406
    %v3653 = vmax.f32 %v3237, %v3408
    %v3654 = vmax.f32 %v3238, %v3416
    %v3655 = vmax.f32 %v3239, %v3424
    %v3656 = vmax.f32 %v3240, %v3423
    %v3657 = vmax.f32 %v3241, %v3425
    %v3658 = vmax.f32 %v3242, %v3433
    %v3659 = vmax.f32 %v3243, %v3441
    %v3660 = vmax.f32 %v3244, %v3440
    %v3661 = vmax.f32 %v3245, %v3442
    %v3662 = vmax.f32 %v3246, %v3450
    %v3663 = vmax.f32 %v3247, %v3458
    %v3664 = vmax.f32 %v3248, %v3457
    %v3665 = vmax.f32 %v3249, %v3459
    %v3666 = vmax.f32 %v3250, %v3467
    %v3667 = vmax.f32 %v3251, %v3475
    %v3668 = vmax.f32 %v3252, %v3474
    %v3669 = vmax.f32 %v3253, %v3476
    %v3670 = vmax.f32 %v3254, %v3484
    %v3671 = vmax.f32 %v3255, %v3492
    %v3672 = vmax.f32 %v3256, %v3491
    %v3673 = vmax.f32 %v3257, %v3493
    %v3674 = vmax.f32 %v3258, %v3501
    %v3675 = vmax.f32 %v3259, %v3509
    %v3676 = vmax.f32 %v3260, %v3508
    %v3677 = vmax.f32 %v3261, %v3510
    %v3678 = vmax.f32 %v3262, %v3518
    %v3679 = vmax.f32 %v3263, %v3526
    %v3680 = vmax.f32 %v3264, %v3525
    %v3681 = vmax.f32 %v3265, %v3527
    %v3682 = vmax.f32 %v3266, %v3535
    %v3683 = vmax.f32 %v3267, %v3543
    %v3684 = vmax.f32 %v3268, %v3542
    %v3685 = vmax.f32 %v3269, %v3544
    %v3686 = vmax.f32 %v3270, %v3552
    %v3687 = vmax.f32 %v3271, %v3560
    %v3688 = vmax.f32 %v3272, %v3559
    %v3689 = vmax.f32 %v3273, %v3561
    %3690 = vst [vmem:[#allocation3] sm:$0xff] 0.0
    %3691 = vst [vmem:[#allocation3 + $0x8] sm:$0xff] 0.0
    %3692 = vst [vmem:[#allocation3 + $0x10] sm:$0x3] 0.0
    %3693 = vst [vmem:[#allocation3 + $0x18] sm:$0x3] 0.0
    %3694 = vst [vmem:[#allocation3 + $0x20] sm:$0xff] 0.0
    %3695 = vst [vmem:[#allocation3 + $0x28] sm:$0xff] 0.0
    %3696 = vst [vmem:[#allocation3 + $0x30] sm:$0x3] 0.0
    %3697 = vst [vmem:[#allocation3 + $0x38] sm:$0x3] 0.0
    %v3698 = vcombine.low %v3626, %v3630
    %v3700 = vunpack.c.l.s4 1934713408
    %v3701 = vunpack.c.0.s8 %v3700
    %v3702 = vlaneseq
    %v3703 = vshrl.u32 %v3702, 7
    %v3704 = vsub.s32 %v3701, %v3703
    %v3705 = vrot.slane %v3698, %v3704
    %v3706 = vcombine.high %v3705, 0.0
    %v3707 = vcombine.low %v3634, %v3638
    %v3709 = vunpack.c.l.s4 1934713408
    %v3710 = vunpack.c.0.s8 %v3709
    %v3711 = vlaneseq
    %v3712 = vshrl.u32 %v3711, 7
    %v3713 = vsub.s32 %v3710, %v3712
    %v3714 = vrot.slane %v3707, %v3713
    %v3715 = vcombine.high %v3714, 0.0
    %v3716 = vcombine.low %v3642, %v3646
    %v3718 = vunpack.c.l.s4 1934713408
    %v3719 = vunpack.c.0.s8 %v3718
    %v3720 = vlaneseq
    %v3721 = vshrl.u32 %v3720, 7
    %v3722 = vsub.s32 %v3719, %v3721
    %v3723 = vrot.slane %v3716, %v3722
    %v3724 = vcombine.high %v3723, 0.0
    %v3725 = vcombine.low %v3650, %v3654
    %v3727 = vunpack.c.l.s4 1934713408
    %v3728 = vunpack.c.0.s8 %v3727
    %v3729 = vlaneseq
    %v3730 = vshrl.u32 %v3729, 7
    %v3731 = vsub.s32 %v3728, %v3730
    %v3732 = vrot.slane %v3725, %v3731
    %v3733 = vcombine.high %v3732, 0.0
    %v3734 = vcombine.low %v3627, %v3631
    %v3736 = vunpack.c.l.s4 1934713408
    %v3737 = vunpack.c.0.s8 %v3736
    %v3738 = vlaneseq
    %v3739 = vshrl.u32 %v3738, 7
    %v3740 = vsub.s32 %v3737, %v3739
    %v3741 = vrot.slane %v3734, %v3740
    %v3742 = vcombine.high %v3741, 0.0
    %v3743 = vcombine.low %v3635, %v3639
    %v3745 = vunpack.c.l.s4 1934713408
    %v3746 = vunpack.c.0.s8 %v3745
    %v3747 = vlaneseq
    %v3748 = vshrl.u32 %v3747, 7
    %v3749 = vsub.s32 %v3746, %v3748
    %v3750 = vrot.slane %v3743, %v3749
    %v3751 = vcombine.high %v3750, 0.0
    %v3752 = vcombine.low %v3643, %v3647
    %v3754 = vunpack.c.l.s4 1934713408
    %v3755 = vunpack.c.0.s8 %v3754
    %v3756 = vlaneseq
    %v3757 = vshrl.u32 %v3756, 7
    %v3758 = vsub.s32 %v3755, %v3757
    %v3759 = vrot.slane %v3752, %v3758
    %v3760 = vcombine.high %v3759, 0.0
    %v3761 = vcombine.low %v3651, %v3655
    %v3763 = vunpack.c.l.s4 1934713408
    %v3764 = vunpack.c.0.s8 %v3763
    %v3765 = vlaneseq
    %v3766 = vshrl.u32 %v3765, 7
    %v3767 = vsub.s32 %v3764, %v3766
    %v3768 = vrot.slane %v3761, %v3767
    %v3769 = vcombine.high %v3768, 0.0
    %v3770 = vcombine.low %v3628, %v3632
    %v3772 = vunpack.c.l.s4 1934713408
    %v3773 = vunpack.c.0.s8 %v3772
    %v3774 = vlaneseq
    %v3775 = vshrl.u32 %v3774, 7
    %v3776 = vsub.s32 %v3773, %v3775
    %v3777 = vrot.slane %v3770, %v3776
    %v3778 = vcombine.high %v3777, 0.0
    %v3779 = vcombine.low %v3636, %v3640
    %v3781 = vunpack.c.l.s4 1934713408
    %v3782 = vunpack.c.0.s8 %v3781
    %v3783 = vlaneseq
    %v3784 = vshrl.u32 %v3783, 7
    %v3785 = vsub.s32 %v3782, %v3784
    %v3786 = vrot.slane %v3779, %v3785
    %v3787 = vcombine.high %v3786, 0.0
    %v3788 = vcombine.low %v3644, %v3648
    %v3790 = vunpack.c.l.s4 1934713408
    %v3791 = vunpack.c.0.s8 %v3790
    %v3792 = vlaneseq
    %v3793 = vshrl.u32 %v3792, 7
    %v3794 = vsub.s32 %v3791, %v3793
    %v3795 = vrot.slane %v3788, %v3794
    %v3796 = vcombine.high %v3795, 0.0
    %v3797 = vcombine.low %v3652, %v3656
    %v3799 = vunpack.c.l.s4 1934713408
    %v3800 = vunpack.c.0.s8 %v3799
    %v3801 = vlaneseq
    %v3802 = vshrl.u32 %v3801, 7
    %v3803 = vsub.s32 %v3800, %v3802
    %v3804 = vrot.slane %v3797, %v3803
    %v3805 = vcombine.high %v3804, 0.0
    %v3806 = vcombine.low %v3629, %v3633
    %v3808 = vunpack.c.l.s4 1934713408
    %v3809 = vunpack.c.0.s8 %v3808
    %v3810 = vlaneseq
    %v3811 = vshrl.u32 %v3810, 7
    %v3812 = vsub.s32 %v3809, %v3811
    %v3813 = vrot.slane %v3806, %v3812
    %v3814 = vcombine.high %v3813, 0.0
    %v3815 = vcombine.low %v3637, %v3641
    %v3817 = vunpack.c.l.s4 1934713408
    %v3818 = vunpack.c.0.s8 %v3817
    %v3819 = vlaneseq
    %v3820 = vshrl.u32 %v3819, 7
    %v3821 = vsub.s32 %v3818, %v3820
    %v3822 = vrot.slane %v3815, %v3821
    %v3823 = vcombine.high %v3822, 0.0
    %v3824 = vcombine.low %v3645, %v3649
    %v3826 = vunpack.c.l.s4 1934713408
    %v3827 = vunpack.c.0.s8 %v3826
    %v3828 = vlaneseq
    %v3829 = vshrl.u32 %v3828, 7
    %v3830 = vsub.s32 %v3827, %v3829
    %v3831 = vrot.slane %v3824, %v3830
    %v3832 = vcombine.high %v3831, 0.0
    %v3833 = vcombine.low %v3653, %v3657
    %v3835 = vunpack.c.l.s4 1934713408
    %v3836 = vunpack.c.0.s8 %v3835
    %v3837 = vlaneseq
    %v3838 = vshrl.u32 %v3837, 7
    %v3839 = vsub.s32 %v3836, %v3838
    %v3840 = vrot.slane %v3833, %v3839
    %v3841 = vcombine.high %v3840, 0.0
    %v3842 = vcombine.low %v3658, %v3662
    %v3844 = vunpack.c.l.s4 1934713408
    %v3845 = vunpack.c.0.s8 %v3844
    %v3846 = vlaneseq
    %v3847 = vshrl.u32 %v3846, 7
    %v3848 = vsub.s32 %v3845, %v3847
    %v3849 = vrot.slane %v3842, %v3848
    %v3850 = vcombine.high %v3849, 0.0
    %v3851 = vcombine.low %v3666, %v3670
    %v3853 = vunpack.c.l.s4 1934713408
    %v3854 = vunpack.c.0.s8 %v3853
    %v3855 = vlaneseq
    %v3856 = vshrl.u32 %v3855, 7
    %v3857 = vsub.s32 %v3854, %v3856
    %v3858 = vrot.slane %v3851, %v3857
    %v3859 = vcombine.high %v3858, 0.0
    %v3860 = vcombine.low %v3674, %v3678
    %v3862 = vunpack.c.l.s4 1934713408
    %v3863 = vunpack.c.0.s8 %v3862
    %v3864 = vlaneseq
    %v3865 = vshrl.u32 %v3864, 7
    %v3866 = vsub.s32 %v3863, %v3865
    %v3867 = vrot.slane %v3860, %v3866
    %v3868 = vcombine.high %v3867, 0.0
    %v3869 = vcombine.low %v3682, %v3686
    %v3871 = vunpack.c.l.s4 1934713408
    %v3872 = vunpack.c.0.s8 %v3871
    %v3873 = vlaneseq
    %v3874 = vshrl.u32 %v3873, 7
    %v3875 = vsub.s32 %v3872, %v3874
    %v3876 = vrot.slane %v3869, %v3875
    %v3877 = vcombine.high %v3876, 0.0
    %v3878 = vcombine.low %v3659, %v3663
    %v3880 = vunpack.c.l.s4 1934713408
    %v3881 = vunpack.c.0.s8 %v3880
    %v3882 = vlaneseq
    %v3883 = vshrl.u32 %v3882, 7
    %v3884 = vsub.s32 %v3881, %v3883
    %v3885 = vrot.slane %v3878, %v3884
    %v3886 = vcombine.high %v3885, 0.0
    %v3887 = vcombine.low %v3667, %v3671
    %v3889 = vunpack.c.l.s4 1934713408
    %v3890 = vunpack.c.0.s8 %v3889
    %v3891 = vlaneseq
    %v3892 = vshrl.u32 %v3891, 7
    %v3893 = vsub.s32 %v3890, %v3892
    %v3894 = vrot.slane %v3887, %v3893
    %v3895 = vcombine.high %v3894, 0.0
    %v3896 = vcombine.low %v3675, %v3679
    %v3898 = vunpack.c.l.s4 1934713408
    %v3899 = vunpack.c.0.s8 %v3898
    %v3900 = vlaneseq
    %v3901 = vshrl.u32 %v3900, 7
    %v3902 = vsub.s32 %v3899, %v3901
    %v3903 = vrot.slane %v3896, %v3902
    %v3904 = vcombine.high %v3903, 0.0
    %v3905 = vcombine.low %v3683, %v3687
    %v3907 = vunpack.c.l.s4 1934713408
    %v3908 = vunpack.c.0.s8 %v3907
    %v3909 = vlaneseq
    %v3910 = vshrl.u32 %v3909, 7
    %v3911 = vsub.s32 %v3908, %v3910
    %v3912 = vrot.slane %v3905, %v3911
    %v3913 = vcombine.high %v3912, 0.0
    %v3914 = vcombine.low %v3660, %v3664
    %v3916 = vunpack.c.l.s4 1934713408
    %v3917 = vunpack.c.0.s8 %v3916
    %v3918 = vlaneseq
    %v3919 = vshrl.u32 %v3918, 7
    %v3920 = vsub.s32 %v3917, %v3919
    %v3921 = vrot.slane %v3914, %v3920
    %v3922 = vcombine.high %v3921, 0.0
    %v3923 = vcombine.low %v3668, %v3672
    %v3925 = vunpack.c.l.s4 1934713408
    %v3926 = vunpack.c.0.s8 %v3925
    %v3927 = vlaneseq
    %v3928 = vshrl.u32 %v3927, 7
    %v3929 = vsub.s32 %v3926, %v3928
    %v3930 = vrot.slane %v3923, %v3929
    %v3931 = vcombine.high %v3930, 0.0
    %v3932 = vcombine.low %v3676, %v3680
    %v3934 = vunpack.c.l.s4 1934713408
    %v3935 = vunpack.c.0.s8 %v3934
    %v3936 = vlaneseq
    %v3937 = vshrl.u32 %v3936, 7
    %v3938 = vsub.s32 %v3935, %v3937
    %v3939 = vrot.slane %v3932, %v3938
    %v3940 = vcombine.high %v3939, 0.0
    %v3941 = vcombine.low %v3684, %v3688
    %v3943 = vunpack.c.l.s4 1934713408
    %v3944 = vunpack.c.0.s8 %v3943
    %v3945 = vlaneseq
    %v3946 = vshrl.u32 %v3945, 7
    %v3947 = vsub.s32 %v3944, %v3946
    %v3948 = vrot.slane %v3941, %v3947
    %v3949 = vcombine.high %v3948, 0.0
    %v3950 = vcombine.low %v3661, %v3665
    %v3952 = vunpack.c.l.s4 1934713408
    %v3953 = vunpack.c.0.s8 %v3952
    %v3954 = vlaneseq
    %v3955 = vshrl.u32 %v3954, 7
    %v3956 = vsub.s32 %v3953, %v3955
    %v3957 = vrot.slane %v3950, %v3956
    %v3958 = vcombine.high %v3957, 0.0
    %v3959 = vcombine.low %v3669, %v3673
    %v3961 = vunpack.c.l.s4 1934713408
    %v3962 = vunpack.c.0.s8 %v3961
    %v3963 = vlaneseq
    %v3964 = vshrl.u32 %v3963, 7
    %v3965 = vsub.s32 %v3962, %v3964
    %v3966 = vrot.slane %v3959, %v3965
    %v3967 = vcombine.high %v3966, 0.0
    %v3968 = vcombine.low %v3677, %v3681
    %v3970 = vunpack.c.l.s4 1934713408
    %v3971 = vunpack.c.0.s8 %v3970
    %v3972 = vlaneseq
    %v3973 = vshrl.u32 %v3972, 7
    %v3974 = vsub.s32 %v3971, %v3973
    %v3975 = vrot.slane %v3968, %v3974
    %v3976 = vcombine.high %v3975, 0.0
    %v3977 = vcombine.low %v3685, %v3689
    %v3979 = vunpack.c.l.s4 1934713408
    %v3980 = vunpack.c.0.s8 %v3979
    %v3981 = vlaneseq
    %v3982 = vshrl.u32 %v3981, 7
    %v3983 = vsub.s32 %v3980, %v3982
    %v3984 = vrot.slane %v3977, %v3983
    %v3985 = vcombine.high %v3984, 0.0
    %v3994 = vcombine.low %v3705, %v3714
    %v3995 = vcombine.low %v3723, %v3732
    %v3997 = vunpack.c.l.s4 1983009808
    %v3998 = vunpack.c.0.s8 %v3997
    %v3999 = vlaneseq
    %v4000 = vshrl.u32 %v3999, 7
    %v4001 = vsub.s32 %v3998, %v4000
    %v4002 = vrot.slane %v3994, %v4001
    %v4004 = vunpack.c.l.s4 1983009808
    %v4005 = vunpack.c.0.s8 %v4004
    %v4006 = vlaneseq
    %v4007 = vshrl.u32 %v4006, 7
    %v4008 = vsub.s32 %v4005, %v4007
    %v4009 = vrot.slane %v3995, %v4008
    %v4010 = vcombine.low %v4002, %v4009
    %v4011 = vcombine.low %v3849, %v3858
    %v4012 = vcombine.low %v3867, %v3876
    %v4014 = vunpack.c.l.s4 1983009808
    %v4015 = vunpack.c.0.s8 %v4014
    %v4016 = vlaneseq
    %v4017 = vshrl.u32 %v4016, 7
    %v4018 = vsub.s32 %v4015, %v4017
    %v4019 = vrot.slane %v4011, %v4018
    %v4021 = vunpack.c.l.s4 1983009808
    %v4022 = vunpack.c.0.s8 %v4021
    %v4023 = vlaneseq
    %v4024 = vshrl.u32 %v4023, 7
    %v4025 = vsub.s32 %v4022, %v4024
    %v4026 = vrot.slane %v4012, %v4025
    %v4027 = vcombine.low %v4019, %v4026
    %v4038 = vcombine.low %v3706, %v3715
    %v4039 = vcombine.low %v3724, %v3733
    %v4041 = vunpack.c.l.s4 1983009808
    %v4042 = vunpack.c.0.s8 %v4041
    %v4043 = vlaneseq
    %v4044 = vshrl.u32 %v4043, 7
    %v4045 = vsub.s32 %v4042, %v4044
    %v4046 = vrot.slane %v4038, %v4045
    %v4048 = vunpack.c.l.s4 1983009808
    %v4049 = vunpack.c.0.s8 %v4048
    %v4050 = vlaneseq
    %v4051 = vshrl.u32 %v4050, 7
    %v4052 = vsub.s32 %v4049, %v4051
    %v4053 = vrot.slane %v4039, %v4052
    %v4054 = vcombine.low %v4046, %v4053
    %v4055 = vcombine.low %v3850, %v3859
    %v4056 = vcombine.low %v3868, %v3877
    %v4058 = vunpack.c.l.s4 1983009808
    %v4059 = vunpack.c.0.s8 %v4058
    %v4060 = vlaneseq
    %v4061 = vshrl.u32 %v4060, 7
    %v4062 = vsub.s32 %v4059, %v4061
    %v4063 = vrot.slane %v4055, %v4062
    %v4065 = vunpack.c.l.s4 1983009808
    %v4066 = vunpack.c.0.s8 %v4065
    %v4067 = vlaneseq
    %v4068 = vshrl.u32 %v4067, 7
    %v4069 = vsub.s32 %v4066, %v4068
    %v4070 = vrot.slane %v4056, %v4069
    %v4071 = vcombine.low %v4063, %v4070
    %4072 = vrot.lane.b32.xlu0 %v4054, 16
    %v4073 = vpop.permute.xlu0 %4072
    %4074 = vrot.lane.b32.xlu0 %v4071, 16
    %v4075 = vpop.permute.xlu0 %4074
    %v4086 = vcombine.low %v3741, %v3750
    %v4087 = vcombine.low %v3759, %v3768
    %v4089 = vunpack.c.l.s4 1983009808
    %v4090 = vunpack.c.0.s8 %v4089
    %v4091 = vlaneseq
    %v4092 = vshrl.u32 %v4091, 7
    %v4093 = vsub.s32 %v4090, %v4092
    %v4094 = vrot.slane %v4086, %v4093
    %v4096 = vunpack.c.l.s4 1983009808
    %v4097 = vunpack.c.0.s8 %v4096
    %v4098 = vlaneseq
    %v4099 = vshrl.u32 %v4098, 7
    %v4100 = vsub.s32 %v4097, %v4099
    %v4101 = vrot.slane %v4087, %v4100
    %v4102 = vcombine.low %v4094, %v4101
    %v4103 = vcombine.low %v3885, %v3894
    %v4104 = vcombine.low %v3903, %v3912
    %v4106 = vunpack.c.l.s4 1983009808
    %v4107 = vunpack.c.0.s8 %v4106
    %v4108 = vlaneseq
    %v4109 = vshrl.u32 %v4108, 7
    %v4110 = vsub.s32 %v4107, %v4109
    %v4111 = vrot.slane %v4103, %v4110
    %v4113 = vunpack.c.l.s4 1983009808
    %v4114 = vunpack.c.0.s8 %v4113
    %v4115 = vlaneseq
    %v4116 = vshrl.u32 %v4115, 7
    %v4117 = vsub.s32 %v4114, %v4116
    %v4118 = vrot.slane %v4104, %v4117
    %v4119 = vcombine.low %v4111, %v4118
    %4120 = vrot.lane.b32.xlu0 %v4102, 32
    %v4121 = vpop.permute.xlu0 %4120
    %4122 = vrot.lane.b32.xlu0 %v4119, 32
    %v4123 = vpop.permute.xlu0 %4122
    %v4134 = vcombine.low %v3742, %v3751
    %v4135 = vcombine.low %v3760, %v3769
    %v4137 = vunpack.c.l.s4 1983009808
    %v4138 = vunpack.c.0.s8 %v4137
    %v4139 = vlaneseq
    %v4140 = vshrl.u32 %v4139, 7
    %v4141 = vsub.s32 %v4138, %v4140
    %v4142 = vrot.slane %v4134, %v4141
    %v4144 = vunpack.c.l.s4 1983009808
    %v4145 = vunpack.c.0.s8 %v4144
    %v4146 = vlaneseq
    %v4147 = vshrl.u32 %v4146, 7
    %v4148 = vsub.s32 %v4145, %v4147
    %v4149 = vrot.slane %v4135, %v4148
    %v4150 = vcombine.low %v4142, %v4149
    %v4151 = vcombine.low %v3886, %v3895
    %v4152 = vcombine.low %v3904, %v3913
    %v4154 = vunpack.c.l.s4 1983009808
    %v4155 = vunpack.c.0.s8 %v4154
    %v4156 = vlaneseq
    %v4157 = vshrl.u32 %v4156, 7
    %v4158 = vsub.s32 %v4155, %v4157
    %v4159 = vrot.slane %v4151, %v4158
    %v4161 = vunpack.c.l.s4 1983009808
    %v4162 = vunpack.c.0.s8 %v4161
    %v4163 = vlaneseq
    %v4164 = vshrl.u32 %v4163, 7
    %v4165 = vsub.s32 %v4162, %v4164
    %v4166 = vrot.slane %v4152, %v4165
    %v4167 = vcombine.low %v4159, %v4166
    %4168 = vrot.lane.b32.xlu0 %v4150, 48
    %v4169 = vpop.permute.xlu0 %4168
    %4170 = vrot.lane.b32.xlu0 %v4167, 48
    %v4171 = vpop.permute.xlu0 %4170
    %v4182 = vcombine.low %v3777, %v3786
    %v4183 = vcombine.low %v3795, %v3804
    %v4185 = vunpack.c.l.s4 1983009808
    %v4186 = vunpack.c.0.s8 %v4185
    %v4187 = vlaneseq
    %v4188 = vshrl.u32 %v4187, 7
    %v4189 = vsub.s32 %v4186, %v4188
    %v4190 = vrot.slane %v4182, %v4189
    %v4192 = vunpack.c.l.s4 1983009808
    %v4193 = vunpack.c.0.s8 %v4192
    %v4194 = vlaneseq
    %v4195 = vshrl.u32 %v4194, 7
    %v4196 = vsub.s32 %v4193, %v4195
    %v4197 = vrot.slane %v4183, %v4196
    %v4198 = vcombine.low %v4190, %v4197
    %v4199 = vcombine.low %v3921, %v3930
    %v4200 = vcombine.low %v3939, %v3948
    %v4202 = vunpack.c.l.s4 1983009808
    %v4203 = vunpack.c.0.s8 %v4202
    %v4204 = vlaneseq
    %v4205 = vshrl.u32 %v4204, 7
    %v4206 = vsub.s32 %v4203, %v4205
    %v4207 = vrot.slane %v4199, %v4206
    %v4209 = vunpack.c.l.s4 1983009808
    %v4210 = vunpack.c.0.s8 %v4209
    %v4211 = vlaneseq
    %v4212 = vshrl.u32 %v4211, 7
    %v4213 = vsub.s32 %v4210, %v4212
    %v4214 = vrot.slane %v4200, %v4213
    %v4215 = vcombine.low %v4207, %v4214
    %4216 = vrot.lane.b32.xlu0 %v4198, 64
    %v4217 = vpop.permute.xlu0 %4216
    %4218 = vrot.lane.b32.xlu0 %v4215, 64
    %v4219 = vpop.permute.xlu0 %4218
    %v4230 = vcombine.low %v3778, %v3787
    %v4231 = vcombine.low %v3796, %v3805
    %v4233 = vunpack.c.l.s4 1983009808
    %v4234 = vunpack.c.0.s8 %v4233
    %v4235 = vlaneseq
    %v4236 = vshrl.u32 %v4235, 7
    %v4237 = vsub.s32 %v4234, %v4236
    %v4238 = vrot.slane %v4230, %v4237
    %v4240 = vunpack.c.l.s4 1983009808
    %v4241 = vunpack.c.0.s8 %v4240
    %v4242 = vlaneseq
    %v4243 = vshrl.u32 %v4242, 7
    %v4244 = vsub.s32 %v4241, %v4243
    %v4245 = vrot.slane %v4231, %v4244
    %v4246 = vcombine.low %v4238, %v4245
    %v4247 = vcombine.low %v3922, %v3931
    %v4248 = vcombine.low %v3940, %v3949
    %v4250 = vunpack.c.l.s4 1983009808
    %v4251 = vunpack.c.0.s8 %v4250
    %v4252 = vlaneseq
    %v4253 = vshrl.u32 %v4252, 7
    %v4254 = vsub.s32 %v4251, %v4253
    %v4255 = vrot.slane %v4247, %v4254
    %v4257 = vunpack.c.l.s4 1983009808
    %v4258 = vunpack.c.0.s8 %v4257
    %v4259 = vlaneseq
    %v4260 = vshrl.u32 %v4259, 7
    %v4261 = vsub.s32 %v4258, %v4260
    %v4262 = vrot.slane %v4248, %v4261
    %v4263 = vcombine.low %v4255, %v4262
    %4264 = vrot.lane.b32.xlu0 %v4246, 80
    %v4265 = vpop.permute.xlu0 %4264
    %4266 = vrot.lane.b32.xlu0 %v4263, 80
    %v4267 = vpop.permute.xlu0 %4266
    %v4278 = vcombine.low %v3813, %v3822
    %v4279 = vcombine.low %v3831, %v3840
    %v4281 = vunpack.c.l.s4 1983009808
    %v4282 = vunpack.c.0.s8 %v4281
    %v4283 = vlaneseq
    %v4284 = vshrl.u32 %v4283, 7
    %v4285 = vsub.s32 %v4282, %v4284
    %v4286 = vrot.slane %v4278, %v4285
    %v4288 = vunpack.c.l.s4 1983009808
    %v4289 = vunpack.c.0.s8 %v4288
    %v4290 = vlaneseq
    %v4291 = vshrl.u32 %v4290, 7
    %v4292 = vsub.s32 %v4289, %v4291
    %v4293 = vrot.slane %v4279, %v4292
    %v4294 = vcombine.low %v4286, %v4293
    %v4295 = vcombine.low %v3957, %v3966
    %v4296 = vcombine.low %v3975, %v3984
    %v4298 = vunpack.c.l.s4 1983009808
    %v4299 = vunpack.c.0.s8 %v4298
    %v4300 = vlaneseq
    %v4301 = vshrl.u32 %v4300, 7
    %v4302 = vsub.s32 %v4299, %v4301
    %v4303 = vrot.slane %v4295, %v4302
    %v4305 = vunpack.c.l.s4 1983009808
    %v4306 = vunpack.c.0.s8 %v4305
    %v4307 = vlaneseq
    %v4308 = vshrl.u32 %v4307, 7
    %v4309 = vsub.s32 %v4306, %v4308
    %v4310 = vrot.slane %v4296, %v4309
    %v4311 = vcombine.low %v4303, %v4310
    %4312 = vrot.lane.b32.xlu0 %v4294, 96
    %v4313 = vpop.permute.xlu0 %4312
    %4314 = vrot.lane.b32.xlu0 %v4311, 96
    %v4315 = vpop.permute.xlu0 %4314
    %v4326 = vcombine.low %v3814, %v3823
    %v4327 = vcombine.low %v3832, %v3841
    %v4329 = vunpack.c.l.s4 1983009808
    %v4330 = vunpack.c.0.s8 %v4329
    %v4331 = vlaneseq
    %v4332 = vshrl.u32 %v4331, 7
    %v4333 = vsub.s32 %v4330, %v4332
    %v4334 = vrot.slane %v4326, %v4333
    %v4336 = vunpack.c.l.s4 1983009808
    %v4337 = vunpack.c.0.s8 %v4336
    %v4338 = vlaneseq
    %v4339 = vshrl.u32 %v4338, 7
    %v4340 = vsub.s32 %v4337, %v4339
    %v4341 = vrot.slane %v4327, %v4340
    %v4342 = vcombine.low %v4334, %v4341
    %v4343 = vcombine.low %v3958, %v3967
    %v4344 = vcombine.low %v3976, %v3985
    %v4346 = vunpack.c.l.s4 1983009808
    %v4347 = vunpack.c.0.s8 %v4346
    %v4348 = vlaneseq
    %v4349 = vshrl.u32 %v4348, 7
    %v4350 = vsub.s32 %v4347, %v4349
    %v4351 = vrot.slane %v4343, %v4350
    %v4353 = vunpack.c.l.s4 1983009808
    %v4354 = vunpack.c.0.s8 %v4353
    %v4355 = vlaneseq
    %v4356 = vshrl.u32 %v4355, 7
    %v4357 = vsub.s32 %v4354, %v4356
    %v4358 = vrot.slane %v4344, %v4357
    %v4359 = vcombine.low %v4351, %v4358
    %4360 = vrot.lane.b32.xlu0 %v4342, 112
    %v4361 = vpop.permute.xlu0 %4360
    %4362 = vrot.lane.b32.xlu0 %v4359, 112
    %v4363 = vpop.permute.xlu0 %4362
    %v4366 = vsel %vm1084, %v4010, %v4073
    %v4367 = vsel %vm1084, %v4027, %v4075
    %v4368 = vsel %vm1090, %v4366, %v4121
    %v4369 = vsel %vm1090, %v4367, %v4123
    %vm4370 = vcmask 392192
    %v4371 = vsel %vm4370, %v4368, %v4169
    %v4372 = vsel %vm4370, %v4369, %v4171
    %v4373 = vsel %vm1096, %v4371, %v4217
    %v4374 = vsel %vm1096, %v4372, %v4219
    %vm4375 = vcmask 654336
    %v4376 = vsel %vm4375, %v4373, %v4265
    %v4377 = vsel %vm4375, %v4374, %v4267
    %vm4378 = vcmask 785408
    %v4379 = vsel %vm4378, %v4376, %v4313
    %v4380 = vsel %vm4378, %v4377, %v4315
    %vm4381 = vcmask 916480
    %v4382 = vsel %vm4381, %v4379, %v4361
    %v4383 = vsel %vm4381, %v4380, %v4363
    %v4386 = vrot.slane %v4382, 7
    %v4387 = vrot.slane %v4383, 7
    %4388 = vrot.lane.b32.xlu0 %v4386, 16
    %v4389 = vpop.permute.xlu0 %4388
    %4390 = vrot.lane.b32.xlu0 %v4387, 16
    %v4391 = vpop.permute.xlu0 %4390
    %vm4394 = vcmask 1047681
    %4395 = vst.msk [vmem:[#allocation3] sm:$0xfe] %vm4394, %v4389
    %vm4396 = vcmask 130049
    %4397 = vst.msk [vmem:[#allocation3 + $0x8] sm:$0xfe] %vm4396, %v4389
    %vm4398 = vcmask 1040512
    %4399 = vst.msk [vmem:[#allocation3 + $0x10] sm:$0x1] %vm4398, %v4389
    %vm4400 = vcmask 122880
    %4401 = vst.msk [vmem:[#allocation3 + $0x18] sm:$0x1] %vm4400, %v4389
    %4402 = vst.msk [vmem:[#allocation3 + $0x20] sm:$0xfe] %vm4394, %v4391
    %4403 = vst.msk [vmem:[#allocation3 + $0x28] sm:$0xfe] %vm4396, %v4391
    %4404 = vst.msk [vmem:[#allocation3 + $0x30] sm:$0x1] %vm4398, %v4391
    %4405 = vst.msk [vmem:[#allocation3 + $0x38] sm:$0x1] %vm4400, %v4391
    %v4406 = vld [vmem:[#allocation3] sm:$0xff]
    %v4407 = vld [vmem:[#allocation3 + $0x8] sm:$0xff]
    %v4408 = vld [vmem:[#allocation3 + $0x10] sm:$0x3]
    %v4409 = vld [vmem:[#allocation3 + $0x18] sm:$0x3]
    %v4410 = vld [vmem:[#allocation3 + $0x20] sm:$0xff]
    %v4411 = vld [vmem:[#allocation3 + $0x28] sm:$0xff]
    %v4412 = vld [vmem:[#allocation3 + $0x30] sm:$0x3]
    %v4413 = vld [vmem:[#allocation3 + $0x38] sm:$0x3]
    %v4414 = vpack.c.bf16 %v4408, %v4406
    %v4415 = vpack.c.bf16 %v4409, %v4407
    %v4416 = vpack.c.bf16 %v4412, %v4410
    %v4417 = vpack.c.bf16 %v4413, %v4411
    %v4422 = vunpack.c.l.b16 %v4414
    %v4423 = vunpack.c.l.b16 %v4415
    %v4424 = vunpack.c.l.b16 %v4416
    %v4425 = vunpack.c.l.b16 %v4417
    %v4426 = vld [vmem:[#allocation10] sm:$0xff]
    %v4427 = vld [vmem:[#allocation10 + $0x8] sm:$0xff]
    %v4428 = vld [vmem:[#allocation10 + $0x10] sm:$0xff]
    %v4429 = vld [vmem:[#allocation10 + $0x18] sm:$0xff]
    %v4430 = vld [vmem:[#allocation10 + $0x20] sm:$0xff]
    %v4431 = vld [vmem:[#allocation10 + $0x28] sm:$0xff]
    %v4432 = vld [vmem:[#allocation10 + $0x30] sm:$0xff]
    %v4433 = vld [vmem:[#allocation10 + $0x38] sm:$0xff]
    %v4434 = vld [vmem:[#allocation10 + $0x40] sm:$0xff]
    %v4435 = vld [vmem:[#allocation10 + $0x48] sm:$0xff]
    %v4436 = vld [vmem:[#allocation10 + $0x50] sm:$0xff]
    %v4437 = vld [vmem:[#allocation10 + $0x58] sm:$0xff]
    %v4438 = vld [vmem:[#allocation10 + $0x60] sm:$0xff]
    %v4439 = vld [vmem:[#allocation10 + $0x68] sm:$0xff]
    %v4440 = vld [vmem:[#allocation10 + $0x70] sm:$0xff]
    %v4441 = vld [vmem:[#allocation10 + $0x78] sm:$0xff]
    %v4442 = vld [vmem:[#allocation10 + $0x80] sm:$0xff]
    %v4443 = vld [vmem:[#allocation10 + $0x88] sm:$0xff]
    %v4444 = vld [vmem:[#allocation10 + $0x90] sm:$0xff]
    %v4445 = vld [vmem:[#allocation10 + $0x98] sm:$0xff]
    %v4446 = vld [vmem:[#allocation10 + $0xa0] sm:$0xff]
    %v4447 = vld [vmem:[#allocation10 + $0xa8] sm:$0xff]
    %v4448 = vld [vmem:[#allocation10 + $0xb0] sm:$0xff]
    %v4449 = vld [vmem:[#allocation10 + $0xb8] sm:$0xff]
    %v4450 = vld [vmem:[#allocation10 + $0xc0] sm:$0xff]
    %v4451 = vld [vmem:[#allocation10 + $0xc8] sm:$0xff]
    %v4452 = vld [vmem:[#allocation10 + $0xd0] sm:$0xff]
    %v4453 = vld [vmem:[#allocation10 + $0xd8] sm:$0xff]
    %v4454 = vld [vmem:[#allocation10 + $0xe0] sm:$0xff]
    %v4455 = vld [vmem:[#allocation10 + $0xe8] sm:$0xff]
    %v4456 = vld [vmem:[#allocation10 + $0xf0] sm:$0xff]
    %v4457 = vld [vmem:[#allocation10 + $0xf8] sm:$0xff]
    %v4458 = vld [vmem:[#allocation10 + $0x100] sm:$0xff]
    %v4459 = vld [vmem:[#allocation10 + $0x108] sm:$0xff]
    %v4460 = vld [vmem:[#allocation10 + $0x110] sm:$0xff]
    %v4461 = vld [vmem:[#allocation10 + $0x118] sm:$0xff]
    %v4462 = vld [vmem:[#allocation10 + $0x120] sm:$0xff]
    %v4463 = vld [vmem:[#allocation10 + $0x128] sm:$0xff]
    %v4464 = vld [vmem:[#allocation10 + $0x130] sm:$0xff]
    %v4465 = vld [vmem:[#allocation10 + $0x138] sm:$0xff]
    %v4466 = vld [vmem:[#allocation10 + $0x140] sm:$0xff]
    %v4467 = vld [vmem:[#allocation10 + $0x148] sm:$0xff]
    %v4468 = vld [vmem:[#allocation10 + $0x150] sm:$0xff]
    %v4469 = vld [vmem:[#allocation10 + $0x158] sm:$0xff]
    %v4470 = vld [vmem:[#allocation10 + $0x160] sm:$0xff]
    %v4471 = vld [vmem:[#allocation10 + $0x168] sm:$0xff]
    %v4472 = vld [vmem:[#allocation10 + $0x170] sm:$0xff]
    %v4473 = vld [vmem:[#allocation10 + $0x178] sm:$0xff]
    %v4474 = vld [vmem:[#allocation10 + $0x180] sm:$0xff]
    %v4475 = vld [vmem:[#allocation10 + $0x188] sm:$0xff]
    %v4476 = vld [vmem:[#allocation10 + $0x190] sm:$0xff]
    %v4477 = vld [vmem:[#allocation10 + $0x198] sm:$0xff]
    %v4478 = vld [vmem:[#allocation10 + $0x1a0] sm:$0xff]
    %v4479 = vld [vmem:[#allocation10 + $0x1a8] sm:$0xff]
    %v4480 = vld [vmem:[#allocation10 + $0x1b0] sm:$0xff]
    %v4481 = vld [vmem:[#allocation10 + $0x1b8] sm:$0xff]
    %v4482 = vld [vmem:[#allocation10 + $0x1c0] sm:$0xff]
    %v4483 = vld [vmem:[#allocation10 + $0x1c8] sm:$0xff]
    %v4484 = vld [vmem:[#allocation10 + $0x1d0] sm:$0xff]
    %v4485 = vld [vmem:[#allocation10 + $0x1d8] sm:$0xff]
    %v4486 = vld [vmem:[#allocation10 + $0x1e0] sm:$0xff]
    %v4487 = vld [vmem:[#allocation10 + $0x1e8] sm:$0xff]
    %v4488 = vld [vmem:[#allocation10 + $0x1f0] sm:$0xff]
    %v4489 = vld [vmem:[#allocation10 + $0x1f8] sm:$0xff]
    %v4490 = vunpack.c.h.b16 %v4414
    %v4491 = vunpack.c.h.b16 %v4415
    %v4492 = vunpack.c.h.b16 %v4416
    %v4493 = vunpack.c.h.b16 %v4417
    %v4494 = vpack.c.b16 %v4423, %v4422
    %v4495 = vpack.c.b16 %v4491, %v4490
    %v4496 = vpack.c.b16 %v4425, %v4424
    %v4497 = vpack.c.b16 %v4493, %v4492
    %vm4498 = vsmask.f32 3328
    %vm4499 = vsmask.f32 7440
    %vm4500 = vmor %vm4498, %vm4499
    %v4502 = vshrl.u32 %v4494, 16
    %v4504 = vrot.slane %v4502, 4
    %v4505 = vshll.u32 %v4494, 16
    %v4507 = vrot.slane %v4505, 5
    %v4508 = vor.u32 %v4504, %v4507
    %v4509 = vrot.slane %v4508, 4
    %v4511 = vshll.u32 %v4495, 16
    %v4513 = vrot.slane %v4511, 5
    %v4514 = vsel %vm4500, %v4509, %v4513
    %v4516 = vshrl.u32 %v4496, 16
    %v4518 = vrot.slane %v4516, 4
    %v4519 = vshll.u32 %v4496, 16
    %v4521 = vrot.slane %v4519, 5
    %v4522 = vor.u32 %v4518, %v4521
    %v4523 = vrot.slane %v4522, 4
    %v4525 = vshll.u32 %v4497, 16
    %v4527 = vrot.slane %v4525, 5
    %v4528 = vsel %vm4500, %v4523, %v4527
    %s4529 = scalar_lea.vmem [#allocation10], 512
    %v4530 = vld [vmem:[%s4529] sm:$0xff]
    %v4531 = vld [vmem:[%s4529 + $0x8] sm:$0xff]
    %v4532 = vld [vmem:[%s4529 + $0x10] sm:$0xff]
    %v4533 = vld [vmem:[%s4529 + $0x18] sm:$0xff]
    %v4534 = vld [vmem:[%s4529 + $0x20] sm:$0xff]
    %v4535 = vld [vmem:[%s4529 + $0x28] sm:$0xff]
    %v4536 = vld [vmem:[%s4529 + $0x30] sm:$0xff]
    %v4537 = vld [vmem:[%s4529 + $0x38] sm:$0xff]
    %v4538 = vld [vmem:[%s4529 + $0x40] sm:$0xff]
    %v4539 = vld [vmem:[%s4529 + $0x48] sm:$0xff]
    %v4540 = vld [vmem:[%s4529 + $0x50] sm:$0xff]
    %v4541 = vld [vmem:[%s4529 + $0x58] sm:$0xff]
    %v4542 = vld [vmem:[%s4529 + $0x60] sm:$0xff]
    %v4543 = vld [vmem:[%s4529 + $0x68] sm:$0xff]
    %v4544 = vld [vmem:[%s4529 + $0x70] sm:$0xff]
    %v4545 = vld [vmem:[%s4529 + $0x78] sm:$0xff]
    %v4546 = vld [vmem:[%s4529 + $0x80] sm:$0xff]
    %v4547 = vld [vmem:[%s4529 + $0x88] sm:$0xff]
    %v4548 = vld [vmem:[%s4529 + $0x90] sm:$0xff]
    %v4549 = vld [vmem:[%s4529 + $0x98] sm:$0xff]
    %v4550 = vld [vmem:[%s4529 + $0xa0] sm:$0xff]
    %v4551 = vld [vmem:[%s4529 + $0xa8] sm:$0xff]
    %v4552 = vld [vmem:[%s4529 + $0xb0] sm:$0xff]
    %v4553 = vld [vmem:[%s4529 + $0xb8] sm:$0xff]
    %v4554 = vld [vmem:[%s4529 + $0xc0] sm:$0xff]
    %v4555 = vld [vmem:[%s4529 + $0xc8] sm:$0xff]
    %v4556 = vld [vmem:[%s4529 + $0xd0] sm:$0xff]
    %v4557 = vld [vmem:[%s4529 + $0xd8] sm:$0xff]
    %v4558 = vld [vmem:[%s4529 + $0xe0] sm:$0xff]
    %v4559 = vld [vmem:[%s4529 + $0xe8] sm:$0xff]
    %v4560 = vld [vmem:[%s4529 + $0xf0] sm:$0xff]
    %v4561 = vld [vmem:[%s4529 + $0xf8] sm:$0xff]
    %v4562 = vld [vmem:[%s4529 + $0x100] sm:$0xff]
    %v4563 = vld [vmem:[%s4529 + $0x108] sm:$0xff]
    %v4564 = vld [vmem:[%s4529 + $0x110] sm:$0xff]
    %v4565 = vld [vmem:[%s4529 + $0x118] sm:$0xff]
    %v4566 = vld [vmem:[%s4529 + $0x120] sm:$0xff]
    %v4567 = vld [vmem:[%s4529 + $0x128] sm:$0xff]
    %v4568 = vld [vmem:[%s4529 + $0x130] sm:$0xff]
    %v4569 = vld [vmem:[%s4529 + $0x138] sm:$0xff]
    %v4570 = vld [vmem:[%s4529 + $0x140] sm:$0xff]
    %v4571 = vld [vmem:[%s4529 + $0x148] sm:$0xff]
    %v4572 = vld [vmem:[%s4529 + $0x150] sm:$0xff]
    %v4573 = vld [vmem:[%s4529 + $0x158] sm:$0xff]
    %v4574 = vld [vmem:[%s4529 + $0x160] sm:$0xff]
    %v4575 = vld [vmem:[%s4529 + $0x168] sm:$0xff]
    %v4576 = vld [vmem:[%s4529 + $0x170] sm:$0xff]
    %v4577 = vld [vmem:[%s4529 + $0x178] sm:$0xff]
    %v4578 = vld [vmem:[%s4529 + $0x180] sm:$0xff]
    %v4579 = vld [vmem:[%s4529 + $0x188] sm:$0xff]
    %v4580 = vld [vmem:[%s4529 + $0x190] sm:$0xff]
    %v4581 = vld [vmem:[%s4529 + $0x198] sm:$0xff]
    %v4582 = vld [vmem:[%s4529 + $0x1a0] sm:$0xff]
    %v4583 = vld [vmem:[%s4529 + $0x1a8] sm:$0xff]
    %v4584 = vld [vmem:[%s4529 + $0x1b0] sm:$0xff]
    %v4585 = vld [vmem:[%s4529 + $0x1b8] sm:$0xff]
    %v4586 = vld [vmem:[%s4529 + $0x1c0] sm:$0xff]
    %v4587 = vld [vmem:[%s4529 + $0x1c8] sm:$0xff]
    %v4588 = vld [vmem:[%s4529 + $0x1d0] sm:$0xff]
    %v4589 = vld [vmem:[%s4529 + $0x1d8] sm:$0xff]
    %v4590 = vld [vmem:[%s4529 + $0x1e0] sm:$0xff]
    %v4591 = vld [vmem:[%s4529 + $0x1e8] sm:$0xff]
    %v4592 = vld [vmem:[%s4529 + $0x1f0] sm:$0xff]
    %v4593 = vld [vmem:[%s4529 + $0x1f8] sm:$0xff]
    %v4594 = vunpack.c.l.b16 %v4514
    %v4595 = vunpack.c.h.b16 %v4514
    %v4596 = vunpack.c.l.b16 %v4528
    %v4597 = vunpack.c.h.b16 %v4528
    %v4598 = vpack.c.b16 %v4596, %v4594
    %v4599 = vpack.c.b16 %v4597, %v4595
    %v4666 = vunpack.c.l.b16 %v4530
    %v4667 = vunpack.c.h.b16 %v4530
    %v4668 = vunpack.c.l.b16 %v4531
    %v4669 = vunpack.c.h.b16 %v4531
    %v4670 = vunpack.c.l.b16 %v4532
    %v4671 = vunpack.c.h.b16 %v4532
    %v4672 = vunpack.c.l.b16 %v4533
    %v4673 = vunpack.c.h.b16 %v4533
    %v4674 = vunpack.c.l.b16 %v4534
    %v4675 = vunpack.c.h.b16 %v4534
    %v4676 = vunpack.c.l.b16 %v4535
    %v4677 = vunpack.c.h.b16 %v4535
    %v4678 = vunpack.c.l.b16 %v4536
    %v4679 = vunpack.c.h.b16 %v4536
    %v4680 = vunpack.c.l.b16 %v4537
    %v4681 = vunpack.c.h.b16 %v4537
    %v4682 = vunpack.c.l.b16 %v4538
    %v4683 = vunpack.c.h.b16 %v4538
    %v4684 = vunpack.c.l.b16 %v4539
    %v4685 = vunpack.c.h.b16 %v4539
    %v4686 = vunpack.c.l.b16 %v4540
    %v4687 = vunpack.c.h.b16 %v4540
    %v4688 = vunpack.c.l.b16 %v4541
    %v4689 = vunpack.c.h.b16 %v4541
    %v4690 = vunpack.c.l.b16 %v4542
    %v4691 = vunpack.c.h.b16 %v4542
    %v4692 = vunpack.c.l.b16 %v4543
    %v4693 = vunpack.c.h.b16 %v4543
    %v4694 = vunpack.c.l.b16 %v4544
    %v4695 = vunpack.c.h.b16 %v4544
    %v4696 = vunpack.c.l.b16 %v4545
    %v4697 = vunpack.c.h.b16 %v4545
    %v4698 = vunpack.c.l.b16 %v4546
    %v4699 = vunpack.c.h.b16 %v4546
    %v4700 = vunpack.c.l.b16 %v4547
    %v4701 = vunpack.c.h.b16 %v4547
    %v4702 = vunpack.c.l.b16 %v4548
    %v4703 = vunpack.c.h.b16 %v4548
    %v4704 = vunpack.c.l.b16 %v4549
    %v4705 = vunpack.c.h.b16 %v4549
    %v4706 = vunpack.c.l.b16 %v4550
    %v4707 = vunpack.c.h.b16 %v4550
    %v4708 = vunpack.c.l.b16 %v4551
    %v4709 = vunpack.c.h.b16 %v4551
    %v4710 = vunpack.c.l.b16 %v4552
    %v4711 = vunpack.c.h.b16 %v4552
    %v4712 = vunpack.c.l.b16 %v4553
    %v4713 = vunpack.c.h.b16 %v4553
    %v4714 = vunpack.c.l.b16 %v4554
    %v4715 = vunpack.c.h.b16 %v4554
    %v4716 = vunpack.c.l.b16 %v4555
    %v4717 = vunpack.c.h.b16 %v4555
    %v4718 = vunpack.c.l.b16 %v4556
    %v4719 = vunpack.c.h.b16 %v4556
    %v4720 = vunpack.c.l.b16 %v4557
    %v4721 = vunpack.c.h.b16 %v4557
    %v4722 = vunpack.c.l.b16 %v4558
    %v4723 = vunpack.c.h.b16 %v4558
    %v4724 = vunpack.c.l.b16 %v4559
    %v4725 = vunpack.c.h.b16 %v4559
    %v4726 = vunpack.c.l.b16 %v4560
    %v4727 = vunpack.c.h.b16 %v4560
    %v4728 = vunpack.c.l.b16 %v4561
    %v4729 = vunpack.c.h.b16 %v4561
    %v4730 = vunpack.c.l.b16 %v4562
    %v4731 = vunpack.c.h.b16 %v4562
    %v4732 = vunpack.c.l.b16 %v4563
    %v4733 = vunpack.c.h.b16 %v4563
    %v4734 = vunpack.c.l.b16 %v4564
    %v4735 = vunpack.c.h.b16 %v4564
    %v4736 = vunpack.c.l.b16 %v4565
    %v4737 = vunpack.c.h.b16 %v4565
    %v4738 = vunpack.c.l.b16 %v4566
    %v4739 = vunpack.c.h.b16 %v4566
    %v4740 = vunpack.c.l.b16 %v4567
    %v4741 = vunpack.c.h.b16 %v4567
    %v4742 = vunpack.c.l.b16 %v4568
    %v4743 = vunpack.c.h.b16 %v4568
    %v4744 = vunpack.c.l.b16 %v4569
    %v4745 = vunpack.c.h.b16 %v4569
    %v4746 = vunpack.c.l.b16 %v4570
    %v4747 = vunpack.c.h.b16 %v4570
    %v4748 = vunpack.c.l.b16 %v4571
    %v4749 = vunpack.c.h.b16 %v4571
    %v4750 = vunpack.c.l.b16 %v4572
    %v4751 = vunpack.c.h.b16 %v4572
    %v4752 = vunpack.c.l.b16 %v4573
    %v4753 = vunpack.c.h.b16 %v4573
    %v4754 = vunpack.c.l.b16 %v4574
    %v4755 = vunpack.c.h.b16 %v4574
    %v4756 = vunpack.c.l.b16 %v4575
    %v4757 = vunpack.c.h.b16 %v4575
    %v4758 = vunpack.c.l.b16 %v4576
    %v4759 = vunpack.c.h.b16 %v4576
    %v4760 = vunpack.c.l.b16 %v4577
    %v4761 = vunpack.c.h.b16 %v4577
    %v4762 = vunpack.c.l.b16 %v4578
    %v4763 = vunpack.c.h.b16 %v4578
    %v4764 = vunpack.c.l.b16 %v4579
    %v4765 = vunpack.c.h.b16 %v4579
    %v4766 = vunpack.c.l.b16 %v4580
    %v4767 = vunpack.c.h.b16 %v4580
    %v4768 = vunpack.c.l.b16 %v4581
    %v4769 = vunpack.c.h.b16 %v4581
    %v4770 = vunpack.c.l.b16 %v4582
    %v4771 = vunpack.c.h.b16 %v4582
    %v4772 = vunpack.c.l.b16 %v4583
    %v4773 = vunpack.c.h.b16 %v4583
    %v4774 = vunpack.c.l.b16 %v4584
    %v4775 = vunpack.c.h.b16 %v4584
    %v4776 = vunpack.c.l.b16 %v4585
    %v4777 = vunpack.c.h.b16 %v4585
    %v4778 = vunpack.c.l.b16 %v4586
    %v4779 = vunpack.c.h.b16 %v4586
    %v4780 = vunpack.c.l.b16 %v4587
    %v4781 = vunpack.c.h.b16 %v4587
    %v4782 = vunpack.c.l.b16 %v4588
    %v4783 = vunpack.c.h.b16 %v4588
    %v4784 = vunpack.c.l.b16 %v4589
    %v4785 = vunpack.c.h.b16 %v4589
    %v4786 = vunpack.c.l.b16 %v4590
    %v4787 = vunpack.c.h.b16 %v4590
    %v4788 = vunpack.c.l.b16 %v4591
    %v4789 = vunpack.c.h.b16 %v4591
    %v4790 = vunpack.c.l.b16 %v4592
    %v4791 = vunpack.c.h.b16 %v4592
    %v4792 = vunpack.c.l.b16 %v4593
    %v4793 = vunpack.c.h.b16 %v4593
    %v4794 = vpack.c.b16 %v4670, %v4666
    %v4795 = vpack.c.b16 %v4671, %v4667
    %v4796 = vpack.c.b16 %v4672, %v4668
    %v4797 = vpack.c.b16 %v4673, %v4669
    %v4798 = vpack.c.b16 %v4678, %v4674
    %v4799 = vpack.c.b16 %v4679, %v4675
    %v4800 = vpack.c.b16 %v4680, %v4676
    %v4801 = vpack.c.b16 %v4681, %v4677
    %v4802 = vpack.c.b16 %v4686, %v4682
    %v4803 = vpack.c.b16 %v4687, %v4683
    %v4804 = vpack.c.b16 %v4688, %v4684
    %v4805 = vpack.c.b16 %v4689, %v4685
    %v4806 = vpack.c.b16 %v4694, %v4690
    %v4807 = vpack.c.b16 %v4695, %v4691
    %v4808 = vpack.c.b16 %v4696, %v4692
    %v4809 = vpack.c.b16 %v4697, %v4693
    %v4810 = vpack.c.b16 %v4702, %v4698
    %v4811 = vpack.c.b16 %v4703, %v4699
    %v4812 = vpack.c.b16 %v4704, %v4700
    %v4813 = vpack.c.b16 %v4705, %v4701
    %v4814 = vpack.c.b16 %v4710, %v4706
    %v4815 = vpack.c.b16 %v4711, %v4707
    %v4816 = vpack.c.b16 %v4712, %v4708
    %v4817 = vpack.c.b16 %v4713, %v4709
    %v4818 = vpack.c.b16 %v4718, %v4714
    %v4819 = vpack.c.b16 %v4719, %v4715
    %v4820 = vpack.c.b16 %v4720, %v4716
    %v4821 = vpack.c.b16 %v4721, %v4717
    %v4822 = vpack.c.b16 %v4726, %v4722
    %v4823 = vpack.c.b16 %v4727, %v4723
    %v4824 = vpack.c.b16 %v4728, %v4724
    %v4825 = vpack.c.b16 %v4729, %v4725
    %v4826 = vpack.c.b16 %v4734, %v4730
    %v4827 = vpack.c.b16 %v4735, %v4731
    %v4828 = vpack.c.b16 %v4736, %v4732
    %v4829 = vpack.c.b16 %v4737, %v4733
    %v4830 = vpack.c.b16 %v4742, %v4738
    %v4831 = vpack.c.b16 %v4743, %v4739
    %v4832 = vpack.c.b16 %v4744, %v4740
    %v4833 = vpack.c.b16 %v4745, %v4741
    %v4834 = vpack.c.b16 %v4750, %v4746
    %v4835 = vpack.c.b16 %v4751, %v4747
    %v4836 = vpack.c.b16 %v4752, %v4748
    %v4837 = vpack.c.b16 %v4753, %v4749
    %v4838 = vpack.c.b16 %v4758, %v4754
    %v4839 = vpack.c.b16 %v4759, %v4755
    %v4840 = vpack.c.b16 %v4760, %v4756
    %v4841 = vpack.c.b16 %v4761, %v4757
    %v4842 = vpack.c.b16 %v4766, %v4762
    %v4843 = vpack.c.b16 %v4767, %v4763
    %v4844 = vpack.c.b16 %v4768, %v4764
    %v4845 = vpack.c.b16 %v4769, %v4765
    %v4846 = vpack.c.b16 %v4774, %v4770
    %v4847 = vpack.c.b16 %v4775, %v4771
    %v4848 = vpack.c.b16 %v4776, %v4772
    %v4849 = vpack.c.b16 %v4777, %v4773
    %v4850 = vpack.c.b16 %v4782, %v4778
    %v4851 = vpack.c.b16 %v4783, %v4779
    %v4852 = vpack.c.b16 %v4784, %v4780
    %v4853 = vpack.c.b16 %v4785, %v4781
    %v4854 = vpack.c.b16 %v4790, %v4786
    %v4855 = vpack.c.b16 %v4791, %v4787
    %v4856 = vpack.c.b16 %v4792, %v4788
    %v4857 = vpack.c.b16 %v4793, %v4789
    %4922 = vmatprep.subr.bf16.mxu0 %v4795
    %4923 = vmatpush1.bf16.msra.mxu0 %v4794
    %4924 = vmatprep.subr.bf16.mxu0 %v4799
    %4925 = vmatpush1.bf16.msra.mxu0 %v4798
    %4926 = vmatprep.subr.bf16.mxu0 %v4803
    %4927 = vmatpush1.bf16.msra.mxu0 %v4802
    %4928 = vmatprep.subr.bf16.mxu0 %v4807
    %4929 = vmatpush1.bf16.msra.mxu0 %v4806
    %4930 = vmatprep.subr.bf16.mxu0 %v4811
    %4931 = vmatpush1.bf16.msra.mxu0 %v4810
    %4932 = vmatprep.subr.bf16.mxu0 %v4815
    %4933 = vmatpush1.bf16.msra.mxu0 %v4814
    %4934 = vmatprep.subr.bf16.mxu0 %v4819
    %4935 = vmatpush1.bf16.msra.mxu0 %v4818
    %4936 = vmatprep.subr.bf16.mxu0 %v4823
    %4937 = vmatpush1.bf16.msra.mxu0 %v4822
    %4938 = vmatprep.subr.bf16.mxu0 %v4827
    %4939 = vmatpush1.bf16.msra.mxu0 %v4826
    %4940 = vmatprep.subr.bf16.mxu0 %v4831
    %4941 = vmatpush1.bf16.msra.mxu0 %v4830
    %4942 = vmatprep.subr.bf16.mxu0 %v4835
    %4943 = vmatpush1.bf16.msra.mxu0 %v4834
    %4944 = vmatprep.subr.bf16.mxu0 %v4839
    %4945 = vmatpush1.bf16.msra.mxu0 %v4838
    %4946 = vmatprep.subr.bf16.mxu0 %v4843
    %4947 = vmatpush1.bf16.msra.mxu0 %v4842
    %4948 = vmatprep.subr.bf16.mxu0 %v4847
    %4949 = vmatpush1.bf16.msra.mxu0 %v4846
    %4950 = vmatprep.subr.bf16.mxu0 %v4851
    %4951 = vmatpush1.bf16.msra.mxu0 %v4850
    %4952 = vmatprep.subr.bf16.mxu0 %v4855
    %4953 = vmatpush1.bf16.msra.mxu0 %v4854
    %4954 = vmatprep.mubr.bf16.mxu0 %v4599
    %4955 = vmatmul.mubr.bf16.gmra.mrb[0].mxu0 %v4598
    %v4956 = vpop.f32.mrb[0].mxu0
    %v4957 = vadd.f32 0.0, %v4956
    %v4958 = vpop.f32.mrb[0].mxu0
    %v4959 = vadd.f32 0.0, %v4958
    %v4960 = vpop.f32.mrb[0].mxu0
    %v4961 = vadd.f32 0.0, %v4960
    %v4962 = vpop.f32.mrb[0].mxu0
    %v4963 = vadd.f32 0.0, %v4962
    %4964 = vdwg.mxu0
    %4965 = vmatprep.subr.bf16.mxu0 %v4797
    %4966 = vmatpush1.bf16.msra.mxu0 %v4796
    %4967 = vmatprep.subr.bf16.mxu0 %v4801
    %4968 = vmatpush1.bf16.msra.mxu0 %v4800
    %4969 = vmatprep.subr.bf16.mxu0 %v4805
    %4970 = vmatpush1.bf16.msra.mxu0 %v4804
    %4971 = vmatprep.subr.bf16.mxu0 %v4809
    %4972 = vmatpush1.bf16.msra.mxu0 %v4808
    %4973 = vmatprep.subr.bf16.mxu0 %v4813
    %4974 = vmatpush1.bf16.msra.mxu0 %v4812
    %4975 = vmatprep.subr.bf16.mxu0 %v4817
    %4976 = vmatpush1.bf16.msra.mxu0 %v4816
    %4977 = vmatprep.subr.bf16.mxu0 %v4821
    %4978 = vmatpush1.bf16.msra.mxu0 %v4820
    %4979 = vmatprep.subr.bf16.mxu0 %v4825
    %4980 = vmatpush1.bf16.msra.mxu0 %v4824
    %4981 = vmatprep.subr.bf16.mxu0 %v4829
    %4982 = vmatpush1.bf16.msra.mxu0 %v4828
    %4983 = vmatprep.subr.bf16.mxu0 %v4833
    %4984 = vmatpush1.bf16.msra.mxu0 %v4832
    %4985 = vmatprep.subr.bf16.mxu0 %v4837
    %4986 = vmatpush1.bf16.msra.mxu0 %v4836
    %4987 = vmatprep.subr.bf16.mxu0 %v4841
    %4988 = vmatpush1.bf16.msra.mxu0 %v4840
    %4989 = vmatprep.subr.bf16.mxu0 %v4845
    %4990 = vmatpush1.bf16.msra.mxu0 %v4844
    %4991 = vmatprep.subr.bf16.mxu0 %v4849
    %4992 = vmatpush1.bf16.msra.mxu0 %v4848
    %4993 = vmatprep.subr.bf16.mxu0 %v4853
    %4994 = vmatpush1.bf16.msra.mxu0 %v4852
    %4995 = vmatprep.subr.bf16.mxu0 %v4857
    %4996 = vmatpush1.bf16.msra.mxu0 %v4856
    %4997 = vmatprep.mubr.bf16.mxu0 %v4599
    %4998 = vmatmul.mubr.bf16.gmra.mrb[0].mxu0 %v4598
    %v4999 = vpop.f32.mrb[0].mxu0
    %v5000 = vadd.f32 0.0, %v4999
    %v5001 = vpop.f32.mrb[0].mxu0
    %v5002 = vadd.f32 0.0, %v5001
    %v5003 = vpop.f32.mrb[0].mxu0
    %v5004 = vadd.f32 0.0, %v5003
    %v5005 = vpop.f32.mrb[0].mxu0
    %v5006 = vadd.f32 0.0, %v5005
    %5007 = vdwg.mxu0
    %v5008 = vpack.c.b16 %v4424, %v4422
    %v5009 = vpack.c.b16 %v4425, %v4423
    %v5076 = vunpack.c.l.b16 %v4426
    %v5077 = vunpack.c.h.b16 %v4426
    %v5078 = vunpack.c.l.b16 %v4427
    %v5079 = vunpack.c.h.b16 %v4427
    %v5080 = vunpack.c.l.b16 %v4428
    %v5081 = vunpack.c.h.b16 %v4428
    %v5082 = vunpack.c.l.b16 %v4429
    %v5083 = vunpack.c.h.b16 %v4429
    %v5084 = vunpack.c.l.b16 %v4430
    %v5085 = vunpack.c.h.b16 %v4430
    %v5086 = vunpack.c.l.b16 %v4431
    %v5087 = vunpack.c.h.b16 %v4431
    %v5088 = vunpack.c.l.b16 %v4432
    %v5089 = vunpack.c.h.b16 %v4432
    %v5090 = vunpack.c.l.b16 %v4433
    %v5091 = vunpack.c.h.b16 %v4433
    %v5092 = vunpack.c.l.b16 %v4434
    %v5093 = vunpack.c.h.b16 %v4434
    %v5094 = vunpack.c.l.b16 %v4435
    %v5095 = vunpack.c.h.b16 %v4435
    %v5096 = vunpack.c.l.b16 %v4436
    %v5097 = vunpack.c.h.b16 %v4436
    %v5098 = vunpack.c.l.b16 %v4437
    %v5099 = vunpack.c.h.b16 %v4437
    %v5100 = vunpack.c.l.b16 %v4438
    %v5101 = vunpack.c.h.b16 %v4438
    %v5102 = vunpack.c.l.b16 %v4439
    %v5103 = vunpack.c.h.b16 %v4439
    %v5104 = vunpack.c.l.b16 %v4440
    %v5105 = vunpack.c.h.b16 %v4440
    %v5106 = vunpack.c.l.b16 %v4441
    %v5107 = vunpack.c.h.b16 %v4441
    %v5108 = vunpack.c.l.b16 %v4442
    %v5109 = vunpack.c.h.b16 %v4442
    %v5110 = vunpack.c.l.b16 %v4443
    %v5111 = vunpack.c.h.b16 %v4443
    %v5112 = vunpack.c.l.b16 %v4444
    %v5113 = vunpack.c.h.b16 %v4444
    %v5114 = vunpack.c.l.b16 %v4445
    %v5115 = vunpack.c.h.b16 %v4445
    %v5116 = vunpack.c.l.b16 %v4446
    %v5117 = vunpack.c.h.b16 %v4446
    %v5118 = vunpack.c.l.b16 %v4447
    %v5119 = vunpack.c.h.b16 %v4447
    %v5120 = vunpack.c.l.b16 %v4448
    %v5121 = vunpack.c.h.b16 %v4448
    %v5122 = vunpack.c.l.b16 %v4449
    %v5123 = vunpack.c.h.b16 %v4449
    %v5124 = vunpack.c.l.b16 %v4450
    %v5125 = vunpack.c.h.b16 %v4450
    %v5126 = vunpack.c.l.b16 %v4451
    %v5127 = vunpack.c.h.b16 %v4451
    %v5128 = vunpack.c.l.b16 %v4452
    %v5129 = vunpack.c.h.b16 %v4452
    %v5130 = vunpack.c.l.b16 %v4453
    %v5131 = vunpack.c.h.b16 %v4453
    %v5132 = vunpack.c.l.b16 %v4454
    %v5133 = vunpack.c.h.b16 %v4454
    %v5134 = vunpack.c.l.b16 %v4455
    %v5135 = vunpack.c.h.b16 %v4455
    %v5136 = vunpack.c.l.b16 %v4456
    %v5137 = vunpack.c.h.b16 %v4456
    %v5138 = vunpack.c.l.b16 %v4457
    %v5139 = vunpack.c.h.b16 %v4457
    %v5140 = vunpack.c.l.b16 %v4458
    %v5141 = vunpack.c.h.b16 %v4458
    %v5142 = vunpack.c.l.b16 %v4459
    %v5143 = vunpack.c.h.b16 %v4459
    %v5144 = vunpack.c.l.b16 %v4460
    %v5145 = vunpack.c.h.b16 %v4460
    %v5146 = vunpack.c.l.b16 %v4461
    %v5147 = vunpack.c.h.b16 %v4461
    %v5148 = vunpack.c.l.b16 %v4462
    %v5149 = vunpack.c.h.b16 %v4462
    %v5150 = vunpack.c.l.b16 %v4463
    %v5151 = vunpack.c.h.b16 %v4463
    %v5152 = vunpack.c.l.b16 %v4464
    %v5153 = vunpack.c.h.b16 %v4464
    %v5154 = vunpack.c.l.b16 %v4465
    %v5155 = vunpack.c.h.b16 %v4465
    %v5156 = vunpack.c.l.b16 %v4466
    %v5157 = vunpack.c.h.b16 %v4466
    %v5158 = vunpack.c.l.b16 %v4467
    %v5159 = vunpack.c.h.b16 %v4467
    %v5160 = vunpack.c.l.b16 %v4468
    %v5161 = vunpack.c.h.b16 %v4468
    %v5162 = vunpack.c.l.b16 %v4469
    %v5163 = vunpack.c.h.b16 %v4469
    %v5164 = vunpack.c.l.b16 %v4470
    %v5165 = vunpack.c.h.b16 %v4470
    %v5166 = vunpack.c.l.b16 %v4471
    %v5167 = vunpack.c.h.b16 %v4471
    %v5168 = vunpack.c.l.b16 %v4472
    %v5169 = vunpack.c.h.b16 %v4472
    %v5170 = vunpack.c.l.b16 %v4473
    %v5171 = vunpack.c.h.b16 %v4473
    %v5172 = vunpack.c.l.b16 %v4474
    %v5173 = vunpack.c.h.b16 %v4474
    %v5174 = vunpack.c.l.b16 %v4475
    %v5175 = vunpack.c.h.b16 %v4475
    %v5176 = vunpack.c.l.b16 %v4476
    %v5177 = vunpack.c.h.b16 %v4476
    %v5178 = vunpack.c.l.b16 %v4477
    %v5179 = vunpack.c.h.b16 %v4477
    %v5180 = vunpack.c.l.b16 %v4478
    %v5181 = vunpack.c.h.b16 %v4478
    %v5182 = vunpack.c.l.b16 %v4479
    %v5183 = vunpack.c.h.b16 %v4479
    %v5184 = vunpack.c.l.b16 %v4480
    %v5185 = vunpack.c.h.b16 %v4480
    %v5186 = vunpack.c.l.b16 %v4481
    %v5187 = vunpack.c.h.b16 %v4481
    %v5188 = vunpack.c.l.b16 %v4482
    %v5189 = vunpack.c.h.b16 %v4482
    %v5190 = vunpack.c.l.b16 %v4483
    %v5191 = vunpack.c.h.b16 %v4483
    %v5192 = vunpack.c.l.b16 %v4484
    %v5193 = vunpack.c.h.b16 %v4484
    %v5194 = vunpack.c.l.b16 %v4485
    %v5195 = vunpack.c.h.b16 %v4485
    %v5196 = vunpack.c.l.b16 %v4486
    %v5197 = vunpack.c.h.b16 %v4486
    %v5198 = vunpack.c.l.b16 %v4487
    %v5199 = vunpack.c.h.b16 %v4487
    %v5200 = vunpack.c.l.b16 %v4488
    %v5201 = vunpack.c.h.b16 %v4488
    %v5202 = vunpack.c.l.b16 %v4489
    %v5203 = vunpack.c.h.b16 %v4489
    %v5204 = vpack.c.b16 %v5080, %v5076
    %v5205 = vpack.c.b16 %v5081, %v5077
    %v5206 = vpack.c.b16 %v5082, %v5078
    %v5207 = vpack.c.b16 %v5083, %v5079
    %v5208 = vpack.c.b16 %v5088, %v5084
    %v5209 = vpack.c.b16 %v5089, %v5085
    %v5210 = vpack.c.b16 %v5090, %v5086
    %v5211 = vpack.c.b16 %v5091, %v5087
    %v5212 = vpack.c.b16 %v5096, %v5092
    %v5213 = vpack.c.b16 %v5097, %v5093
    %v5214 = vpack.c.b16 %v5098, %v5094
    %v5215 = vpack.c.b16 %v5099, %v5095
    %v5216 = vpack.c.b16 %v5104, %v5100
    %v5217 = vpack.c.b16 %v5105, %v5101
    %v5218 = vpack.c.b16 %v5106, %v5102
    %v5219 = vpack.c.b16 %v5107, %v5103
    %v5220 = vpack.c.b16 %v5112, %v5108
    %v5221 = vpack.c.b16 %v5113, %v5109
    %v5222 = vpack.c.b16 %v5114, %v5110
    %v5223 = vpack.c.b16 %v5115, %v5111
    %v5224 = vpack.c.b16 %v5120, %v5116
    %v5225 = vpack.c.b16 %v5121, %v5117
    %v5226 = vpack.c.b16 %v5122, %v5118
    %v5227 = vpack.c.b16 %v5123, %v5119
    %v5228 = vpack.c.b16 %v5128, %v5124
    %v5229 = vpack.c.b16 %v5129, %v5125
    %v5230 = vpack.c.b16 %v5130, %v5126
    %v5231 = vpack.c.b16 %v5131, %v5127
    %v5232 = vpack.c.b16 %v5136, %v5132
    %v5233 = vpack.c.b16 %v5137, %v5133
    %v5234 = vpack.c.b16 %v5138, %v5134
    %v5235 = vpack.c.b16 %v5139, %v5135
    %v5236 = vpack.c.b16 %v5144, %v5140
    %v5237 = vpack.c.b16 %v5145, %v5141
    %v5238 = vpack.c.b16 %v5146, %v5142
    %v5239 = vpack.c.b16 %v5147, %v5143
    %v5240 = vpack.c.b16 %v5152, %v5148
    %v5241 = vpack.c.b16 %v5153, %v5149
    %v5242 = vpack.c.b16 %v5154, %v5150
    %v5243 = vpack.c.b16 %v5155, %v5151
    %v5244 = vpack.c.b16 %v5160, %v5156
    %v5245 = vpack.c.b16 %v5161, %v5157
    %v5246 = vpack.c.b16 %v5162, %v5158
    %v5247 = vpack.c.b16 %v5163, %v5159
    %v5248 = vpack.c.b16 %v5168, %v5164
    %v5249 = vpack.c.b16 %v5169, %v5165
    %v5250 = vpack.c.b16 %v5170, %v5166
    %v5251 = vpack.c.b16 %v5171, %v5167
    %v5252 = vpack.c.b16 %v5176, %v5172
    %v5253 = vpack.c.b16 %v5177, %v5173
    %v5254 = vpack.c.b16 %v5178, %v5174
    %v5255 = vpack.c.b16 %v5179, %v5175
    %v5256 = vpack.c.b16 %v5184, %v5180
    %v5257 = vpack.c.b16 %v5185, %v5181
    %v5258 = vpack.c.b16 %v5186, %v5182
    %v5259 = vpack.c.b16 %v5187, %v5183
    %v5260 = vpack.c.b16 %v5192, %v5188
    %v5261 = vpack.c.b16 %v5193, %v5189
    %v5262 = vpack.c.b16 %v5194, %v5190
    %v5263 = vpack.c.b16 %v5195, %v5191
    %v5264 = vpack.c.b16 %v5200, %v5196
    %v5265 = vpack.c.b16 %v5201, %v5197
    %v5266 = vpack.c.b16 %v5202, %v5198
    %v5267 = vpack.c.b16 %v5203, %v5199
    %5332 = vmatprep.subr.bf16.mxu0 %v5205
    %5333 = vmatpush1.bf16.msra.mxu0 %v5204
    %5334 = vmatprep.subr.bf16.mxu0 %v5209
    %5335 = vmatpush1.bf16.msra.mxu0 %v5208
    %5336 = vmatprep.subr.bf16.mxu0 %v5213
    %5337 = vmatpush1.bf16.msra.mxu0 %v5212
    %5338 = vmatprep.subr.bf16.mxu0 %v5217
    %5339 = vmatpush1.bf16.msra.mxu0 %v5216
    %5340 = vmatprep.subr.bf16.mxu0 %v5221
    %5341 = vmatpush1.bf16.msra.mxu0 %v5220
    %5342 = vmatprep.subr.bf16.mxu0 %v5225
    %5343 = vmatpush1.bf16.msra.mxu0 %v5224
    %5344 = vmatprep.subr.bf16.mxu0 %v5229
    %5345 = vmatpush1.bf16.msra.mxu0 %v5228
    %5346 = vmatprep.subr.bf16.mxu0 %v5233
    %5347 = vmatpush1.bf16.msra.mxu0 %v5232
    %5348 = vmatprep.subr.bf16.mxu0 %v5237
    %5349 = vmatpush1.bf16.msra.mxu0 %v5236
    %5350 = vmatprep.subr.bf16.mxu0 %v5241
    %5351 = vmatpush1.bf16.msra.mxu0 %v5240
    %5352 = vmatprep.subr.bf16.mxu0 %v5245
    %5353 = vmatpush1.bf16.msra.mxu0 %v5244
    %5354 = vmatprep.subr.bf16.mxu0 %v5249
    %5355 = vmatpush1.bf16.msra.mxu0 %v5248
    %5356 = vmatprep.subr.bf16.mxu0 %v5253
    %5357 = vmatpush1.bf16.msra.mxu0 %v5252
    %5358 = vmatprep.subr.bf16.mxu0 %v5257
    %5359 = vmatpush1.bf16.msra.mxu0 %v5256
    %5360 = vmatprep.subr.bf16.mxu0 %v5261
    %5361 = vmatpush1.bf16.msra.mxu0 %v5260
    %5362 = vmatprep.subr.bf16.mxu0 %v5265
    %5363 = vmatpush1.bf16.msra.mxu0 %v5264
    %5364 = vmatprep.mubr.bf16.mxu0 %v5009
    %5365 = vmatmul.mubr.bf16.gmra.mrb[0].mxu0 %v5008
    %v5366 = vpop.f32.mrb[0].mxu0
    %v5367 = vadd.f32 %v4957, %v5366
    %v5368 = vpop.f32.mrb[0].mxu0
    %v5369 = vadd.f32 %v4959, %v5368
    %v5370 = vpop.f32.mrb[0].mxu0
    %v5371 = vadd.f32 %v4961, %v5370
    %v5372 = vpop.f32.mrb[0].mxu0
    %v5373 = vadd.f32 %v4963, %v5372
    %5374 = vdwg.mxu0
    %5375 = vmatprep.subr.bf16.mxu0 %v5207
    %5376 = vmatpush1.bf16.msra.mxu0 %v5206
    %5377 = vmatprep.subr.bf16.mxu0 %v5211
    %5378 = vmatpush1.bf16.msra.mxu0 %v5210
    %5379 = vmatprep.subr.bf16.mxu0 %v5215
    %5380 = vmatpush1.bf16.msra.mxu0 %v5214
    %5381 = vmatprep.subr.bf16.mxu0 %v5219
    %5382 = vmatpush1.bf16.msra.mxu0 %v5218
    %5383 = vmatprep.subr.bf16.mxu0 %v5223
    %5384 = vmatpush1.bf16.msra.mxu0 %v5222
    %5385 = vmatprep.subr.bf16.mxu0 %v5227
    %5386 = vmatpush1.bf16.msra.mxu0 %v5226
    %5387 = vmatprep.subr.bf16.mxu0 %v5231
    %5388 = vmatpush1.bf16.msra.mxu0 %v5230
    %5389 = vmatprep.subr.bf16.mxu0 %v5235
    %5390 = vmatpush1.bf16.msra.mxu0 %v5234
    %5391 = vmatprep.subr.bf16.mxu0 %v5239
    %5392 = vmatpush1.bf16.msra.mxu0 %v5238
    %5393 = vmatprep.subr.bf16.mxu0 %v5243
    %5394 = vmatpush1.bf16.msra.mxu0 %v5242
    %5395 = vmatprep.subr.bf16.mxu0 %v5247
    %5396 = vmatpush1.bf16.msra.mxu0 %v5246
    %5397 = vmatprep.subr.bf16.mxu0 %v5251
    %5398 = vmatpush1.bf16.msra.mxu0 %v5250
    %5399 = vmatprep.subr.bf16.mxu0 %v5255
    %5400 = vmatpush1.bf16.msra.mxu0 %v5254
    %5401 = vmatprep.subr.bf16.mxu0 %v5259
    %5402 = vmatpush1.bf16.msra.mxu0 %v5258
    %5403 = vmatprep.subr.bf16.mxu0 %v5263
    %5404 = vmatpush1.bf16.msra.mxu0 %v5262
    %5405 = vmatprep.subr.bf16.mxu0 %v5267
    %5406 = vmatpush1.bf16.msra.mxu0 %v5266
    %5407 = vmatprep.mubr.bf16.mxu0 %v5009
    %5408 = vmatmul.mubr.bf16.gmra.mrb[0].mxu0 %v5008
    %v5409 = vpop.f32.mrb[0].mxu0
    %v5410 = vadd.f32 %v5000, %v5409
    %v5411 = vpop.f32.mrb[0].mxu0
    %v5412 = vadd.f32 %v5002, %v5411
    %v5413 = vpop.f32.mrb[0].mxu0
    %v5414 = vadd.f32 %v5004, %v5413
    %v5415 = vpop.f32.mrb[0].mxu0
    %v5416 = vadd.f32 %v5006, %v5415
    %5417 = vdwg.mxu0
    %vm5418 = vcmask 1042432
    %vm5419 = vcmask 1046532
    %vm5420 = vmor %vm5418, %vm5419
    %v5421 = vrot.slane %v4494, 5
    %v5422 = vrot.slane %v5421, 4
    %v5423 = vrot.slane %v4495, 5
    %v5424 = vsel %vm5420, %v5422, %v5423
    %v5425 = vrot.slane %v4496, 5
    %v5426 = vrot.slane %v5425, 4
    %v5427 = vrot.slane %v4497, 5
    %v5428 = vsel %vm5420, %v5426, %v5427
    %s5429 = scalar_lea.vmem [#allocation10], 1024
    %v5430 = vld [vmem:[%s5429] sm:$0xff]
    %v5431 = vld [vmem:[%s5429 + $0x8] sm:$0xff]
    %v5432 = vld [vmem:[%s5429 + $0x10] sm:$0xff]
    %v5433 = vld [vmem:[%s5429 + $0x18] sm:$0xff]
    %v5434 = vld [vmem:[%s5429 + $0x20] sm:$0xff]
    %v5435 = vld [vmem:[%s5429 + $0x28] sm:$0xff]
    %v5436 = vld [vmem:[%s5429 + $0x30] sm:$0xff]
    %v5437 = vld [vmem:[%s5429 + $0x38] sm:$0xff]
    %v5438 = vld [vmem:[%s5429 + $0x40] sm:$0xff]
    %v5439 = vld [vmem:[%s5429 + $0x48] sm:$0xff]
    %v5440 = vld [vmem:[%s5429 + $0x50] sm:$0xff]
    %v5441 = vld [vmem:[%s5429 + $0x58] sm:$0xff]
    %v5442 = vld [vmem:[%s5429 + $0x60] sm:$0xff]
    %v5443 = vld [vmem:[%s5429 + $0x68] sm:$0xff]
    %v5444 = vld [vmem:[%s5429 + $0x70] sm:$0xff]
    %v5445 = vld [vmem:[%s5429 + $0x78] sm:$0xff]
    %v5446 = vld [vmem:[%s5429 + $0x80] sm:$0xff]
    %v5447 = vld [vmem:[%s5429 + $0x88] sm:$0xff]
    %v5448 = vld [vmem:[%s5429 + $0x90] sm:$0xff]
    %v5449 = vld [vmem:[%s5429 + $0x98] sm:$0xff]
    %v5450 = vld [vmem:[%s5429 + $0xa0] sm:$0xff]
    %v5451 = vld [vmem:[%s5429 + $0xa8] sm:$0xff]
    %v5452 = vld [vmem:[%s5429 + $0xb0] sm:$0xff]
    %v5453 = vld [vmem:[%s5429 + $0xb8] sm:$0xff]
    %v5454 = vld [vmem:[%s5429 + $0xc0] sm:$0xff]
    %v5455 = vld [vmem:[%s5429 + $0xc8] sm:$0xff]
    %v5456 = vld [vmem:[%s5429 + $0xd0] sm:$0xff]
    %v5457 = vld [vmem:[%s5429 + $0xd8] sm:$0xff]
    %v5458 = vld [vmem:[%s5429 + $0xe0] sm:$0xff]
    %v5459 = vld [vmem:[%s5429 + $0xe8] sm:$0xff]
    %v5460 = vld [vmem:[%s5429 + $0xf0] sm:$0xff]
    %v5461 = vld [vmem:[%s5429 + $0xf8] sm:$0xff]
    %v5462 = vld [vmem:[%s5429 + $0x100] sm:$0xff]
    %v5463 = vld [vmem:[%s5429 + $0x108] sm:$0xff]
    %v5464 = vld [vmem:[%s5429 + $0x110] sm:$0xff]
    %v5465 = vld [vmem:[%s5429 + $0x118] sm:$0xff]
    %v5466 = vld [vmem:[%s5429 + $0x120] sm:$0xff]
    %v5467 = vld [vmem:[%s5429 + $0x128] sm:$0xff]
    %v5468 = vld [vmem:[%s5429 + $0x130] sm:$0xff]
    %v5469 = vld [vmem:[%s5429 + $0x138] sm:$0xff]
    %v5470 = vld [vmem:[%s5429 + $0x140] sm:$0xff]
    %v5471 = vld [vmem:[%s5429 + $0x148] sm:$0xff]
    %v5472 = vld [vmem:[%s5429 + $0x150] sm:$0xff]
    %v5473 = vld [vmem:[%s5429 + $0x158] sm:$0xff]
    %v5474 = vld [vmem:[%s5429 + $0x160] sm:$0xff]
    %v5475 = vld [vmem:[%s5429 + $0x168] sm:$0xff]
    %v5476 = vld [vmem:[%s5429 + $0x170] sm:$0xff]
    %v5477 = vld [vmem:[%s5429 + $0x178] sm:$0xff]
    %v5478 = vld [vmem:[%s5429 + $0x180] sm:$0xff]
    %v5479 = vld [vmem:[%s5429 + $0x188] sm:$0xff]
    %v5480 = vld [vmem:[%s5429 + $0x190] sm:$0xff]
    %v5481 = vld [vmem:[%s5429 + $0x198] sm:$0xff]
    %v5482 = vld [vmem:[%s5429 + $0x1a0] sm:$0xff]
    %v5483 = vld [vmem:[%s5429 + $0x1a8] sm:$0xff]
    %v5484 = vld [vmem:[%s5429 + $0x1b0] sm:$0xff]
    %v5485 = vld [vmem:[%s5429 + $0x1b8] sm:$0xff]
    %v5486 = vld [vmem:[%s5429 + $0x1c0] sm:$0xff]
    %v5487 = vld [vmem:[%s5429 + $0x1c8] sm:$0xff]
    %v5488 = vld [vmem:[%s5429 + $0x1d0] sm:$0xff]
    %v5489 = vld [vmem:[%s5429 + $0x1d8] sm:$0xff]
    %v5490 = vld [vmem:[%s5429 + $0x1e0] sm:$0xff]
    %v5491 = vld [vmem:[%s5429 + $0x1e8] sm:$0xff]
    %v5492 = vld [vmem:[%s5429 + $0x1f0] sm:$0xff]
    %v5493 = vld [vmem:[%s5429 + $0x1f8] sm:$0xff]
    %v5494 = vunpack.c.l.b16 %v5424
    %v5495 = vunpack.c.h.b16 %v5424
    %v5496 = vunpack.c.l.b16 %v5428
    %v5497 = vunpack.c.h.b16 %v5428
    %v5498 = vpack.c.b16 %v5496, %v5494
    %v5499 = vpack.c.b16 %v5497, %v5495
    %v5566 = vunpack.c.l.b16 %v5430
    %v5567 = vunpack.c.h.b16 %v5430
    %v5568 = vunpack.c.l.b16 %v5431
    %v5569 = vunpack.c.h.b16 %v5431
    %v5570 = vunpack.c.l.b16 %v5432
    %v5571 = vunpack.c.h.b16 %v5432
    %v5572 = vunpack.c.l.b16 %v5433
    %v5573 = vunpack.c.h.b16 %v5433
    %v5574 = vunpack.c.l.b16 %v5434
    %v5575 = vunpack.c.h.b16 %v5434
    %v5576 = vunpack.c.l.b16 %v5435
    %v5577 = vunpack.c.h.b16 %v5435
    %v5578 = vunpack.c.l.b16 %v5436
    %v5579 = vunpack.c.h.b16 %v5436
    %v5580 = vunpack.c.l.b16 %v5437
    %v5581 = vunpack.c.h.b16 %v5437
    %v5582 = vunpack.c.l.b16 %v5438
    %v5583 = vunpack.c.h.b16 %v5438
    %v5584 = vunpack.c.l.b16 %v5439
    %v5585 = vunpack.c.h.b16 %v5439
    %v5586 = vunpack.c.l.b16 %v5440
    %v5587 = vunpack.c.h.b16 %v5440
    %v5588 = vunpack.c.l.b16 %v5441
    %v5589 = vunpack.c.h.b16 %v5441
    %v5590 = vunpack.c.l.b16 %v5442
    %v5591 = vunpack.c.h.b16 %v5442
    %v5592 = vunpack.c.l.b16 %v5443
    %v5593 = vunpack.c.h.b16 %v5443
    %v5594 = vunpack.c.l.b16 %v5444
    %v5595 = vunpack.c.h.b16 %v5444
    %v5596 = vunpack.c.l.b16 %v5445
    %v5597 = vunpack.c.h.b16 %v5445
    %v5598 = vunpack.c.l.b16 %v5446
    %v5599 = vunpack.c.h.b16 %v5446
    %v5600 = vunpack.c.l.b16 %v5447
    %v5601 = vunpack.c.h.b16 %v5447
    %v5602 = vunpack.c.l.b16 %v5448
    %v5603 = vunpack.c.h.b16 %v5448
    %v5604 = vunpack.c.l.b16 %v5449
    %v5605 = vunpack.c.h.b16 %v5449
    %v5606 = vunpack.c.l.b16 %v5450
    %v5607 = vunpack.c.h.b16 %v5450
    %v5608 = vunpack.c.l.b16 %v5451
    %v5609 = vunpack.c.h.b16 %v5451
    %v5610 = vunpack.c.l.b16 %v5452
    %v5611 = vunpack.c.h.b16 %v5452
    %v5612 = vunpack.c.l.b16 %v5453
    %v5613 = vunpack.c.h.b16 %v5453
    %v5614 = vunpack.c.l.b16 %v5454
    %v5615 = vunpack.c.h.b16 %v5454
    %v5616 = vunpack.c.l.b16 %v5455
    %v5617 = vunpack.c.h.b16 %v5455
    %v5618 = vunpack.c.l.b16 %v5456
    %v5619 = vunpack.c.h.b16 %v5456
    %v5620 = vunpack.c.l.b16 %v5457
    %v5621 = vunpack.c.h.b16 %v5457
    %v5622 = vunpack.c.l.b16 %v5458
    %v5623 = vunpack.c.h.b16 %v5458
    %v5624 = vunpack.c.l.b16 %v5459
    %v5625 = vunpack.c.h.b16 %v5459
    %v5626 = vunpack.c.l.b16 %v5460
    %v5627 = vunpack.c.h.b16 %v5460
    %v5628 = vunpack.c.l.b16 %v5461
    %v5629 = vunpack.c.h.b16 %v5461
    %v5630 = vunpack.c.l.b16 %v5462
    %v5631 = vunpack.c.h.b16 %v5462
    %v5632 = vunpack.c.l.b16 %v5463
    %v5633 = vunpack.c.h.b16 %v5463
    %v5634 = vunpack.c.l.b16 %v5464
    %v5635 = vunpack.c.h.b16 %v5464
    %v5636 = vunpack.c.l.b16 %v5465
    %v5637 = vunpack.c.h.b16 %v5465
    %v5638 = vunpack.c.l.b16 %v5466
    %v5639 = vunpack.c.h.b16 %v5466
    %v5640 = vunpack.c.l.b16 %v5467
    %v5641 = vunpack.c.h.b16 %v5467
    %v5642 = vunpack.c.l.b16 %v5468
    %v5643 = vunpack.c.h.b16 %v5468
    %v5644 = vunpack.c.l.b16 %v5469
    %v5645 = vunpack.c.h.b16 %v5469
    %v5646 = vunpack.c.l.b16 %v5470
    %v5647 = vunpack.c.h.b16 %v5470
    %v5648 = vunpack.c.l.b16 %v5471
    %v5649 = vunpack.c.h.b16 %v5471
    %v5650 = vunpack.c.l.b16 %v5472
    %v5651 = vunpack.c.h.b16 %v5472
    %v5652 = vunpack.c.l.b16 %v5473
    %v5653 = vunpack.c.h.b16 %v5473
    %v5654 = vunpack.c.l.b16 %v5474
    %v5655 = vunpack.c.h.b16 %v5474
    %v5656 = vunpack.c.l.b16 %v5475
    %v5657 = vunpack.c.h.b16 %v5475
    %v5658 = vunpack.c.l.b16 %v5476
    %v5659 = vunpack.c.h.b16 %v5476
    %v5660 = vunpack.c.l.b16 %v5477
    %v5661 = vunpack.c.h.b16 %v5477
    %v5662 = vunpack.c.l.b16 %v5478
    %v5663 = vunpack.c.h.b16 %v5478
    %v5664 = vunpack.c.l.b16 %v5479
    %v5665 = vunpack.c.h.b16 %v5479
    %v5666 = vunpack.c.l.b16 %v5480
    %v5667 = vunpack.c.h.b16 %v5480
    %v5668 = vunpack.c.l.b16 %v5481
    %v5669 = vunpack.c.h.b16 %v5481
    %v5670 = vunpack.c.l.b16 %v5482
    %v5671 = vunpack.c.h.b16 %v5482
    %v5672 = vunpack.c.l.b16 %v5483
    %v5673 = vunpack.c.h.b16 %v5483
    %v5674 = vunpack.c.l.b16 %v5484
    %v5675 = vunpack.c.h.b16 %v5484
    %v5676 = vunpack.c.l.b16 %v5485
    %v5677 = vunpack.c.h.b16 %v5485
    %v5678 = vunpack.c.l.b16 %v5486
    %v5679 = vunpack.c.h.b16 %v5486
    %v5680 = vunpack.c.l.b16 %v5487
    %v5681 = vunpack.c.h.b16 %v5487
    %v5682 = vunpack.c.l.b16 %v5488
    %v5683 = vunpack.c.h.b16 %v5488
    %v5684 = vunpack.c.l.b16 %v5489
    %v5685 = vunpack.c.h.b16 %v5489
    %v5686 = vunpack.c.l.b16 %v5490
    %v5687 = vunpack.c.h.b16 %v5490
    %v5688 = vunpack.c.l.b16 %v5491
    %v5689 = vunpack.c.h.b16 %v5491
    %v5690 = vunpack.c.l.b16 %v5492
    %v5691 = vunpack.c.h.b16 %v5492
    %v5692 = vunpack.c.l.b16 %v5493
    %v5693 = vunpack.c.h.b16 %v5493
    %v5694 = vpack.c.b16 %v5570, %v5566
    %v5695 = vpack.c.b16 %v5571, %v5567
    %v5696 = vpack.c.b16 %v5572, %v5568
    %v5697 = vpack.c.b16 %v5573, %v5569
    %v5698 = vpack.c.b16 %v5578, %v5574
    %v5699 = vpack.c.b16 %v5579, %v5575
    %v5700 = vpack.c.b16 %v5580, %v5576
    %v5701 = vpack.c.b16 %v5581, %v5577
    %v5702 = vpack.c.b16 %v5586, %v5582
    %v5703 = vpack.c.b16 %v5587, %v5583
    %v5704 = vpack.c.b16 %v5588, %v5584
    %v5705 = vpack.c.b16 %v5589, %v5585
    %v5706 = vpack.c.b16 %v5594, %v5590
    %v5707 = vpack.c.b16 %v5595, %v5591
    %v5708 = vpack.c.b16 %v5596, %v5592
    %v5709 = vpack.c.b16 %v5597, %v5593
    %v5710 = vpack.c.b16 %v5602, %v5598
    %v5711 = vpack.c.b16 %v5603, %v5599
    %v5712 = vpack.c.b16 %v5604, %v5600
    %v5713 = vpack.c.b16 %v5605, %v5601
    %v5714 = vpack.c.b16 %v5610, %v5606
    %v5715 = vpack.c.b16 %v5611, %v5607
    %v5716 = vpack.c.b16 %v5612, %v5608
    %v5717 = vpack.c.b16 %v5613, %v5609
    %v5718 = vpack.c.b16 %v5618, %v5614
    %v5719 = vpack.c.b16 %v5619, %v5615
    %v5720 = vpack.c.b16 %v5620, %v5616
    %v5721 = vpack.c.b16 %v5621, %v5617
    %v5722 = vpack.c.b16 %v5626, %v5622
    %v5723 = vpack.c.b16 %v5627, %v5623
    %v5724 = vpack.c.b16 %v5628, %v5624
    %v5725 = vpack.c.b16 %v5629, %v5625
    %v5726 = vpack.c.b16 %v5634, %v5630
    %v5727 = vpack.c.b16 %v5635, %v5631
    %v5728 = vpack.c.b16 %v5636, %v5632
    %v5729 = vpack.c.b16 %v5637, %v5633
    %v5730 = vpack.c.b16 %v5642, %v5638
    %v5731 = vpack.c.b16 %v5643, %v5639
    %v5732 = vpack.c.b16 %v5644, %v5640
    %v5733 = vpack.c.b16 %v5645, %v5641
    %v5734 = vpack.c.b16 %v5650, %v5646
    %v5735 = vpack.c.b16 %v5651, %v5647
    %v5736 = vpack.c.b16 %v5652, %v5648
    %v5737 = vpack.c.b16 %v5653, %v5649
    %v5738 = vpack.c.b16 %v5658, %v5654
    %v5739 = vpack.c.b16 %v5659, %v5655
    %v5740 = vpack.c.b16 %v5660, %v5656
    %v5741 = vpack.c.b16 %v5661, %v5657
    %v5742 = vpack.c.b16 %v5666, %v5662
    %v5743 = vpack.c.b16 %v5667, %v5663
    %v5744 = vpack.c.b16 %v5668, %v5664
    %v5745 = vpack.c.b16 %v5669, %v5665
    %v5746 = vpack.c.b16 %v5674, %v5670
    %v5747 = vpack.c.b16 %v5675, %v5671
    %v5748 = vpack.c.b16 %v5676, %v5672
    %v5749 = vpack.c.b16 %v5677, %v5673
    %v5750 = vpack.c.b16 %v5682, %v5678
    %v5751 = vpack.c.b16 %v5683, %v5679
    %v5752 = vpack.c.b16 %v5684, %v5680
    %v5753 = vpack.c.b16 %v5685, %v5681
    %v5754 = vpack.c.b16 %v5690, %v5686
    %v5755 = vpack.c.b16 %v5691, %v5687
    %v5756 = vpack.c.b16 %v5692, %v5688
    %v5757 = vpack.c.b16 %v5693, %v5689
    %5822 = vmatprep.subr.bf16.mxu0 %v5695
    %5823 = vmatpush1.bf16.msra.mxu0 %v5694
    %5824 = vmatprep.subr.bf16.mxu0 %v5699
    %5825 = vmatpush1.bf16.msra.mxu0 %v5698
    %5826 = vmatprep.subr.bf16.mxu0 %v5703
    %5827 = vmatpush1.bf16.msra.mxu0 %v5702
    %5828 = vmatprep.subr.bf16.mxu0 %v5707
    %5829 = vmatpush1.bf16.msra.mxu0 %v5706
    %5830 = vmatprep.subr.bf16.mxu0 %v5711
    %5831 = vmatpush1.bf16.msra.mxu0 %v5710
    %5832 = vmatprep.subr.bf16.mxu0 %v5715
    %5833 = vmatpush1.bf16.msra.mxu0 %v5714
    %5834 = vmatprep.subr.bf16.mxu0 %v5719
    %5835 = vmatpush1.bf16.msra.mxu0 %v5718
    %5836 = vmatprep.subr.bf16.mxu0 %v5723
    %5837 = vmatpush1.bf16.msra.mxu0 %v5722
    %5838 = vmatprep.subr.bf16.mxu0 %v5727
    %5839 = vmatpush1.bf16.msra.mxu0 %v5726
    %5840 = vmatprep.subr.bf16.mxu0 %v5731
    %5841 = vmatpush1.bf16.msra.mxu0 %v5730
    %5842 = vmatprep.subr.bf16.mxu0 %v5735
    %5843 = vmatpush1.bf16.msra.mxu0 %v5734
    %5844 = vmatprep.subr.bf16.mxu0 %v5739
    %5845 = vmatpush1.bf16.msra.mxu0 %v5738
    %5846 = vmatprep.subr.bf16.mxu0 %v5743
    %5847 = vmatpush1.bf16.msra.mxu0 %v5742
    %5848 = vmatprep.subr.bf16.mxu0 %v5747
    %5849 = vmatpush1.bf16.msra.mxu0 %v5746
    %5850 = vmatprep.subr.bf16.mxu0 %v5751
    %5851 = vmatpush1.bf16.msra.mxu0 %v5750
    %5852 = vmatprep.subr.bf16.mxu0 %v5755
    %5853 = vmatpush1.bf16.msra.mxu0 %v5754
    %5854 = vmatprep.mubr.bf16.mxu0 %v5499
    %5855 = vmatmul.mubr.bf16.gmra.mrb[0].mxu0 %v5498
    %v5856 = vpop.f32.mrb[0].mxu0
    %v5857 = vadd.f32 0.0, %v5856
    %v5858 = vpop.f32.mrb[0].mxu0
    %v5859 = vadd.f32 0.0, %v5858
    %v5860 = vpop.f32.mrb[0].mxu0
    %v5861 = vadd.f32 0.0, %v5860
    %v5862 = vpop.f32.mrb[0].mxu0
    %v5863 = vadd.f32 0.0, %v5862
    %5864 = vdwg.mxu0
    %5865 = vmatprep.subr.bf16.mxu0 %v5697
    %5866 = vmatpush1.bf16.msra.mxu0 %v5696
    %5867 = vmatprep.subr.bf16.mxu0 %v5701
    %5868 = vmatpush1.bf16.msra.mxu0 %v5700
    %5869 = vmatprep.subr.bf16.mxu0 %v5705
    %5870 = vmatpush1.bf16.msra.mxu0 %v5704
    %5871 = vmatprep.subr.bf16.mxu0 %v5709
    %5872 = vmatpush1.bf16.msra.mxu0 %v5708
    %5873 = vmatprep.subr.bf16.mxu0 %v5713
    %5874 = vmatpush1.bf16.msra.mxu0 %v5712
    %5875 = vmatprep.subr.bf16.mxu0 %v5717
    %5876 = vmatpush1.bf16.msra.mxu0 %v5716
    %5877 = vmatprep.subr.bf16.mxu0 %v5721
    %5878 = vmatpush1.bf16.msra.mxu0 %v5720
    %5879 = vmatprep.subr.bf16.mxu0 %v5725
    %5880 = vmatpush1.bf16.msra.mxu0 %v5724
    %5881 = vmatprep.subr.bf16.mxu0 %v5729
    %5882 = vmatpush1.bf16.msra.mxu0 %v5728
    %5883 = vmatprep.subr.bf16.mxu0 %v5733
    %5884 = vmatpush1.bf16.msra.mxu0 %v5732
    %5885 = vmatprep.subr.bf16.mxu0 %v5737
    %5886 = vmatpush1.bf16.msra.mxu0 %v5736
    %5887 = vmatprep.subr.bf16.mxu0 %v5741
    %5888 = vmatpush1.bf16.msra.mxu0 %v5740
    %5889 = vmatprep.subr.bf16.mxu0 %v5745
    %5890 = vmatpush1.bf16.msra.mxu0 %v5744
    %5891 = vmatprep.subr.bf16.mxu0 %v5749
    %5892 = vmatpush1.bf16.msra.mxu0 %v5748
    %5893 = vmatprep.subr.bf16.mxu0 %v5753
    %5894 = vmatpush1.bf16.msra.mxu0 %v5752
    %5895 = vmatprep.subr.bf16.mxu0 %v5757
    %5896 = vmatpush1.bf16.msra.mxu0 %v5756
    %5897 = vmatprep.mubr.bf16.mxu0 %v5499
    %5898 = vmatmul.mubr.bf16.gmra.mrb[0].mxu0 %v5498
    %v5899 = vpop.f32.mrb[0].mxu0
    %v5900 = vadd.f32 0.0, %v5899
    %v5901 = vpop.f32.mrb[0].mxu0
    %v5902 = vadd.f32 0.0, %v5901
    %v5903 = vpop.f32.mrb[0].mxu0
    %v5904 = vadd.f32 0.0, %v5903
    %v5905 = vpop.f32.mrb[0].mxu0
    %v5906 = vadd.f32 0.0, %v5905
    %5907 = vdwg.mxu0
    %v5908 = vadd.f32 %v5367, %v5857
    %v5909 = vadd.f32 %v5369, %v5859
    %v5910 = vadd.f32 %v5410, %v5900
    %v5911 = vadd.f32 %v5412, %v5902
    %v5912 = vadd.f32 %v5371, %v5861
    %v5913 = vadd.f32 %v5373, %v5863
    %v5914 = vadd.f32 %v5414, %v5904
    %v5915 = vadd.f32 %v5416, %v5906
    %v5916 = vld [vmem:[%s5] sm:$0xf]
    %v5917 = vld [vmem:[%s6] sm:$0xf]
    %v5918 = vadd.f32 %v5908, %v5912
    %v5919 = vrot.slane %v5918, 4
    %v5920 = vadd.f32 %v5918, %v5919
    %v5921 = vrot.slane %v5920, 2
    %v5922 = vadd.f32 %v5920, %v5921
    %v5923 = vrot.slane %v5922, 1
    %v5924 = vadd.f32 %v5922, %v5923
    %v5925 = vadd.f32 %v5909, %v5913
    %v5926 = vrot.slane %v5925, 4
    %v5927 = vadd.f32 %v5925, %v5926
    %v5928 = vrot.slane %v5927, 2
    %v5929 = vadd.f32 %v5927, %v5928
    %v5930 = vrot.slane %v5929, 1
    %v5931 = vadd.f32 %v5929, %v5930
    %v5932 = vadd.f32 %v5910, %v5914
    %v5933 = vrot.slane %v5932, 4
    %v5934 = vadd.f32 %v5932, %v5933
    %v5935 = vrot.slane %v5934, 2
    %v5936 = vadd.f32 %v5934, %v5935
    %v5937 = vrot.slane %v5936, 1
    %v5938 = vadd.f32 %v5936, %v5937
    %v5939 = vadd.f32 %v5911, %v5915
    %v5940 = vrot.slane %v5939, 4
    %v5941 = vadd.f32 %v5939, %v5940
    %v5942 = vrot.slane %v5941, 2
    %v5943 = vadd.f32 %v5941, %v5942
    %v5944 = vrot.slane %v5943, 1
    %v5945 = vadd.f32 %v5943, %v5944
    %v5946 = vadd.f32 %v5924, %v5938
    %v5947 = vadd.f32 %v5931, %v5945
    %v5948 = vadd.f32 %v5946, %v5947
    %5950 = vrot.lane.b32.xlu0 %v5948, 64
    %v5951 = vpop.permute.xlu0 %5950
    %v5953 = vadd.f32 %v5948, %v5951
    %v5954 = vmul.f32 %v5953, 0.0078125
    %5956 = vrot.lane.b32.xlu0 %v5954, 64
    %v5957 = vpop.permute.xlu0 %5956
    %v5959 = vsel %vm1096, %v5954, %v5957
    %v5960 = vlaneseq
    %v5961 = vshrl.u32 %v5960, 7
    %v5962 = vsub.s32 0, %v5961
    %v5963 = vrot.slane %v5959, %v5962
    %v5964 = vsub.f32 %v5908, %v5963
    %v5965 = vsub.f32 %v5909, %v5963
    %v5966 = vsub.f32 %v5910, %v5963
    %v5967 = vsub.f32 %v5911, %v5963
    %v5968 = vsub.f32 %v5912, %v5963
    %v5969 = vsub.f32 %v5913, %v5963
    %v5970 = vsub.f32 %v5914, %v5963
    %v5971 = vsub.f32 %v5915, %v5963
    %v5972 = vmul.f32 %v5964, %v5964
    %v5973 = vmul.f32 %v5965, %v5965
    %v5974 = vmul.f32 %v5966, %v5966
    %v5975 = vmul.f32 %v5967, %v5967
    %v5976 = vmul.f32 %v5968, %v5968
    %v5977 = vmul.f32 %v5969, %v5969
    %v5978 = vmul.f32 %v5970, %v5970
    %v5979 = vmul.f32 %v5971, %v5971
    %v5980 = vadd.f32 %v5972, %v5976
    %v5981 = vrot.slane %v5980, 4
    %v5982 = vadd.f32 %v5980, %v5981
    %v5983 = vrot.slane %v5982, 2
    %v5984 = vadd.f32 %v5982, %v5983
    %v5985 = vrot.slane %v5984, 1
    %v5986 = vadd.f32 %v5984, %v5985
    %v5987 = vadd.f32 %v5973, %v5977
    %v5988 = vrot.slane %v5987, 4
    %v5989 = vadd.f32 %v5987, %v5988
    %v5990 = vrot.slane %v5989, 2
    %v5991 = vadd.f32 %v5989, %v5990
    %v5992 = vrot.slane %v5991, 1
    %v5993 = vadd.f32 %v5991, %v5992
    %v5994 = vadd.f32 %v5974, %v5978
    %v5995 = vrot.slane %v5994, 4
    %v5996 = vadd.f32 %v5994, %v5995
    %v5997 = vrot.slane %v5996, 2
    %v5998 = vadd.f32 %v5996, %v5997
    %v5999 = vrot.slane %v5998, 1
    %v6000 = vadd.f32 %v5998, %v5999
    %v6001 = vadd.f32 %v5975, %v5979
    %v6002 = vrot.slane %v6001, 4
    %v6003 = vadd.f32 %v6001, %v6002
    %v6004 = vrot.slane %v6003, 2
    %v6005 = vadd.f32 %v6003, %v6004
    %v6006 = vrot.slane %v6005, 1
    %v6007 = vadd.f32 %v6005, %v6006
    %v6008 = vadd.f32 %v5986, %v6000
    %v6009 = vadd.f32 %v5993, %v6007
    %v6010 = vadd.f32 %v6008, %v6009
    %6012 = vrot.lane.b32.xlu0 %v6010, 64
    %v6013 = vpop.permute.xlu0 %6012
    %v6015 = vadd.f32 %v6010, %v6013
    %v6016 = vmul.f32 %v6015, 0.0078125
    %v6017 = vadd.f32 %v6016, 1e-05
    %v6018 = vrsqrt.pop %v6017
    %6020 = vrot.lane.b32.xlu0 %v6018, 64
    %v6021 = vpop.permute.xlu0 %6020
    %v6023 = vsel %vm1096, %v6018, %v6021
    %v6025 = vcombine.low %v6023, %v6023
    %v6027 = vunpack.c.l.s4 1966171168
    %v6028 = vunpack.c.0.s8 %v6027
    %v6029 = vlaneseq
    %v6030 = vshrl.u32 %v6029, 7
    %v6031 = vsub.s32 %v6028, %v6030
    %v6032 = vrot.slane %v6025, %v6031
    %v6033 = vcombine.low %v6032, %v6032
    %v6035 = vunpack.c.l.s4 1966171168
    %v6036 = vunpack.c.0.s8 %v6035
    %v6037 = vlaneseq
    %v6038 = vshrl.u32 %v6037, 7
    %v6039 = vsub.s32 %v6036, %v6038
    %v6040 = vrot.slane %v6033, %v6039
    %v6042 = vmul.f32 %v5916, %v6040
    %v6044 = vlaneseq
    %v6045 = vshrl.u32 %v6044, 7
    %v6046 = vsub.s32 0, %v6045
    %v6047 = vrot.slane %v6042, %v6046
    %v6048 = vlaneseq
    %v6049 = vshrl.u32 %v6048, 7
    %v6050 = vsub.s32 1, %v6049
    %v6051 = vrot.slane %v6042, %v6050
    %v6052 = vlaneseq
    %v6053 = vshrl.u32 %v6052, 7
    %v6054 = vsub.s32 2, %v6053
    %v6055 = vrot.slane %v6042, %v6054
    %v6056 = vlaneseq
    %v6057 = vshrl.u32 %v6056, 7
    %v6058 = vsub.s32 3, %v6057
    %v6059 = vrot.slane %v6042, %v6058
    %v6064 = vmul.f32 %v5964, %v6047
    %v6065 = vmul.f32 %v5965, %v6051
    %v6066 = vmul.f32 %v5966, %v6055
    %v6067 = vmul.f32 %v5967, %v6059
    %v6068 = vmul.f32 %v5968, %v6047
    %v6069 = vmul.f32 %v5969, %v6051
    %v6070 = vmul.f32 %v5970, %v6055
    %v6071 = vmul.f32 %v5971, %v6059
    %v6073 = vlaneseq
    %v6074 = vshrl.u32 %v6073, 7
    %v6075 = vsub.s32 0, %v6074
    %v6076 = vrot.slane %v5917, %v6075
    %v6077 = vlaneseq
    %v6078 = vshrl.u32 %v6077, 7
    %v6079 = vsub.s32 1, %v6078
    %v6080 = vrot.slane %v5917, %v6079
    %v6081 = vlaneseq
    %v6082 = vshrl.u32 %v6081, 7
    %v6083 = vsub.s32 2, %v6082
    %v6084 = vrot.slane %v5917, %v6083
    %v6085 = vlaneseq
    %v6086 = vshrl.u32 %v6085, 7
    %v6087 = vsub.s32 3, %v6086
    %v6088 = vrot.slane %v5917, %v6087
    %v6093 = vadd.f32 %v6064, %v6076
    %v6094 = vadd.f32 %v6065, %v6080
    %v6095 = vadd.f32 %v6066, %v6084
    %v6096 = vadd.f32 %v6067, %v6088
    %v6097 = vadd.f32 %v6068, %v6076
    %v6098 = vadd.f32 %v6069, %v6080
    %v6099 = vadd.f32 %v6070, %v6084
    %v6100 = vadd.f32 %v6071, %v6088
    %v6101 = vmax.f32 %v6093, 0.0
    %v6102 = vmax.f32 %v6094, 0.0
    %v6103 = vmax.f32 %v6095, 0.0
    %v6104 = vmax.f32 %v6096, 0.0
    %v6105 = vmax.f32 %v6097, 0.0
    %v6106 = vmax.f32 %v6098, 0.0
    %v6107 = vmax.f32 %v6099, 0.0
    %v6108 = vmax.f32 %v6100, 0.0
    %v6117 = vcombine.low %v6101, %v6102
    %v6118 = vcombine.high %v6101, %v6102
    %v6119 = vcombine.low %v6103, %v6104
    %v6120 = vcombine.high %v6103, %v6104
    %v6122 = vunpack.c.l.s4 1983009808
    %v6123 = vunpack.c.0.s8 %v6122
    %v6124 = vlaneseq
    %v6125 = vshrl.u32 %v6124, 7
    %v6126 = vsub.s32 %v6123, %v6125
    %v6127 = vrot.slane %v6117, %v6126
    %v6129 = vunpack.c.l.s4 1983009808
    %v6130 = vunpack.c.0.s8 %v6129
    %v6131 = vlaneseq
    %v6132 = vshrl.u32 %v6131, 7
    %v6133 = vsub.s32 %v6130, %v6132
    %v6134 = vrot.slane %v6118, %v6133
    %v6136 = vunpack.c.l.s4 1983009808
    %v6137 = vunpack.c.0.s8 %v6136
    %v6138 = vlaneseq
    %v6139 = vshrl.u32 %v6138, 7
    %v6140 = vsub.s32 %v6137, %v6139
    %v6141 = vrot.slane %v6119, %v6140
    %v6143 = vunpack.c.l.s4 1983009808
    %v6144 = vunpack.c.0.s8 %v6143
    %v6145 = vlaneseq
    %v6146 = vshrl.u32 %v6145, 7
    %v6147 = vsub.s32 %v6144, %v6146
    %v6148 = vrot.slane %v6120, %v6147
    %v6149 = vcombine.low %v6127, %v6141
    %v6150 = vcombine.high %v6127, %v6141
    %v6151 = vcombine.low %v6134, %v6148
    %v6152 = vcombine.high %v6134, %v6148
    %v6153 = vcombine.low %v6105, %v6106
    %v6154 = vcombine.high %v6105, %v6106
    %v6155 = vcombine.low %v6107, %v6108
    %v6156 = vcombine.high %v6107, %v6108
    %v6158 = vunpack.c.l.s4 1983009808
    %v6159 = vunpack.c.0.s8 %v6158
    %v6160 = vlaneseq
    %v6161 = vshrl.u32 %v6160, 7
    %v6162 = vsub.s32 %v6159, %v6161
    %v6163 = vrot.slane %v6153, %v6162
    %v6165 = vunpack.c.l.s4 1983009808
    %v6166 = vunpack.c.0.s8 %v6165
    %v6167 = vlaneseq
    %v6168 = vshrl.u32 %v6167, 7
    %v6169 = vsub.s32 %v6166, %v6168
    %v6170 = vrot.slane %v6154, %v6169
    %v6172 = vunpack.c.l.s4 1983009808
    %v6173 = vunpack.c.0.s8 %v6172
    %v6174 = vlaneseq
    %v6175 = vshrl.u32 %v6174, 7
    %v6176 = vsub.s32 %v6173, %v6175
    %v6177 = vrot.slane %v6155, %v6176
    %v6179 = vunpack.c.l.s4 1983009808
    %v6180 = vunpack.c.0.s8 %v6179
    %v6181 = vlaneseq
    %v6182 = vshrl.u32 %v6181, 7
    %v6183 = vsub.s32 %v6180, %v6182
    %v6184 = vrot.slane %v6156, %v6183
    %v6185 = vcombine.low %v6163, %v6177
    %v6186 = vcombine.high %v6163, %v6177
    %v6187 = vcombine.low %v6170, %v6184
    %v6188 = vcombine.high %v6170, %v6184
    %v6197 = vlaneseq
    %v6198 = vshrl.u32 %v6197, 7
    %v6199 = vsub.s32 1, %v6198
    %v6200 = vrot.slane %v6149, %v6199
    %v6201 = vlaneseq
    %v6202 = vshrl.u32 %v6201, 7
    %v6203 = vsub.s32 3, %v6202
    %v6204 = vrot.slane %v6149, %v6203
    %v6205 = vlaneseq
    %v6206 = vshrl.u32 %v6205, 7
    %v6207 = vsub.s32 5, %v6206
    %v6208 = vrot.slane %v6149, %v6207
    %v6209 = vlaneseq
    %v6210 = vshrl.u32 %v6209, 7
    %v6211 = vsub.s32 7, %v6210
    %v6212 = vrot.slane %v6149, %v6211
    %v6213 = vlaneseq
    %v6214 = vshrl.u32 %v6213, 7
    %v6215 = vsub.s32 1, %v6214
    %v6216 = vrot.slane %v6150, %v6215
    %v6217 = vlaneseq
    %v6218 = vshrl.u32 %v6217, 7
    %v6219 = vsub.s32 3, %v6218
    %v6220 = vrot.slane %v6150, %v6219
    %v6221 = vlaneseq
    %v6222 = vshrl.u32 %v6221, 7
    %v6223 = vsub.s32 5, %v6222
    %v6224 = vrot.slane %v6150, %v6223
    %v6225 = vlaneseq
    %v6226 = vshrl.u32 %v6225, 7
    %v6227 = vsub.s32 7, %v6226
    %v6228 = vrot.slane %v6150, %v6227
    %v6229 = vlaneseq
    %v6230 = vshrl.u32 %v6229, 7
    %v6231 = vsub.s32 1, %v6230
    %v6232 = vrot.slane %v6151, %v6231
    %v6233 = vlaneseq
    %v6234 = vshrl.u32 %v6233, 7
    %v6235 = vsub.s32 3, %v6234
    %v6236 = vrot.slane %v6151, %v6235
    %v6237 = vlaneseq
    %v6238 = vshrl.u32 %v6237, 7
    %v6239 = vsub.s32 5, %v6238
    %v6240 = vrot.slane %v6151, %v6239
    %v6241 = vlaneseq
    %v6242 = vshrl.u32 %v6241, 7
    %v6243 = vsub.s32 7, %v6242
    %v6244 = vrot.slane %v6151, %v6243
    %v6245 = vlaneseq
    %v6246 = vshrl.u32 %v6245, 7
    %v6247 = vsub.s32 1, %v6246
    %v6248 = vrot.slane %v6185, %v6247
    %v6249 = vlaneseq
    %v6250 = vshrl.u32 %v6249, 7
    %v6251 = vsub.s32 3, %v6250
    %v6252 = vrot.slane %v6185, %v6251
    %v6253 = vlaneseq
    %v6254 = vshrl.u32 %v6253, 7
    %v6255 = vsub.s32 5, %v6254
    %v6256 = vrot.slane %v6185, %v6255
    %v6257 = vlaneseq
    %v6258 = vshrl.u32 %v6257, 7
    %v6259 = vsub.s32 7, %v6258
    %v6260 = vrot.slane %v6185, %v6259
    %v6261 = vlaneseq
    %v6262 = vshrl.u32 %v6261, 7
    %v6263 = vsub.s32 1, %v6262
    %v6264 = vrot.slane %v6186, %v6263
    %v6265 = vlaneseq
    %v6266 = vshrl.u32 %v6265, 7
    %v6267 = vsub.s32 3, %v6266
    %v6268 = vrot.slane %v6186, %v6267
    %v6269 = vlaneseq
    %v6270 = vshrl.u32 %v6269, 7
    %v6271 = vsub.s32 5, %v6270
    %v6272 = vrot.slane %v6186, %v6271
    %v6273 = vlaneseq
    %v6274 = vshrl.u32 %v6273, 7
    %v6275 = vsub.s32 7, %v6274
    %v6276 = vrot.slane %v6186, %v6275
    %v6277 = vlaneseq
    %v6278 = vshrl.u32 %v6277, 7
    %v6279 = vsub.s32 1, %v6278
    %v6280 = vrot.slane %v6187, %v6279
    %v6281 = vlaneseq
    %v6282 = vshrl.u32 %v6281, 7
    %v6283 = vsub.s32 3, %v6282
    %v6284 = vrot.slane %v6187, %v6283
    %v6285 = vlaneseq
    %v6286 = vshrl.u32 %v6285, 7
    %v6287 = vsub.s32 5, %v6286
    %v6288 = vrot.slane %v6187, %v6287
    %v6289 = vlaneseq
    %v6290 = vshrl.u32 %v6289, 7
    %v6291 = vsub.s32 7, %v6290
    %v6292 = vrot.slane %v6187, %v6291
    %v6293 = vsel %vm1442, %v6216, %v6200
    %v6294 = vsel %vm1444, %v6232, %v6293
    %v6295 = vsel %vm1442, %v6220, %v6204
    %v6296 = vsel %vm1444, %v6236, %v6295
    %v6297 = vsel %vm1442, %v6224, %v6208
    %v6298 = vsel %vm1444, %v6240, %v6297
    %v6299 = vsel %vm1442, %v6228, %v6212
    %v6300 = vsel %vm1444, %v6244, %v6299
    %v6301 = vsel %vm1442, %v6264, %v6248
    %v6302 = vsel %vm1444, %v6280, %v6301
    %v6303 = vsel %vm1442, %v6268, %v6252
    %v6304 = vsel %vm1444, %v6284, %v6303
    %v6305 = vsel %vm1442, %v6272, %v6256
    %v6306 = vsel %vm1444, %v6288, %v6305
    %v6307 = vsel %vm1442, %v6276, %v6260
    %v6308 = vsel %vm1444, %v6292, %v6307
    %v6317 = vsel %vm1476, 0.0, %v6294
    %v6318 = vsel %vm1476, 0.0, %v6296
    %v6319 = vsel %vm1476, 0.0, %v6298
    %v6320 = vsel %vm1476, 0.0, %v6300
    %v6321 = vsel %vm1476, 0.0, %v6302
    %v6322 = vsel %vm1476, 0.0, %v6304
    %v6323 = vsel %vm1476, 0.0, %v6306
    %v6324 = vsel %vm1476, 0.0, %v6308
    %v6325 = vrot.slane %v6149, 7
    %v6326 = vrot.slane %v6325, 2
    %v6327 = vrot.slane %v6150, 7
    %v6328 = vrot.slane %v6327, 2
    %v6329 = vrot.slane %v6151, 7
    %v6330 = vrot.slane %v6329, 2
    %v6331 = vrot.slane %v6152, 7
    %v6332 = vrot.slane %v6331, 2
    %v6333 = vrot.slane %v6185, 7
    %v6334 = vrot.slane %v6333, 2
    %v6335 = vrot.slane %v6186, 7
    %v6336 = vrot.slane %v6335, 2
    %v6337 = vrot.slane %v6187, 7
    %v6338 = vrot.slane %v6337, 2
    %v6339 = vrot.slane %v6188, 7
    %v6340 = vrot.slane %v6339, 2
    %v6349 = vmax.f32 %v6149, %v6326
    %v6350 = vmax.f32 %v6150, %v6328
    %v6351 = vmax.f32 %v6151, %v6330
    %v6352 = vmax.f32 %v6152, %v6332
    %v6353 = vmax.f32 %v6185, %v6334
    %v6354 = vmax.f32 %v6186, %v6336
    %v6355 = vmax.f32 %v6187, %v6338
    %v6356 = vmax.f32 %v6188, %v6340
    %v6365 = vcombine.low %v6317, %v6318
    %v6366 = vcombine.low %v6319, %v6320
    %v6368 = vunpack.c.l.s4 1983009808
    %v6369 = vunpack.c.0.s8 %v6368
    %v6370 = vlaneseq
    %v6371 = vshrl.u32 %v6370, 7
    %v6372 = vsub.s32 %v6369, %v6371
    %v6373 = vrot.slane %v6365, %v6372
    %v6375 = vunpack.c.l.s4 1983009808
    %v6376 = vunpack.c.0.s8 %v6375
    %v6377 = vlaneseq
    %v6378 = vshrl.u32 %v6377, 7
    %v6379 = vsub.s32 %v6376, %v6378
    %v6380 = vrot.slane %v6366, %v6379
    %v6381 = vcombine.low %v6373, %v6380
    %v6382 = vcombine.high %v6373, %v6380
    %v6383 = vcombine.low %v6321, %v6322
    %v6384 = vcombine.low %v6323, %v6324
    %v6386 = vunpack.c.l.s4 1983009808
    %v6387 = vunpack.c.0.s8 %v6386
    %v6388 = vlaneseq
    %v6389 = vshrl.u32 %v6388, 7
    %v6390 = vsub.s32 %v6387, %v6389
    %v6391 = vrot.slane %v6383, %v6390
    %v6393 = vunpack.c.l.s4 1983009808
    %v6394 = vunpack.c.0.s8 %v6393
    %v6395 = vlaneseq
    %v6396 = vshrl.u32 %v6395, 7
    %v6397 = vsub.s32 %v6394, %v6396
    %v6398 = vrot.slane %v6384, %v6397
    %v6399 = vcombine.low %v6391, %v6398
    %v6400 = vcombine.high %v6391, %v6398
    %v6401 = vrot.slane %v6381, 1
    %v6402 = vrot.slane %v6382, 1
    %v6403 = vrot.slane %v6399, 1
    %v6404 = vrot.slane %v6400, 1
    %v6413 = vmax.f32 %v6349, %v6381
    %v6414 = vmax.f32 %v6350, %v6401
    %v6415 = vmax.f32 %v6351, %v6382
    %v6416 = vmax.f32 %v6352, %v6402
    %v6417 = vmax.f32 %v6353, %v6399
    %v6418 = vmax.f32 %v6354, %v6403
    %v6419 = vmax.f32 %v6355, %v6400
    %v6420 = vmax.f32 %v6356, %v6404
    %v6429 = vrot.slane %v6413, 2
    %v6430 = vrot.slane %v6414, 2
    %v6431 = vrot.slane %v6415, 2
    %v6432 = vrot.slane %v6416, 2
    %v6433 = vrot.slane %v6417, 2
    %v6434 = vrot.slane %v6418, 2
    %v6435 = vrot.slane %v6419, 2
    %v6436 = vrot.slane %v6420, 2
    %v6437 = vrot.slane %v6413, 4
    %v6438 = vrot.slane %v6414, 4
    %v6439 = vrot.slane %v6415, 4
    %v6440 = vrot.slane %v6416, 4
    %v6441 = vrot.slane %v6417, 4
    %v6442 = vrot.slane %v6418, 4
    %v6443 = vrot.slane %v6419, 4
    %v6444 = vrot.slane %v6420, 4
    %v6445 = vrot.slane %v6413, 6
    %v6446 = vrot.slane %v6414, 6
    %v6447 = vrot.slane %v6415, 6
    %v6448 = vrot.slane %v6416, 6
    %v6449 = vrot.slane %v6417, 6
    %v6450 = vrot.slane %v6418, 6
    %v6451 = vrot.slane %v6419, 6
    %v6452 = vrot.slane %v6420, 6
    %v6453 = vsel %vm1446, %v6413, %v6413
    %v6454 = vsel %vm1450, %v6413, %v6453
    %v6455 = vrot.slane %v6414, 7
    %v6456 = vsel %vm1804, %v6455, %v6454
    %v6457 = vsel %vm1444, %v6455, %v6456
    %v6458 = vsel %vm1448, %v6455, %v6457
    %v6459 = vsel %vm1452, %v6455, %v6458
    %v6460 = vsel %vm1446, %v6415, %v6415
    %v6461 = vsel %vm1450, %v6415, %v6460
    %v6462 = vrot.slane %v6416, 7
    %v6463 = vsel %vm1804, %v6462, %v6461
    %v6464 = vsel %vm1444, %v6462, %v6463
    %v6465 = vsel %vm1448, %v6462, %v6464
    %v6466 = vsel %vm1452, %v6462, %v6465
    %v6467 = vsel %vm1446, %v6429, %v6429
    %v6468 = vsel %vm1450, %v6429, %v6467
    %v6469 = vrot.slane %v6430, 7
    %v6470 = vsel %vm1804, %v6469, %v6468
    %v6471 = vsel %vm1444, %v6469, %v6470
    %v6472 = vsel %vm1448, %v6469, %v6471
    %v6473 = vsel %vm1452, %v6469, %v6472
    %v6474 = vsel %vm1446, %v6431, %v6431
    %v6475 = vsel %vm1450, %v6431, %v6474
    %v6476 = vrot.slane %v6432, 7
    %v6477 = vsel %vm1804, %v6476, %v6475
    %v6478 = vsel %vm1444, %v6476, %v6477
    %v6479 = vsel %vm1448, %v6476, %v6478
    %v6480 = vsel %vm1452, %v6476, %v6479
    %v6481 = vsel %vm1446, %v6437, %v6437
    %v6482 = vsel %vm1450, %v6437, %v6481
    %v6483 = vrot.slane %v6438, 7
    %v6484 = vsel %vm1804, %v6483, %v6482
    %v6485 = vsel %vm1444, %v6483, %v6484
    %v6486 = vsel %vm1448, %v6483, %v6485
    %v6487 = vsel %vm1452, %v6483, %v6486
    %v6488 = vsel %vm1446, %v6439, %v6439
    %v6489 = vsel %vm1450, %v6439, %v6488
    %v6490 = vrot.slane %v6440, 7
    %v6491 = vsel %vm1804, %v6490, %v6489
    %v6492 = vsel %vm1444, %v6490, %v6491
    %v6493 = vsel %vm1448, %v6490, %v6492
    %v6494 = vsel %vm1452, %v6490, %v6493
    %v6495 = vsel %vm1446, %v6445, %v6445
    %v6496 = vsel %vm1450, %v6445, %v6495
    %v6497 = vrot.slane %v6446, 7
    %v6498 = vsel %vm1804, %v6497, %v6496
    %v6499 = vsel %vm1444, %v6497, %v6498
    %v6500 = vsel %vm1448, %v6497, %v6499
    %v6501 = vsel %vm1452, %v6497, %v6500
    %v6502 = vsel %vm1446, %v6447, %v6447
    %v6503 = vsel %vm1450, %v6447, %v6502
    %v6504 = vrot.slane %v6448, 7
    %v6505 = vsel %vm1804, %v6504, %v6503
    %v6506 = vsel %vm1444, %v6504, %v6505
    %v6507 = vsel %vm1448, %v6504, %v6506
    %v6508 = vsel %vm1452, %v6504, %v6507
    %v6509 = vsel %vm1446, %v6417, %v6417
    %v6510 = vsel %vm1450, %v6417, %v6509
    %v6511 = vrot.slane %v6418, 7
    %v6512 = vsel %vm1804, %v6511, %v6510
    %v6513 = vsel %vm1444, %v6511, %v6512
    %v6514 = vsel %vm1448, %v6511, %v6513
    %v6515 = vsel %vm1452, %v6511, %v6514
    %v6516 = vsel %vm1446, %v6419, %v6419
    %v6517 = vsel %vm1450, %v6419, %v6516
    %v6518 = vrot.slane %v6420, 7
    %v6519 = vsel %vm1804, %v6518, %v6517
    %v6520 = vsel %vm1444, %v6518, %v6519
    %v6521 = vsel %vm1448, %v6518, %v6520
    %v6522 = vsel %vm1452, %v6518, %v6521
    %v6523 = vsel %vm1446, %v6433, %v6433
    %v6524 = vsel %vm1450, %v6433, %v6523
    %v6525 = vrot.slane %v6434, 7
    %v6526 = vsel %vm1804, %v6525, %v6524
    %v6527 = vsel %vm1444, %v6525, %v6526
    %v6528 = vsel %vm1448, %v6525, %v6527
    %v6529 = vsel %vm1452, %v6525, %v6528
    %v6530 = vsel %vm1446, %v6435, %v6435
    %v6531 = vsel %vm1450, %v6435, %v6530
    %v6532 = vrot.slane %v6436, 7
    %v6533 = vsel %vm1804, %v6532, %v6531
    %v6534 = vsel %vm1444, %v6532, %v6533
    %v6535 = vsel %vm1448, %v6532, %v6534
    %v6536 = vsel %vm1452, %v6532, %v6535
    %v6537 = vsel %vm1446, %v6441, %v6441
    %v6538 = vsel %vm1450, %v6441, %v6537
    %v6539 = vrot.slane %v6442, 7
    %v6540 = vsel %vm1804, %v6539, %v6538
    %v6541 = vsel %vm1444, %v6539, %v6540
    %v6542 = vsel %vm1448, %v6539, %v6541
    %v6543 = vsel %vm1452, %v6539, %v6542
    %v6544 = vsel %vm1446, %v6443, %v6443
    %v6545 = vsel %vm1450, %v6443, %v6544
    %v6546 = vrot.slane %v6444, 7
    %v6547 = vsel %vm1804, %v6546, %v6545
    %v6548 = vsel %vm1444, %v6546, %v6547
    %v6549 = vsel %vm1448, %v6546, %v6548
    %v6550 = vsel %vm1452, %v6546, %v6549
    %v6551 = vsel %vm1446, %v6449, %v6449
    %v6552 = vsel %vm1450, %v6449, %v6551
    %v6553 = vrot.slane %v6450, 7
    %v6554 = vsel %vm1804, %v6553, %v6552
    %v6555 = vsel %vm1444, %v6553, %v6554
    %v6556 = vsel %vm1448, %v6553, %v6555
    %v6557 = vsel %vm1452, %v6553, %v6556
    %v6558 = vsel %vm1446, %v6451, %v6451
    %v6559 = vsel %vm1450, %v6451, %v6558
    %v6560 = vrot.slane %v6452, 7
    %v6561 = vsel %vm1804, %v6560, %v6559
    %v6562 = vsel %vm1444, %v6560, %v6561
    %v6563 = vsel %vm1448, %v6560, %v6562
    %v6564 = vsel %vm1452, %v6560, %v6563
    %v6581 = vcombine.low %v6459, %v6473
    %v6583 = vunpack.c.l.s4 1934713408
    %v6584 = vunpack.c.0.s8 %v6583
    %v6585 = vlaneseq
    %v6586 = vshrl.u32 %v6585, 7
    %v6587 = vsub.s32 %v6584, %v6586
    %v6588 = vrot.slane %v6581, %v6587
    %v6589 = vcombine.high %v6588, 0.0
    %v6590 = vcombine.low %v6487, %v6501
    %v6592 = vunpack.c.l.s4 1934713408
    %v6593 = vunpack.c.0.s8 %v6592
    %v6594 = vlaneseq
    %v6595 = vshrl.u32 %v6594, 7
    %v6596 = vsub.s32 %v6593, %v6595
    %v6597 = vrot.slane %v6590, %v6596
    %v6598 = vcombine.high %v6597, 0.0
    %v6599 = vcombine.low %v6466, %v6480
    %v6601 = vunpack.c.l.s4 1934713408
    %v6602 = vunpack.c.0.s8 %v6601
    %v6603 = vlaneseq
    %v6604 = vshrl.u32 %v6603, 7
    %v6605 = vsub.s32 %v6602, %v6604
    %v6606 = vrot.slane %v6599, %v6605
    %v6607 = vcombine.high %v6606, 0.0
    %v6608 = vcombine.low %v6494, %v6508
    %v6610 = vunpack.c.l.s4 1934713408
    %v6611 = vunpack.c.0.s8 %v6610
    %v6612 = vlaneseq
    %v6613 = vshrl.u32 %v6612, 7
    %v6614 = vsub.s32 %v6611, %v6613
    %v6615 = vrot.slane %v6608, %v6614
    %v6616 = vcombine.high %v6615, 0.0
    %v6617 = vcombine.low %v6515, %v6529
    %v6619 = vunpack.c.l.s4 1934713408
    %v6620 = vunpack.c.0.s8 %v6619
    %v6621 = vlaneseq
    %v6622 = vshrl.u32 %v6621, 7
    %v6623 = vsub.s32 %v6620, %v6622
    %v6624 = vrot.slane %v6617, %v6623
    %v6625 = vcombine.high %v6624, 0.0
    %v6626 = vcombine.low %v6543, %v6557
    %v6628 = vunpack.c.l.s4 1934713408
    %v6629 = vunpack.c.0.s8 %v6628
    %v6630 = vlaneseq
    %v6631 = vshrl.u32 %v6630, 7
    %v6632 = vsub.s32 %v6629, %v6631
    %v6633 = vrot.slane %v6626, %v6632
    %v6634 = vcombine.high %v6633, 0.0
    %v6635 = vcombine.low %v6522, %v6536
    %v6637 = vunpack.c.l.s4 1934713408
    %v6638 = vunpack.c.0.s8 %v6637
    %v6639 = vlaneseq
    %v6640 = vshrl.u32 %v6639, 7
    %v6641 = vsub.s32 %v6638, %v6640
    %v6642 = vrot.slane %v6635, %v6641
    %v6643 = vcombine.high %v6642, 0.0
    %v6644 = vcombine.low %v6550, %v6564
    %v6646 = vunpack.c.l.s4 1934713408
    %v6647 = vunpack.c.0.s8 %v6646
    %v6648 = vlaneseq
    %v6649 = vshrl.u32 %v6648, 7
    %v6650 = vsub.s32 %v6647, %v6649
    %v6651 = vrot.slane %v6644, %v6650
    %v6652 = vcombine.high %v6651, 0.0
    %v6669 = vcombine.low %v6588, %v6597
    %v6671 = vunpack.c.l.s4 1983009808
    %v6672 = vunpack.c.0.s8 %v6671
    %v6673 = vlaneseq
    %v6674 = vshrl.u32 %v6673, 7
    %v6675 = vsub.s32 %v6672, %v6674
    %v6676 = vrot.slane %v6669, %v6675
    %v6677 = vcombine.low %v6589, %v6598
    %v6679 = vunpack.c.l.s4 1983009808
    %v6680 = vunpack.c.0.s8 %v6679
    %v6681 = vlaneseq
    %v6682 = vshrl.u32 %v6681, 7
    %v6683 = vsub.s32 %v6680, %v6682
    %v6684 = vrot.slane %v6677, %v6683
    %v6685 = vcombine.low %v6606, %v6615
    %v6687 = vunpack.c.l.s4 1983009808
    %v6688 = vunpack.c.0.s8 %v6687
    %v6689 = vlaneseq
    %v6690 = vshrl.u32 %v6689, 7
    %v6691 = vsub.s32 %v6688, %v6690
    %v6692 = vrot.slane %v6685, %v6691
    %v6693 = vcombine.low %v6607, %v6616
    %v6695 = vunpack.c.l.s4 1983009808
    %v6696 = vunpack.c.0.s8 %v6695
    %v6697 = vlaneseq
    %v6698 = vshrl.u32 %v6697, 7
    %v6699 = vsub.s32 %v6696, %v6698
    %v6700 = vrot.slane %v6693, %v6699
    %v6701 = vcombine.low %v6624, %v6633
    %v6703 = vunpack.c.l.s4 1983009808
    %v6704 = vunpack.c.0.s8 %v6703
    %v6705 = vlaneseq
    %v6706 = vshrl.u32 %v6705, 7
    %v6707 = vsub.s32 %v6704, %v6706
    %v6708 = vrot.slane %v6701, %v6707
    %v6709 = vcombine.low %v6625, %v6634
    %v6711 = vunpack.c.l.s4 1983009808
    %v6712 = vunpack.c.0.s8 %v6711
    %v6713 = vlaneseq
    %v6714 = vshrl.u32 %v6713, 7
    %v6715 = vsub.s32 %v6712, %v6714
    %v6716 = vrot.slane %v6709, %v6715
    %v6717 = vcombine.low %v6642, %v6651
    %v6719 = vunpack.c.l.s4 1983009808
    %v6720 = vunpack.c.0.s8 %v6719
    %v6721 = vlaneseq
    %v6722 = vshrl.u32 %v6721, 7
    %v6723 = vsub.s32 %v6720, %v6722
    %v6724 = vrot.slane %v6717, %v6723
    %v6725 = vcombine.low %v6643, %v6652
    %v6727 = vunpack.c.l.s4 1983009808
    %v6728 = vunpack.c.0.s8 %v6727
    %v6729 = vlaneseq
    %v6730 = vshrl.u32 %v6729, 7
    %v6731 = vsub.s32 %v6728, %v6730
    %v6732 = vrot.slane %v6725, %v6731
    %v6733 = vrot.slane %v6676, 7
    %v6734 = vrot.slane %v6684, 7
    %v6735 = vrot.slane %v6692, 7
    %v6736 = vrot.slane %v6700, 7
    %v6737 = vrot.slane %v6708, 7
    %v6738 = vrot.slane %v6716, 7
    %v6739 = vrot.slane %v6724, 7
    %v6740 = vrot.slane %v6732, 7
    %6741 = vrot.lane.b32.xlu0 %v6733, 64
    %v6742 = vpop.permute.xlu0 %6741
    %6743 = vrot.lane.b32.xlu0 %v6734, 64
    %v6744 = vpop.permute.xlu0 %6743
    %6745 = vrot.lane.b32.xlu0 %v6735, 64
    %v6746 = vpop.permute.xlu0 %6745
    %6747 = vrot.lane.b32.xlu0 %v6736, 64
    %v6748 = vpop.permute.xlu0 %6747
    %6749 = vrot.lane.b32.xlu0 %v6737, 64
    %v6750 = vpop.permute.xlu0 %6749
    %6751 = vrot.lane.b32.xlu0 %v6738, 64
    %v6752 = vpop.permute.xlu0 %6751
    %6753 = vrot.lane.b32.xlu0 %v6739, 64
    %v6754 = vpop.permute.xlu0 %6753
    %6755 = vrot.lane.b32.xlu0 %v6740, 64
    %v6756 = vpop.permute.xlu0 %6755
    %v6765 = vsel %vm1476, 0.0, %v6742
    %v6766 = vsel %vm1476, 0.0, %v6744
    %v6767 = vsel %vm1476, 0.0, %v6746
    %v6768 = vsel %vm1476, 0.0, %v6748
    %v6769 = vsel %vm1476, 0.0, %v6750
    %v6770 = vsel %vm1476, 0.0, %v6752
    %v6771 = vsel %vm1476, 0.0, %v6754
    %v6772 = vsel %vm1476, 0.0, %v6756
    %6773 = vrot.lane.b32.xlu0 %v6588, 64
    %v6774 = vpop.permute.xlu0 %6773
    %6775 = vrot.lane.b32.xlu0 %v6597, 64
    %v6776 = vpop.permute.xlu0 %6775
    %6777 = vrot.lane.b32.xlu0 %v6589, 64
    %v6778 = vpop.permute.xlu0 %6777
    %6779 = vrot.lane.b32.xlu0 %v6598, 64
    %v6780 = vpop.permute.xlu0 %6779
    %6781 = vrot.lane.b32.xlu0 %v6606, 64
    %v6782 = vpop.permute.xlu0 %6781
    %6783 = vrot.lane.b32.xlu0 %v6615, 64
    %v6784 = vpop.permute.xlu0 %6783
    %6785 = vrot.lane.b32.xlu0 %v6607, 64
    %v6786 = vpop.permute.xlu0 %6785
    %6787 = vrot.lane.b32.xlu0 %v6616, 64
    %v6788 = vpop.permute.xlu0 %6787
    %6789 = vrot.lane.b32.xlu0 %v6624, 64
    %v6790 = vpop.permute.xlu0 %6789
    %6791 = vrot.lane.b32.xlu0 %v6633, 64
    %v6792 = vpop.permute.xlu0 %6791
    %6793 = vrot.lane.b32.xlu0 %v6625, 64
    %v6794 = vpop.permute.xlu0 %6793
    %6795 = vrot.lane.b32.xlu0 %v6634, 64
    %v6796 = vpop.permute.xlu0 %6795
    %6797 = vrot.lane.b32.xlu0 %v6642, 64
    %v6798 = vpop.permute.xlu0 %6797
    %6799 = vrot.lane.b32.xlu0 %v6651, 64
    %v6800 = vpop.permute.xlu0 %6799
    %6801 = vrot.lane.b32.xlu0 %v6643, 64
    %v6802 = vpop.permute.xlu0 %6801
    %6803 = vrot.lane.b32.xlu0 %v6652, 64
    %v6804 = vpop.permute.xlu0 %6803
    %v6821 = vmax.f32 %v6588, %v6774
    %v6822 = vmax.f32 %v6597, %v6776
    %v6823 = vmax.f32 %v6589, %v6778
    %v6824 = vmax.f32 %v6598, %v6780
    %v6825 = vmax.f32 %v6606, %v6782
    %v6826 = vmax.f32 %v6615, %v6784
    %v6827 = vmax.f32 %v6607, %v6786
    %v6828 = vmax.f32 %v6616, %v6788
    %v6829 = vmax.f32 %v6624, %v6790
    %v6830 = vmax.f32 %v6633, %v6792
    %v6831 = vmax.f32 %v6625, %v6794
    %v6832 = vmax.f32 %v6634, %v6796
    %v6833 = vmax.f32 %v6642, %v6798
    %v6834 = vmax.f32 %v6651, %v6800
    %v6835 = vmax.f32 %v6643, %v6802
    %v6836 = vmax.f32 %v6652, %v6804
    %v6846 = vunpack.c.l.s4 1983009808
    %v6847 = vunpack.c.0.s8 %v6846
    %v6848 = vlaneseq
    %v6849 = vshrl.u32 %v6848, 7
    %v6850 = vsub.s32 %v6847, %v6849
    %v6851 = vrot.slane %v6765, %v6850
    %v6852 = vcombine.high %v6851, %v6851
    %v6854 = vunpack.c.l.s4 1983009808
    %v6855 = vunpack.c.0.s8 %v6854
    %v6856 = vlaneseq
    %v6857 = vshrl.u32 %v6856, 7
    %v6858 = vsub.s32 %v6855, %v6857
    %v6859 = vrot.slane %v6766, %v6858
    %v6860 = vcombine.high %v6859, %v6859
    %v6862 = vunpack.c.l.s4 1983009808
    %v6863 = vunpack.c.0.s8 %v6862
    %v6864 = vlaneseq
    %v6865 = vshrl.u32 %v6864, 7
    %v6866 = vsub.s32 %v6863, %v6865
    %v6867 = vrot.slane %v6767, %v6866
    %v6868 = vcombine.high %v6867, %v6867
    %v6870 = vunpack.c.l.s4 1983009808
    %v6871 = vunpack.c.0.s8 %v6870
    %v6872 = vlaneseq
    %v6873 = vshrl.u32 %v6872, 7
    %v6874 = vsub.s32 %v6871, %v6873
    %v6875 = vrot.slane %v6768, %v6874
    %v6876 = vcombine.high %v6875, %v6875
    %v6878 = vunpack.c.l.s4 1983009808
    %v6879 = vunpack.c.0.s8 %v6878
    %v6880 = vlaneseq
    %v6881 = vshrl.u32 %v6880, 7
    %v6882 = vsub.s32 %v6879, %v6881
    %v6883 = vrot.slane %v6769, %v6882
    %v6884 = vcombine.high %v6883, %v6883
    %v6886 = vunpack.c.l.s4 1983009808
    %v6887 = vunpack.c.0.s8 %v6886
    %v6888 = vlaneseq
    %v6889 = vshrl.u32 %v6888, 7
    %v6890 = vsub.s32 %v6887, %v6889
    %v6891 = vrot.slane %v6770, %v6890
    %v6892 = vcombine.high %v6891, %v6891
    %v6894 = vunpack.c.l.s4 1983009808
    %v6895 = vunpack.c.0.s8 %v6894
    %v6896 = vlaneseq
    %v6897 = vshrl.u32 %v6896, 7
    %v6898 = vsub.s32 %v6895, %v6897
    %v6899 = vrot.slane %v6771, %v6898
    %v6900 = vcombine.high %v6899, %v6899
    %v6902 = vunpack.c.l.s4 1983009808
    %v6903 = vunpack.c.0.s8 %v6902
    %v6904 = vlaneseq
    %v6905 = vshrl.u32 %v6904, 7
    %v6906 = vsub.s32 %v6903, %v6905
    %v6907 = vrot.slane %v6772, %v6906
    %v6908 = vcombine.high %v6907, %v6907
    %v6925 = vmax.f32 %v6821, %v6851
    %v6926 = vmax.f32 %v6822, %v6852
    %v6927 = vmax.f32 %v6823, %v6859
    %v6928 = vmax.f32 %v6824, %v6860
    %v6929 = vmax.f32 %v6825, %v6867
    %v6930 = vmax.f32 %v6826, %v6868
    %v6931 = vmax.f32 %v6827, %v6875
    %v6932 = vmax.f32 %v6828, %v6876
    %v6933 = vmax.f32 %v6829, %v6883
    %v6934 = vmax.f32 %v6830, %v6884
    %v6935 = vmax.f32 %v6831, %v6891
    %v6936 = vmax.f32 %v6832, %v6892
    %v6937 = vmax.f32 %v6833, %v6899
    %v6938 = vmax.f32 %v6834, %v6900
    %v6939 = vmax.f32 %v6835, %v6907
    %v6940 = vmax.f32 %v6836, %v6908
    %v6957 = vcombine.low %v6925, %v6926
    %v6958 = vcombine.low %v6927, %v6928
    %v6960 = vunpack.c.l.s4 1983009808
    %v6961 = vunpack.c.0.s8 %v6960
    %v6962 = vlaneseq
    %v6963 = vshrl.u32 %v6962, 7
    %v6964 = vsub.s32 %v6961, %v6963
    %v6965 = vrot.slane %v6957, %v6964
    %v6967 = vunpack.c.l.s4 1983009808
    %v6968 = vunpack.c.0.s8 %v6967
    %v6969 = vlaneseq
    %v6970 = vshrl.u32 %v6969, 7
    %v6971 = vsub.s32 %v6968, %v6970
    %v6972 = vrot.slane %v6958, %v6971
    %v6973 = vcombine.low %v6965, %v6972
    %v6974 = vcombine.low %v6929, %v6930
    %v6975 = vcombine.low %v6931, %v6932
    %v6977 = vunpack.c.l.s4 1983009808
    %v6978 = vunpack.c.0.s8 %v6977
    %v6979 = vlaneseq
    %v6980 = vshrl.u32 %v6979, 7
    %v6981 = vsub.s32 %v6978, %v6980
    %v6982 = vrot.slane %v6974, %v6981
    %v6984 = vunpack.c.l.s4 1983009808
    %v6985 = vunpack.c.0.s8 %v6984
    %v6986 = vlaneseq
    %v6987 = vshrl.u32 %v6986, 7
    %v6988 = vsub.s32 %v6985, %v6987
    %v6989 = vrot.slane %v6975, %v6988
    %v6990 = vcombine.low %v6982, %v6989
    %v6991 = vcombine.low %v6933, %v6934
    %v6992 = vcombine.low %v6935, %v6936
    %v6994 = vunpack.c.l.s4 1983009808
    %v6995 = vunpack.c.0.s8 %v6994
    %v6996 = vlaneseq
    %v6997 = vshrl.u32 %v6996, 7
    %v6998 = vsub.s32 %v6995, %v6997
    %v6999 = vrot.slane %v6991, %v6998
    %v7001 = vunpack.c.l.s4 1983009808
    %v7002 = vunpack.c.0.s8 %v7001
    %v7003 = vlaneseq
    %v7004 = vshrl.u32 %v7003, 7
    %v7005 = vsub.s32 %v7002, %v7004
    %v7006 = vrot.slane %v6992, %v7005
    %v7007 = vcombine.low %v6999, %v7006
    %v7008 = vcombine.low %v6937, %v6938
    %v7009 = vcombine.low %v6939, %v6940
    %v7011 = vunpack.c.l.s4 1983009808
    %v7012 = vunpack.c.0.s8 %v7011
    %v7013 = vlaneseq
    %v7014 = vshrl.u32 %v7013, 7
    %v7015 = vsub.s32 %v7012, %v7014
    %v7016 = vrot.slane %v7008, %v7015
    %v7018 = vunpack.c.l.s4 1983009808
    %v7019 = vunpack.c.0.s8 %v7018
    %v7020 = vlaneseq
    %v7021 = vshrl.u32 %v7020, 7
    %v7022 = vsub.s32 %v7019, %v7021
    %v7023 = vrot.slane %v7009, %v7022
    %v7024 = vcombine.low %v7016, %v7023
    %7029 = vxpose.xlu0.b32.start [1/16] %v6973, 128
    %7030 = vxpose.xlu0.b32.cont [2/16] %v6990, 128
    %7031 = vxpose.xlu0.b32.cont [3/16] 0.0, 128
    %7032 = vxpose.xlu0.b32.cont [4/16] 0.0, 128
    %7033 = vxpose.xlu0.b32.cont [5/16] 0.0, 128
    %7034 = vxpose.xlu0.b32.cont [6/16] 0.0, 128
    %7035 = vxpose.xlu0.b32.cont [7/16] 0.0, 128
    %7036 = vxpose.xlu0.b32.cont [8/16] 0.0, 128
    %7037 = vxpose.xlu0.b32.cont [9/16] 0.0, 128
    %7038 = vxpose.xlu0.b32.cont [10/16] 0.0, 128
    %7039 = vxpose.xlu0.b32.cont [11/16] 0.0, 128
    %7040 = vxpose.xlu0.b32.cont [12/16] 0.0, 128
    %7041 = vxpose.xlu0.b32.cont [13/16] 0.0, 128
    %7042 = vxpose.xlu0.b32.cont [14/16] 0.0, 128
    %7043 = vxpose.xlu0.b32.cont [15/16] 0.0, 128
    %7044 = vxpose.xlu0.b32.end [16/16] 0.0, 128
    %v7045 = vpop.trf.xlu0
    %v7046 = vpop.trf.xlu0
    %v7047 = vpop.trf.xlu0
    %v7048 = vpop.trf.xlu0
    %v7049 = vpop.trf.xlu0
    %v7050 = vpop.trf.xlu0
    %v7051 = vpop.trf.xlu0
    %v7052 = vpop.trf.xlu0
    %v7053 = vpop.trf.xlu0
    %v7054 = vpop.trf.xlu0
    %v7055 = vpop.trf.xlu0
    %v7056 = vpop.trf.xlu0
    %v7057 = vpop.trf.xlu0
    %v7058 = vpop.trf.xlu0
    %v7059 = vpop.trf.xlu0
    %v7060 = vpop.trf.xlu0
    %7061 = vxpose.xlu0.b32.start [1/16] %v7007, 128
    %7062 = vxpose.xlu0.b32.cont [2/16] %v7024, 128
    %7063 = vxpose.xlu0.b32.cont [3/16] 0.0, 128
    %7064 = vxpose.xlu0.b32.cont [4/16] 0.0, 128
    %7065 = vxpose.xlu0.b32.cont [5/16] 0.0, 128
    %7066 = vxpose.xlu0.b32.cont [6/16] 0.0, 128
    %7067 = vxpose.xlu0.b32.cont [7/16] 0.0, 128
    %7068 = vxpose.xlu0.b32.cont [8/16] 0.0, 128
    %7069 = vxpose.xlu0.b32.cont [9/16] 0.0, 128
    %7070 = vxpose.xlu0.b32.cont [10/16] 0.0, 128
    %7071 = vxpose.xlu0.b32.cont [11/16] 0.0, 128
    %7072 = vxpose.xlu0.b32.cont [12/16] 0.0, 128
    %7073 = vxpose.xlu0.b32.cont [13/16] 0.0, 128
    %7074 = vxpose.xlu0.b32.cont [14/16] 0.0, 128
    %7075 = vxpose.xlu0.b32.cont [15/16] 0.0, 128
    %7076 = vxpose.xlu0.b32.end [16/16] 0.0, 128
    %v7077 = vpop.trf.xlu0
    %v7078 = vpop.trf.xlu0
    %v7079 = vpop.trf.xlu0
    %v7080 = vpop.trf.xlu0
    %v7081 = vpop.trf.xlu0
    %v7082 = vpop.trf.xlu0
    %v7083 = vpop.trf.xlu0
    %v7084 = vpop.trf.xlu0
    %v7085 = vpop.trf.xlu0
    %v7086 = vpop.trf.xlu0
    %v7087 = vpop.trf.xlu0
    %v7088 = vpop.trf.xlu0
    %v7089 = vpop.trf.xlu0
    %v7090 = vpop.trf.xlu0
    %v7091 = vpop.trf.xlu0
    %v7092 = vpop.trf.xlu0
    %v7093 = vcombine.high %v7045, 0.0
    %v7095 = vunpack.c.l.s4 1983009808
    %v7096 = vunpack.c.0.s8 %v7095
    %v7097 = vlaneseq
    %v7098 = vshrl.u32 %v7097, 7
    %v7099 = vsub.s32 %v7096, %v7098
    %v7100 = vrot.slane %v7045, %v7099
    %v7102 = vunpack.c.l.s4 1983009808
    %v7103 = vunpack.c.0.s8 %v7102
    %v7104 = vlaneseq
    %v7105 = vshrl.u32 %v7104, 7
    %v7106 = vsub.s32 %v7103, %v7105
    %v7107 = vrot.slane %v7093, %v7106
    %v7108 = vcombine.high %v7077, 0.0
    %v7110 = vunpack.c.l.s4 1983009808
    %v7111 = vunpack.c.0.s8 %v7110
    %v7112 = vlaneseq
    %v7113 = vshrl.u32 %v7112, 7
    %v7114 = vsub.s32 %v7111, %v7113
    %v7115 = vrot.slane %v7077, %v7114
    %v7117 = vunpack.c.l.s4 1983009808
    %v7118 = vunpack.c.0.s8 %v7117
    %v7119 = vlaneseq
    %v7120 = vshrl.u32 %v7119, 7
    %v7121 = vsub.s32 %v7118, %v7120
    %v7122 = vrot.slane %v7108, %v7121
    %v7123 = vcombine.low %v7100, %v7115
    %v7124 = vcombine.high %v7100, %v7115
    %v7126 = vunpack.c.l.s4 1934713408
    %v7127 = vunpack.c.0.s8 %v7126
    %v7128 = vlaneseq
    %v7129 = vshrl.u32 %v7128, 7
    %v7130 = vsub.s32 %v7127, %v7129
    %v7131 = vrot.slane %v7123, %v7130
    %v7133 = vunpack.c.l.s4 1934713408
    %v7134 = vunpack.c.0.s8 %v7133
    %v7135 = vlaneseq
    %v7136 = vshrl.u32 %v7135, 7
    %v7137 = vsub.s32 %v7134, %v7136
    %v7138 = vrot.slane %v7124, %v7137
    %v7139 = vcombine.low %v7107, %v7122
    %v7140 = vcombine.high %v7107, %v7122
    %v7142 = vunpack.c.l.s4 1934713408
    %v7143 = vunpack.c.0.s8 %v7142
    %v7144 = vlaneseq
    %v7145 = vshrl.u32 %v7144, 7
    %v7146 = vsub.s32 %v7143, %v7145
    %v7147 = vrot.slane %v7139, %v7146
    %v7149 = vunpack.c.l.s4 1934713408
    %v7150 = vunpack.c.0.s8 %v7149
    %v7151 = vlaneseq
    %v7152 = vshrl.u32 %v7151, 7
    %v7153 = vsub.s32 %v7150, %v7152
    %v7154 = vrot.slane %v7140, %v7153
    %v7155 = vcombine.high %v7131, 0.0
    %v7156 = vcombine.high %v7138, 0.0
    %v7157 = vcombine.high %v7147, 0.0
    %v7158 = vcombine.high %v7154, 0.0
    %v7159 = vcombine.high %v7046, 0.0
    %v7161 = vunpack.c.l.s4 1983009808
    %v7162 = vunpack.c.0.s8 %v7161
    %v7163 = vlaneseq
    %v7164 = vshrl.u32 %v7163, 7
    %v7165 = vsub.s32 %v7162, %v7164
    %v7166 = vrot.slane %v7046, %v7165
    %v7168 = vunpack.c.l.s4 1983009808
    %v7169 = vunpack.c.0.s8 %v7168
    %v7170 = vlaneseq
    %v7171 = vshrl.u32 %v7170, 7
    %v7172 = vsub.s32 %v7169, %v7171
    %v7173 = vrot.slane %v7159, %v7172
    %v7174 = vcombine.high %v7078, 0.0
    %v7176 = vunpack.c.l.s4 1983009808
    %v7177 = vunpack.c.0.s8 %v7176
    %v7178 = vlaneseq
    %v7179 = vshrl.u32 %v7178, 7
    %v7180 = vsub.s32 %v7177, %v7179
    %v7181 = vrot.slane %v7078, %v7180
    %v7183 = vunpack.c.l.s4 1983009808
    %v7184 = vunpack.c.0.s8 %v7183
    %v7185 = vlaneseq
    %v7186 = vshrl.u32 %v7185, 7
    %v7187 = vsub.s32 %v7184, %v7186
    %v7188 = vrot.slane %v7174, %v7187
    %v7189 = vcombine.low %v7166, %v7181
    %v7190 = vcombine.high %v7166, %v7181
    %v7192 = vunpack.c.l.s4 1934713408
    %v7193 = vunpack.c.0.s8 %v7192
    %v7194 = vlaneseq
    %v7195 = vshrl.u32 %v7194, 7
    %v7196 = vsub.s32 %v7193, %v7195
    %v7197 = vrot.slane %v7189, %v7196
    %v7199 = vunpack.c.l.s4 1934713408
    %v7200 = vunpack.c.0.s8 %v7199
    %v7201 = vlaneseq
    %v7202 = vshrl.u32 %v7201, 7
    %v7203 = vsub.s32 %v7200, %v7202
    %v7204 = vrot.slane %v7190, %v7203
    %v7205 = vcombine.low %v7173, %v7188
    %v7206 = vcombine.high %v7173, %v7188
    %v7208 = vunpack.c.l.s4 1934713408
    %v7209 = vunpack.c.0.s8 %v7208
    %v7210 = vlaneseq
    %v7211 = vshrl.u32 %v7210, 7
    %v7212 = vsub.s32 %v7209, %v7211
    %v7213 = vrot.slane %v7205, %v7212
    %v7215 = vunpack.c.l.s4 1934713408
    %v7216 = vunpack.c.0.s8 %v7215
    %v7217 = vlaneseq
    %v7218 = vshrl.u32 %v7217, 7
    %v7219 = vsub.s32 %v7216, %v7218
    %v7220 = vrot.slane %v7206, %v7219
    %v7221 = vcombine.high %v7197, 0.0
    %v7222 = vcombine.high %v7204, 0.0
    %v7223 = vcombine.high %v7213, 0.0
    %v7224 = vcombine.high %v7220, 0.0
    %v7225 = vcombine.high %v7047, 0.0
    %v7227 = vunpack.c.l.s4 1983009808
    %v7228 = vunpack.c.0.s8 %v7227
    %v7229 = vlaneseq
    %v7230 = vshrl.u32 %v7229, 7
    %v7231 = vsub.s32 %v7228, %v7230
    %v7232 = vrot.slane %v7047, %v7231
    %v7234 = vunpack.c.l.s4 1983009808
    %v7235 = vunpack.c.0.s8 %v7234
    %v7236 = vlaneseq
    %v7237 = vshrl.u32 %v7236, 7
    %v7238 = vsub.s32 %v7235, %v7237
    %v7239 = vrot.slane %v7225, %v7238
    %v7240 = vcombine.high %v7079, 0.0
    %v7242 = vunpack.c.l.s4 1983009808
    %v7243 = vunpack.c.0.s8 %v7242
    %v7244 = vlaneseq
    %v7245 = vshrl.u32 %v7244, 7
    %v7246 = vsub.s32 %v7243, %v7245
    %v7247 = vrot.slane %v7079, %v7246
    %v7249 = vunpack.c.l.s4 1983009808
    %v7250 = vunpack.c.0.s8 %v7249
    %v7251 = vlaneseq
    %v7252 = vshrl.u32 %v7251, 7
    %v7253 = vsub.s32 %v7250, %v7252
    %v7254 = vrot.slane %v7240, %v7253
    %v7255 = vcombine.low %v7232, %v7247
    %v7256 = vcombine.high %v7232, %v7247
    %v7258 = vunpack.c.l.s4 1934713408
    %v7259 = vunpack.c.0.s8 %v7258
    %v7260 = vlaneseq
    %v7261 = vshrl.u32 %v7260, 7
    %v7262 = vsub.s32 %v7259, %v7261
    %v7263 = vrot.slane %v7255, %v7262
    %v7265 = vunpack.c.l.s4 1934713408
    %v7266 = vunpack.c.0.s8 %v7265
    %v7267 = vlaneseq
    %v7268 = vshrl.u32 %v7267, 7
    %v7269 = vsub.s32 %v7266, %v7268
    %v7270 = vrot.slane %v7256, %v7269
    %v7271 = vcombine.low %v7239, %v7254
    %v7272 = vcombine.high %v7239, %v7254
    %v7274 = vunpack.c.l.s4 1934713408
    %v7275 = vunpack.c.0.s8 %v7274
    %v7276 = vlaneseq
    %v7277 = vshrl.u32 %v7276, 7
    %v7278 = vsub.s32 %v7275, %v7277
    %v7279 = vrot.slane %v7271, %v7278
    %v7281 = vunpack.c.l.s4 1934713408
    %v7282 = vunpack.c.0.s8 %v7281
    %v7283 = vlaneseq
    %v7284 = vshrl.u32 %v7283, 7
    %v7285 = vsub.s32 %v7282, %v7284
    %v7286 = vrot.slane %v7272, %v7285
    %v7287 = vcombine.high %v7263, 0.0
    %v7288 = vcombine.high %v7270, 0.0
    %v7289 = vcombine.high %v7279, 0.0
    %v7290 = vcombine.high %v7286, 0.0
    %v7291 = vcombine.high %v7048, 0.0
    %v7293 = vunpack.c.l.s4 1983009808
    %v7294 = vunpack.c.0.s8 %v7293
    %v7295 = vlaneseq
    %v7296 = vshrl.u32 %v7295, 7
    %v7297 = vsub.s32 %v7294, %v7296
    %v7298 = vrot.slane %v7048, %v7297
    %v7300 = vunpack.c.l.s4 1983009808
    %v7301 = vunpack.c.0.s8 %v7300
    %v7302 = vlaneseq
    %v7303 = vshrl.u32 %v7302, 7
    %v7304 = vsub.s32 %v7301, %v7303
    %v7305 = vrot.slane %v7291, %v7304
    %v7306 = vcombine.high %v7080, 0.0
    %v7308 = vunpack.c.l.s4 1983009808
    %v7309 = vunpack.c.0.s8 %v7308
    %v7310 = vlaneseq
    %v7311 = vshrl.u32 %v7310, 7
    %v7312 = vsub.s32 %v7309, %v7311
    %v7313 = vrot.slane %v7080, %v7312
    %v7315 = vunpack.c.l.s4 1983009808
    %v7316 = vunpack.c.0.s8 %v7315
    %v7317 = vlaneseq
    %v7318 = vshrl.u32 %v7317, 7
    %v7319 = vsub.s32 %v7316, %v7318
    %v7320 = vrot.slane %v7306, %v7319
    %v7321 = vcombine.low %v7298, %v7313
    %v7322 = vcombine.high %v7298, %v7313
    %v7324 = vunpack.c.l.s4 1934713408
    %v7325 = vunpack.c.0.s8 %v7324
    %v7326 = vlaneseq
    %v7327 = vshrl.u32 %v7326, 7
    %v7328 = vsub.s32 %v7325, %v7327
    %v7329 = vrot.slane %v7321, %v7328
    %v7331 = vunpack.c.l.s4 1934713408
    %v7332 = vunpack.c.0.s8 %v7331
    %v7333 = vlaneseq
    %v7334 = vshrl.u32 %v7333, 7
    %v7335 = vsub.s32 %v7332, %v7334
    %v7336 = vrot.slane %v7322, %v7335
    %v7337 = vcombine.low %v7305, %v7320
    %v7338 = vcombine.high %v7305, %v7320
    %v7340 = vunpack.c.l.s4 1934713408
    %v7341 = vunpack.c.0.s8 %v7340
    %v7342 = vlaneseq
    %v7343 = vshrl.u32 %v7342, 7
    %v7344 = vsub.s32 %v7341, %v7343
    %v7345 = vrot.slane %v7337, %v7344
    %v7347 = vunpack.c.l.s4 1934713408
    %v7348 = vunpack.c.0.s8 %v7347
    %v7349 = vlaneseq
    %v7350 = vshrl.u32 %v7349, 7
    %v7351 = vsub.s32 %v7348, %v7350
    %v7352 = vrot.slane %v7338, %v7351
    %v7353 = vcombine.high %v7329, 0.0
    %v7354 = vcombine.high %v7336, 0.0
    %v7355 = vcombine.high %v7345, 0.0
    %v7356 = vcombine.high %v7352, 0.0
    %v7357 = vcombine.high %v7049, 0.0
    %v7359 = vunpack.c.l.s4 1983009808
    %v7360 = vunpack.c.0.s8 %v7359
    %v7361 = vlaneseq
    %v7362 = vshrl.u32 %v7361, 7
    %v7363 = vsub.s32 %v7360, %v7362
    %v7364 = vrot.slane %v7049, %v7363
    %v7366 = vunpack.c.l.s4 1983009808
    %v7367 = vunpack.c.0.s8 %v7366
    %v7368 = vlaneseq
    %v7369 = vshrl.u32 %v7368, 7
    %v7370 = vsub.s32 %v7367, %v7369
    %v7371 = vrot.slane %v7357, %v7370
    %v7372 = vcombine.high %v7081, 0.0
    %v7374 = vunpack.c.l.s4 1983009808
    %v7375 = vunpack.c.0.s8 %v7374
    %v7376 = vlaneseq
    %v7377 = vshrl.u32 %v7376, 7
    %v7378 = vsub.s32 %v7375, %v7377
    %v7379 = vrot.slane %v7081, %v7378
    %v7381 = vunpack.c.l.s4 1983009808
    %v7382 = vunpack.c.0.s8 %v7381
    %v7383 = vlaneseq
    %v7384 = vshrl.u32 %v7383, 7
    %v7385 = vsub.s32 %v7382, %v7384
    %v7386 = vrot.slane %v7372, %v7385
    %v7387 = vcombine.low %v7364, %v7379
    %v7388 = vcombine.high %v7364, %v7379
    %v7390 = vunpack.c.l.s4 1934713408
    %v7391 = vunpack.c.0.s8 %v7390
    %v7392 = vlaneseq
    %v7393 = vshrl.u32 %v7392, 7
    %v7394 = vsub.s32 %v7391, %v7393
    %v7395 = vrot.slane %v7387, %v7394
    %v7397 = vunpack.c.l.s4 1934713408
    %v7398 = vunpack.c.0.s8 %v7397
    %v7399 = vlaneseq
    %v7400 = vshrl.u32 %v7399, 7
    %v7401 = vsub.s32 %v7398, %v7400
    %v7402 = vrot.slane %v7388, %v7401
    %v7403 = vcombine.low %v7371, %v7386
    %v7404 = vcombine.high %v7371, %v7386
    %v7406 = vunpack.c.l.s4 1934713408
    %v7407 = vunpack.c.0.s8 %v7406
    %v7408 = vlaneseq
    %v7409 = vshrl.u32 %v7408, 7
    %v7410 = vsub.s32 %v7407, %v7409
    %v7411 = vrot.slane %v7403, %v7410
    %v7413 = vunpack.c.l.s4 1934713408
    %v7414 = vunpack.c.0.s8 %v7413
    %v7415 = vlaneseq
    %v7416 = vshrl.u32 %v7415, 7
    %v7417 = vsub.s32 %v7414, %v7416
    %v7418 = vrot.slane %v7404, %v7417
    %v7419 = vcombine.high %v7395, 0.0
    %v7420 = vcombine.high %v7402, 0.0
    %v7421 = vcombine.high %v7411, 0.0
    %v7422 = vcombine.high %v7418, 0.0
    %v7423 = vcombine.high %v7050, 0.0
    %v7425 = vunpack.c.l.s4 1983009808
    %v7426 = vunpack.c.0.s8 %v7425
    %v7427 = vlaneseq
    %v7428 = vshrl.u32 %v7427, 7
    %v7429 = vsub.s32 %v7426, %v7428
    %v7430 = vrot.slane %v7050, %v7429
    %v7432 = vunpack.c.l.s4 1983009808
    %v7433 = vunpack.c.0.s8 %v7432
    %v7434 = vlaneseq
    %v7435 = vshrl.u32 %v7434, 7
    %v7436 = vsub.s32 %v7433, %v7435
    %v7437 = vrot.slane %v7423, %v7436
    %v7438 = vcombine.high %v7082, 0.0
    %v7440 = vunpack.c.l.s4 1983009808
    %v7441 = vunpack.c.0.s8 %v7440
    %v7442 = vlaneseq
    %v7443 = vshrl.u32 %v7442, 7
    %v7444 = vsub.s32 %v7441, %v7443
    %v7445 = vrot.slane %v7082, %v7444
    %v7447 = vunpack.c.l.s4 1983009808
    %v7448 = vunpack.c.0.s8 %v7447
    %v7449 = vlaneseq
    %v7450 = vshrl.u32 %v7449, 7
    %v7451 = vsub.s32 %v7448, %v7450
    %v7452 = vrot.slane %v7438, %v7451
    %v7453 = vcombine.low %v7430, %v7445
    %v7454 = vcombine.high %v7430, %v7445
    %v7456 = vunpack.c.l.s4 1934713408
    %v7457 = vunpack.c.0.s8 %v7456
    %v7458 = vlaneseq
    %v7459 = vshrl.u32 %v7458, 7
    %v7460 = vsub.s32 %v7457, %v7459
    %v7461 = vrot.slane %v7453, %v7460
    %v7463 = vunpack.c.l.s4 1934713408
    %v7464 = vunpack.c.0.s8 %v7463
    %v7465 = vlaneseq
    %v7466 = vshrl.u32 %v7465, 7
    %v7467 = vsub.s32 %v7464, %v7466
    %v7468 = vrot.slane %v7454, %v7467
    %v7469 = vcombine.low %v7437, %v7452
    %v7470 = vcombine.high %v7437, %v7452
    %v7472 = vunpack.c.l.s4 1934713408
    %v7473 = vunpack.c.0.s8 %v7472
    %v7474 = vlaneseq
    %v7475 = vshrl.u32 %v7474, 7
    %v7476 = vsub.s32 %v7473, %v7475
    %v7477 = vrot.slane %v7469, %v7476
    %v7479 = vunpack.c.l.s4 1934713408
    %v7480 = vunpack.c.0.s8 %v7479
    %v7481 = vlaneseq
    %v7482 = vshrl.u32 %v7481, 7
    %v7483 = vsub.s32 %v7480, %v7482
    %v7484 = vrot.slane %v7470, %v7483
    %v7485 = vcombine.high %v7461, 0.0
    %v7486 = vcombine.high %v7468, 0.0
    %v7487 = vcombine.high %v7477, 0.0
    %v7488 = vcombine.high %v7484, 0.0
    %v7489 = vcombine.high %v7051, 0.0
    %v7491 = vunpack.c.l.s4 1983009808
    %v7492 = vunpack.c.0.s8 %v7491
    %v7493 = vlaneseq
    %v7494 = vshrl.u32 %v7493, 7
    %v7495 = vsub.s32 %v7492, %v7494
    %v7496 = vrot.slane %v7051, %v7495
    %v7498 = vunpack.c.l.s4 1983009808
    %v7499 = vunpack.c.0.s8 %v7498
    %v7500 = vlaneseq
    %v7501 = vshrl.u32 %v7500, 7
    %v7502 = vsub.s32 %v7499, %v7501
    %v7503 = vrot.slane %v7489, %v7502
    %v7504 = vcombine.high %v7083, 0.0
    %v7506 = vunpack.c.l.s4 1983009808
    %v7507 = vunpack.c.0.s8 %v7506
    %v7508 = vlaneseq
    %v7509 = vshrl.u32 %v7508, 7
    %v7510 = vsub.s32 %v7507, %v7509
    %v7511 = vrot.slane %v7083, %v7510
    %v7513 = vunpack.c.l.s4 1983009808
    %v7514 = vunpack.c.0.s8 %v7513
    %v7515 = vlaneseq
    %v7516 = vshrl.u32 %v7515, 7
    %v7517 = vsub.s32 %v7514, %v7516
    %v7518 = vrot.slane %v7504, %v7517
    %v7519 = vcombine.low %v7496, %v7511
    %v7520 = vcombine.high %v7496, %v7511
    %v7522 = vunpack.c.l.s4 1934713408
    %v7523 = vunpack.c.0.s8 %v7522
    %v7524 = vlaneseq
    %v7525 = vshrl.u32 %v7524, 7
    %v7526 = vsub.s32 %v7523, %v7525
    %v7527 = vrot.slane %v7519, %v7526
    %v7529 = vunpack.c.l.s4 1934713408
    %v7530 = vunpack.c.0.s8 %v7529
    %v7531 = vlaneseq
    %v7532 = vshrl.u32 %v7531, 7
    %v7533 = vsub.s32 %v7530, %v7532
    %v7534 = vrot.slane %v7520, %v7533
    %v7535 = vcombine.low %v7503, %v7518
    %v7536 = vcombine.high %v7503, %v7518
    %v7538 = vunpack.c.l.s4 1934713408
    %v7539 = vunpack.c.0.s8 %v7538
    %v7540 = vlaneseq
    %v7541 = vshrl.u32 %v7540, 7
    %v7542 = vsub.s32 %v7539, %v7541
    %v7543 = vrot.slane %v7535, %v7542
    %v7545 = vunpack.c.l.s4 1934713408
    %v7546 = vunpack.c.0.s8 %v7545
    %v7547 = vlaneseq
    %v7548 = vshrl.u32 %v7547, 7
    %v7549 = vsub.s32 %v7546, %v7548
    %v7550 = vrot.slane %v7536, %v7549
    %v7551 = vcombine.high %v7527, 0.0
    %v7552 = vcombine.high %v7534, 0.0
    %v7553 = vcombine.high %v7543, 0.0
    %v7554 = vcombine.high %v7550, 0.0
    %v7555 = vcombine.high %v7052, 0.0
    %v7557 = vunpack.c.l.s4 1983009808
    %v7558 = vunpack.c.0.s8 %v7557
    %v7559 = vlaneseq
    %v7560 = vshrl.u32 %v7559, 7
    %v7561 = vsub.s32 %v7558, %v7560
    %v7562 = vrot.slane %v7052, %v7561
    %v7564 = vunpack.c.l.s4 1983009808
    %v7565 = vunpack.c.0.s8 %v7564
    %v7566 = vlaneseq
    %v7567 = vshrl.u32 %v7566, 7
    %v7568 = vsub.s32 %v7565, %v7567
    %v7569 = vrot.slane %v7555, %v7568
    %v7570 = vcombine.high %v7084, 0.0
    %v7572 = vunpack.c.l.s4 1983009808
    %v7573 = vunpack.c.0.s8 %v7572
    %v7574 = vlaneseq
    %v7575 = vshrl.u32 %v7574, 7
    %v7576 = vsub.s32 %v7573, %v7575
    %v7577 = vrot.slane %v7084, %v7576
    %v7579 = vunpack.c.l.s4 1983009808
    %v7580 = vunpack.c.0.s8 %v7579
    %v7581 = vlaneseq
    %v7582 = vshrl.u32 %v7581, 7
    %v7583 = vsub.s32 %v7580, %v7582
    %v7584 = vrot.slane %v7570, %v7583
    %v7585 = vcombine.low %v7562, %v7577
    %v7586 = vcombine.high %v7562, %v7577
    %v7588 = vunpack.c.l.s4 1934713408
    %v7589 = vunpack.c.0.s8 %v7588
    %v7590 = vlaneseq
    %v7591 = vshrl.u32 %v7590, 7
    %v7592 = vsub.s32 %v7589, %v7591
    %v7593 = vrot.slane %v7585, %v7592
    %v7595 = vunpack.c.l.s4 1934713408
    %v7596 = vunpack.c.0.s8 %v7595
    %v7597 = vlaneseq
    %v7598 = vshrl.u32 %v7597, 7
    %v7599 = vsub.s32 %v7596, %v7598
    %v7600 = vrot.slane %v7586, %v7599
    %v7601 = vcombine.low %v7569, %v7584
    %v7602 = vcombine.high %v7569, %v7584
    %v7604 = vunpack.c.l.s4 1934713408
    %v7605 = vunpack.c.0.s8 %v7604
    %v7606 = vlaneseq
    %v7607 = vshrl.u32 %v7606, 7
    %v7608 = vsub.s32 %v7605, %v7607
    %v7609 = vrot.slane %v7601, %v7608
    %v7611 = vunpack.c.l.s4 1934713408
    %v7612 = vunpack.c.0.s8 %v7611
    %v7613 = vlaneseq
    %v7614 = vshrl.u32 %v7613, 7
    %v7615 = vsub.s32 %v7612, %v7614
    %v7616 = vrot.slane %v7602, %v7615
    %v7617 = vcombine.high %v7593, 0.0
    %v7618 = vcombine.high %v7600, 0.0
    %v7619 = vcombine.high %v7609, 0.0
    %v7620 = vcombine.high %v7616, 0.0
    %7622 = vrot.lane.b32.xlu0 %v7155, 16
    %v7623 = vpop.permute.xlu0 %7622
    %7626 = vrot.lane.b32.xlu0 %v7138, 32
    %v7627 = vpop.permute.xlu0 %7626
    %7630 = vrot.lane.b32.xlu0 %v7156, 48
    %v7631 = vpop.permute.xlu0 %7630
    %7634 = vrot.lane.b32.xlu0 %v7147, 64
    %v7635 = vpop.permute.xlu0 %7634
    %7638 = vrot.lane.b32.xlu0 %v7157, 80
    %v7639 = vpop.permute.xlu0 %7638
    %7642 = vrot.lane.b32.xlu0 %v7154, 96
    %v7643 = vpop.permute.xlu0 %7642
    %7646 = vrot.lane.b32.xlu0 %v7158, 112
    %v7647 = vpop.permute.xlu0 %7646
    %7650 = vrot.lane.b32.xlu0 %v7221, 16
    %v7651 = vpop.permute.xlu0 %7650
    %7654 = vrot.lane.b32.xlu0 %v7204, 32
    %v7655 = vpop.permute.xlu0 %7654
    %7658 = vrot.lane.b32.xlu0 %v7222, 48
    %v7659 = vpop.permute.xlu0 %7658
    %7662 = vrot.lane.b32.xlu0 %v7213, 64
    %v7663 = vpop.permute.xlu0 %7662
    %7666 = vrot.lane.b32.xlu0 %v7223, 80
    %v7667 = vpop.permute.xlu0 %7666
    %7670 = vrot.lane.b32.xlu0 %v7220, 96
    %v7671 = vpop.permute.xlu0 %7670
    %7674 = vrot.lane.b32.xlu0 %v7224, 112
    %v7675 = vpop.permute.xlu0 %7674
    %7678 = vrot.lane.b32.xlu0 %v7287, 16
    %v7679 = vpop.permute.xlu0 %7678
    %7682 = vrot.lane.b32.xlu0 %v7270, 32
    %v7683 = vpop.permute.xlu0 %7682
    %7686 = vrot.lane.b32.xlu0 %v7288, 48
    %v7687 = vpop.permute.xlu0 %7686
    %7690 = vrot.lane.b32.xlu0 %v7279, 64
    %v7691 = vpop.permute.xlu0 %7690
    %7694 = vrot.lane.b32.xlu0 %v7289, 80
    %v7695 = vpop.permute.xlu0 %7694
    %7698 = vrot.lane.b32.xlu0 %v7286, 96
    %v7699 = vpop.permute.xlu0 %7698
    %7702 = vrot.lane.b32.xlu0 %v7290, 112
    %v7703 = vpop.permute.xlu0 %7702
    %7706 = vrot.lane.b32.xlu0 %v7353, 16
    %v7707 = vpop.permute.xlu0 %7706
    %7710 = vrot.lane.b32.xlu0 %v7336, 32
    %v7711 = vpop.permute.xlu0 %7710
    %7714 = vrot.lane.b32.xlu0 %v7354, 48
    %v7715 = vpop.permute.xlu0 %7714
    %7718 = vrot.lane.b32.xlu0 %v7345, 64
    %v7719 = vpop.permute.xlu0 %7718
    %7722 = vrot.lane.b32.xlu0 %v7355, 80
    %v7723 = vpop.permute.xlu0 %7722
    %7726 = vrot.lane.b32.xlu0 %v7352, 96
    %v7727 = vpop.permute.xlu0 %7726
    %7730 = vrot.lane.b32.xlu0 %v7356, 112
    %v7731 = vpop.permute.xlu0 %7730
    %7734 = vrot.lane.b32.xlu0 %v7419, 16
    %v7735 = vpop.permute.xlu0 %7734
    %7738 = vrot.lane.b32.xlu0 %v7402, 32
    %v7739 = vpop.permute.xlu0 %7738
    %7742 = vrot.lane.b32.xlu0 %v7420, 48
    %v7743 = vpop.permute.xlu0 %7742
    %7746 = vrot.lane.b32.xlu0 %v7411, 64
    %v7747 = vpop.permute.xlu0 %7746
    %7750 = vrot.lane.b32.xlu0 %v7421, 80
    %v7751 = vpop.permute.xlu0 %7750
    %7754 = vrot.lane.b32.xlu0 %v7418, 96
    %v7755 = vpop.permute.xlu0 %7754
    %7758 = vrot.lane.b32.xlu0 %v7422, 112
    %v7759 = vpop.permute.xlu0 %7758
    %7762 = vrot.lane.b32.xlu0 %v7485, 16
    %v7763 = vpop.permute.xlu0 %7762
    %7766 = vrot.lane.b32.xlu0 %v7468, 32
    %v7767 = vpop.permute.xlu0 %7766
    %7770 = vrot.lane.b32.xlu0 %v7486, 48
    %v7771 = vpop.permute.xlu0 %7770
    %7774 = vrot.lane.b32.xlu0 %v7477, 64
    %v7775 = vpop.permute.xlu0 %7774
    %7778 = vrot.lane.b32.xlu0 %v7487, 80
    %v7779 = vpop.permute.xlu0 %7778
    %7782 = vrot.lane.b32.xlu0 %v7484, 96
    %v7783 = vpop.permute.xlu0 %7782
    %7786 = vrot.lane.b32.xlu0 %v7488, 112
    %v7787 = vpop.permute.xlu0 %7786
    %7790 = vrot.lane.b32.xlu0 %v7551, 16
    %v7791 = vpop.permute.xlu0 %7790
    %7794 = vrot.lane.b32.xlu0 %v7534, 32
    %v7795 = vpop.permute.xlu0 %7794
    %7798 = vrot.lane.b32.xlu0 %v7552, 48
    %v7799 = vpop.permute.xlu0 %7798
    %7802 = vrot.lane.b32.xlu0 %v7543, 64
    %v7803 = vpop.permute.xlu0 %7802
    %7806 = vrot.lane.b32.xlu0 %v7553, 80
    %v7807 = vpop.permute.xlu0 %7806
    %7810 = vrot.lane.b32.xlu0 %v7550, 96
    %v7811 = vpop.permute.xlu0 %7810
    %7814 = vrot.lane.b32.xlu0 %v7554, 112
    %v7815 = vpop.permute.xlu0 %7814
    %7818 = vrot.lane.b32.xlu0 %v7617, 16
    %v7819 = vpop.permute.xlu0 %7818
    %7822 = vrot.lane.b32.xlu0 %v7600, 32
    %v7823 = vpop.permute.xlu0 %7822
    %7826 = vrot.lane.b32.xlu0 %v7618, 48
    %v7827 = vpop.permute.xlu0 %7826
    %7830 = vrot.lane.b32.xlu0 %v7609, 64
    %v7831 = vpop.permute.xlu0 %7830
    %7834 = vrot.lane.b32.xlu0 %v7619, 80
    %v7835 = vpop.permute.xlu0 %7834
    %7838 = vrot.lane.b32.xlu0 %v7616, 96
    %v7839 = vpop.permute.xlu0 %7838
    %7842 = vrot.lane.b32.xlu0 %v7620, 112
    %v7843 = vpop.permute.xlu0 %7842
    %v7845 = vsel %vm1084, %v7131, %v7623
    %v7846 = vsel %vm1090, %v7845, %v7627
    %v7847 = vsel %vm4370, %v7846, %v7631
    %v7848 = vsel %vm1096, %v7847, %v7635
    %v7849 = vsel %vm4375, %v7848, %v7639
    %v7850 = vsel %vm4378, %v7849, %v7643
    %v7851 = vsel %vm4381, %v7850, %v7647
    %v7852 = vsel %vm1084, %v7197, %v7651
    %v7853 = vsel %vm1090, %v7852, %v7655
    %v7854 = vsel %vm4370, %v7853, %v7659
    %v7855 = vsel %vm1096, %v7854, %v7663
    %v7856 = vsel %vm4375, %v7855, %v7667
    %v7857 = vsel %vm4378, %v7856, %v7671
    %v7858 = vsel %vm4381, %v7857, %v7675
    %v7859 = vsel %vm1084, %v7263, %v7679
    %v7860 = vsel %vm1090, %v7859, %v7683
    %v7861 = vsel %vm4370, %v7860, %v7687
    %v7862 = vsel %vm1096, %v7861, %v7691
    %v7863 = vsel %vm4375, %v7862, %v7695
    %v7864 = vsel %vm4378, %v7863, %v7699
    %v7865 = vsel %vm4381, %v7864, %v7703
    %v7866 = vsel %vm1084, %v7329, %v7707
    %v7867 = vsel %vm1090, %v7866, %v7711
    %v7868 = vsel %vm4370, %v7867, %v7715
    %v7869 = vsel %vm1096, %v7868, %v7719
    %v7870 = vsel %vm4375, %v7869, %v7723
    %v7871 = vsel %vm4378, %v7870, %v7727
    %v7872 = vsel %vm4381, %v7871, %v7731
    %v7873 = vsel %vm1084, %v7395, %v7735
    %v7874 = vsel %vm1090, %v7873, %v7739
    %v7875 = vsel %vm4370, %v7874, %v7743
    %v7876 = vsel %vm1096, %v7875, %v7747
    %v7877 = vsel %vm4375, %v7876, %v7751
    %v7878 = vsel %vm4378, %v7877, %v7755
    %v7879 = vsel %vm4381, %v7878, %v7759
    %v7880 = vsel %vm1084, %v7461, %v7763
    %v7881 = vsel %vm1090, %v7880, %v7767
    %v7882 = vsel %vm4370, %v7881, %v7771
    %v7883 = vsel %vm1096, %v7882, %v7775
    %v7884 = vsel %vm4375, %v7883, %v7779
    %v7885 = vsel %vm4378, %v7884, %v7783
    %v7886 = vsel %vm4381, %v7885, %v7787
    %v7887 = vsel %vm1084, %v7527, %v7791
    %v7888 = vsel %vm1090, %v7887, %v7795
    %v7889 = vsel %vm4370, %v7888, %v7799
    %v7890 = vsel %vm1096, %v7889, %v7803
    %v7891 = vsel %vm4375, %v7890, %v7807
    %v7892 = vsel %vm4378, %v7891, %v7811
    %v7893 = vsel %vm4381, %v7892, %v7815
    %v7894 = vsel %vm1084, %v7593, %v7819
    %v7895 = vsel %vm1090, %v7894, %v7823
    %v7896 = vsel %vm4370, %v7895, %v7827
    %v7897 = vsel %vm1096, %v7896, %v7831
    %v7898 = vsel %vm4375, %v7897, %v7835
    %v7899 = vsel %vm4378, %v7898, %v7839
    %v7900 = vsel %vm4381, %v7899, %v7843
    %v7909 = vcombine.low %v7851, %v7858
    %v7910 = vcombine.low %v7865, %v7872
    %v7912 = vunpack.c.l.s4 1983009808
    %v7913 = vunpack.c.0.s8 %v7912
    %v7914 = vlaneseq
    %v7915 = vshrl.u32 %v7914, 7
    %v7916 = vsub.s32 %v7913, %v7915
    %v7917 = vrot.slane %v7909, %v7916
    %v7919 = vunpack.c.l.s4 1983009808
    %v7920 = vunpack.c.0.s8 %v7919
    %v7921 = vlaneseq
    %v7922 = vshrl.u32 %v7921, 7
    %v7923 = vsub.s32 %v7920, %v7922
    %v7924 = vrot.slane %v7910, %v7923
    %v7925 = vcombine.low %v7917, %v7924
    %v7926 = vcombine.low %v7879, %v7886
    %v7927 = vcombine.low %v7893, %v7900
    %v7929 = vunpack.c.l.s4 1983009808
    %v7930 = vunpack.c.0.s8 %v7929
    %v7931 = vlaneseq
    %v7932 = vshrl.u32 %v7931, 7
    %v7933 = vsub.s32 %v7930, %v7932
    %v7934 = vrot.slane %v7926, %v7933
    %v7936 = vunpack.c.l.s4 1983009808
    %v7937 = vunpack.c.0.s8 %v7936
    %v7938 = vlaneseq
    %v7939 = vshrl.u32 %v7938, 7
    %v7940 = vsub.s32 %v7937, %v7939
    %v7941 = vrot.slane %v7927, %v7940
    %v7942 = vcombine.low %v7934, %v7941
    %7945 = vst [vmem:[#allocation12] sm:$0xff] %v7925
    %7946 = vst [vmem:[#allocation12 + $0x8] sm:$0xff] %v7942
    // Predicated region
    $region46: #{encoder_bn_forward.1} parent=1 // pred_check
      _
    $region47: #{encoder_bn_forward.1} parent=1 // pred_check_branch
      %7948 = sbr.rel (0) target = $region49
    $region48: #{encoder_bn_forward.1} parent=1 // pred_region
      %s7950 = ssub.s32 256, 256
      %7951 = vsyncadd [#allocation6], %s7950
      %s7953 = sshll.u32 [#allocation12], 4
      %s7954 = int_to_ptr.vmem [resolvable:$true] %s7953
      %7956 = dma.vmem_to_hbm [thread:$0]  %s7954, 256, %s7, [#allocation6]
    $region49: #{encoder_bn_forward.1} parent=1 // pred_fallthru
      _
    // Predicated region
    $region50: #{encoder_bn_forward.1} parent=1 // pred_check
      _
    $region51: #{encoder_bn_forward.1} parent=1 // pred_check_branch
      %7958 = sbr.rel (0) target = $region53
    $region52: #{encoder_bn_forward.1} parent=1 // pred_region
      %7959 = dma.done [#allocation6], 256
    $region53: #{encoder_bn_forward.1} parent=1 // pred_fallthru
      _
    %7960 = vsyncpa [#allocation5], 1
    %7961 = vsyncpa [#allocation8], 1
    %7962 = vsyncpa [#allocation11], 1
    %7963 = vsyncpa [#allocation6], 1

</llo_original>
